<compile_context>
chip_gen: v5e
topology: v5e:2x2
jax: 0.10.0
libtpu: 0.0.40
codegen_flags: <defaults>
</compile_context>

<pallas_src>
import jax
import jax.numpy as jnp
from jax.experimental import pallas as pl
from jax.experimental.pallas import tpu as pltpu

DIM = 3
IN_FEATURES = 32
OUT_FEATURES = 4
NF = 32
DIMZ = DIM + IN_FEATURES        # 35
K_IN = DIMZ + 1                 # 36: x plus a constant-1 column (folds biases b0..b4)
NEG_SLOPE = 0.01                # PyTorch LeakyReLU default

# (fan_in, fan_out) per layer, matching the PyTorch module
LAYER_SIZES = [
    (DIMZ, NF * 16),                 # fc0: 35  -> 512
    (NF * 16 + DIMZ, NF * 8),        # fc1: 547 -> 256
    (NF * 8 + DIMZ, NF * 4),         # fc2: 291 -> 128
    (NF * 4 + DIMZ, NF * 2),         # fc3: 163 -> 64
    (NF * 2 + DIMZ, NF * 1),         # fc4: 99  -> 32
    (NF * 1, OUT_FEATURES),          # fc5: 32  -> 4
]

# Hidden widths of fc0..fc4 outputs.
H0, H1, H2, H3, H4 = NF * 16, NF * 8, NF * 4, NF * 2, NF * 1   # 512,256,128,64,32

# Column layout of the fused x-projection slab (compacted to 1024 = 8*128 lanes):
#   [ fc0:512 | fc1x:256 | fc2x:128 | fc3x:64 | fc4x:32 | pad:32 ]
# fc3x starts 128-aligned; the fc4x slice at 960 costs one lane rotate (XLU slot,
# off the MXU critical path) but saves a full 256-lane MXU N-pass per step.
OFF0, OFF1, OFF2, OFF3, OFF4 = 0, 512, 768, 896, 960
X_COLS = 1024


def _cdiv(a, b):
    return (a + b - 1) // b


def _round_up(a, b):
    return _cdiv(a, b) * b


def _leaky(x):
    # max-based leaky ReLU: 2 VALU ops/element, identical for 0 < slope < 1.
    return jnp.maximum(x, NEG_SLOPE * x)


def imnet_kernel(x_ref, wx_ref, w1h_ref, w2h_ref, w3h_ref, w4h_ref, w5_ref,
                 b5_ref, out_ref):
    x = x_ref[...]                                 # (bt, 36) bf16, ones col appended

    # One fused K=36 matmul: fc0 pre-activation AND the x-path contribution of
    # fc1..fc4 (cat([h, x]) @ W == h @ Wh + x @ Wx), with biases b0..b4 folded in
    # via the constant-1 column (no separate f32 bias add needed).
    xproj = jnp.dot(x, wx_ref[...], preferred_element_type=jnp.float32)  # (bt,1024)

    def hdot(h, w_ref):
        return jnp.dot(h.astype(jnp.bfloat16), w_ref[...],
                       preferred_element_type=jnp.float32)

    h = _leaky(xproj[:, OFF0:OFF0 + H0])                        # fc0
    h = _leaky(hdot(h, w1h_ref) + xproj[:, OFF1:OFF1 + H1])     # fc1
    h = _leaky(hdot(h, w2h_ref) + xproj[:, OFF2:OFF2 + H2])     # fc2
    h = _leaky(hdot(h, w3h_ref) + xproj[:, OFF3:OFF3 + H3])     # fc3
    h = _leaky(hdot(h, w4h_ref) + xproj[:, OFF4:OFF4 + H4])     # fc4
    out = hdot(h, w5_ref) + b5_ref[...]                         # fc5 (no activation)
    # TODO(synk): if profiling ever shows the 4-wide masked stores (vst.msk) on the
    # critical path, pad w5/b5 to 128 output columns and slice [:, :4] in the wrapper.
    out_ref[...] = out.astype(out_ref.dtype)


def init_params(key):
    """Deterministic init matching PyTorch Linear default U(-1/sqrt(fan_in), +)."""
    params = []
    for (fan_in, fan_out) in LAYER_SIZES:
        key, kw, kb = jax.random.split(key, 3)
        bound = 1.0 / jnp.sqrt(fan_in)
        w = jax.random.uniform(kw, (fan_in, fan_out), jnp.float32, -bound, bound)
        b = jax.random.uniform(kb, (fan_out,), jnp.float32, -bound, bound)
        params.append((w, b))
    return params


def pack_params(params, matmul_dtype=jnp.bfloat16):
    """Split concat-weights, fuse the x-path (plus b0..b4 as a bias row) into one
    lane-aligned (36, 1024) slab, cast matmul operands to bf16 once."""
    (w0, b0), (w1, b1), (w2, b2), (w3, b3), (w4, b4), (w5, b5) = params
    w1h, w1x = w1[:H0], w1[H0:]
    w2h, w2x = w2[:H1], w2[H1:]
    w3h, w3x = w3[:H2], w3[H2:]
    w4h, w4x = w4[:H3], w4[H3:]

    def seg(wx_part, b_part):
        # (35, n) weights + (n,) bias as row 35 -> (36, n); the ones-column of the
        # input picks up the bias during the matmul.
        return jnp.concatenate([wx_part, b_part[None, :]], axis=0)

    wx = jnp.concatenate([
        seg(w0, b0),      # [   0: 512]
        seg(w1x, b1),     # [ 512: 768]
        seg(w2x, b2),     # [ 768: 896]
        seg(w3x, b3),     # [ 896: 960]
        seg(w4x, b4),     # [ 960: 992]
    ], axis=1)
    wx = jnp.pad(wx, ((0, 0), (0, X_COLS - wx.shape[1]))).astype(matmul_dtype)
    assert wx.shape == (K_IN, X_COLS)

    return (wx,
            w1h.astype(matmul_dtype), w2h.astype(matmul_dtype),
            w3h.astype(matmul_dtype), w4h.astype(matmul_dtype),
            w5.astype(matmul_dtype),
            b5[None, :].astype(jnp.float32))          # (1, 4) f32, stays a tiny add


def _is_multi_tc():
    """Best-effort detection of multi-TensorCore chips (v7x)."""
    try:
        kind = jax.devices()[0].device_kind.lower()
    except Exception:
        return False
    return "v7" in kind


def _choose_bt(B, bt_max):
    """Pick a batch tile: as large as allowed (amortize ~0.35us/step grid overhead),
    128-row granularity for good MXU fill / bf16 sublane packing, and an even,
    balanced step count only on multi-TC parts (v7x)."""
    bt_max = max(16, (bt_max // 16) * 16)
    n_tiles = max(1, _cdiv(B, bt_max))
    if _is_multi_tc() and B >= 512 and n_tiles % 2 == 1:
        n_tiles += 1          # keep both v7x TensorCores busy with balanced tiles
    gran = 128 if B >= 128 else 16
    return _round_up(_cdiv(B, n_tiles), gran)


def imnet_pallas(x, params, *, bt=2048):
    # bt=2048 keeps live f32 intermediates (~8 KB/row) + double-buffered I/O well
    # under the 48 MiB VMEM limit on every generation (incl. v7x's 64 MiB physical);
    # on v5e/v6e (128 MiB) bt can be pushed to ~4096 via the knob.
    B = x.shape[0]
    bt_eff = _choose_bt(B, bt)
    Bp = _round_up(B, bt_eff)

    # Append the constant-1 column (bias fold) and cast to bf16 once, outside the
    # kernel; pad the batch with zero rows (sliced off below).
    ones = jnp.ones((B, 1), x.dtype)
    x_in = jnp.concatenate([x, ones], axis=1).astype(jnp.bfloat16)
    if Bp != B:
        x_in = jnp.pad(x_in, ((0, Bp - B), (0, 0)))

    flat_weights = pack_params(params)

    def full_spec(a):
        # weights/biases are small & grid-invariant: constant index_map -> resident
        # in VMEM, DMA'd once (not re-fetched per grid step).
        return pl.BlockSpec(a.shape, lambda i: (0,) * a.ndim)

    in_specs = ([pl.BlockSpec((bt_eff, K_IN), lambda i: (i, 0))]
                + [full_spec(a) for a in flat_weights])
    out_spec = pl.BlockSpec((bt_eff, OUT_FEATURES), lambda i: (i, 0))

    out = pl.pallas_call(
        imnet_kernel,
        out_shape=jax.ShapeDtypeStruct((Bp, OUT_FEATURES), jnp.float32),
        grid_spec=pltpu.PrefetchScalarGridSpec(
            num_scalar_prefetch=0,
            grid=(Bp // bt_eff,),
            in_specs=in_specs,
            out_specs=out_spec,
        ),
        compiler_params=pltpu.CompilerParams(
            dimension_semantics=("parallel",),
            vmem_limit_bytes=48 * 1024 * 1024,
        ),
    )(x_in, *flat_weights)

    return out[:B] if Bp != B else out


def imnet_reference(x, params, matmul_dtype=jnp.bfloat16):
    """Pure-JAX reference mirroring the PyTorch forward (with concatenation and f32
    biases), using the same bf16-operand / f32-accumulate matmul policy."""
    def mm(a, w):
        return jnp.dot(a.astype(matmul_dtype), w.astype(matmul_dtype),
                       preferred_element_type=jnp.float32)
    x_tmp = x
    for (w, b) in params[:4]:
        x_tmp = _leaky(mm(x_tmp, w) + b)
        x_tmp = jnp.concatenate([x_tmp, x], axis=-1)
    w4, b4 = params[4]
    x_tmp = _leaky(mm(x_tmp, w4) + b4)
    w5, b5 = params[5]
    return mm(x_tmp, w5) + b5


if __name__ == "__main__":
    key = jax.random.PRNGKey(0)
    k_params, k_x = jax.random.split(key)

    params = init_params(k_params)
    B = 1000   # not a multiple of the tile: exercises batch padding / tile choice
    x = jax.random.normal(k_x, (B, DIMZ), jnp.float32)

    out = imnet_pallas(x, params)
    out = jax.block_until_ready(out)

    ref = imnet_reference(x, params)
    assert out.shape == (B, OUT_FEATURES)
    max_err = float(jnp.max(jnp.abs(out - ref)))
    # Tolerance covers the bf16 rounding of b0..b4 folded into the weight slab
    # (biases are O(1/sqrt(fan_in)), so the extra error is O(1e-4) at the output).
    assert jnp.allclose(out, ref, atol=3e-3, rtol=3e-3), \
        f"mismatch vs reference (max |diff|={max_err})"

    print("KERNEL_OK")
</pallas_src>

<mosaic_0001>
module attributes {stable_mosaic.version = 11 : i64} {
  func.func @imnet_kernel(%arg0: i32, %arg1: memref<1024x36xbf16, #tpu.memory_space<vmem>>, %arg2: memref<36x1024xbf16, #tpu.memory_space<vmem>>, %arg3: memref<512x256xbf16, #tpu.memory_space<vmem>>, %arg4: memref<256x128xbf16, #tpu.memory_space<vmem>>, %arg5: memref<128x64xbf16, #tpu.memory_space<vmem>>, %arg6: memref<64x32xbf16, #tpu.memory_space<vmem>>, %arg7: memref<32x4xbf16, #tpu.memory_space<vmem>>, %arg8: memref<1x4xf32, #tpu.memory_space<vmem>>, %arg9: memref<1024x4xf32, #tpu.memory_space<vmem>>) attributes {dimension_semantics = [#tpu.dimension_semantics<parallel>], iteration_bounds = array<i64: 1>, scalar_prefetch = 0 : i64, scratch_operands = 0 : i64, tpu.core_type = #tpu.core_type<tc>, window_params = [{transform_indices = @transform_0, window_bounds = array<i64: 1024, 36>}, {pipeline_mode = #tpu.pipeline_mode<synchronous>, transform_indices = @transform_1, window_bounds = array<i64: 36, 1024>}, {pipeline_mode = #tpu.pipeline_mode<synchronous>, transform_indices = @transform_2, window_bounds = array<i64: 512, 256>}, {pipeline_mode = #tpu.pipeline_mode<synchronous>, transform_indices = @transform_3, window_bounds = array<i64: 256, 128>}, {pipeline_mode = #tpu.pipeline_mode<synchronous>, transform_indices = @transform_4, window_bounds = array<i64: 128, 64>}, {pipeline_mode = #tpu.pipeline_mode<synchronous>, transform_indices = @transform_5, window_bounds = array<i64: 64, 32>}, {pipeline_mode = #tpu.pipeline_mode<synchronous>, transform_indices = @transform_6, window_bounds = array<i64: 32, 4>}, {pipeline_mode = #tpu.pipeline_mode<synchronous>, transform_indices = @transform_7, window_bounds = array<i64: 1, 4>}, {transform_indices = @transform_8, window_bounds = array<i64: 1024, 4>}]} {
    %c0 = arith.constant 0 : index
    %c0_0 = arith.constant 0 : index
    %0 = vector.load %arg1[%c0, %c0_0] : memref<1024x36xbf16, #tpu.memory_space<vmem>>, vector<1024x36xbf16>
    %c0_1 = arith.constant 0 : index
    %c0_2 = arith.constant 0 : index
    %1 = vector.load %arg2[%c0_1, %c0_2] : memref<36x1024xbf16, #tpu.memory_space<vmem>>, vector<36x1024xbf16>
    %cst = arith.constant dense<0.000000e+00> : vector<1024x1024xf32>
    %2 = tpu.matmul %0, %1, %cst {dimension_numbers = #tpu.dot_dimension_numbers<[1], [0], [0], [1], [0, 0, 1, 1], [], []>} : vector<1024x36xbf16>, vector<36x1024xbf16>, vector<1024x1024xf32> -> vector<1024x1024xf32>
    %3 = vector.extract_strided_slice %2 {offsets = [0, 0], sizes = [1024, 512], strides = [1, 1]} : vector<1024x1024xf32> to vector<1024x512xf32>
    %cst_3 = arith.constant 0.00999999977 : f32
    %4 = vector.broadcast %cst_3 : f32 to vector<1024x512xf32>
    %5 = arith.mulf %4, %3 : vector<1024x512xf32>
    %6 = arith.maximumf %3, %5 : vector<1024x512xf32>
    %7 = arith.truncf %6 : vector<1024x512xf32> to vector<1024x512xbf16>
    %c0_4 = arith.constant 0 : index
    %c0_5 = arith.constant 0 : index
    %8 = vector.load %arg3[%c0_4, %c0_5] : memref<512x256xbf16, #tpu.memory_space<vmem>>, vector<512x256xbf16>
    %cst_6 = arith.constant dense<0.000000e+00> : vector<1024x256xf32>
    %9 = tpu.matmul %7, %8, %cst_6 {dimension_numbers = #tpu.dot_dimension_numbers<[1], [0], [0], [1], [0, 0, 1, 1], [], []>} : vector<1024x512xbf16>, vector<512x256xbf16>, vector<1024x256xf32> -> vector<1024x256xf32>
    %10 = vector.extract_strided_slice %2 {offsets = [0, 512], sizes = [1024, 256], strides = [1, 1]} : vector<1024x1024xf32> to vector<1024x256xf32>
    %11 = arith.addf %9, %10 : vector<1024x256xf32>
    %cst_7 = arith.constant 0.00999999977 : f32
    %12 = vector.broadcast %cst_7 : f32 to vector<1024x256xf32>
    %13 = arith.mulf %12, %11 : vector<1024x256xf32>
    %14 = arith.maximumf %11, %13 : vector<1024x256xf32>
    %15 = arith.truncf %14 : vector<1024x256xf32> to vector<1024x256xbf16>
    %c0_8 = arith.constant 0 : index
    %c0_9 = arith.constant 0 : index
    %16 = vector.load %arg4[%c0_8, %c0_9] : memref<256x128xbf16, #tpu.memory_space<vmem>>, vector<256x128xbf16>
    %cst_10 = arith.constant dense<0.000000e+00> : vector<1024x128xf32>
    %17 = tpu.matmul %15, %16, %cst_10 {dimension_numbers = #tpu.dot_dimension_numbers<[1], [0], [0], [1], [0, 0, 1, 1], [], []>} : vector<1024x256xbf16>, vector<256x128xbf16>, vector<1024x128xf32> -> vector<1024x128xf32>
    %18 = vector.extract_strided_slice %2 {offsets = [0, 768], sizes = [1024, 128], strides = [1, 1]} : vector<1024x1024xf32> to vector<1024x128xf32>
    %19 = arith.addf %17, %18 : vector<1024x128xf32>
    %cst_11 = arith.constant 0.00999999977 : f32
    %20 = vector.broadcast %cst_11 : f32 to vector<1024x128xf32>
    %21 = arith.mulf %20, %19 : vector<1024x128xf32>
    %22 = arith.maximumf %19, %21 : vector<1024x128xf32>
    %23 = arith.truncf %22 : vector<1024x128xf32> to vector<1024x128xbf16>
    %c0_12 = arith.constant 0 : index
    %c0_13 = arith.constant 0 : index
    %24 = vector.load %arg5[%c0_12, %c0_13] : memref<128x64xbf16, #tpu.memory_space<vmem>>, vector<128x64xbf16>
    %cst_14 = arith.constant dense<0.000000e+00> : vector<1024x64xf32>
    %25 = tpu.matmul %23, %24, %cst_14 {dimension_numbers = #tpu.dot_dimension_numbers<[1], [0], [0], [1], [0, 0, 1, 1], [], []>} : vector<1024x128xbf16>, vector<128x64xbf16>, vector<1024x64xf32> -> vector<1024x64xf32>
    %26 = vector.extract_strided_slice %2 {offsets = [0, 896], sizes = [1024, 64], strides = [1, 1]} : vector<1024x1024xf32> to vector<1024x64xf32>
    %27 = arith.addf %25, %26 : vector<1024x64xf32>
    %cst_15 = arith.constant 0.00999999977 : f32
    %28 = vector.broadcast %cst_15 : f32 to vector<1024x64xf32>
    %29 = arith.mulf %28, %27 : vector<1024x64xf32>
    %30 = arith.maximumf %27, %29 : vector<1024x64xf32>
    %31 = arith.truncf %30 : vector<1024x64xf32> to vector<1024x64xbf16>
    %c0_16 = arith.constant 0 : index
    %c0_17 = arith.constant 0 : index
    %32 = vector.load %arg6[%c0_16, %c0_17] : memref<64x32xbf16, #tpu.memory_space<vmem>>, vector<64x32xbf16>
    %cst_18 = arith.constant dense<0.000000e+00> : vector<1024x32xf32>
    %33 = tpu.matmul %31, %32, %cst_18 {dimension_numbers = #tpu.dot_dimension_numbers<[1], [0], [0], [1], [0, 0, 1, 1], [], []>} : vector<1024x64xbf16>, vector<64x32xbf16>, vector<1024x32xf32> -> vector<1024x32xf32>
    %34 = vector.extract_strided_slice %2 {offsets = [0, 960], sizes = [1024, 32], strides = [1, 1]} : vector<1024x1024xf32> to vector<1024x32xf32>
    %35 = arith.addf %33, %34 : vector<1024x32xf32>
    %cst_19 = arith.constant 0.00999999977 : f32
    %36 = vector.broadcast %cst_19 : f32 to vector<1024x32xf32>
    %37 = arith.mulf %36, %35 : vector<1024x32xf32>
    %38 = arith.maximumf %35, %37 : vector<1024x32xf32>
    %39 = arith.truncf %38 : vector<1024x32xf32> to vector<1024x32xbf16>
    %c0_20 = arith.constant 0 : index
    %c0_21 = arith.constant 0 : index
    %40 = vector.load %arg7[%c0_20, %c0_21] : memref<32x4xbf16, #tpu.memory_space<vmem>>, vector<32x4xbf16>
    %cst_22 = arith.constant dense<0.000000e+00> : vector<1024x4xf32>
    %41 = tpu.matmul %39, %40, %cst_22 {dimension_numbers = #tpu.dot_dimension_numbers<[1], [0], [0], [1], [0, 0, 1, 1], [], []>} : vector<1024x32xbf16>, vector<32x4xbf16>, vector<1024x4xf32> -> vector<1024x4xf32>
    %c0_23 = arith.constant 0 : index
    %c0_24 = arith.constant 0 : index
    %42 = vector.load %arg8[%c0_23, %c0_24] : memref<1x4xf32, #tpu.memory_space<vmem>>, vector<1x4xf32>
    %43 = vector.broadcast %42 : vector<1x4xf32> to vector<1024x4xf32>
    %44 = arith.addf %41, %43 : vector<1024x4xf32>
    %c0_25 = arith.constant 0 : index
    %c0_26 = arith.constant 0 : index
    %45 = vector.load %arg9[%c0_25, %c0_26] : memref<1024x4xf32, #tpu.memory_space<vmem>>, vector<1024x4xf32>
    tpu.vector_store %arg9[%c0_25, %c0_26], %44 {strides = array<i32>} : memref<1024x4xf32, #tpu.memory_space<vmem>>, vector<1024x4xf32>,
    return
  }
  func.func @transform_0(%arg0: i32) -> (i32, i32) {
    %c0_i32 = arith.constant 0 : i32
    %c0_i32_0 = arith.constant 0 : i32
    return %arg0, %c0_i32 : i32, i32
  }
  func.func @transform_1(%arg0: i32) -> (i32, i32) {
    %c0_i32 = arith.constant 0 : i32
    %c0_i32_0 = arith.constant 0 : i32
    %c0_i32_1 = arith.constant 0 : i32
    return %c0_i32, %c0_i32_0 : i32, i32
  }
  func.func @transform_2(%arg0: i32) -> (i32, i32) {
    %c0_i32 = arith.constant 0 : i32
    %c0_i32_0 = arith.constant 0 : i32
    %c0_i32_1 = arith.constant 0 : i32
    return %c0_i32, %c0_i32_0 : i32, i32
  }
  func.func @transform_3(%arg0: i32) -> (i32, i32) {
    %c0_i32 = arith.constant 0 : i32
    %c0_i32_0 = arith.constant 0 : i32
    %c0_i32_1 = arith.constant 0 : i32
    return %c0_i32, %c0_i32_0 : i32, i32
  }
  func.func @transform_4(%arg0: i32) -> (i32, i32) {
    %c0_i32 = arith.constant 0 : i32
    %c0_i32_0 = arith.constant 0 : i32
    %c0_i32_1 = arith.constant 0 : i32
    return %c0_i32, %c0_i32_0 : i32, i32
  }
  func.func @transform_5(%arg0: i32) -> (i32, i32) {
    %c0_i32 = arith.constant 0 : i32
    %c0_i32_0 = arith.constant 0 : i32
    %c0_i32_1 = arith.constant 0 : i32
    return %c0_i32, %c0_i32_0 : i32, i32
  }
  func.func @transform_6(%arg0: i32) -> (i32, i32) {
    %c0_i32 = arith.constant 0 : i32
    %c0_i32_0 = arith.constant 0 : i32
    %c0_i32_1 = arith.constant 0 : i32
    return %c0_i32, %c0_i32_0 : i32, i32
  }
  func.func @transform_7(%arg0: i32) -> (i32, i32) {
    %c0_i32 = arith.constant 0 : i32
    %c0_i32_0 = arith.constant 0 : i32
    %c0_i32_1 = arith.constant 0 : i32
    return %c0_i32, %c0_i32_0 : i32, i32
  }
  func.func @transform_8(%arg0: i32) -> (i32, i32) {
    %c0_i32 = arith.constant 0 : i32
    %c0_i32_0 = arith.constant 0 : i32
    return %arg0, %c0_i32 : i32, i32
  }
}

</mosaic_0001>

<llo_original>
// kernel: tpu_custom_call.1
$region0: #{tpu_custom_call.1}
  #allocation0 [shape = 'u32[]', space=smem, size = 0x4, offset = 0x4, fixed_abs, tag = 'smem constant byte address 0x4 - core index']
  #allocation1 [shape = 'u32[72,128]{1,0:T(1,128)}', space=vmem, size = 0x9000, scoped, tag = 'internal scratch']
  %s0 = inlined_call_operand.vmem [shape: bf16[1024,36], index: 0, kind: input, shape index: {}]
  %s1 = inlined_call_operand.vmem [shape: bf16[36,1024], index: 1, kind: input, shape index: {}]
  %s2 = inlined_call_operand.vmem [shape: bf16[512,256], index: 2, kind: input, shape index: {}]
  %s3 = inlined_call_operand.hbm [shape: bf16[256,128], index: 3, kind: input, shape index: {}]
  %s4 = inlined_call_operand.vmem [shape: bf16[128,64], index: 4, kind: input, shape index: {}]
  %s5 = inlined_call_operand.vmem [shape: bf16[64,32], index: 5, kind: input, shape index: {}]
  %s6 = inlined_call_operand.vmem [shape: bf16[32,4], index: 6, kind: input, shape index: {}]
  %s7 = inlined_call_operand.vmem [shape: f32[1,4], index: 7, kind: input, shape index: {}]
  %s8 = inlined_call_operand.vmem [shape: f32[1024,4], index: 8, kind: output, shape index: {}]
  %s9 = sld [smem:[#allocation0]]
  $region46: #{tpu_custom_call.1} parent=0
    _
  %s11 = ssub.s32 1, %s9
  %s12 = scalar_select 0, %s11, %s9
  $region1: #{tpu_custom_call.1} parent=0
    #allocation2 [shape = 'u8[65536]{0}', space=vmem, size = 0x10000, scoped, tag = 'input window, operand 3, single buffered']
    #allocation3 [shape = 's32[1]{0}', space=sflag, size = 0x4, scoped, tag = 'scoped memory for tpu_custom_call.1']
    %13 = vsyncpa [#allocation3], 0
    // Predicated region
    $region2: #{tpu_custom_call.1} parent=1 // pred_check
      _
    $region3: #{tpu_custom_call.1} parent=1 // pred_check_branch
      %15 = sbr.rel (0) target = $region5
    $region4: #{tpu_custom_call.1} parent=1 // pred_region
      _
    $region5: #{tpu_custom_call.1} parent=1 // pred_fallthru
      _
    // Predicated region
    $region6: #{tpu_custom_call.1} parent=1 // pred_check
      _
    $region7: #{tpu_custom_call.1} parent=1 // pred_check_branch
      %17 = sbr.rel (0) target = $region9
    $region8: #{tpu_custom_call.1} parent=1 // pred_region
      _
    $region9: #{tpu_custom_call.1} parent=1 // pred_fallthru
      _
    // Predicated region
    $region10: #{tpu_custom_call.1} parent=1 // pred_check
      _
    $region11: #{tpu_custom_call.1} parent=1 // pred_check_branch
      %19 = sbr.rel (0) target = $region13
    $region12: #{tpu_custom_call.1} parent=1 // pred_region
      _
    $region13: #{tpu_custom_call.1} parent=1 // pred_fallthru
      _
    // Predicated region
    $region14: #{tpu_custom_call.1} parent=1 // pred_check
      _
    $region15: #{tpu_custom_call.1} parent=1 // pred_check_branch
      %21 = sbr.rel (0) target = $region17
    $region16: #{tpu_custom_call.1} parent=1 // pred_region
      %23 = vsyncadd [#allocation3], 0
      %s24 = sshll.u32 %s3, 4
      %s25 = int_to_ptr.hbm [resolvable:$true] %s24
      %s26 = sshll.u32 [#allocation2], 4
      %s27 = int_to_ptr.vmem [resolvable:$true] %s26
      %32 = dma.hbm_to_vmem [thread:$0]  %s25, 2048, %s27, [#allocation3], 64, 64, 4
    $region17: #{tpu_custom_call.1} parent=1 // pred_fallthru
      _
    // Predicated region
    $region18: #{tpu_custom_call.1} parent=1 // pred_check
      _
    $region19: #{tpu_custom_call.1} parent=1 // pred_check_branch
      %34 = sbr.rel (0) target = $region21
    $region20: #{tpu_custom_call.1} parent=1 // pred_region
      _
    $region21: #{tpu_custom_call.1} parent=1 // pred_fallthru
      _
    // Predicated region
    $region22: #{tpu_custom_call.1} parent=1 // pred_check
      _
    $region23: #{tpu_custom_call.1} parent=1 // pred_check_branch
      %36 = sbr.rel (0) target = $region25
    $region24: #{tpu_custom_call.1} parent=1 // pred_region
      _
    $region25: #{tpu_custom_call.1} parent=1 // pred_fallthru
      _
    // Predicated region
    $region26: #{tpu_custom_call.1} parent=1 // pred_check
      _
    $region27: #{tpu_custom_call.1} parent=1 // pred_check_branch
      %38 = sbr.rel (0) target = $region29
    $region28: #{tpu_custom_call.1} parent=1 // pred_region
      _
    $region29: #{tpu_custom_call.1} parent=1 // pred_fallthru
      _
    // Predicated region
    $region30: #{tpu_custom_call.1} parent=1 // pred_check
      _
    $region31: #{tpu_custom_call.1} parent=1 // pred_check_branch
      %40 = sbr.rel (0) target = $region33
    $region32: #{tpu_custom_call.1} parent=1 // pred_region
      _
    $region33: #{tpu_custom_call.1} parent=1 // pred_fallthru
      _
    // Predicated region
    $region34: #{tpu_custom_call.1} parent=1 // pred_check
      _
    $region35: #{tpu_custom_call.1} parent=1 // pred_check_branch
      %42 = sbr.rel (0) target = $region37
    $region36: #{tpu_custom_call.1} parent=1 // pred_region
      %44 = dma.done [#allocation3], 2048
    $region37: #{tpu_custom_call.1} parent=1 // pred_fallthru
      _
    %v46 = vld [vmem:[%s0] sm:$0xf]
    %v47 = vld [vmem:[%s0 + $0x4] sm:$0xf]
    %v48 = vld [vmem:[%s0 + $0x8] sm:$0xf]
    %v49 = vld [vmem:[%s0 + $0xc] sm:$0xf]
    %v50 = vld [vmem:[%s0 + $0x10] sm:$0xf]
    %v51 = vld [vmem:[%s0 + $0x14] sm:$0xf]
    %v52 = vld [vmem:[%s0 + $0x18] sm:$0xf]
    %v53 = vld [vmem:[%s0 + $0x1c] sm:$0xf]
    %v54 = vld [vmem:[%s0 + $0x20] sm:$0xf]
    %v55 = vld [vmem:[%s0 + $0x24] sm:$0xf]
    %v56 = vld [vmem:[%s0 + $0x28] sm:$0xf]
    %v57 = vld [vmem:[%s0 + $0x2c] sm:$0xf]
    %v58 = vld [vmem:[%s0 + $0x30] sm:$0xf]
    %v59 = vld [vmem:[%s0 + $0x34] sm:$0xf]
    %v60 = vld [vmem:[%s0 + $0x38] sm:$0xf]
    %v61 = vld [vmem:[%s0 + $0x3c] sm:$0xf]
    %v62 = vld [vmem:[%s0 + $0x40] sm:$0xf]
    %v63 = vld [vmem:[%s0 + $0x44] sm:$0xf]
    %v64 = vld [vmem:[%s0 + $0x48] sm:$0xf]
    %v65 = vld [vmem:[%s0 + $0x4c] sm:$0xf]
    %v66 = vld [vmem:[%s0 + $0x50] sm:$0xf]
    %v67 = vld [vmem:[%s0 + $0x54] sm:$0xf]
    %v68 = vld [vmem:[%s0 + $0x58] sm:$0xf]
    %v69 = vld [vmem:[%s0 + $0x5c] sm:$0xf]
    %v70 = vld [vmem:[%s0 + $0x60] sm:$0xf]
    %v71 = vld [vmem:[%s0 + $0x64] sm:$0xf]
    %v72 = vld [vmem:[%s0 + $0x68] sm:$0xf]
    %v73 = vld [vmem:[%s0 + $0x6c] sm:$0xf]
    %v74 = vld [vmem:[%s0 + $0x70] sm:$0xf]
    %v75 = vld [vmem:[%s0 + $0x74] sm:$0xf]
    %v76 = vld [vmem:[%s0 + $0x78] sm:$0xf]
    %v77 = vld [vmem:[%s0 + $0x7c] sm:$0xf]
    %v78 = vld [vmem:[%s0 + $0x80] sm:$0xf]
    %v79 = vld [vmem:[%s0 + $0x84] sm:$0xf]
    %v80 = vld [vmem:[%s0 + $0x88] sm:$0xf]
    %v81 = vld [vmem:[%s0 + $0x8c] sm:$0xf]
    %v82 = vld [vmem:[%s0 + $0x90] sm:$0xf]
    %v83 = vld [vmem:[%s0 + $0x94] sm:$0xf]
    %v84 = vld [vmem:[%s0 + $0x98] sm:$0xf]
    %v85 = vld [vmem:[%s0 + $0x9c] sm:$0xf]
    %v86 = vld [vmem:[%s0 + $0xa0] sm:$0xf]
    %v87 = vld [vmem:[%s0 + $0xa4] sm:$0xf]
    %v88 = vld [vmem:[%s0 + $0xa8] sm:$0xf]
    %v89 = vld [vmem:[%s0 + $0xac] sm:$0xf]
    %v90 = vld [vmem:[%s0 + $0xb0] sm:$0xf]
    %v91 = vld [vmem:[%s0 + $0xb4] sm:$0xf]
    %v92 = vld [vmem:[%s0 + $0xb8] sm:$0xf]
    %v93 = vld [vmem:[%s0 + $0xbc] sm:$0xf]
    %v94 = vld [vmem:[%s0 + $0xc0] sm:$0xf]
    %v95 = vld [vmem:[%s0 + $0xc4] sm:$0xf]
    %v96 = vld [vmem:[%s0 + $0xc8] sm:$0xf]
    %v97 = vld [vmem:[%s0 + $0xcc] sm:$0xf]
    %v98 = vld [vmem:[%s0 + $0xd0] sm:$0xf]
    %v99 = vld [vmem:[%s0 + $0xd4] sm:$0xf]
    %v100 = vld [vmem:[%s0 + $0xd8] sm:$0xf]
    %v101 = vld [vmem:[%s0 + $0xdc] sm:$0xf]
    %v102 = vld [vmem:[%s0 + $0xe0] sm:$0xf]
    %v103 = vld [vmem:[%s0 + $0xe4] sm:$0xf]
    %v104 = vld [vmem:[%s0 + $0xe8] sm:$0xf]
    %v105 = vld [vmem:[%s0 + $0xec] sm:$0xf]
    %v106 = vld [vmem:[%s0 + $0xf0] sm:$0xf]
    %v107 = vld [vmem:[%s0 + $0xf4] sm:$0xf]
    %v108 = vld [vmem:[%s0 + $0xf8] sm:$0xf]
    %v109 = vld [vmem:[%s0 + $0xfc] sm:$0xf]
    %v110 = vld [vmem:[%s0 + $0x100] sm:$0xf]
    %v111 = vld [vmem:[%s0 + $0x104] sm:$0xf]
    %v112 = vld [vmem:[%s0 + $0x108] sm:$0xf]
    %v113 = vld [vmem:[%s0 + $0x10c] sm:$0xf]
    %v114 = vld [vmem:[%s0 + $0x110] sm:$0xf]
    %v115 = vld [vmem:[%s0 + $0x114] sm:$0xf]
    %v116 = vld [vmem:[%s0 + $0x118] sm:$0xf]
    %v117 = vld [vmem:[%s0 + $0x11c] sm:$0xf]
    %v118 = vld [vmem:[%s0 + $0x120] sm:$0xf]
    %v119 = vld [vmem:[%s0 + $0x124] sm:$0xf]
    %v120 = vld [vmem:[%s0 + $0x128] sm:$0xf]
    %v121 = vld [vmem:[%s0 + $0x12c] sm:$0xf]
    %v122 = vld [vmem:[%s0 + $0x130] sm:$0xf]
    %v123 = vld [vmem:[%s0 + $0x134] sm:$0xf]
    %v124 = vld [vmem:[%s0 + $0x138] sm:$0xf]
    %v125 = vld [vmem:[%s0 + $0x13c] sm:$0xf]
    %v126 = vld [vmem:[%s0 + $0x140] sm:$0xf]
    %v127 = vld [vmem:[%s0 + $0x144] sm:$0xf]
    %v128 = vld [vmem:[%s0 + $0x148] sm:$0xf]
    %v129 = vld [vmem:[%s0 + $0x14c] sm:$0xf]
    %v130 = vld [vmem:[%s0 + $0x150] sm:$0xf]
    %v131 = vld [vmem:[%s0 + $0x154] sm:$0xf]
    %v132 = vld [vmem:[%s0 + $0x158] sm:$0xf]
    %v133 = vld [vmem:[%s0 + $0x15c] sm:$0xf]
    %v134 = vld [vmem:[%s0 + $0x160] sm:$0xf]
    %v135 = vld [vmem:[%s0 + $0x164] sm:$0xf]
    %v136 = vld [vmem:[%s0 + $0x168] sm:$0xf]
    %v137 = vld [vmem:[%s0 + $0x16c] sm:$0xf]
    %v138 = vld [vmem:[%s0 + $0x170] sm:$0xf]
    %v139 = vld [vmem:[%s0 + $0x174] sm:$0xf]
    %v140 = vld [vmem:[%s0 + $0x178] sm:$0xf]
    %v141 = vld [vmem:[%s0 + $0x17c] sm:$0xf]
    %v142 = vld [vmem:[%s0 + $0x180] sm:$0xf]
    %v143 = vld [vmem:[%s0 + $0x184] sm:$0xf]
    %v144 = vld [vmem:[%s0 + $0x188] sm:$0xf]
    %v145 = vld [vmem:[%s0 + $0x18c] sm:$0xf]
    %v146 = vld [vmem:[%s0 + $0x190] sm:$0xf]
    %v147 = vld [vmem:[%s0 + $0x194] sm:$0xf]
    %v148 = vld [vmem:[%s0 + $0x198] sm:$0xf]
    %v149 = vld [vmem:[%s0 + $0x19c] sm:$0xf]
    %v150 = vld [vmem:[%s0 + $0x1a0] sm:$0xf]
    %v151 = vld [vmem:[%s0 + $0x1a4] sm:$0xf]
    %v152 = vld [vmem:[%s0 + $0x1a8] sm:$0xf]
    %v153 = vld [vmem:[%s0 + $0x1ac] sm:$0xf]
    %v154 = vld [vmem:[%s0 + $0x1b0] sm:$0xf]
    %v155 = vld [vmem:[%s0 + $0x1b4] sm:$0xf]
    %v156 = vld [vmem:[%s0 + $0x1b8] sm:$0xf]
    %v157 = vld [vmem:[%s0 + $0x1bc] sm:$0xf]
    %v158 = vld [vmem:[%s0 + $0x1c0] sm:$0xf]
    %v159 = vld [vmem:[%s0 + $0x1c4] sm:$0xf]
    %v160 = vld [vmem:[%s0 + $0x1c8] sm:$0xf]
    %v161 = vld [vmem:[%s0 + $0x1cc] sm:$0xf]
    %v162 = vld [vmem:[%s0 + $0x1d0] sm:$0xf]
    %v163 = vld [vmem:[%s0 + $0x1d4] sm:$0xf]
    %v164 = vld [vmem:[%s0 + $0x1d8] sm:$0xf]
    %v165 = vld [vmem:[%s0 + $0x1dc] sm:$0xf]
    %v166 = vld [vmem:[%s0 + $0x1e0] sm:$0xf]
    %v167 = vld [vmem:[%s0 + $0x1e4] sm:$0xf]
    %v168 = vld [vmem:[%s0 + $0x1e8] sm:$0xf]
    %v169 = vld [vmem:[%s0 + $0x1ec] sm:$0xf]
    %v170 = vld [vmem:[%s0 + $0x1f0] sm:$0xf]
    %v171 = vld [vmem:[%s0 + $0x1f4] sm:$0xf]
    %v172 = vld [vmem:[%s0 + $0x1f8] sm:$0xf]
    %v173 = vld [vmem:[%s0 + $0x1fc] sm:$0xf]
    %v174 = vld [vmem:[%s1] sm:$0xff]
    %v175 = vld [vmem:[%s1 + $0x8] sm:$0xff]
    %v176 = vld [vmem:[%s1 + $0x10] sm:$0xff]
    %v177 = vld [vmem:[%s1 + $0x18] sm:$0xff]
    %v178 = vld [vmem:[%s1 + $0x20] sm:$0xff]
    %v179 = vld [vmem:[%s1 + $0x28] sm:$0xff]
    %v180 = vld [vmem:[%s1 + $0x30] sm:$0xff]
    %v181 = vld [vmem:[%s1 + $0x38] sm:$0xff]
    %v182 = vld [vmem:[%s1 + $0x40] sm:$0xff]
    %v183 = vld [vmem:[%s1 + $0x48] sm:$0xff]
    %v184 = vld [vmem:[%s1 + $0x50] sm:$0xff]
    %v185 = vld [vmem:[%s1 + $0x58] sm:$0xff]
    %v186 = vld [vmem:[%s1 + $0x60] sm:$0xff]
    %v187 = vld [vmem:[%s1 + $0x68] sm:$0xff]
    %v188 = vld [vmem:[%s1 + $0x70] sm:$0xff]
    %v189 = vld [vmem:[%s1 + $0x78] sm:$0xff]
    %v190 = vld [vmem:[%s1 + $0x80] sm:$0x33]
    %v191 = vld [vmem:[%s1 + $0x88] sm:$0x33]
    %v192 = vld [vmem:[%s1 + $0x90] sm:$0x33]
    %v193 = vld [vmem:[%s1 + $0x98] sm:$0x33]
    %v322 = vunpack.c.l.b16 %v46
    %v323 = vunpack.c.l.b16 %v47
    %v324 = vunpack.c.l.b16 %v48
    %v325 = vunpack.c.l.b16 %v49
    %v326 = vunpack.c.l.b16 %v50
    %v327 = vunpack.c.l.b16 %v51
    %v328 = vunpack.c.l.b16 %v52
    %v329 = vunpack.c.l.b16 %v53
    %v330 = vunpack.c.l.b16 %v54
    %v331 = vunpack.c.l.b16 %v55
    %v332 = vunpack.c.l.b16 %v56
    %v333 = vunpack.c.l.b16 %v57
    %v334 = vunpack.c.l.b16 %v58
    %v335 = vunpack.c.l.b16 %v59
    %v336 = vunpack.c.l.b16 %v60
    %v337 = vunpack.c.l.b16 %v61
    %v338 = vunpack.c.l.b16 %v62
    %v339 = vunpack.c.l.b16 %v63
    %v340 = vunpack.c.l.b16 %v64
    %v341 = vunpack.c.l.b16 %v65
    %v342 = vunpack.c.l.b16 %v66
    %v343 = vunpack.c.l.b16 %v67
    %v344 = vunpack.c.l.b16 %v68
    %v345 = vunpack.c.l.b16 %v69
    %v346 = vunpack.c.l.b16 %v70
    %v347 = vunpack.c.l.b16 %v71
    %v348 = vunpack.c.l.b16 %v72
    %v349 = vunpack.c.l.b16 %v73
    %v350 = vunpack.c.l.b16 %v74
    %v351 = vunpack.c.l.b16 %v75
    %v352 = vunpack.c.l.b16 %v76
    %v353 = vunpack.c.l.b16 %v77
    %v354 = vunpack.c.l.b16 %v78
    %v355 = vunpack.c.l.b16 %v79
    %v356 = vunpack.c.l.b16 %v80
    %v357 = vunpack.c.l.b16 %v81
    %v358 = vunpack.c.l.b16 %v82
    %v359 = vunpack.c.l.b16 %v83
    %v360 = vunpack.c.l.b16 %v84
    %v361 = vunpack.c.l.b16 %v85
    %v362 = vunpack.c.l.b16 %v86
    %v363 = vunpack.c.l.b16 %v87
    %v364 = vunpack.c.l.b16 %v88
    %v365 = vunpack.c.l.b16 %v89
    %v366 = vunpack.c.l.b16 %v90
    %v367 = vunpack.c.l.b16 %v91
    %v368 = vunpack.c.l.b16 %v92
    %v369 = vunpack.c.l.b16 %v93
    %v370 = vunpack.c.l.b16 %v94
    %v371 = vunpack.c.l.b16 %v95
    %v372 = vunpack.c.l.b16 %v96
    %v373 = vunpack.c.l.b16 %v97
    %v374 = vunpack.c.l.b16 %v98
    %v375 = vunpack.c.l.b16 %v99
    %v376 = vunpack.c.l.b16 %v100
    %v377 = vunpack.c.l.b16 %v101
    %v378 = vunpack.c.l.b16 %v102
    %v379 = vunpack.c.l.b16 %v103
    %v380 = vunpack.c.l.b16 %v104
    %v381 = vunpack.c.l.b16 %v105
    %v382 = vunpack.c.l.b16 %v106
    %v383 = vunpack.c.l.b16 %v107
    %v384 = vunpack.c.l.b16 %v108
    %v385 = vunpack.c.l.b16 %v109
    %v386 = vunpack.c.l.b16 %v110
    %v387 = vunpack.c.l.b16 %v111
    %v388 = vunpack.c.l.b16 %v112
    %v389 = vunpack.c.l.b16 %v113
    %v390 = vunpack.c.l.b16 %v114
    %v391 = vunpack.c.l.b16 %v115
    %v392 = vunpack.c.l.b16 %v116
    %v393 = vunpack.c.l.b16 %v117
    %v394 = vunpack.c.l.b16 %v118
    %v395 = vunpack.c.l.b16 %v119
    %v396 = vunpack.c.l.b16 %v120
    %v397 = vunpack.c.l.b16 %v121
    %v398 = vunpack.c.l.b16 %v122
    %v399 = vunpack.c.l.b16 %v123
    %v400 = vunpack.c.l.b16 %v124
    %v401 = vunpack.c.l.b16 %v125
    %v402 = vunpack.c.l.b16 %v126
    %v403 = vunpack.c.l.b16 %v127
    %v404 = vunpack.c.l.b16 %v128
    %v405 = vunpack.c.l.b16 %v129
    %v406 = vunpack.c.l.b16 %v130
    %v407 = vunpack.c.l.b16 %v131
    %v408 = vunpack.c.l.b16 %v132
    %v409 = vunpack.c.l.b16 %v133
    %v410 = vunpack.c.l.b16 %v134
    %v411 = vunpack.c.l.b16 %v135
    %v412 = vunpack.c.l.b16 %v136
    %v413 = vunpack.c.l.b16 %v137
    %v414 = vunpack.c.l.b16 %v138
    %v415 = vunpack.c.l.b16 %v139
    %v416 = vunpack.c.l.b16 %v140
    %v417 = vunpack.c.l.b16 %v141
    %v418 = vunpack.c.l.b16 %v142
    %v419 = vunpack.c.l.b16 %v143
    %v420 = vunpack.c.l.b16 %v144
    %v421 = vunpack.c.l.b16 %v145
    %v422 = vunpack.c.l.b16 %v146
    %v423 = vunpack.c.l.b16 %v147
    %v424 = vunpack.c.l.b16 %v148
    %v425 = vunpack.c.l.b16 %v149
    %v426 = vunpack.c.l.b16 %v150
    %v427 = vunpack.c.l.b16 %v151
    %v428 = vunpack.c.l.b16 %v152
    %v429 = vunpack.c.l.b16 %v153
    %v430 = vunpack.c.l.b16 %v154
    %v431 = vunpack.c.l.b16 %v155
    %v432 = vunpack.c.l.b16 %v156
    %v433 = vunpack.c.l.b16 %v157
    %v434 = vunpack.c.l.b16 %v158
    %v435 = vunpack.c.l.b16 %v159
    %v436 = vunpack.c.l.b16 %v160
    %v437 = vunpack.c.l.b16 %v161
    %v438 = vunpack.c.l.b16 %v162
    %v439 = vunpack.c.l.b16 %v163
    %v440 = vunpack.c.l.b16 %v164
    %v441 = vunpack.c.l.b16 %v165
    %v442 = vunpack.c.l.b16 %v166
    %v443 = vunpack.c.l.b16 %v167
    %v444 = vunpack.c.l.b16 %v168
    %v445 = vunpack.c.l.b16 %v169
    %v446 = vunpack.c.l.b16 %v170
    %v447 = vunpack.c.l.b16 %v171
    %v448 = vunpack.c.l.b16 %v172
    %v449 = vunpack.c.l.b16 %v173
    %v450 = vpack.c.b16 %v323, %v322
    %v451 = vpack.c.b16 %v325, %v324
    %v452 = vpack.c.b16 %v327, %v326
    %v453 = vpack.c.b16 %v329, %v328
    %v454 = vpack.c.b16 %v331, %v330
    %v455 = vpack.c.b16 %v333, %v332
    %v456 = vpack.c.b16 %v335, %v334
    %v457 = vpack.c.b16 %v337, %v336
    %v458 = vpack.c.b16 %v339, %v338
    %v459 = vpack.c.b16 %v341, %v340
    %v460 = vpack.c.b16 %v343, %v342
    %v461 = vpack.c.b16 %v345, %v344
    %v462 = vpack.c.b16 %v347, %v346
    %v463 = vpack.c.b16 %v349, %v348
    %v464 = vpack.c.b16 %v351, %v350
    %v465 = vpack.c.b16 %v353, %v352
    %v466 = vpack.c.b16 %v355, %v354
    %v467 = vpack.c.b16 %v357, %v356
    %v468 = vpack.c.b16 %v359, %v358
    %v469 = vpack.c.b16 %v361, %v360
    %v470 = vpack.c.b16 %v363, %v362
    %v471 = vpack.c.b16 %v365, %v364
    %v472 = vpack.c.b16 %v367, %v366
    %v473 = vpack.c.b16 %v369, %v368
    %v474 = vpack.c.b16 %v371, %v370
    %v475 = vpack.c.b16 %v373, %v372
    %v476 = vpack.c.b16 %v375, %v374
    %v477 = vpack.c.b16 %v377, %v376
    %v478 = vpack.c.b16 %v379, %v378
    %v479 = vpack.c.b16 %v381, %v380
    %v480 = vpack.c.b16 %v383, %v382
    %v481 = vpack.c.b16 %v385, %v384
    %v482 = vpack.c.b16 %v387, %v386
    %v483 = vpack.c.b16 %v389, %v388
    %v484 = vpack.c.b16 %v391, %v390
    %v485 = vpack.c.b16 %v393, %v392
    %v486 = vpack.c.b16 %v395, %v394
    %v487 = vpack.c.b16 %v397, %v396
    %v488 = vpack.c.b16 %v399, %v398
    %v489 = vpack.c.b16 %v401, %v400
    %v490 = vpack.c.b16 %v403, %v402
    %v491 = vpack.c.b16 %v405, %v404
    %v492 = vpack.c.b16 %v407, %v406
    %v493 = vpack.c.b16 %v409, %v408
    %v494 = vpack.c.b16 %v411, %v410
    %v495 = vpack.c.b16 %v413, %v412
    %v496 = vpack.c.b16 %v415, %v414
    %v497 = vpack.c.b16 %v417, %v416
    %v498 = vpack.c.b16 %v419, %v418
    %v499 = vpack.c.b16 %v421, %v420
    %v500 = vpack.c.b16 %v423, %v422
    %v501 = vpack.c.b16 %v425, %v424
    %v502 = vpack.c.b16 %v427, %v426
    %v503 = vpack.c.b16 %v429, %v428
    %v504 = vpack.c.b16 %v431, %v430
    %v505 = vpack.c.b16 %v433, %v432
    %v506 = vpack.c.b16 %v435, %v434
    %v507 = vpack.c.b16 %v437, %v436
    %v508 = vpack.c.b16 %v439, %v438
    %v509 = vpack.c.b16 %v441, %v440
    %v510 = vpack.c.b16 %v443, %v442
    %v511 = vpack.c.b16 %v445, %v444
    %v512 = vpack.c.b16 %v447, %v446
    %v513 = vpack.c.b16 %v449, %v448
    %v534 = vunpack.c.l.b16 %v174
    %v535 = vunpack.c.h.b16 %v174
    %v536 = vunpack.c.l.b16 %v175
    %v537 = vunpack.c.h.b16 %v175
    %v538 = vunpack.c.l.b16 %v176
    %v539 = vunpack.c.h.b16 %v176
    %v540 = vunpack.c.l.b16 %v177
    %v541 = vunpack.c.h.b16 %v177
    %v542 = vunpack.c.l.b16 %v178
    %v543 = vunpack.c.h.b16 %v178
    %v544 = vunpack.c.l.b16 %v179
    %v545 = vunpack.c.h.b16 %v179
    %v546 = vunpack.c.l.b16 %v180
    %v547 = vunpack.c.h.b16 %v180
    %v548 = vunpack.c.l.b16 %v181
    %v549 = vunpack.c.h.b16 %v181
    %v550 = vunpack.c.l.b16 %v182
    %v551 = vunpack.c.h.b16 %v182
    %v552 = vunpack.c.l.b16 %v183
    %v553 = vunpack.c.h.b16 %v183
    %v554 = vunpack.c.l.b16 %v184
    %v555 = vunpack.c.h.b16 %v184
    %v556 = vunpack.c.l.b16 %v185
    %v557 = vunpack.c.h.b16 %v185
    %v558 = vunpack.c.l.b16 %v186
    %v559 = vunpack.c.h.b16 %v186
    %v560 = vunpack.c.l.b16 %v187
    %v561 = vunpack.c.h.b16 %v187
    %v562 = vunpack.c.l.b16 %v188
    %v563 = vunpack.c.h.b16 %v188
    %v564 = vunpack.c.l.b16 %v189
    %v565 = vunpack.c.h.b16 %v189
    %v566 = vunpack.c.l.b16 %v190
    %v567 = vunpack.c.h.b16 %v190
    %v568 = vunpack.c.l.b16 %v191
    %v569 = vunpack.c.h.b16 %v191
    %v570 = vunpack.c.l.b16 %v192
    %v571 = vunpack.c.h.b16 %v192
    %v572 = vunpack.c.l.b16 %v193
    %v573 = vunpack.c.h.b16 %v193
    %v574 = vpack.c.b16 %v542, %v534
    %v575 = vpack.c.b16 %v543, %v535
    %v576 = vpack.c.b16 %v544, %v536
    %v577 = vpack.c.b16 %v545, %v537
    %v578 = vpack.c.b16 %v546, %v538
    %v579 = vpack.c.b16 %v547, %v539
    %v580 = vpack.c.b16 %v548, %v540
    %v581 = vpack.c.b16 %v549, %v541
    %v582 = vpack.c.b16 %v558, %v550
    %v583 = vpack.c.b16 %v559, %v551
    %v584 = vpack.c.b16 %v560, %v552
    %v585 = vpack.c.b16 %v561, %v553
    %v586 = vpack.c.b16 %v562, %v554
    %v587 = vpack.c.b16 %v563, %v555
    %v588 = vpack.c.b16 %v564, %v556
    %v589 = vpack.c.b16 %v565, %v557
    %v590 = vpack.c.b16 %v566, %v566
    %v591 = vpack.c.b16 %v567, %v567
    %v592 = vpack.c.b16 %v568, %v568
    %v593 = vpack.c.b16 %v569, %v569
    %v594 = vpack.c.b16 %v570, %v570
    %v595 = vpack.c.b16 %v571, %v571
    %v596 = vpack.c.b16 %v572, %v572
    %v597 = vpack.c.b16 %v573, %v573
    %vm614 = vcmask 293888
    %v616 = vsel %vm614, %v450, 0
    %v619 = vsel %vm614, %v451, 0
    %v622 = vsel %vm614, %v452, 0
    %v625 = vsel %vm614, %v453, 0
    %v628 = vsel %vm614, %v454, 0
    %v631 = vsel %vm614, %v455, 0
    %v634 = vsel %vm614, %v456, 0
    %v637 = vsel %vm614, %v457, 0
    %v640 = vsel %vm614, %v458, 0
    %v643 = vsel %vm614, %v459, 0
    %v646 = vsel %vm614, %v460, 0
    %v649 = vsel %vm614, %v461, 0
    %v652 = vsel %vm614, %v462, 0
    %v655 = vsel %vm614, %v463, 0
    %v658 = vsel %vm614, %v464, 0
    %v661 = vsel %vm614, %v465, 0
    %v664 = vsel %vm614, %v466, 0
    %v667 = vsel %vm614, %v467, 0
    %v670 = vsel %vm614, %v468, 0
    %v673 = vsel %vm614, %v469, 0
    %v676 = vsel %vm614, %v470, 0
    %v679 = vsel %vm614, %v471, 0
    %v682 = vsel %vm614, %v472, 0
    %v685 = vsel %vm614, %v473, 0
    %v688 = vsel %vm614, %v474, 0
    %v691 = vsel %vm614, %v475, 0
    %v694 = vsel %vm614, %v476, 0
    %v697 = vsel %vm614, %v477, 0
    %v700 = vsel %vm614, %v478, 0
    %v703 = vsel %vm614, %v479, 0
    %v706 = vsel %vm614, %v480, 0
    %v709 = vsel %vm614, %v481, 0
    %v712 = vsel %vm614, %v482, 0
    %v715 = vsel %vm614, %v483, 0
    %v718 = vsel %vm614, %v484, 0
    %v721 = vsel %vm614, %v485, 0
    %v724 = vsel %vm614, %v486, 0
    %v727 = vsel %vm614, %v487, 0
    %v730 = vsel %vm614, %v488, 0
    %v733 = vsel %vm614, %v489, 0
    %v736 = vsel %vm614, %v490, 0
    %v739 = vsel %vm614, %v491, 0
    %v742 = vsel %vm614, %v492, 0
    %v745 = vsel %vm614, %v493, 0
    %v748 = vsel %vm614, %v494, 0
    %v751 = vsel %vm614, %v495, 0
    %v754 = vsel %vm614, %v496, 0
    %v757 = vsel %vm614, %v497, 0
    %v760 = vsel %vm614, %v498, 0
    %v763 = vsel %vm614, %v499, 0
    %v766 = vsel %vm614, %v500, 0
    %v769 = vsel %vm614, %v501, 0
    %v772 = vsel %vm614, %v502, 0
    %v775 = vsel %vm614, %v503, 0
    %v778 = vsel %vm614, %v504, 0
    %v781 = vsel %vm614, %v505, 0
    %v784 = vsel %vm614, %v506, 0
    %v787 = vsel %vm614, %v507, 0
    %v790 = vsel %vm614, %v508, 0
    %v793 = vsel %vm614, %v509, 0
    %v796 = vsel %vm614, %v510, 0
    %v799 = vsel %vm614, %v511, 0
    %v802 = vsel %vm614, %v512, 0
    %v805 = vsel %vm614, %v513, 0
    %vm807 = vcmask 1041408
    %v809 = vsel %vm807, %v590, 0
    %v812 = vsel %vm807, %v591, 0
    %v815 = vsel %vm807, %v592, 0
    %v818 = vsel %vm807, %v593, 0
    %v821 = vsel %vm807, %v594, 0
    %v824 = vsel %vm807, %v595, 0
    %v827 = vsel %vm807, %v596, 0
    %v830 = vsel %vm807, %v597, 0
    %832 = vmatpush.bf16.msra.mxu0 0
    %833 = vmatpush.bf16.msra.mxu0 0
    %834 = vmatpush.bf16.msra.mxu0 0
    %835 = vmatpush.bf16.msra.mxu0 0
    %836 = vmatpush.bf16.msra.mxu0 0
    %837 = vmatpush.bf16.msra.mxu0 %v809
    %838 = vmatpush.bf16.msra.mxu0 %v582
    %839 = vmatpush.bf16.msra.mxu0 %v574
    %840 = vmatmul.bf16.gmra.mxu0 %v616
    %v841 = vpop.f32.mrf.mxu0
    %v842 = vadd.f32 0.0, %v841
    %v843 = vpop.f32.mrf.mxu0
    %v844 = vadd.f32 0.0, %v843
    %845 = vmatmul.bf16.gmra.mxu0 %v619
    %v846 = vpop.f32.mrf.mxu0
    %v847 = vadd.f32 0.0, %v846
    %v848 = vpop.f32.mrf.mxu0
    %v849 = vadd.f32 0.0, %v848
    %850 = vmatmul.bf16.gmra.mxu0 %v622
    %v851 = vpop.f32.mrf.mxu0
    %v852 = vadd.f32 0.0, %v851
    %v853 = vpop.f32.mrf.mxu0
    %v854 = vadd.f32 0.0, %v853
    %855 = vmatmul.bf16.gmra.mxu0 %v625
    %v856 = vpop.f32.mrf.mxu0
    %v857 = vadd.f32 0.0, %v856
    %v858 = vpop.f32.mrf.mxu0
    %v859 = vadd.f32 0.0, %v858
    %860 = vmatmul.bf16.gmra.mxu0 %v628
    %v861 = vpop.f32.mrf.mxu0
    %v862 = vadd.f32 0.0, %v861
    %v863 = vpop.f32.mrf.mxu0
    %v864 = vadd.f32 0.0, %v863
    %865 = vmatmul.bf16.gmra.mxu0 %v631
    %v866 = vpop.f32.mrf.mxu0
    %v867 = vadd.f32 0.0, %v866
    %v868 = vpop.f32.mrf.mxu0
    %v869 = vadd.f32 0.0, %v868
    %870 = vmatmul.bf16.gmra.mxu0 %v634
    %v871 = vpop.f32.mrf.mxu0
    %v872 = vadd.f32 0.0, %v871
    %v873 = vpop.f32.mrf.mxu0
    %v874 = vadd.f32 0.0, %v873
    %875 = vmatmul.bf16.gmra.mxu0 %v637
    %v876 = vpop.f32.mrf.mxu0
    %v877 = vadd.f32 0.0, %v876
    %v878 = vpop.f32.mrf.mxu0
    %v879 = vadd.f32 0.0, %v878
    %880 = vmatmul.bf16.gmra.mxu0 %v640
    %v881 = vpop.f32.mrf.mxu0
    %v882 = vadd.f32 0.0, %v881
    %v883 = vpop.f32.mrf.mxu0
    %v884 = vadd.f32 0.0, %v883
    %885 = vmatmul.bf16.gmra.mxu0 %v643
    %v886 = vpop.f32.mrf.mxu0
    %v887 = vadd.f32 0.0, %v886
    %v888 = vpop.f32.mrf.mxu0
    %v889 = vadd.f32 0.0, %v888
    %890 = vmatmul.bf16.gmra.mxu0 %v646
    %v891 = vpop.f32.mrf.mxu0
    %v892 = vadd.f32 0.0, %v891
    %v893 = vpop.f32.mrf.mxu0
    %v894 = vadd.f32 0.0, %v893
    %895 = vmatmul.bf16.gmra.mxu0 %v649
    %v896 = vpop.f32.mrf.mxu0
    %v897 = vadd.f32 0.0, %v896
    %v898 = vpop.f32.mrf.mxu0
    %v899 = vadd.f32 0.0, %v898
    %900 = vmatmul.bf16.gmra.mxu0 %v652
    %v901 = vpop.f32.mrf.mxu0
    %v902 = vadd.f32 0.0, %v901
    %v903 = vpop.f32.mrf.mxu0
    %v904 = vadd.f32 0.0, %v903
    %905 = vmatmul.bf16.gmra.mxu0 %v655
    %v906 = vpop.f32.mrf.mxu0
    %v907 = vadd.f32 0.0, %v906
    %v908 = vpop.f32.mrf.mxu0
    %v909 = vadd.f32 0.0, %v908
    %910 = vmatmul.bf16.gmra.mxu0 %v658
    %v911 = vpop.f32.mrf.mxu0
    %v912 = vadd.f32 0.0, %v911
    %v913 = vpop.f32.mrf.mxu0
    %v914 = vadd.f32 0.0, %v913
    %915 = vmatmul.bf16.gmra.mxu0 %v661
    %v916 = vpop.f32.mrf.mxu0
    %v917 = vadd.f32 0.0, %v916
    %v918 = vpop.f32.mrf.mxu0
    %v919 = vadd.f32 0.0, %v918
    %920 = vmatmul.bf16.gmra.mxu0 %v664
    %v921 = vpop.f32.mrf.mxu0
    %v922 = vadd.f32 0.0, %v921
    %v923 = vpop.f32.mrf.mxu0
    %v924 = vadd.f32 0.0, %v923
    %925 = vmatmul.bf16.gmra.mxu0 %v667
    %v926 = vpop.f32.mrf.mxu0
    %v927 = vadd.f32 0.0, %v926
    %v928 = vpop.f32.mrf.mxu0
    %v929 = vadd.f32 0.0, %v928
    %930 = vmatmul.bf16.gmra.mxu0 %v670
    %v931 = vpop.f32.mrf.mxu0
    %v932 = vadd.f32 0.0, %v931
    %v933 = vpop.f32.mrf.mxu0
    %v934 = vadd.f32 0.0, %v933
    %935 = vmatmul.bf16.gmra.mxu0 %v673
    %v936 = vpop.f32.mrf.mxu0
    %v937 = vadd.f32 0.0, %v936
    %v938 = vpop.f32.mrf.mxu0
    %v939 = vadd.f32 0.0, %v938
    %940 = vmatmul.bf16.gmra.mxu0 %v676
    %v941 = vpop.f32.mrf.mxu0
    %v942 = vadd.f32 0.0, %v941
    %v943 = vpop.f32.mrf.mxu0
    %v944 = vadd.f32 0.0, %v943
    %945 = vmatmul.bf16.gmra.mxu0 %v679
    %v946 = vpop.f32.mrf.mxu0
    %v947 = vadd.f32 0.0, %v946
    %v948 = vpop.f32.mrf.mxu0
    %v949 = vadd.f32 0.0, %v948
    %950 = vmatmul.bf16.gmra.mxu0 %v682
    %v951 = vpop.f32.mrf.mxu0
    %v952 = vadd.f32 0.0, %v951
    %v953 = vpop.f32.mrf.mxu0
    %v954 = vadd.f32 0.0, %v953
    %955 = vmatmul.bf16.gmra.mxu0 %v685
    %v956 = vpop.f32.mrf.mxu0
    %v957 = vadd.f32 0.0, %v956
    %v958 = vpop.f32.mrf.mxu0
    %v959 = vadd.f32 0.0, %v958
    %960 = vmatmul.bf16.gmra.mxu0 %v688
    %v961 = vpop.f32.mrf.mxu0
    %v962 = vadd.f32 0.0, %v961
    %v963 = vpop.f32.mrf.mxu0
    %v964 = vadd.f32 0.0, %v963
    %965 = vmatmul.bf16.gmra.mxu0 %v691
    %v966 = vpop.f32.mrf.mxu0
    %v967 = vadd.f32 0.0, %v966
    %v968 = vpop.f32.mrf.mxu0
    %v969 = vadd.f32 0.0, %v968
    %970 = vmatmul.bf16.gmra.mxu0 %v694
    %v971 = vpop.f32.mrf.mxu0
    %v972 = vadd.f32 0.0, %v971
    %v973 = vpop.f32.mrf.mxu0
    %v974 = vadd.f32 0.0, %v973
    %975 = vmatmul.bf16.gmra.mxu0 %v697
    %v976 = vpop.f32.mrf.mxu0
    %v977 = vadd.f32 0.0, %v976
    %v978 = vpop.f32.mrf.mxu0
    %v979 = vadd.f32 0.0, %v978
    %980 = vmatmul.bf16.gmra.mxu0 %v700
    %v981 = vpop.f32.mrf.mxu0
    %v982 = vadd.f32 0.0, %v981
    %v983 = vpop.f32.mrf.mxu0
    %v984 = vadd.f32 0.0, %v983
    %985 = vmatmul.bf16.gmra.mxu0 %v703
    %v986 = vpop.f32.mrf.mxu0
    %v987 = vadd.f32 0.0, %v986
    %v988 = vpop.f32.mrf.mxu0
    %v989 = vadd.f32 0.0, %v988
    %990 = vmatmul.bf16.gmra.mxu0 %v706
    %v991 = vpop.f32.mrf.mxu0
    %v992 = vadd.f32 0.0, %v991
    %v993 = vpop.f32.mrf.mxu0
    %v994 = vadd.f32 0.0, %v993
    %995 = vmatmul.bf16.gmra.mxu0 %v709
    %v996 = vpop.f32.mrf.mxu0
    %v997 = vadd.f32 0.0, %v996
    %v998 = vpop.f32.mrf.mxu0
    %v999 = vadd.f32 0.0, %v998
    %1000 = vmatmul.bf16.gmra.mxu0 %v712
    %v1001 = vpop.f32.mrf.mxu0
    %v1002 = vadd.f32 0.0, %v1001
    %v1003 = vpop.f32.mrf.mxu0
    %v1004 = vadd.f32 0.0, %v1003
    %1005 = vmatmul.bf16.gmra.mxu0 %v715
    %v1006 = vpop.f32.mrf.mxu0
    %v1007 = vadd.f32 0.0, %v1006
    %v1008 = vpop.f32.mrf.mxu0
    %v1009 = vadd.f32 0.0, %v1008
    %1010 = vmatmul.bf16.gmra.mxu0 %v718
    %v1011 = vpop.f32.mrf.mxu0
    %v1012 = vadd.f32 0.0, %v1011
    %v1013 = vpop.f32.mrf.mxu0
    %v1014 = vadd.f32 0.0, %v1013
    %1015 = vmatmul.bf16.gmra.mxu0 %v721
    %v1016 = vpop.f32.mrf.mxu0
    %v1017 = vadd.f32 0.0, %v1016
    %v1018 = vpop.f32.mrf.mxu0
    %v1019 = vadd.f32 0.0, %v1018
    %1020 = vmatmul.bf16.gmra.mxu0 %v724
    %v1021 = vpop.f32.mrf.mxu0
    %v1022 = vadd.f32 0.0, %v1021
    %v1023 = vpop.f32.mrf.mxu0
    %v1024 = vadd.f32 0.0, %v1023
    %1025 = vmatmul.bf16.gmra.mxu0 %v727
    %v1026 = vpop.f32.mrf.mxu0
    %v1027 = vadd.f32 0.0, %v1026
    %v1028 = vpop.f32.mrf.mxu0
    %v1029 = vadd.f32 0.0, %v1028
    %1030 = vmatmul.bf16.gmra.mxu0 %v730
    %v1031 = vpop.f32.mrf.mxu0
    %v1032 = vadd.f32 0.0, %v1031
    %v1033 = vpop.f32.mrf.mxu0
    %v1034 = vadd.f32 0.0, %v1033
    %1035 = vmatmul.bf16.gmra.mxu0 %v733
    %v1036 = vpop.f32.mrf.mxu0
    %v1037 = vadd.f32 0.0, %v1036
    %v1038 = vpop.f32.mrf.mxu0
    %v1039 = vadd.f32 0.0, %v1038
    %1040 = vmatmul.bf16.gmra.mxu0 %v736
    %v1041 = vpop.f32.mrf.mxu0
    %v1042 = vadd.f32 0.0, %v1041
    %v1043 = vpop.f32.mrf.mxu0
    %v1044 = vadd.f32 0.0, %v1043
    %1045 = vmatmul.bf16.gmra.mxu0 %v739
    %v1046 = vpop.f32.mrf.mxu0
    %v1047 = vadd.f32 0.0, %v1046
    %v1048 = vpop.f32.mrf.mxu0
    %v1049 = vadd.f32 0.0, %v1048
    %1050 = vmatmul.bf16.gmra.mxu0 %v742
    %v1051 = vpop.f32.mrf.mxu0
    %v1052 = vadd.f32 0.0, %v1051
    %v1053 = vpop.f32.mrf.mxu0
    %v1054 = vadd.f32 0.0, %v1053
    %1055 = vmatmul.bf16.gmra.mxu0 %v745
    %v1056 = vpop.f32.mrf.mxu0
    %v1057 = vadd.f32 0.0, %v1056
    %v1058 = vpop.f32.mrf.mxu0
    %v1059 = vadd.f32 0.0, %v1058
    %1060 = vmatmul.bf16.gmra.mxu0 %v748
    %v1061 = vpop.f32.mrf.mxu0
    %v1062 = vadd.f32 0.0, %v1061
    %v1063 = vpop.f32.mrf.mxu0
    %v1064 = vadd.f32 0.0, %v1063
    %1065 = vmatmul.bf16.gmra.mxu0 %v751
    %v1066 = vpop.f32.mrf.mxu0
    %v1067 = vadd.f32 0.0, %v1066
    %v1068 = vpop.f32.mrf.mxu0
    %v1069 = vadd.f32 0.0, %v1068
    %1070 = vmatmul.bf16.gmra.mxu0 %v754
    %v1071 = vpop.f32.mrf.mxu0
    %v1072 = vadd.f32 0.0, %v1071
    %v1073 = vpop.f32.mrf.mxu0
    %v1074 = vadd.f32 0.0, %v1073
    %1075 = vmatmul.bf16.gmra.mxu0 %v757
    %v1076 = vpop.f32.mrf.mxu0
    %v1077 = vadd.f32 0.0, %v1076
    %v1078 = vpop.f32.mrf.mxu0
    %v1079 = vadd.f32 0.0, %v1078
    %1080 = vmatmul.bf16.gmra.mxu0 %v760
    %v1081 = vpop.f32.mrf.mxu0
    %v1082 = vadd.f32 0.0, %v1081
    %v1083 = vpop.f32.mrf.mxu0
    %v1084 = vadd.f32 0.0, %v1083
    %1085 = vmatmul.bf16.gmra.mxu0 %v763
    %v1086 = vpop.f32.mrf.mxu0
    %v1087 = vadd.f32 0.0, %v1086
    %v1088 = vpop.f32.mrf.mxu0
    %v1089 = vadd.f32 0.0, %v1088
    %1090 = vmatmul.bf16.gmra.mxu0 %v766
    %v1091 = vpop.f32.mrf.mxu0
    %v1092 = vadd.f32 0.0, %v1091
    %v1093 = vpop.f32.mrf.mxu0
    %v1094 = vadd.f32 0.0, %v1093
    %1095 = vmatmul.bf16.gmra.mxu0 %v769
    %v1096 = vpop.f32.mrf.mxu0
    %v1097 = vadd.f32 0.0, %v1096
    %v1098 = vpop.f32.mrf.mxu0
    %v1099 = vadd.f32 0.0, %v1098
    %1100 = vmatmul.bf16.gmra.mxu0 %v772
    %v1101 = vpop.f32.mrf.mxu0
    %v1102 = vadd.f32 0.0, %v1101
    %v1103 = vpop.f32.mrf.mxu0
    %v1104 = vadd.f32 0.0, %v1103
    %1105 = vmatmul.bf16.gmra.mxu0 %v775
    %v1106 = vpop.f32.mrf.mxu0
    %v1107 = vadd.f32 0.0, %v1106
    %v1108 = vpop.f32.mrf.mxu0
    %v1109 = vadd.f32 0.0, %v1108
    %1110 = vmatmul.bf16.gmra.mxu0 %v778
    %v1111 = vpop.f32.mrf.mxu0
    %v1112 = vadd.f32 0.0, %v1111
    %v1113 = vpop.f32.mrf.mxu0
    %v1114 = vadd.f32 0.0, %v1113
    %1115 = vmatmul.bf16.gmra.mxu0 %v781
    %v1116 = vpop.f32.mrf.mxu0
    %v1117 = vadd.f32 0.0, %v1116
    %v1118 = vpop.f32.mrf.mxu0
    %v1119 = vadd.f32 0.0, %v1118
    %1120 = vmatmul.bf16.gmra.mxu0 %v784
    %v1121 = vpop.f32.mrf.mxu0
    %v1122 = vadd.f32 0.0, %v1121
    %v1123 = vpop.f32.mrf.mxu0
    %v1124 = vadd.f32 0.0, %v1123
    %1125 = vmatmul.bf16.gmra.mxu0 %v787
    %v1126 = vpop.f32.mrf.mxu0
    %v1127 = vadd.f32 0.0, %v1126
    %v1128 = vpop.f32.mrf.mxu0
    %v1129 = vadd.f32 0.0, %v1128
    %1130 = vmatmul.bf16.gmra.mxu0 %v790
    %v1131 = vpop.f32.mrf.mxu0
    %v1132 = vadd.f32 0.0, %v1131
    %v1133 = vpop.f32.mrf.mxu0
    %v1134 = vadd.f32 0.0, %v1133
    %1135 = vmatmul.bf16.gmra.mxu0 %v793
    %v1136 = vpop.f32.mrf.mxu0
    %v1137 = vadd.f32 0.0, %v1136
    %v1138 = vpop.f32.mrf.mxu0
    %v1139 = vadd.f32 0.0, %v1138
    %1140 = vmatmul.bf16.gmra.mxu0 %v796
    %v1141 = vpop.f32.mrf.mxu0
    %v1142 = vadd.f32 0.0, %v1141
    %v1143 = vpop.f32.mrf.mxu0
    %v1144 = vadd.f32 0.0, %v1143
    %1145 = vmatmul.bf16.gmra.mxu0 %v799
    %v1146 = vpop.f32.mrf.mxu0
    %v1147 = vadd.f32 0.0, %v1146
    %v1148 = vpop.f32.mrf.mxu0
    %v1149 = vadd.f32 0.0, %v1148
    %1150 = vmatmul.bf16.gmra.mxu0 %v802
    %v1151 = vpop.f32.mrf.mxu0
    %v1152 = vadd.f32 0.0, %v1151
    %v1153 = vpop.f32.mrf.mxu0
    %v1154 = vadd.f32 0.0, %v1153
    %1155 = vmatmul.bf16.gmra.mxu0 %v805
    %v1156 = vpop.f32.mrf.mxu0
    %v1157 = vadd.f32 0.0, %v1156
    %v1158 = vpop.f32.mrf.mxu0
    %v1159 = vadd.f32 0.0, %v1158
    %1160 = vdwg.mxu0
    %1161 = vmatpush.bf16.msra.mxu0 0
    %1162 = vmatpush.bf16.msra.mxu0 0
    %1163 = vmatpush.bf16.msra.mxu0 0
    %1164 = vmatpush.bf16.msra.mxu0 0
    %1165 = vmatpush.bf16.msra.mxu0 0
    %1166 = vmatpush.bf16.msra.mxu0 %v812
    %1167 = vmatpush.bf16.msra.mxu0 %v583
    %1168 = vmatpush.bf16.msra.mxu0 %v575
    %1169 = vmatmul.bf16.gmra.mxu0 %v616
    %v1170 = vpop.f32.mrf.mxu0
    %v1171 = vadd.f32 0.0, %v1170
    %v1172 = vpop.f32.mrf.mxu0
    %v1173 = vadd.f32 0.0, %v1172
    %1174 = vmatmul.bf16.gmra.mxu0 %v619
    %v1175 = vpop.f32.mrf.mxu0
    %v1176 = vadd.f32 0.0, %v1175
    %v1177 = vpop.f32.mrf.mxu0
    %v1178 = vadd.f32 0.0, %v1177
    %1179 = vmatmul.bf16.gmra.mxu0 %v622
    %v1180 = vpop.f32.mrf.mxu0
    %v1181 = vadd.f32 0.0, %v1180
    %v1182 = vpop.f32.mrf.mxu0
    %v1183 = vadd.f32 0.0, %v1182
    %1184 = vmatmul.bf16.gmra.mxu0 %v625
    %v1185 = vpop.f32.mrf.mxu0
    %v1186 = vadd.f32 0.0, %v1185
    %v1187 = vpop.f32.mrf.mxu0
    %v1188 = vadd.f32 0.0, %v1187
    %1189 = vmatmul.bf16.gmra.mxu0 %v628
    %v1190 = vpop.f32.mrf.mxu0
    %v1191 = vadd.f32 0.0, %v1190
    %v1192 = vpop.f32.mrf.mxu0
    %v1193 = vadd.f32 0.0, %v1192
    %1194 = vmatmul.bf16.gmra.mxu0 %v631
    %v1195 = vpop.f32.mrf.mxu0
    %v1196 = vadd.f32 0.0, %v1195
    %v1197 = vpop.f32.mrf.mxu0
    %v1198 = vadd.f32 0.0, %v1197
    %1199 = vmatmul.bf16.gmra.mxu0 %v634
    %v1200 = vpop.f32.mrf.mxu0
    %v1201 = vadd.f32 0.0, %v1200
    %v1202 = vpop.f32.mrf.mxu0
    %v1203 = vadd.f32 0.0, %v1202
    %1204 = vmatmul.bf16.gmra.mxu0 %v637
    %v1205 = vpop.f32.mrf.mxu0
    %v1206 = vadd.f32 0.0, %v1205
    %v1207 = vpop.f32.mrf.mxu0
    %v1208 = vadd.f32 0.0, %v1207
    %1209 = vmatmul.bf16.gmra.mxu0 %v640
    %v1210 = vpop.f32.mrf.mxu0
    %v1211 = vadd.f32 0.0, %v1210
    %v1212 = vpop.f32.mrf.mxu0
    %v1213 = vadd.f32 0.0, %v1212
    %1214 = vmatmul.bf16.gmra.mxu0 %v643
    %v1215 = vpop.f32.mrf.mxu0
    %v1216 = vadd.f32 0.0, %v1215
    %v1217 = vpop.f32.mrf.mxu0
    %v1218 = vadd.f32 0.0, %v1217
    %1219 = vmatmul.bf16.gmra.mxu0 %v646
    %v1220 = vpop.f32.mrf.mxu0
    %v1221 = vadd.f32 0.0, %v1220
    %v1222 = vpop.f32.mrf.mxu0
    %v1223 = vadd.f32 0.0, %v1222
    %1224 = vmatmul.bf16.gmra.mxu0 %v649
    %v1225 = vpop.f32.mrf.mxu0
    %v1226 = vadd.f32 0.0, %v1225
    %v1227 = vpop.f32.mrf.mxu0
    %v1228 = vadd.f32 0.0, %v1227
    %1229 = vmatmul.bf16.gmra.mxu0 %v652
    %v1230 = vpop.f32.mrf.mxu0
    %v1231 = vadd.f32 0.0, %v1230
    %v1232 = vpop.f32.mrf.mxu0
    %v1233 = vadd.f32 0.0, %v1232
    %1234 = vmatmul.bf16.gmra.mxu0 %v655
    %v1235 = vpop.f32.mrf.mxu0
    %v1236 = vadd.f32 0.0, %v1235
    %v1237 = vpop.f32.mrf.mxu0
    %v1238 = vadd.f32 0.0, %v1237
    %1239 = vmatmul.bf16.gmra.mxu0 %v658
    %v1240 = vpop.f32.mrf.mxu0
    %v1241 = vadd.f32 0.0, %v1240
    %v1242 = vpop.f32.mrf.mxu0
    %v1243 = vadd.f32 0.0, %v1242
    %1244 = vmatmul.bf16.gmra.mxu0 %v661
    %v1245 = vpop.f32.mrf.mxu0
    %v1246 = vadd.f32 0.0, %v1245
    %v1247 = vpop.f32.mrf.mxu0
    %v1248 = vadd.f32 0.0, %v1247
    %1249 = vmatmul.bf16.gmra.mxu0 %v664
    %v1250 = vpop.f32.mrf.mxu0
    %v1251 = vadd.f32 0.0, %v1250
    %v1252 = vpop.f32.mrf.mxu0
    %v1253 = vadd.f32 0.0, %v1252
    %1254 = vmatmul.bf16.gmra.mxu0 %v667
    %v1255 = vpop.f32.mrf.mxu0
    %v1256 = vadd.f32 0.0, %v1255
    %v1257 = vpop.f32.mrf.mxu0
    %v1258 = vadd.f32 0.0, %v1257
    %1259 = vmatmul.bf16.gmra.mxu0 %v670
    %v1260 = vpop.f32.mrf.mxu0
    %v1261 = vadd.f32 0.0, %v1260
    %v1262 = vpop.f32.mrf.mxu0
    %v1263 = vadd.f32 0.0, %v1262
    %1264 = vmatmul.bf16.gmra.mxu0 %v673
    %v1265 = vpop.f32.mrf.mxu0
    %v1266 = vadd.f32 0.0, %v1265
    %v1267 = vpop.f32.mrf.mxu0
    %v1268 = vadd.f32 0.0, %v1267
    %1269 = vmatmul.bf16.gmra.mxu0 %v676
    %v1270 = vpop.f32.mrf.mxu0
    %v1271 = vadd.f32 0.0, %v1270
    %v1272 = vpop.f32.mrf.mxu0
    %v1273 = vadd.f32 0.0, %v1272
    %1274 = vmatmul.bf16.gmra.mxu0 %v679
    %v1275 = vpop.f32.mrf.mxu0
    %v1276 = vadd.f32 0.0, %v1275
    %v1277 = vpop.f32.mrf.mxu0
    %v1278 = vadd.f32 0.0, %v1277
    %1279 = vmatmul.bf16.gmra.mxu0 %v682
    %v1280 = vpop.f32.mrf.mxu0
    %v1281 = vadd.f32 0.0, %v1280
    %v1282 = vpop.f32.mrf.mxu0
    %v1283 = vadd.f32 0.0, %v1282
    %1284 = vmatmul.bf16.gmra.mxu0 %v685
    %v1285 = vpop.f32.mrf.mxu0
    %v1286 = vadd.f32 0.0, %v1285
    %v1287 = vpop.f32.mrf.mxu0
    %v1288 = vadd.f32 0.0, %v1287
    %1289 = vmatmul.bf16.gmra.mxu0 %v688
    %v1290 = vpop.f32.mrf.mxu0
    %v1291 = vadd.f32 0.0, %v1290
    %v1292 = vpop.f32.mrf.mxu0
    %v1293 = vadd.f32 0.0, %v1292
    %1294 = vmatmul.bf16.gmra.mxu0 %v691
    %v1295 = vpop.f32.mrf.mxu0
    %v1296 = vadd.f32 0.0, %v1295
    %v1297 = vpop.f32.mrf.mxu0
    %v1298 = vadd.f32 0.0, %v1297
    %1299 = vmatmul.bf16.gmra.mxu0 %v694
    %v1300 = vpop.f32.mrf.mxu0
    %v1301 = vadd.f32 0.0, %v1300
    %v1302 = vpop.f32.mrf.mxu0
    %v1303 = vadd.f32 0.0, %v1302
    %1304 = vmatmul.bf16.gmra.mxu0 %v697
    %v1305 = vpop.f32.mrf.mxu0
    %v1306 = vadd.f32 0.0, %v1305
    %v1307 = vpop.f32.mrf.mxu0
    %v1308 = vadd.f32 0.0, %v1307
    %1309 = vmatmul.bf16.gmra.mxu0 %v700
    %v1310 = vpop.f32.mrf.mxu0
    %v1311 = vadd.f32 0.0, %v1310
    %v1312 = vpop.f32.mrf.mxu0
    %v1313 = vadd.f32 0.0, %v1312
    %1314 = vmatmul.bf16.gmra.mxu0 %v703
    %v1315 = vpop.f32.mrf.mxu0
    %v1316 = vadd.f32 0.0, %v1315
    %v1317 = vpop.f32.mrf.mxu0
    %v1318 = vadd.f32 0.0, %v1317
    %1319 = vmatmul.bf16.gmra.mxu0 %v706
    %v1320 = vpop.f32.mrf.mxu0
    %v1321 = vadd.f32 0.0, %v1320
    %v1322 = vpop.f32.mrf.mxu0
    %v1323 = vadd.f32 0.0, %v1322
    %1324 = vmatmul.bf16.gmra.mxu0 %v709
    %v1325 = vpop.f32.mrf.mxu0
    %v1326 = vadd.f32 0.0, %v1325
    %v1327 = vpop.f32.mrf.mxu0
    %v1328 = vadd.f32 0.0, %v1327
    %1329 = vmatmul.bf16.gmra.mxu0 %v712
    %v1330 = vpop.f32.mrf.mxu0
    %v1331 = vadd.f32 0.0, %v1330
    %v1332 = vpop.f32.mrf.mxu0
    %v1333 = vadd.f32 0.0, %v1332
    %1334 = vmatmul.bf16.gmra.mxu0 %v715
    %v1335 = vpop.f32.mrf.mxu0
    %v1336 = vadd.f32 0.0, %v1335
    %v1337 = vpop.f32.mrf.mxu0
    %v1338 = vadd.f32 0.0, %v1337
    %1339 = vmatmul.bf16.gmra.mxu0 %v718
    %v1340 = vpop.f32.mrf.mxu0
    %v1341 = vadd.f32 0.0, %v1340
    %v1342 = vpop.f32.mrf.mxu0
    %v1343 = vadd.f32 0.0, %v1342
    %1344 = vmatmul.bf16.gmra.mxu0 %v721
    %v1345 = vpop.f32.mrf.mxu0
    %v1346 = vadd.f32 0.0, %v1345
    %v1347 = vpop.f32.mrf.mxu0
    %v1348 = vadd.f32 0.0, %v1347
    %1349 = vmatmul.bf16.gmra.mxu0 %v724
    %v1350 = vpop.f32.mrf.mxu0
    %v1351 = vadd.f32 0.0, %v1350
    %v1352 = vpop.f32.mrf.mxu0
    %v1353 = vadd.f32 0.0, %v1352
    %1354 = vmatmul.bf16.gmra.mxu0 %v727
    %v1355 = vpop.f32.mrf.mxu0
    %v1356 = vadd.f32 0.0, %v1355
    %v1357 = vpop.f32.mrf.mxu0
    %v1358 = vadd.f32 0.0, %v1357
    %1359 = vmatmul.bf16.gmra.mxu0 %v730
    %v1360 = vpop.f32.mrf.mxu0
    %v1361 = vadd.f32 0.0, %v1360
    %v1362 = vpop.f32.mrf.mxu0
    %v1363 = vadd.f32 0.0, %v1362
    %1364 = vmatmul.bf16.gmra.mxu0 %v733
    %v1365 = vpop.f32.mrf.mxu0
    %v1366 = vadd.f32 0.0, %v1365
    %v1367 = vpop.f32.mrf.mxu0
    %v1368 = vadd.f32 0.0, %v1367
    %1369 = vmatmul.bf16.gmra.mxu0 %v736
    %v1370 = vpop.f32.mrf.mxu0
    %v1371 = vadd.f32 0.0, %v1370
    %v1372 = vpop.f32.mrf.mxu0
    %v1373 = vadd.f32 0.0, %v1372
    %1374 = vmatmul.bf16.gmra.mxu0 %v739
    %v1375 = vpop.f32.mrf.mxu0
    %v1376 = vadd.f32 0.0, %v1375
    %v1377 = vpop.f32.mrf.mxu0
    %v1378 = vadd.f32 0.0, %v1377
    %1379 = vmatmul.bf16.gmra.mxu0 %v742
    %v1380 = vpop.f32.mrf.mxu0
    %v1381 = vadd.f32 0.0, %v1380
    %v1382 = vpop.f32.mrf.mxu0
    %v1383 = vadd.f32 0.0, %v1382
    %1384 = vmatmul.bf16.gmra.mxu0 %v745
    %v1385 = vpop.f32.mrf.mxu0
    %v1386 = vadd.f32 0.0, %v1385
    %v1387 = vpop.f32.mrf.mxu0
    %v1388 = vadd.f32 0.0, %v1387
    %1389 = vmatmul.bf16.gmra.mxu0 %v748
    %v1390 = vpop.f32.mrf.mxu0
    %v1391 = vadd.f32 0.0, %v1390
    %v1392 = vpop.f32.mrf.mxu0
    %v1393 = vadd.f32 0.0, %v1392
    %1394 = vmatmul.bf16.gmra.mxu0 %v751
    %v1395 = vpop.f32.mrf.mxu0
    %v1396 = vadd.f32 0.0, %v1395
    %v1397 = vpop.f32.mrf.mxu0
    %v1398 = vadd.f32 0.0, %v1397
    %1399 = vmatmul.bf16.gmra.mxu0 %v754
    %v1400 = vpop.f32.mrf.mxu0
    %v1401 = vadd.f32 0.0, %v1400
    %v1402 = vpop.f32.mrf.mxu0
    %v1403 = vadd.f32 0.0, %v1402
    %1404 = vmatmul.bf16.gmra.mxu0 %v757
    %v1405 = vpop.f32.mrf.mxu0
    %v1406 = vadd.f32 0.0, %v1405
    %v1407 = vpop.f32.mrf.mxu0
    %v1408 = vadd.f32 0.0, %v1407
    %1409 = vmatmul.bf16.gmra.mxu0 %v760
    %v1410 = vpop.f32.mrf.mxu0
    %v1411 = vadd.f32 0.0, %v1410
    %v1412 = vpop.f32.mrf.mxu0
    %v1413 = vadd.f32 0.0, %v1412
    %1414 = vmatmul.bf16.gmra.mxu0 %v763
    %v1415 = vpop.f32.mrf.mxu0
    %v1416 = vadd.f32 0.0, %v1415
    %v1417 = vpop.f32.mrf.mxu0
    %v1418 = vadd.f32 0.0, %v1417
    %1419 = vmatmul.bf16.gmra.mxu0 %v766
    %v1420 = vpop.f32.mrf.mxu0
    %v1421 = vadd.f32 0.0, %v1420
    %v1422 = vpop.f32.mrf.mxu0
    %v1423 = vadd.f32 0.0, %v1422
    %1424 = vmatmul.bf16.gmra.mxu0 %v769
    %v1425 = vpop.f32.mrf.mxu0
    %v1426 = vadd.f32 0.0, %v1425
    %v1427 = vpop.f32.mrf.mxu0
    %v1428 = vadd.f32 0.0, %v1427
    %1429 = vmatmul.bf16.gmra.mxu0 %v772
    %v1430 = vpop.f32.mrf.mxu0
    %v1431 = vadd.f32 0.0, %v1430
    %v1432 = vpop.f32.mrf.mxu0
    %v1433 = vadd.f32 0.0, %v1432
    %1434 = vmatmul.bf16.gmra.mxu0 %v775
    %v1435 = vpop.f32.mrf.mxu0
    %v1436 = vadd.f32 0.0, %v1435
    %v1437 = vpop.f32.mrf.mxu0
    %v1438 = vadd.f32 0.0, %v1437
    %1439 = vmatmul.bf16.gmra.mxu0 %v778
    %v1440 = vpop.f32.mrf.mxu0
    %v1441 = vadd.f32 0.0, %v1440
    %v1442 = vpop.f32.mrf.mxu0
    %v1443 = vadd.f32 0.0, %v1442
    %1444 = vmatmul.bf16.gmra.mxu0 %v781
    %v1445 = vpop.f32.mrf.mxu0
    %v1446 = vadd.f32 0.0, %v1445
    %v1447 = vpop.f32.mrf.mxu0
    %v1448 = vadd.f32 0.0, %v1447
    %1449 = vmatmul.bf16.gmra.mxu0 %v784
    %v1450 = vpop.f32.mrf.mxu0
    %v1451 = vadd.f32 0.0, %v1450
    %v1452 = vpop.f32.mrf.mxu0
    %v1453 = vadd.f32 0.0, %v1452
    %1454 = vmatmul.bf16.gmra.mxu0 %v787
    %v1455 = vpop.f32.mrf.mxu0
    %v1456 = vadd.f32 0.0, %v1455
    %v1457 = vpop.f32.mrf.mxu0
    %v1458 = vadd.f32 0.0, %v1457
    %1459 = vmatmul.bf16.gmra.mxu0 %v790
    %v1460 = vpop.f32.mrf.mxu0
    %v1461 = vadd.f32 0.0, %v1460
    %v1462 = vpop.f32.mrf.mxu0
    %v1463 = vadd.f32 0.0, %v1462
    %1464 = vmatmul.bf16.gmra.mxu0 %v793
    %v1465 = vpop.f32.mrf.mxu0
    %v1466 = vadd.f32 0.0, %v1465
    %v1467 = vpop.f32.mrf.mxu0
    %v1468 = vadd.f32 0.0, %v1467
    %1469 = vmatmul.bf16.gmra.mxu0 %v796
    %v1470 = vpop.f32.mrf.mxu0
    %v1471 = vadd.f32 0.0, %v1470
    %v1472 = vpop.f32.mrf.mxu0
    %v1473 = vadd.f32 0.0, %v1472
    %1474 = vmatmul.bf16.gmra.mxu0 %v799
    %v1475 = vpop.f32.mrf.mxu0
    %v1476 = vadd.f32 0.0, %v1475
    %v1477 = vpop.f32.mrf.mxu0
    %v1478 = vadd.f32 0.0, %v1477
    %1479 = vmatmul.bf16.gmra.mxu0 %v802
    %v1480 = vpop.f32.mrf.mxu0
    %v1481 = vadd.f32 0.0, %v1480
    %v1482 = vpop.f32.mrf.mxu0
    %v1483 = vadd.f32 0.0, %v1482
    %1484 = vmatmul.bf16.gmra.mxu0 %v805
    %v1485 = vpop.f32.mrf.mxu0
    %v1486 = vadd.f32 0.0, %v1485
    %v1487 = vpop.f32.mrf.mxu0
    %v1488 = vadd.f32 0.0, %v1487
    %1489 = vdwg.mxu0
    %1490 = vmatpush.bf16.msra.mxu0 0
    %1491 = vmatpush.bf16.msra.mxu0 0
    %1492 = vmatpush.bf16.msra.mxu0 0
    %1493 = vmatpush.bf16.msra.mxu0 0
    %1494 = vmatpush.bf16.msra.mxu0 0
    %1495 = vmatpush.bf16.msra.mxu0 %v815
    %1496 = vmatpush.bf16.msra.mxu0 %v584
    %1497 = vmatpush.bf16.msra.mxu0 %v576
    %1498 = vmatmul.bf16.gmra.mxu0 %v616
    %v1499 = vpop.f32.mrf.mxu0
    %v1500 = vadd.f32 0.0, %v1499
    %v1501 = vpop.f32.mrf.mxu0
    %v1502 = vadd.f32 0.0, %v1501
    %1503 = vmatmul.bf16.gmra.mxu0 %v619
    %v1504 = vpop.f32.mrf.mxu0
    %v1505 = vadd.f32 0.0, %v1504
    %v1506 = vpop.f32.mrf.mxu0
    %v1507 = vadd.f32 0.0, %v1506
    %1508 = vmatmul.bf16.gmra.mxu0 %v622
    %v1509 = vpop.f32.mrf.mxu0
    %v1510 = vadd.f32 0.0, %v1509
    %v1511 = vpop.f32.mrf.mxu0
    %v1512 = vadd.f32 0.0, %v1511
    %1513 = vmatmul.bf16.gmra.mxu0 %v625
    %v1514 = vpop.f32.mrf.mxu0
    %v1515 = vadd.f32 0.0, %v1514
    %v1516 = vpop.f32.mrf.mxu0
    %v1517 = vadd.f32 0.0, %v1516
    %1518 = vmatmul.bf16.gmra.mxu0 %v628
    %v1519 = vpop.f32.mrf.mxu0
    %v1520 = vadd.f32 0.0, %v1519
    %v1521 = vpop.f32.mrf.mxu0
    %v1522 = vadd.f32 0.0, %v1521
    %1523 = vmatmul.bf16.gmra.mxu0 %v631
    %v1524 = vpop.f32.mrf.mxu0
    %v1525 = vadd.f32 0.0, %v1524
    %v1526 = vpop.f32.mrf.mxu0
    %v1527 = vadd.f32 0.0, %v1526
    %1528 = vmatmul.bf16.gmra.mxu0 %v634
    %v1529 = vpop.f32.mrf.mxu0
    %v1530 = vadd.f32 0.0, %v1529
    %v1531 = vpop.f32.mrf.mxu0
    %v1532 = vadd.f32 0.0, %v1531
    %1533 = vmatmul.bf16.gmra.mxu0 %v637
    %v1534 = vpop.f32.mrf.mxu0
    %v1535 = vadd.f32 0.0, %v1534
    %v1536 = vpop.f32.mrf.mxu0
    %v1537 = vadd.f32 0.0, %v1536
    %1538 = vmatmul.bf16.gmra.mxu0 %v640
    %v1539 = vpop.f32.mrf.mxu0
    %v1540 = vadd.f32 0.0, %v1539
    %v1541 = vpop.f32.mrf.mxu0
    %v1542 = vadd.f32 0.0, %v1541
    %1543 = vmatmul.bf16.gmra.mxu0 %v643
    %v1544 = vpop.f32.mrf.mxu0
    %v1545 = vadd.f32 0.0, %v1544
    %v1546 = vpop.f32.mrf.mxu0
    %v1547 = vadd.f32 0.0, %v1546
    %1548 = vmatmul.bf16.gmra.mxu0 %v646
    %v1549 = vpop.f32.mrf.mxu0
    %v1550 = vadd.f32 0.0, %v1549
    %v1551 = vpop.f32.mrf.mxu0
    %v1552 = vadd.f32 0.0, %v1551
    %1553 = vmatmul.bf16.gmra.mxu0 %v649
    %v1554 = vpop.f32.mrf.mxu0
    %v1555 = vadd.f32 0.0, %v1554
    %v1556 = vpop.f32.mrf.mxu0
    %v1557 = vadd.f32 0.0, %v1556
    %1558 = vmatmul.bf16.gmra.mxu0 %v652
    %v1559 = vpop.f32.mrf.mxu0
    %v1560 = vadd.f32 0.0, %v1559
    %v1561 = vpop.f32.mrf.mxu0
    %v1562 = vadd.f32 0.0, %v1561
    %1563 = vmatmul.bf16.gmra.mxu0 %v655
    %v1564 = vpop.f32.mrf.mxu0
    %v1565 = vadd.f32 0.0, %v1564
    %v1566 = vpop.f32.mrf.mxu0
    %v1567 = vadd.f32 0.0, %v1566
    %1568 = vmatmul.bf16.gmra.mxu0 %v658
    %v1569 = vpop.f32.mrf.mxu0
    %v1570 = vadd.f32 0.0, %v1569
    %v1571 = vpop.f32.mrf.mxu0
    %v1572 = vadd.f32 0.0, %v1571
    %1573 = vmatmul.bf16.gmra.mxu0 %v661
    %v1574 = vpop.f32.mrf.mxu0
    %v1575 = vadd.f32 0.0, %v1574
    %v1576 = vpop.f32.mrf.mxu0
    %v1577 = vadd.f32 0.0, %v1576
    %1578 = vmatmul.bf16.gmra.mxu0 %v664
    %v1579 = vpop.f32.mrf.mxu0
    %v1580 = vadd.f32 0.0, %v1579
    %v1581 = vpop.f32.mrf.mxu0
    %v1582 = vadd.f32 0.0, %v1581
    %1583 = vmatmul.bf16.gmra.mxu0 %v667
    %v1584 = vpop.f32.mrf.mxu0
    %v1585 = vadd.f32 0.0, %v1584
    %v1586 = vpop.f32.mrf.mxu0
    %v1587 = vadd.f32 0.0, %v1586
    %1588 = vmatmul.bf16.gmra.mxu0 %v670
    %v1589 = vpop.f32.mrf.mxu0
    %v1590 = vadd.f32 0.0, %v1589
    %v1591 = vpop.f32.mrf.mxu0
    %v1592 = vadd.f32 0.0, %v1591
    %1593 = vmatmul.bf16.gmra.mxu0 %v673
    %v1594 = vpop.f32.mrf.mxu0
    %v1595 = vadd.f32 0.0, %v1594
    %v1596 = vpop.f32.mrf.mxu0
    %v1597 = vadd.f32 0.0, %v1596
    %1598 = vmatmul.bf16.gmra.mxu0 %v676
    %v1599 = vpop.f32.mrf.mxu0
    %v1600 = vadd.f32 0.0, %v1599
    %v1601 = vpop.f32.mrf.mxu0
    %v1602 = vadd.f32 0.0, %v1601
    %1603 = vmatmul.bf16.gmra.mxu0 %v679
    %v1604 = vpop.f32.mrf.mxu0
    %v1605 = vadd.f32 0.0, %v1604
    %v1606 = vpop.f32.mrf.mxu0
    %v1607 = vadd.f32 0.0, %v1606
    %1608 = vmatmul.bf16.gmra.mxu0 %v682
    %v1609 = vpop.f32.mrf.mxu0
    %v1610 = vadd.f32 0.0, %v1609
    %v1611 = vpop.f32.mrf.mxu0
    %v1612 = vadd.f32 0.0, %v1611
    %1613 = vmatmul.bf16.gmra.mxu0 %v685
    %v1614 = vpop.f32.mrf.mxu0
    %v1615 = vadd.f32 0.0, %v1614
    %v1616 = vpop.f32.mrf.mxu0
    %v1617 = vadd.f32 0.0, %v1616
    %1618 = vmatmul.bf16.gmra.mxu0 %v688
    %v1619 = vpop.f32.mrf.mxu0
    %v1620 = vadd.f32 0.0, %v1619
    %v1621 = vpop.f32.mrf.mxu0
    %v1622 = vadd.f32 0.0, %v1621
    %1623 = vmatmul.bf16.gmra.mxu0 %v691
    %v1624 = vpop.f32.mrf.mxu0
    %v1625 = vadd.f32 0.0, %v1624
    %v1626 = vpop.f32.mrf.mxu0
    %v1627 = vadd.f32 0.0, %v1626
    %1628 = vmatmul.bf16.gmra.mxu0 %v694
    %v1629 = vpop.f32.mrf.mxu0
    %v1630 = vadd.f32 0.0, %v1629
    %v1631 = vpop.f32.mrf.mxu0
    %v1632 = vadd.f32 0.0, %v1631
    %1633 = vmatmul.bf16.gmra.mxu0 %v697
    %v1634 = vpop.f32.mrf.mxu0
    %v1635 = vadd.f32 0.0, %v1634
    %v1636 = vpop.f32.mrf.mxu0
    %v1637 = vadd.f32 0.0, %v1636
    %1638 = vmatmul.bf16.gmra.mxu0 %v700
    %v1639 = vpop.f32.mrf.mxu0
    %v1640 = vadd.f32 0.0, %v1639
    %v1641 = vpop.f32.mrf.mxu0
    %v1642 = vadd.f32 0.0, %v1641
    %1643 = vmatmul.bf16.gmra.mxu0 %v703
    %v1644 = vpop.f32.mrf.mxu0
    %v1645 = vadd.f32 0.0, %v1644
    %v1646 = vpop.f32.mrf.mxu0
    %v1647 = vadd.f32 0.0, %v1646
    %1648 = vmatmul.bf16.gmra.mxu0 %v706
    %v1649 = vpop.f32.mrf.mxu0
    %v1650 = vadd.f32 0.0, %v1649
    %v1651 = vpop.f32.mrf.mxu0
    %v1652 = vadd.f32 0.0, %v1651
    %1653 = vmatmul.bf16.gmra.mxu0 %v709
    %v1654 = vpop.f32.mrf.mxu0
    %v1655 = vadd.f32 0.0, %v1654
    %v1656 = vpop.f32.mrf.mxu0
    %v1657 = vadd.f32 0.0, %v1656
    %1658 = vmatmul.bf16.gmra.mxu0 %v712
    %v1659 = vpop.f32.mrf.mxu0
    %v1660 = vadd.f32 0.0, %v1659
    %v1661 = vpop.f32.mrf.mxu0
    %v1662 = vadd.f32 0.0, %v1661
    %1663 = vmatmul.bf16.gmra.mxu0 %v715
    %v1664 = vpop.f32.mrf.mxu0
    %v1665 = vadd.f32 0.0, %v1664
    %v1666 = vpop.f32.mrf.mxu0
    %v1667 = vadd.f32 0.0, %v1666
    %1668 = vmatmul.bf16.gmra.mxu0 %v718
    %v1669 = vpop.f32.mrf.mxu0
    %v1670 = vadd.f32 0.0, %v1669
    %v1671 = vpop.f32.mrf.mxu0
    %v1672 = vadd.f32 0.0, %v1671
    %1673 = vmatmul.bf16.gmra.mxu0 %v721
    %v1674 = vpop.f32.mrf.mxu0
    %v1675 = vadd.f32 0.0, %v1674
    %v1676 = vpop.f32.mrf.mxu0
    %v1677 = vadd.f32 0.0, %v1676
    %1678 = vmatmul.bf16.gmra.mxu0 %v724
    %v1679 = vpop.f32.mrf.mxu0
    %v1680 = vadd.f32 0.0, %v1679
    %v1681 = vpop.f32.mrf.mxu0
    %v1682 = vadd.f32 0.0, %v1681
    %1683 = vmatmul.bf16.gmra.mxu0 %v727
    %v1684 = vpop.f32.mrf.mxu0
    %v1685 = vadd.f32 0.0, %v1684
    %v1686 = vpop.f32.mrf.mxu0
    %v1687 = vadd.f32 0.0, %v1686
    %1688 = vmatmul.bf16.gmra.mxu0 %v730
    %v1689 = vpop.f32.mrf.mxu0
    %v1690 = vadd.f32 0.0, %v1689
    %v1691 = vpop.f32.mrf.mxu0
    %v1692 = vadd.f32 0.0, %v1691
    %1693 = vmatmul.bf16.gmra.mxu0 %v733
    %v1694 = vpop.f32.mrf.mxu0
    %v1695 = vadd.f32 0.0, %v1694
    %v1696 = vpop.f32.mrf.mxu0
    %v1697 = vadd.f32 0.0, %v1696
    %1698 = vmatmul.bf16.gmra.mxu0 %v736
    %v1699 = vpop.f32.mrf.mxu0
    %v1700 = vadd.f32 0.0, %v1699
    %v1701 = vpop.f32.mrf.mxu0
    %v1702 = vadd.f32 0.0, %v1701
    %1703 = vmatmul.bf16.gmra.mxu0 %v739
    %v1704 = vpop.f32.mrf.mxu0
    %v1705 = vadd.f32 0.0, %v1704
    %v1706 = vpop.f32.mrf.mxu0
    %v1707 = vadd.f32 0.0, %v1706
    %1708 = vmatmul.bf16.gmra.mxu0 %v742
    %v1709 = vpop.f32.mrf.mxu0
    %v1710 = vadd.f32 0.0, %v1709
    %v1711 = vpop.f32.mrf.mxu0
    %v1712 = vadd.f32 0.0, %v1711
    %1713 = vmatmul.bf16.gmra.mxu0 %v745
    %v1714 = vpop.f32.mrf.mxu0
    %v1715 = vadd.f32 0.0, %v1714
    %v1716 = vpop.f32.mrf.mxu0
    %v1717 = vadd.f32 0.0, %v1716
    %1718 = vmatmul.bf16.gmra.mxu0 %v748
    %v1719 = vpop.f32.mrf.mxu0
    %v1720 = vadd.f32 0.0, %v1719
    %v1721 = vpop.f32.mrf.mxu0
    %v1722 = vadd.f32 0.0, %v1721
    %1723 = vmatmul.bf16.gmra.mxu0 %v751
    %v1724 = vpop.f32.mrf.mxu0
    %v1725 = vadd.f32 0.0, %v1724
    %v1726 = vpop.f32.mrf.mxu0
    %v1727 = vadd.f32 0.0, %v1726
    %1728 = vmatmul.bf16.gmra.mxu0 %v754
    %v1729 = vpop.f32.mrf.mxu0
    %v1730 = vadd.f32 0.0, %v1729
    %v1731 = vpop.f32.mrf.mxu0
    %v1732 = vadd.f32 0.0, %v1731
    %1733 = vmatmul.bf16.gmra.mxu0 %v757
    %v1734 = vpop.f32.mrf.mxu0
    %v1735 = vadd.f32 0.0, %v1734
    %v1736 = vpop.f32.mrf.mxu0
    %v1737 = vadd.f32 0.0, %v1736
    %1738 = vmatmul.bf16.gmra.mxu0 %v760
    %v1739 = vpop.f32.mrf.mxu0
    %v1740 = vadd.f32 0.0, %v1739
    %v1741 = vpop.f32.mrf.mxu0
    %v1742 = vadd.f32 0.0, %v1741
    %1743 = vmatmul.bf16.gmra.mxu0 %v763
    %v1744 = vpop.f32.mrf.mxu0
    %v1745 = vadd.f32 0.0, %v1744
    %v1746 = vpop.f32.mrf.mxu0
    %v1747 = vadd.f32 0.0, %v1746
    %1748 = vmatmul.bf16.gmra.mxu0 %v766
    %v1749 = vpop.f32.mrf.mxu0
    %v1750 = vadd.f32 0.0, %v1749
    %v1751 = vpop.f32.mrf.mxu0
    %v1752 = vadd.f32 0.0, %v1751
    %1753 = vmatmul.bf16.gmra.mxu0 %v769
    %v1754 = vpop.f32.mrf.mxu0
    %v1755 = vadd.f32 0.0, %v1754
    %v1756 = vpop.f32.mrf.mxu0
    %v1757 = vadd.f32 0.0, %v1756
    %1758 = vmatmul.bf16.gmra.mxu0 %v772
    %v1759 = vpop.f32.mrf.mxu0
    %v1760 = vadd.f32 0.0, %v1759
    %v1761 = vpop.f32.mrf.mxu0
    %v1762 = vadd.f32 0.0, %v1761
    %1763 = vmatmul.bf16.gmra.mxu0 %v775
    %v1764 = vpop.f32.mrf.mxu0
    %v1765 = vadd.f32 0.0, %v1764
    %v1766 = vpop.f32.mrf.mxu0
    %v1767 = vadd.f32 0.0, %v1766
    %1768 = vmatmul.bf16.gmra.mxu0 %v778
    %v1769 = vpop.f32.mrf.mxu0
    %v1770 = vadd.f32 0.0, %v1769
    %v1771 = vpop.f32.mrf.mxu0
    %v1772 = vadd.f32 0.0, %v1771
    %1773 = vmatmul.bf16.gmra.mxu0 %v781
    %v1774 = vpop.f32.mrf.mxu0
    %v1775 = vadd.f32 0.0, %v1774
    %v1776 = vpop.f32.mrf.mxu0
    %v1777 = vadd.f32 0.0, %v1776
    %1778 = vmatmul.bf16.gmra.mxu0 %v784
    %v1779 = vpop.f32.mrf.mxu0
    %v1780 = vadd.f32 0.0, %v1779
    %v1781 = vpop.f32.mrf.mxu0
    %v1782 = vadd.f32 0.0, %v1781
    %1783 = vmatmul.bf16.gmra.mxu0 %v787
    %v1784 = vpop.f32.mrf.mxu0
    %v1785 = vadd.f32 0.0, %v1784
    %v1786 = vpop.f32.mrf.mxu0
    %v1787 = vadd.f32 0.0, %v1786
    %1788 = vmatmul.bf16.gmra.mxu0 %v790
    %v1789 = vpop.f32.mrf.mxu0
    %v1790 = vadd.f32 0.0, %v1789
    %v1791 = vpop.f32.mrf.mxu0
    %v1792 = vadd.f32 0.0, %v1791
    %1793 = vmatmul.bf16.gmra.mxu0 %v793
    %v1794 = vpop.f32.mrf.mxu0
    %v1795 = vadd.f32 0.0, %v1794
    %v1796 = vpop.f32.mrf.mxu0
    %v1797 = vadd.f32 0.0, %v1796
    %1798 = vmatmul.bf16.gmra.mxu0 %v796
    %v1799 = vpop.f32.mrf.mxu0
    %v1800 = vadd.f32 0.0, %v1799
    %v1801 = vpop.f32.mrf.mxu0
    %v1802 = vadd.f32 0.0, %v1801
    %1803 = vmatmul.bf16.gmra.mxu0 %v799
    %v1804 = vpop.f32.mrf.mxu0
    %v1805 = vadd.f32 0.0, %v1804
    %v1806 = vpop.f32.mrf.mxu0
    %v1807 = vadd.f32 0.0, %v1806
    %1808 = vmatmul.bf16.gmra.mxu0 %v802
    %v1809 = vpop.f32.mrf.mxu0
    %v1810 = vadd.f32 0.0, %v1809
    %v1811 = vpop.f32.mrf.mxu0
    %v1812 = vadd.f32 0.0, %v1811
    %1813 = vmatmul.bf16.gmra.mxu0 %v805
    %v1814 = vpop.f32.mrf.mxu0
    %v1815 = vadd.f32 0.0, %v1814
    %v1816 = vpop.f32.mrf.mxu0
    %v1817 = vadd.f32 0.0, %v1816
    %1818 = vdwg.mxu0
    %1819 = vmatpush.bf16.msra.mxu0 0
    %1820 = vmatpush.bf16.msra.mxu0 0
    %1821 = vmatpush.bf16.msra.mxu0 0
    %1822 = vmatpush.bf16.msra.mxu0 0
    %1823 = vmatpush.bf16.msra.mxu0 0
    %1824 = vmatpush.bf16.msra.mxu0 %v818
    %1825 = vmatpush.bf16.msra.mxu0 %v585
    %1826 = vmatpush.bf16.msra.mxu0 %v577
    %1827 = vmatmul.bf16.gmra.mxu0 %v616
    %v1828 = vpop.f32.mrf.mxu0
    %v1829 = vadd.f32 0.0, %v1828
    %v1830 = vpop.f32.mrf.mxu0
    %v1831 = vadd.f32 0.0, %v1830
    %1832 = vmatmul.bf16.gmra.mxu0 %v619
    %v1833 = vpop.f32.mrf.mxu0
    %v1834 = vadd.f32 0.0, %v1833
    %v1835 = vpop.f32.mrf.mxu0
    %v1836 = vadd.f32 0.0, %v1835
    %1837 = vmatmul.bf16.gmra.mxu0 %v622
    %v1838 = vpop.f32.mrf.mxu0
    %v1839 = vadd.f32 0.0, %v1838
    %v1840 = vpop.f32.mrf.mxu0
    %v1841 = vadd.f32 0.0, %v1840
    %1842 = vmatmul.bf16.gmra.mxu0 %v625
    %v1843 = vpop.f32.mrf.mxu0
    %v1844 = vadd.f32 0.0, %v1843
    %v1845 = vpop.f32.mrf.mxu0
    %v1846 = vadd.f32 0.0, %v1845
    %1847 = vmatmul.bf16.gmra.mxu0 %v628
    %v1848 = vpop.f32.mrf.mxu0
    %v1849 = vadd.f32 0.0, %v1848
    %v1850 = vpop.f32.mrf.mxu0
    %v1851 = vadd.f32 0.0, %v1850
    %1852 = vmatmul.bf16.gmra.mxu0 %v631
    %v1853 = vpop.f32.mrf.mxu0
    %v1854 = vadd.f32 0.0, %v1853
    %v1855 = vpop.f32.mrf.mxu0
    %v1856 = vadd.f32 0.0, %v1855
    %1857 = vmatmul.bf16.gmra.mxu0 %v634
    %v1858 = vpop.f32.mrf.mxu0
    %v1859 = vadd.f32 0.0, %v1858
    %v1860 = vpop.f32.mrf.mxu0
    %v1861 = vadd.f32 0.0, %v1860
    %1862 = vmatmul.bf16.gmra.mxu0 %v637
    %v1863 = vpop.f32.mrf.mxu0
    %v1864 = vadd.f32 0.0, %v1863
    %v1865 = vpop.f32.mrf.mxu0
    %v1866 = vadd.f32 0.0, %v1865
    %1867 = vmatmul.bf16.gmra.mxu0 %v640
    %v1868 = vpop.f32.mrf.mxu0
    %v1869 = vadd.f32 0.0, %v1868
    %v1870 = vpop.f32.mrf.mxu0
    %v1871 = vadd.f32 0.0, %v1870
    %1872 = vmatmul.bf16.gmra.mxu0 %v643
    %v1873 = vpop.f32.mrf.mxu0
    %v1874 = vadd.f32 0.0, %v1873
    %v1875 = vpop.f32.mrf.mxu0
    %v1876 = vadd.f32 0.0, %v1875
    %1877 = vmatmul.bf16.gmra.mxu0 %v646
    %v1878 = vpop.f32.mrf.mxu0
    %v1879 = vadd.f32 0.0, %v1878
    %v1880 = vpop.f32.mrf.mxu0
    %v1881 = vadd.f32 0.0, %v1880
    %1882 = vmatmul.bf16.gmra.mxu0 %v649
    %v1883 = vpop.f32.mrf.mxu0
    %v1884 = vadd.f32 0.0, %v1883
    %v1885 = vpop.f32.mrf.mxu0
    %v1886 = vadd.f32 0.0, %v1885
    %1887 = vmatmul.bf16.gmra.mxu0 %v652
    %v1888 = vpop.f32.mrf.mxu0
    %v1889 = vadd.f32 0.0, %v1888
    %v1890 = vpop.f32.mrf.mxu0
    %v1891 = vadd.f32 0.0, %v1890
    %1892 = vmatmul.bf16.gmra.mxu0 %v655
    %v1893 = vpop.f32.mrf.mxu0
    %v1894 = vadd.f32 0.0, %v1893
    %v1895 = vpop.f32.mrf.mxu0
    %v1896 = vadd.f32 0.0, %v1895
    %1897 = vmatmul.bf16.gmra.mxu0 %v658
    %v1898 = vpop.f32.mrf.mxu0
    %v1899 = vadd.f32 0.0, %v1898
    %v1900 = vpop.f32.mrf.mxu0
    %v1901 = vadd.f32 0.0, %v1900
    %1902 = vmatmul.bf16.gmra.mxu0 %v661
    %v1903 = vpop.f32.mrf.mxu0
    %v1904 = vadd.f32 0.0, %v1903
    %v1905 = vpop.f32.mrf.mxu0
    %v1906 = vadd.f32 0.0, %v1905
    %1907 = vmatmul.bf16.gmra.mxu0 %v664
    %v1908 = vpop.f32.mrf.mxu0
    %v1909 = vadd.f32 0.0, %v1908
    %v1910 = vpop.f32.mrf.mxu0
    %v1911 = vadd.f32 0.0, %v1910
    %1912 = vmatmul.bf16.gmra.mxu0 %v667
    %v1913 = vpop.f32.mrf.mxu0
    %v1914 = vadd.f32 0.0, %v1913
    %v1915 = vpop.f32.mrf.mxu0
    %v1916 = vadd.f32 0.0, %v1915
    %1917 = vmatmul.bf16.gmra.mxu0 %v670
    %v1918 = vpop.f32.mrf.mxu0
    %v1919 = vadd.f32 0.0, %v1918
    %v1920 = vpop.f32.mrf.mxu0
    %v1921 = vadd.f32 0.0, %v1920
    %1922 = vmatmul.bf16.gmra.mxu0 %v673
    %v1923 = vpop.f32.mrf.mxu0
    %v1924 = vadd.f32 0.0, %v1923
    %v1925 = vpop.f32.mrf.mxu0
    %v1926 = vadd.f32 0.0, %v1925
    %1927 = vmatmul.bf16.gmra.mxu0 %v676
    %v1928 = vpop.f32.mrf.mxu0
    %v1929 = vadd.f32 0.0, %v1928
    %v1930 = vpop.f32.mrf.mxu0
    %v1931 = vadd.f32 0.0, %v1930
    %1932 = vmatmul.bf16.gmra.mxu0 %v679
    %v1933 = vpop.f32.mrf.mxu0
    %v1934 = vadd.f32 0.0, %v1933
    %v1935 = vpop.f32.mrf.mxu0
    %v1936 = vadd.f32 0.0, %v1935
    %1937 = vmatmul.bf16.gmra.mxu0 %v682
    %v1938 = vpop.f32.mrf.mxu0
    %v1939 = vadd.f32 0.0, %v1938
    %v1940 = vpop.f32.mrf.mxu0
    %v1941 = vadd.f32 0.0, %v1940
    %1942 = vmatmul.bf16.gmra.mxu0 %v685
    %v1943 = vpop.f32.mrf.mxu0
    %v1944 = vadd.f32 0.0, %v1943
    %v1945 = vpop.f32.mrf.mxu0
    %v1946 = vadd.f32 0.0, %v1945
    %1947 = vmatmul.bf16.gmra.mxu0 %v688
    %v1948 = vpop.f32.mrf.mxu0
    %v1949 = vadd.f32 0.0, %v1948
    %v1950 = vpop.f32.mrf.mxu0
    %v1951 = vadd.f32 0.0, %v1950
    %1952 = vmatmul.bf16.gmra.mxu0 %v691
    %v1953 = vpop.f32.mrf.mxu0
    %v1954 = vadd.f32 0.0, %v1953
    %v1955 = vpop.f32.mrf.mxu0
    %v1956 = vadd.f32 0.0, %v1955
    %1957 = vmatmul.bf16.gmra.mxu0 %v694
    %v1958 = vpop.f32.mrf.mxu0
    %v1959 = vadd.f32 0.0, %v1958
    %v1960 = vpop.f32.mrf.mxu0
    %v1961 = vadd.f32 0.0, %v1960
    %1962 = vmatmul.bf16.gmra.mxu0 %v697
    %v1963 = vpop.f32.mrf.mxu0
    %v1964 = vadd.f32 0.0, %v1963
    %v1965 = vpop.f32.mrf.mxu0
    %v1966 = vadd.f32 0.0, %v1965
    %1967 = vmatmul.bf16.gmra.mxu0 %v700
    %v1968 = vpop.f32.mrf.mxu0
    %v1969 = vadd.f32 0.0, %v1968
    %v1970 = vpop.f32.mrf.mxu0
    %v1971 = vadd.f32 0.0, %v1970
    %1972 = vmatmul.bf16.gmra.mxu0 %v703
    %v1973 = vpop.f32.mrf.mxu0
    %v1974 = vadd.f32 0.0, %v1973
    %v1975 = vpop.f32.mrf.mxu0
    %v1976 = vadd.f32 0.0, %v1975
    %1977 = vmatmul.bf16.gmra.mxu0 %v706
    %v1978 = vpop.f32.mrf.mxu0
    %v1979 = vadd.f32 0.0, %v1978
    %v1980 = vpop.f32.mrf.mxu0
    %v1981 = vadd.f32 0.0, %v1980
    %1982 = vmatmul.bf16.gmra.mxu0 %v709
    %v1983 = vpop.f32.mrf.mxu0
    %v1984 = vadd.f32 0.0, %v1983
    %v1985 = vpop.f32.mrf.mxu0
    %v1986 = vadd.f32 0.0, %v1985
    %1987 = vmatmul.bf16.gmra.mxu0 %v712
    %v1988 = vpop.f32.mrf.mxu0
    %v1989 = vadd.f32 0.0, %v1988
    %v1990 = vpop.f32.mrf.mxu0
    %v1991 = vadd.f32 0.0, %v1990
    %1992 = vmatmul.bf16.gmra.mxu0 %v715
    %v1993 = vpop.f32.mrf.mxu0
    %v1994 = vadd.f32 0.0, %v1993
    %v1995 = vpop.f32.mrf.mxu0
    %v1996 = vadd.f32 0.0, %v1995
    %1997 = vmatmul.bf16.gmra.mxu0 %v718
    %v1998 = vpop.f32.mrf.mxu0
    %v1999 = vadd.f32 0.0, %v1998
    %v2000 = vpop.f32.mrf.mxu0
    %v2001 = vadd.f32 0.0, %v2000
    %2002 = vmatmul.bf16.gmra.mxu0 %v721
    %v2003 = vpop.f32.mrf.mxu0
    %v2004 = vadd.f32 0.0, %v2003
    %v2005 = vpop.f32.mrf.mxu0
    %v2006 = vadd.f32 0.0, %v2005
    %2007 = vmatmul.bf16.gmra.mxu0 %v724
    %v2008 = vpop.f32.mrf.mxu0
    %v2009 = vadd.f32 0.0, %v2008
    %v2010 = vpop.f32.mrf.mxu0
    %v2011 = vadd.f32 0.0, %v2010
    %2012 = vmatmul.bf16.gmra.mxu0 %v727
    %v2013 = vpop.f32.mrf.mxu0
    %v2014 = vadd.f32 0.0, %v2013
    %v2015 = vpop.f32.mrf.mxu0
    %v2016 = vadd.f32 0.0, %v2015
    %2017 = vmatmul.bf16.gmra.mxu0 %v730
    %v2018 = vpop.f32.mrf.mxu0
    %v2019 = vadd.f32 0.0, %v2018
    %v2020 = vpop.f32.mrf.mxu0
    %v2021 = vadd.f32 0.0, %v2020
    %2022 = vmatmul.bf16.gmra.mxu0 %v733
    %v2023 = vpop.f32.mrf.mxu0
    %v2024 = vadd.f32 0.0, %v2023
    %v2025 = vpop.f32.mrf.mxu0
    %v2026 = vadd.f32 0.0, %v2025
    %2027 = vmatmul.bf16.gmra.mxu0 %v736
    %v2028 = vpop.f32.mrf.mxu0
    %v2029 = vadd.f32 0.0, %v2028
    %v2030 = vpop.f32.mrf.mxu0
    %v2031 = vadd.f32 0.0, %v2030
    %2032 = vmatmul.bf16.gmra.mxu0 %v739
    %v2033 = vpop.f32.mrf.mxu0
    %v2034 = vadd.f32 0.0, %v2033
    %v2035 = vpop.f32.mrf.mxu0
    %v2036 = vadd.f32 0.0, %v2035
    %2037 = vmatmul.bf16.gmra.mxu0 %v742
    %v2038 = vpop.f32.mrf.mxu0
    %v2039 = vadd.f32 0.0, %v2038
    %v2040 = vpop.f32.mrf.mxu0
    %v2041 = vadd.f32 0.0, %v2040
    %2042 = vmatmul.bf16.gmra.mxu0 %v745
    %v2043 = vpop.f32.mrf.mxu0
    %v2044 = vadd.f32 0.0, %v2043
    %v2045 = vpop.f32.mrf.mxu0
    %v2046 = vadd.f32 0.0, %v2045
    %2047 = vmatmul.bf16.gmra.mxu0 %v748
    %v2048 = vpop.f32.mrf.mxu0
    %v2049 = vadd.f32 0.0, %v2048
    %v2050 = vpop.f32.mrf.mxu0
    %v2051 = vadd.f32 0.0, %v2050
    %2052 = vmatmul.bf16.gmra.mxu0 %v751
    %v2053 = vpop.f32.mrf.mxu0
    %v2054 = vadd.f32 0.0, %v2053
    %v2055 = vpop.f32.mrf.mxu0
    %v2056 = vadd.f32 0.0, %v2055
    %2057 = vmatmul.bf16.gmra.mxu0 %v754
    %v2058 = vpop.f32.mrf.mxu0
    %v2059 = vadd.f32 0.0, %v2058
    %v2060 = vpop.f32.mrf.mxu0
    %v2061 = vadd.f32 0.0, %v2060
    %2062 = vmatmul.bf16.gmra.mxu0 %v757
    %v2063 = vpop.f32.mrf.mxu0
    %v2064 = vadd.f32 0.0, %v2063
    %v2065 = vpop.f32.mrf.mxu0
    %v2066 = vadd.f32 0.0, %v2065
    %2067 = vmatmul.bf16.gmra.mxu0 %v760
    %v2068 = vpop.f32.mrf.mxu0
    %v2069 = vadd.f32 0.0, %v2068
    %v2070 = vpop.f32.mrf.mxu0
    %v2071 = vadd.f32 0.0, %v2070
    %2072 = vmatmul.bf16.gmra.mxu0 %v763
    %v2073 = vpop.f32.mrf.mxu0
    %v2074 = vadd.f32 0.0, %v2073
    %v2075 = vpop.f32.mrf.mxu0
    %v2076 = vadd.f32 0.0, %v2075
    %2077 = vmatmul.bf16.gmra.mxu0 %v766
    %v2078 = vpop.f32.mrf.mxu0
    %v2079 = vadd.f32 0.0, %v2078
    %v2080 = vpop.f32.mrf.mxu0
    %v2081 = vadd.f32 0.0, %v2080
    %2082 = vmatmul.bf16.gmra.mxu0 %v769
    %v2083 = vpop.f32.mrf.mxu0
    %v2084 = vadd.f32 0.0, %v2083
    %v2085 = vpop.f32.mrf.mxu0
    %v2086 = vadd.f32 0.0, %v2085
    %2087 = vmatmul.bf16.gmra.mxu0 %v772
    %v2088 = vpop.f32.mrf.mxu0
    %v2089 = vadd.f32 0.0, %v2088
    %v2090 = vpop.f32.mrf.mxu0
    %v2091 = vadd.f32 0.0, %v2090
    %2092 = vmatmul.bf16.gmra.mxu0 %v775
    %v2093 = vpop.f32.mrf.mxu0
    %v2094 = vadd.f32 0.0, %v2093
    %v2095 = vpop.f32.mrf.mxu0
    %v2096 = vadd.f32 0.0, %v2095
    %2097 = vmatmul.bf16.gmra.mxu0 %v778
    %v2098 = vpop.f32.mrf.mxu0
    %v2099 = vadd.f32 0.0, %v2098
    %v2100 = vpop.f32.mrf.mxu0
    %v2101 = vadd.f32 0.0, %v2100
    %2102 = vmatmul.bf16.gmra.mxu0 %v781
    %v2103 = vpop.f32.mrf.mxu0
    %v2104 = vadd.f32 0.0, %v2103
    %v2105 = vpop.f32.mrf.mxu0
    %v2106 = vadd.f32 0.0, %v2105
    %2107 = vmatmul.bf16.gmra.mxu0 %v784
    %v2108 = vpop.f32.mrf.mxu0
    %v2109 = vadd.f32 0.0, %v2108
    %v2110 = vpop.f32.mrf.mxu0
    %v2111 = vadd.f32 0.0, %v2110
    %2112 = vmatmul.bf16.gmra.mxu0 %v787
    %v2113 = vpop.f32.mrf.mxu0
    %v2114 = vadd.f32 0.0, %v2113
    %v2115 = vpop.f32.mrf.mxu0
    %v2116 = vadd.f32 0.0, %v2115
    %2117 = vmatmul.bf16.gmra.mxu0 %v790
    %v2118 = vpop.f32.mrf.mxu0
    %v2119 = vadd.f32 0.0, %v2118
    %v2120 = vpop.f32.mrf.mxu0
    %v2121 = vadd.f32 0.0, %v2120
    %2122 = vmatmul.bf16.gmra.mxu0 %v793
    %v2123 = vpop.f32.mrf.mxu0
    %v2124 = vadd.f32 0.0, %v2123
    %v2125 = vpop.f32.mrf.mxu0
    %v2126 = vadd.f32 0.0, %v2125
    %2127 = vmatmul.bf16.gmra.mxu0 %v796
    %v2128 = vpop.f32.mrf.mxu0
    %v2129 = vadd.f32 0.0, %v2128
    %v2130 = vpop.f32.mrf.mxu0
    %v2131 = vadd.f32 0.0, %v2130
    %2132 = vmatmul.bf16.gmra.mxu0 %v799
    %v2133 = vpop.f32.mrf.mxu0
    %v2134 = vadd.f32 0.0, %v2133
    %v2135 = vpop.f32.mrf.mxu0
    %v2136 = vadd.f32 0.0, %v2135
    %2137 = vmatmul.bf16.gmra.mxu0 %v802
    %v2138 = vpop.f32.mrf.mxu0
    %v2139 = vadd.f32 0.0, %v2138
    %v2140 = vpop.f32.mrf.mxu0
    %v2141 = vadd.f32 0.0, %v2140
    %2142 = vmatmul.bf16.gmra.mxu0 %v805
    %v2143 = vpop.f32.mrf.mxu0
    %v2144 = vadd.f32 0.0, %v2143
    %v2145 = vpop.f32.mrf.mxu0
    %v2146 = vadd.f32 0.0, %v2145
    %2147 = vdwg.mxu0
    %2148 = vmatpush.bf16.msra.mxu0 0
    %2149 = vmatpush.bf16.msra.mxu0 0
    %2150 = vmatpush.bf16.msra.mxu0 0
    %2151 = vmatpush.bf16.msra.mxu0 0
    %2152 = vmatpush.bf16.msra.mxu0 0
    %2153 = vmatpush.bf16.msra.mxu0 %v821
    %2154 = vmatpush.bf16.msra.mxu0 %v586
    %2155 = vmatpush.bf16.msra.mxu0 %v578
    %2156 = vmatmul.bf16.gmra.mxu0 %v616
    %v2157 = vpop.f32.mrf.mxu0
    %v2158 = vadd.f32 0.0, %v2157
    %v2159 = vpop.f32.mrf.mxu0
    %v2160 = vadd.f32 0.0, %v2159
    %2161 = vmatmul.bf16.gmra.mxu0 %v619
    %v2162 = vpop.f32.mrf.mxu0
    %v2163 = vadd.f32 0.0, %v2162
    %v2164 = vpop.f32.mrf.mxu0
    %v2165 = vadd.f32 0.0, %v2164
    %2166 = vmatmul.bf16.gmra.mxu0 %v622
    %v2167 = vpop.f32.mrf.mxu0
    %v2168 = vadd.f32 0.0, %v2167
    %v2169 = vpop.f32.mrf.mxu0
    %v2170 = vadd.f32 0.0, %v2169
    %2171 = vmatmul.bf16.gmra.mxu0 %v625
    %v2172 = vpop.f32.mrf.mxu0
    %v2173 = vadd.f32 0.0, %v2172
    %v2174 = vpop.f32.mrf.mxu0
    %v2175 = vadd.f32 0.0, %v2174
    %2176 = vmatmul.bf16.gmra.mxu0 %v628
    %v2177 = vpop.f32.mrf.mxu0
    %v2178 = vadd.f32 0.0, %v2177
    %v2179 = vpop.f32.mrf.mxu0
    %v2180 = vadd.f32 0.0, %v2179
    %2181 = vmatmul.bf16.gmra.mxu0 %v631
    %v2182 = vpop.f32.mrf.mxu0
    %v2183 = vadd.f32 0.0, %v2182
    %v2184 = vpop.f32.mrf.mxu0
    %v2185 = vadd.f32 0.0, %v2184
    %2186 = vmatmul.bf16.gmra.mxu0 %v634
    %v2187 = vpop.f32.mrf.mxu0
    %v2188 = vadd.f32 0.0, %v2187
    %v2189 = vpop.f32.mrf.mxu0
    %v2190 = vadd.f32 0.0, %v2189
    %2191 = vmatmul.bf16.gmra.mxu0 %v637
    %v2192 = vpop.f32.mrf.mxu0
    %v2193 = vadd.f32 0.0, %v2192
    %v2194 = vpop.f32.mrf.mxu0
    %v2195 = vadd.f32 0.0, %v2194
    %2196 = vmatmul.bf16.gmra.mxu0 %v640
    %v2197 = vpop.f32.mrf.mxu0
    %v2198 = vadd.f32 0.0, %v2197
    %v2199 = vpop.f32.mrf.mxu0
    %v2200 = vadd.f32 0.0, %v2199
    %2201 = vmatmul.bf16.gmra.mxu0 %v643
    %v2202 = vpop.f32.mrf.mxu0
    %v2203 = vadd.f32 0.0, %v2202
    %v2204 = vpop.f32.mrf.mxu0
    %v2205 = vadd.f32 0.0, %v2204
    %2206 = vmatmul.bf16.gmra.mxu0 %v646
    %v2207 = vpop.f32.mrf.mxu0
    %v2208 = vadd.f32 0.0, %v2207
    %v2209 = vpop.f32.mrf.mxu0
    %v2210 = vadd.f32 0.0, %v2209
    %2211 = vmatmul.bf16.gmra.mxu0 %v649
    %v2212 = vpop.f32.mrf.mxu0
    %v2213 = vadd.f32 0.0, %v2212
    %v2214 = vpop.f32.mrf.mxu0
    %v2215 = vadd.f32 0.0, %v2214
    %2216 = vmatmul.bf16.gmra.mxu0 %v652
    %v2217 = vpop.f32.mrf.mxu0
    %v2218 = vadd.f32 0.0, %v2217
    %v2219 = vpop.f32.mrf.mxu0
    %v2220 = vadd.f32 0.0, %v2219
    %2221 = vmatmul.bf16.gmra.mxu0 %v655
    %v2222 = vpop.f32.mrf.mxu0
    %v2223 = vadd.f32 0.0, %v2222
    %v2224 = vpop.f32.mrf.mxu0
    %v2225 = vadd.f32 0.0, %v2224
    %2226 = vmatmul.bf16.gmra.mxu0 %v658
    %v2227 = vpop.f32.mrf.mxu0
    %v2228 = vadd.f32 0.0, %v2227
    %v2229 = vpop.f32.mrf.mxu0
    %v2230 = vadd.f32 0.0, %v2229
    %2231 = vmatmul.bf16.gmra.mxu0 %v661
    %v2232 = vpop.f32.mrf.mxu0
    %v2233 = vadd.f32 0.0, %v2232
    %v2234 = vpop.f32.mrf.mxu0
    %v2235 = vadd.f32 0.0, %v2234
    %2236 = vmatmul.bf16.gmra.mxu0 %v664
    %v2237 = vpop.f32.mrf.mxu0
    %v2238 = vadd.f32 0.0, %v2237
    %v2239 = vpop.f32.mrf.mxu0
    %v2240 = vadd.f32 0.0, %v2239
    %2241 = vmatmul.bf16.gmra.mxu0 %v667
    %v2242 = vpop.f32.mrf.mxu0
    %v2243 = vadd.f32 0.0, %v2242
    %v2244 = vpop.f32.mrf.mxu0
    %v2245 = vadd.f32 0.0, %v2244
    %2246 = vmatmul.bf16.gmra.mxu0 %v670
    %v2247 = vpop.f32.mrf.mxu0
    %v2248 = vadd.f32 0.0, %v2247
    %v2249 = vpop.f32.mrf.mxu0
    %v2250 = vadd.f32 0.0, %v2249
    %2251 = vmatmul.bf16.gmra.mxu0 %v673
    %v2252 = vpop.f32.mrf.mxu0
    %v2253 = vadd.f32 0.0, %v2252
    %v2254 = vpop.f32.mrf.mxu0
    %v2255 = vadd.f32 0.0, %v2254
    %2256 = vmatmul.bf16.gmra.mxu0 %v676
    %v2257 = vpop.f32.mrf.mxu0
    %v2258 = vadd.f32 0.0, %v2257
    %v2259 = vpop.f32.mrf.mxu0
    %v2260 = vadd.f32 0.0, %v2259
    %2261 = vmatmul.bf16.gmra.mxu0 %v679
    %v2262 = vpop.f32.mrf.mxu0
    %v2263 = vadd.f32 0.0, %v2262
    %v2264 = vpop.f32.mrf.mxu0
    %v2265 = vadd.f32 0.0, %v2264
    %2266 = vmatmul.bf16.gmra.mxu0 %v682
    %v2267 = vpop.f32.mrf.mxu0
    %v2268 = vadd.f32 0.0, %v2267
    %v2269 = vpop.f32.mrf.mxu0
    %v2270 = vadd.f32 0.0, %v2269
    %2271 = vmatmul.bf16.gmra.mxu0 %v685
    %v2272 = vpop.f32.mrf.mxu0
    %v2273 = vadd.f32 0.0, %v2272
    %v2274 = vpop.f32.mrf.mxu0
    %v2275 = vadd.f32 0.0, %v2274
    %2276 = vmatmul.bf16.gmra.mxu0 %v688
    %v2277 = vpop.f32.mrf.mxu0
    %v2278 = vadd.f32 0.0, %v2277
    %v2279 = vpop.f32.mrf.mxu0
    %v2280 = vadd.f32 0.0, %v2279
    %2281 = vmatmul.bf16.gmra.mxu0 %v691
    %v2282 = vpop.f32.mrf.mxu0
    %v2283 = vadd.f32 0.0, %v2282
    %v2284 = vpop.f32.mrf.mxu0
    %v2285 = vadd.f32 0.0, %v2284
    %2286 = vmatmul.bf16.gmra.mxu0 %v694
    %v2287 = vpop.f32.mrf.mxu0
    %v2288 = vadd.f32 0.0, %v2287
    %v2289 = vpop.f32.mrf.mxu0
    %v2290 = vadd.f32 0.0, %v2289
    %2291 = vmatmul.bf16.gmra.mxu0 %v697
    %v2292 = vpop.f32.mrf.mxu0
    %v2293 = vadd.f32 0.0, %v2292
    %v2294 = vpop.f32.mrf.mxu0
    %v2295 = vadd.f32 0.0, %v2294
    %2296 = vmatmul.bf16.gmra.mxu0 %v700
    %v2297 = vpop.f32.mrf.mxu0
    %v2298 = vadd.f32 0.0, %v2297
    %v2299 = vpop.f32.mrf.mxu0
    %v2300 = vadd.f32 0.0, %v2299
    %2301 = vmatmul.bf16.gmra.mxu0 %v703
    %v2302 = vpop.f32.mrf.mxu0
    %v2303 = vadd.f32 0.0, %v2302
    %v2304 = vpop.f32.mrf.mxu0
    %v2305 = vadd.f32 0.0, %v2304
    %2306 = vmatmul.bf16.gmra.mxu0 %v706
    %v2307 = vpop.f32.mrf.mxu0
    %v2308 = vadd.f32 0.0, %v2307
    %v2309 = vpop.f32.mrf.mxu0
    %v2310 = vadd.f32 0.0, %v2309
    %2311 = vmatmul.bf16.gmra.mxu0 %v709
    %v2312 = vpop.f32.mrf.mxu0
    %v2313 = vadd.f32 0.0, %v2312
    %v2314 = vpop.f32.mrf.mxu0
    %v2315 = vadd.f32 0.0, %v2314
    %2316 = vmatmul.bf16.gmra.mxu0 %v712
    %v2317 = vpop.f32.mrf.mxu0
    %v2318 = vadd.f32 0.0, %v2317
    %v2319 = vpop.f32.mrf.mxu0
    %v2320 = vadd.f32 0.0, %v2319
    %2321 = vmatmul.bf16.gmra.mxu0 %v715
    %v2322 = vpop.f32.mrf.mxu0
    %v2323 = vadd.f32 0.0, %v2322
    %v2324 = vpop.f32.mrf.mxu0
    %v2325 = vadd.f32 0.0, %v2324
    %2326 = vmatmul.bf16.gmra.mxu0 %v718
    %v2327 = vpop.f32.mrf.mxu0
    %v2328 = vadd.f32 0.0, %v2327
    %v2329 = vpop.f32.mrf.mxu0
    %v2330 = vadd.f32 0.0, %v2329
    %2331 = vmatmul.bf16.gmra.mxu0 %v721
    %v2332 = vpop.f32.mrf.mxu0
    %v2333 = vadd.f32 0.0, %v2332
    %v2334 = vpop.f32.mrf.mxu0
    %v2335 = vadd.f32 0.0, %v2334
    %2336 = vmatmul.bf16.gmra.mxu0 %v724
    %v2337 = vpop.f32.mrf.mxu0
    %v2338 = vadd.f32 0.0, %v2337
    %v2339 = vpop.f32.mrf.mxu0
    %v2340 = vadd.f32 0.0, %v2339
    %2341 = vmatmul.bf16.gmra.mxu0 %v727
    %v2342 = vpop.f32.mrf.mxu0
    %v2343 = vadd.f32 0.0, %v2342
    %v2344 = vpop.f32.mrf.mxu0
    %v2345 = vadd.f32 0.0, %v2344
    %2346 = vmatmul.bf16.gmra.mxu0 %v730
    %v2347 = vpop.f32.mrf.mxu0
    %v2348 = vadd.f32 0.0, %v2347
    %v2349 = vpop.f32.mrf.mxu0
    %v2350 = vadd.f32 0.0, %v2349
    %2351 = vmatmul.bf16.gmra.mxu0 %v733
    %v2352 = vpop.f32.mrf.mxu0
    %v2353 = vadd.f32 0.0, %v2352
    %v2354 = vpop.f32.mrf.mxu0
    %v2355 = vadd.f32 0.0, %v2354
    %2356 = vmatmul.bf16.gmra.mxu0 %v736
    %v2357 = vpop.f32.mrf.mxu0
    %v2358 = vadd.f32 0.0, %v2357
    %v2359 = vpop.f32.mrf.mxu0
    %v2360 = vadd.f32 0.0, %v2359
    %2361 = vmatmul.bf16.gmra.mxu0 %v739
    %v2362 = vpop.f32.mrf.mxu0
    %v2363 = vadd.f32 0.0, %v2362
    %v2364 = vpop.f32.mrf.mxu0
    %v2365 = vadd.f32 0.0, %v2364
    %2366 = vmatmul.bf16.gmra.mxu0 %v742
    %v2367 = vpop.f32.mrf.mxu0
    %v2368 = vadd.f32 0.0, %v2367
    %v2369 = vpop.f32.mrf.mxu0
    %v2370 = vadd.f32 0.0, %v2369
    %2371 = vmatmul.bf16.gmra.mxu0 %v745
    %v2372 = vpop.f32.mrf.mxu0
    %v2373 = vadd.f32 0.0, %v2372
    %v2374 = vpop.f32.mrf.mxu0
    %v2375 = vadd.f32 0.0, %v2374
    %2376 = vmatmul.bf16.gmra.mxu0 %v748
    %v2377 = vpop.f32.mrf.mxu0
    %v2378 = vadd.f32 0.0, %v2377
    %v2379 = vpop.f32.mrf.mxu0
    %v2380 = vadd.f32 0.0, %v2379
    %2381 = vmatmul.bf16.gmra.mxu0 %v751
    %v2382 = vpop.f32.mrf.mxu0
    %v2383 = vadd.f32 0.0, %v2382
    %v2384 = vpop.f32.mrf.mxu0
    %v2385 = vadd.f32 0.0, %v2384
    %2386 = vmatmul.bf16.gmra.mxu0 %v754
    %v2387 = vpop.f32.mrf.mxu0
    %v2388 = vadd.f32 0.0, %v2387
    %v2389 = vpop.f32.mrf.mxu0
    %v2390 = vadd.f32 0.0, %v2389
    %2391 = vmatmul.bf16.gmra.mxu0 %v757
    %v2392 = vpop.f32.mrf.mxu0
    %v2393 = vadd.f32 0.0, %v2392
    %v2394 = vpop.f32.mrf.mxu0
    %v2395 = vadd.f32 0.0, %v2394
    %2396 = vmatmul.bf16.gmra.mxu0 %v760
    %v2397 = vpop.f32.mrf.mxu0
    %v2398 = vadd.f32 0.0, %v2397
    %v2399 = vpop.f32.mrf.mxu0
    %v2400 = vadd.f32 0.0, %v2399
    %2401 = vmatmul.bf16.gmra.mxu0 %v763
    %v2402 = vpop.f32.mrf.mxu0
    %v2403 = vadd.f32 0.0, %v2402
    %v2404 = vpop.f32.mrf.mxu0
    %v2405 = vadd.f32 0.0, %v2404
    %2406 = vmatmul.bf16.gmra.mxu0 %v766
    %v2407 = vpop.f32.mrf.mxu0
    %v2408 = vadd.f32 0.0, %v2407
    %v2409 = vpop.f32.mrf.mxu0
    %v2410 = vadd.f32 0.0, %v2409
    %2411 = vmatmul.bf16.gmra.mxu0 %v769
    %v2412 = vpop.f32.mrf.mxu0
    %v2413 = vadd.f32 0.0, %v2412
    %v2414 = vpop.f32.mrf.mxu0
    %v2415 = vadd.f32 0.0, %v2414
    %2416 = vmatmul.bf16.gmra.mxu0 %v772
    %v2417 = vpop.f32.mrf.mxu0
    %v2418 = vadd.f32 0.0, %v2417
    %v2419 = vpop.f32.mrf.mxu0
    %v2420 = vadd.f32 0.0, %v2419
    %2421 = vmatmul.bf16.gmra.mxu0 %v775
    %v2422 = vpop.f32.mrf.mxu0
    %v2423 = vadd.f32 0.0, %v2422
    %v2424 = vpop.f32.mrf.mxu0
    %v2425 = vadd.f32 0.0, %v2424
    %2426 = vmatmul.bf16.gmra.mxu0 %v778
    %v2427 = vpop.f32.mrf.mxu0
    %v2428 = vadd.f32 0.0, %v2427
    %v2429 = vpop.f32.mrf.mxu0
    %v2430 = vadd.f32 0.0, %v2429
    %2431 = vmatmul.bf16.gmra.mxu0 %v781
    %v2432 = vpop.f32.mrf.mxu0
    %v2433 = vadd.f32 0.0, %v2432
    %v2434 = vpop.f32.mrf.mxu0
    %v2435 = vadd.f32 0.0, %v2434
    %2436 = vmatmul.bf16.gmra.mxu0 %v784
    %v2437 = vpop.f32.mrf.mxu0
    %v2438 = vadd.f32 0.0, %v2437
    %v2439 = vpop.f32.mrf.mxu0
    %v2440 = vadd.f32 0.0, %v2439
    %2441 = vmatmul.bf16.gmra.mxu0 %v787
    %v2442 = vpop.f32.mrf.mxu0
    %v2443 = vadd.f32 0.0, %v2442
    %v2444 = vpop.f32.mrf.mxu0
    %v2445 = vadd.f32 0.0, %v2444
    %2446 = vmatmul.bf16.gmra.mxu0 %v790
    %v2447 = vpop.f32.mrf.mxu0
    %v2448 = vadd.f32 0.0, %v2447
    %v2449 = vpop.f32.mrf.mxu0
    %v2450 = vadd.f32 0.0, %v2449
    %2451 = vmatmul.bf16.gmra.mxu0 %v793
    %v2452 = vpop.f32.mrf.mxu0
    %v2453 = vadd.f32 0.0, %v2452
    %v2454 = vpop.f32.mrf.mxu0
    %v2455 = vadd.f32 0.0, %v2454
    %2456 = vmatmul.bf16.gmra.mxu0 %v796
    %v2457 = vpop.f32.mrf.mxu0
    %v2458 = vadd.f32 0.0, %v2457
    %v2459 = vpop.f32.mrf.mxu0
    %v2460 = vadd.f32 0.0, %v2459
    %2461 = vmatmul.bf16.gmra.mxu0 %v799
    %v2462 = vpop.f32.mrf.mxu0
    %v2463 = vadd.f32 0.0, %v2462
    %v2464 = vpop.f32.mrf.mxu0
    %v2465 = vadd.f32 0.0, %v2464
    %2466 = vmatmul.bf16.gmra.mxu0 %v802
    %v2467 = vpop.f32.mrf.mxu0
    %v2468 = vadd.f32 0.0, %v2467
    %v2469 = vpop.f32.mrf.mxu0
    %v2470 = vadd.f32 0.0, %v2469
    %2471 = vmatmul.bf16.gmra.mxu0 %v805
    %v2472 = vpop.f32.mrf.mxu0
    %v2473 = vadd.f32 0.0, %v2472
    %v2474 = vpop.f32.mrf.mxu0
    %v2475 = vadd.f32 0.0, %v2474
    %2476 = vdwg.mxu0
    %2477 = vmatpush.bf16.msra.mxu0 0
    %2478 = vmatpush.bf16.msra.mxu0 0
    %2479 = vmatpush.bf16.msra.mxu0 0
    %2480 = vmatpush.bf16.msra.mxu0 0
    %2481 = vmatpush.bf16.msra.mxu0 0
    %2482 = vmatpush.bf16.msra.mxu0 %v824
    %2483 = vmatpush.bf16.msra.mxu0 %v587
    %2484 = vmatpush.bf16.msra.mxu0 %v579
    %2485 = vmatmul.bf16.gmra.mxu0 %v616
    %v2486 = vpop.f32.mrf.mxu0
    %v2487 = vadd.f32 0.0, %v2486
    %v2488 = vpop.f32.mrf.mxu0
    %v2489 = vadd.f32 0.0, %v2488
    %2490 = vmatmul.bf16.gmra.mxu0 %v619
    %v2491 = vpop.f32.mrf.mxu0
    %v2492 = vadd.f32 0.0, %v2491
    %v2493 = vpop.f32.mrf.mxu0
    %v2494 = vadd.f32 0.0, %v2493
    %2495 = vmatmul.bf16.gmra.mxu0 %v622
    %v2496 = vpop.f32.mrf.mxu0
    %v2497 = vadd.f32 0.0, %v2496
    %v2498 = vpop.f32.mrf.mxu0
    %v2499 = vadd.f32 0.0, %v2498
    %2500 = vmatmul.bf16.gmra.mxu0 %v625
    %v2501 = vpop.f32.mrf.mxu0
    %v2502 = vadd.f32 0.0, %v2501
    %v2503 = vpop.f32.mrf.mxu0
    %v2504 = vadd.f32 0.0, %v2503
    %2505 = vmatmul.bf16.gmra.mxu0 %v628
    %v2506 = vpop.f32.mrf.mxu0
    %v2507 = vadd.f32 0.0, %v2506
    %v2508 = vpop.f32.mrf.mxu0
    %v2509 = vadd.f32 0.0, %v2508
    %2510 = vmatmul.bf16.gmra.mxu0 %v631
    %v2511 = vpop.f32.mrf.mxu0
    %v2512 = vadd.f32 0.0, %v2511
    %v2513 = vpop.f32.mrf.mxu0
    %v2514 = vadd.f32 0.0, %v2513
    %2515 = vmatmul.bf16.gmra.mxu0 %v634
    %v2516 = vpop.f32.mrf.mxu0
    %v2517 = vadd.f32 0.0, %v2516
    %v2518 = vpop.f32.mrf.mxu0
    %v2519 = vadd.f32 0.0, %v2518
    %2520 = vmatmul.bf16.gmra.mxu0 %v637
    %v2521 = vpop.f32.mrf.mxu0
    %v2522 = vadd.f32 0.0, %v2521
    %v2523 = vpop.f32.mrf.mxu0
    %v2524 = vadd.f32 0.0, %v2523
    %2525 = vmatmul.bf16.gmra.mxu0 %v640
    %v2526 = vpop.f32.mrf.mxu0
    %v2527 = vadd.f32 0.0, %v2526
    %v2528 = vpop.f32.mrf.mxu0
    %v2529 = vadd.f32 0.0, %v2528
    %2530 = vmatmul.bf16.gmra.mxu0 %v643
    %v2531 = vpop.f32.mrf.mxu0
    %v2532 = vadd.f32 0.0, %v2531
    %v2533 = vpop.f32.mrf.mxu0
    %v2534 = vadd.f32 0.0, %v2533
    %2535 = vmatmul.bf16.gmra.mxu0 %v646
    %v2536 = vpop.f32.mrf.mxu0
    %v2537 = vadd.f32 0.0, %v2536
    %v2538 = vpop.f32.mrf.mxu0
    %v2539 = vadd.f32 0.0, %v2538
    %2540 = vmatmul.bf16.gmra.mxu0 %v649
    %v2541 = vpop.f32.mrf.mxu0
    %v2542 = vadd.f32 0.0, %v2541
    %v2543 = vpop.f32.mrf.mxu0
    %v2544 = vadd.f32 0.0, %v2543
    %2545 = vmatmul.bf16.gmra.mxu0 %v652
    %v2546 = vpop.f32.mrf.mxu0
    %v2547 = vadd.f32 0.0, %v2546
    %v2548 = vpop.f32.mrf.mxu0
    %v2549 = vadd.f32 0.0, %v2548
    %2550 = vmatmul.bf16.gmra.mxu0 %v655
    %v2551 = vpop.f32.mrf.mxu0
    %v2552 = vadd.f32 0.0, %v2551
    %v2553 = vpop.f32.mrf.mxu0
    %v2554 = vadd.f32 0.0, %v2553
    %2555 = vmatmul.bf16.gmra.mxu0 %v658
    %v2556 = vpop.f32.mrf.mxu0
    %v2557 = vadd.f32 0.0, %v2556
    %v2558 = vpop.f32.mrf.mxu0
    %v2559 = vadd.f32 0.0, %v2558
    %2560 = vmatmul.bf16.gmra.mxu0 %v661
    %v2561 = vpop.f32.mrf.mxu0
    %v2562 = vadd.f32 0.0, %v2561
    %v2563 = vpop.f32.mrf.mxu0
    %v2564 = vadd.f32 0.0, %v2563
    %2565 = vmatmul.bf16.gmra.mxu0 %v664
    %v2566 = vpop.f32.mrf.mxu0
    %v2567 = vadd.f32 0.0, %v2566
    %v2568 = vpop.f32.mrf.mxu0
    %v2569 = vadd.f32 0.0, %v2568
    %2570 = vmatmul.bf16.gmra.mxu0 %v667
    %v2571 = vpop.f32.mrf.mxu0
    %v2572 = vadd.f32 0.0, %v2571
    %v2573 = vpop.f32.mrf.mxu0
    %v2574 = vadd.f32 0.0, %v2573
    %2575 = vmatmul.bf16.gmra.mxu0 %v670
    %v2576 = vpop.f32.mrf.mxu0
    %v2577 = vadd.f32 0.0, %v2576
    %v2578 = vpop.f32.mrf.mxu0
    %v2579 = vadd.f32 0.0, %v2578
    %2580 = vmatmul.bf16.gmra.mxu0 %v673
    %v2581 = vpop.f32.mrf.mxu0
    %v2582 = vadd.f32 0.0, %v2581
    %v2583 = vpop.f32.mrf.mxu0
    %v2584 = vadd.f32 0.0, %v2583
    %2585 = vmatmul.bf16.gmra.mxu0 %v676
    %v2586 = vpop.f32.mrf.mxu0
    %v2587 = vadd.f32 0.0, %v2586
    %v2588 = vpop.f32.mrf.mxu0
    %v2589 = vadd.f32 0.0, %v2588
    %2590 = vmatmul.bf16.gmra.mxu0 %v679
    %v2591 = vpop.f32.mrf.mxu0
    %v2592 = vadd.f32 0.0, %v2591
    %v2593 = vpop.f32.mrf.mxu0
    %v2594 = vadd.f32 0.0, %v2593
    %2595 = vmatmul.bf16.gmra.mxu0 %v682
    %v2596 = vpop.f32.mrf.mxu0
    %v2597 = vadd.f32 0.0, %v2596
    %v2598 = vpop.f32.mrf.mxu0
    %v2599 = vadd.f32 0.0, %v2598
    %2600 = vmatmul.bf16.gmra.mxu0 %v685
    %v2601 = vpop.f32.mrf.mxu0
    %v2602 = vadd.f32 0.0, %v2601
    %v2603 = vpop.f32.mrf.mxu0
    %v2604 = vadd.f32 0.0, %v2603
    %2605 = vmatmul.bf16.gmra.mxu0 %v688
    %v2606 = vpop.f32.mrf.mxu0
    %v2607 = vadd.f32 0.0, %v2606
    %v2608 = vpop.f32.mrf.mxu0
    %v2609 = vadd.f32 0.0, %v2608
    %2610 = vmatmul.bf16.gmra.mxu0 %v691
    %v2611 = vpop.f32.mrf.mxu0
    %v2612 = vadd.f32 0.0, %v2611
    %v2613 = vpop.f32.mrf.mxu0
    %v2614 = vadd.f32 0.0, %v2613
    %2615 = vmatmul.bf16.gmra.mxu0 %v694
    %v2616 = vpop.f32.mrf.mxu0
    %v2617 = vadd.f32 0.0, %v2616
    %v2618 = vpop.f32.mrf.mxu0
    %v2619 = vadd.f32 0.0, %v2618
    %2620 = vmatmul.bf16.gmra.mxu0 %v697
    %v2621 = vpop.f32.mrf.mxu0
    %v2622 = vadd.f32 0.0, %v2621
    %v2623 = vpop.f32.mrf.mxu0
    %v2624 = vadd.f32 0.0, %v2623
    %2625 = vmatmul.bf16.gmra.mxu0 %v700
    %v2626 = vpop.f32.mrf.mxu0
    %v2627 = vadd.f32 0.0, %v2626
    %v2628 = vpop.f32.mrf.mxu0
    %v2629 = vadd.f32 0.0, %v2628
    %2630 = vmatmul.bf16.gmra.mxu0 %v703
    %v2631 = vpop.f32.mrf.mxu0
    %v2632 = vadd.f32 0.0, %v2631
    %v2633 = vpop.f32.mrf.mxu0
    %v2634 = vadd.f32 0.0, %v2633
    %2635 = vmatmul.bf16.gmra.mxu0 %v706
    %v2636 = vpop.f32.mrf.mxu0
    %v2637 = vadd.f32 0.0, %v2636
    %v2638 = vpop.f32.mrf.mxu0
    %v2639 = vadd.f32 0.0, %v2638
    %2640 = vmatmul.bf16.gmra.mxu0 %v709
    %v2641 = vpop.f32.mrf.mxu0
    %v2642 = vadd.f32 0.0, %v2641
    %v2643 = vpop.f32.mrf.mxu0
    %v2644 = vadd.f32 0.0, %v2643
    %2645 = vmatmul.bf16.gmra.mxu0 %v712
    %v2646 = vpop.f32.mrf.mxu0
    %v2647 = vadd.f32 0.0, %v2646
    %v2648 = vpop.f32.mrf.mxu0
    %v2649 = vadd.f32 0.0, %v2648
    %2650 = vmatmul.bf16.gmra.mxu0 %v715
    %v2651 = vpop.f32.mrf.mxu0
    %v2652 = vadd.f32 0.0, %v2651
    %v2653 = vpop.f32.mrf.mxu0
    %v2654 = vadd.f32 0.0, %v2653
    %2655 = vmatmul.bf16.gmra.mxu0 %v718
    %v2656 = vpop.f32.mrf.mxu0
    %v2657 = vadd.f32 0.0, %v2656
    %v2658 = vpop.f32.mrf.mxu0
    %v2659 = vadd.f32 0.0, %v2658
    %2660 = vmatmul.bf16.gmra.mxu0 %v721
    %v2661 = vpop.f32.mrf.mxu0
    %v2662 = vadd.f32 0.0, %v2661
    %v2663 = vpop.f32.mrf.mxu0
    %v2664 = vadd.f32 0.0, %v2663
    %2665 = vmatmul.bf16.gmra.mxu0 %v724
    %v2666 = vpop.f32.mrf.mxu0
    %v2667 = vadd.f32 0.0, %v2666
    %v2668 = vpop.f32.mrf.mxu0
    %v2669 = vadd.f32 0.0, %v2668
    %2670 = vmatmul.bf16.gmra.mxu0 %v727
    %v2671 = vpop.f32.mrf.mxu0
    %v2672 = vadd.f32 0.0, %v2671
    %v2673 = vpop.f32.mrf.mxu0
    %v2674 = vadd.f32 0.0, %v2673
    %2675 = vmatmul.bf16.gmra.mxu0 %v730
    %v2676 = vpop.f32.mrf.mxu0
    %v2677 = vadd.f32 0.0, %v2676
    %v2678 = vpop.f32.mrf.mxu0
    %v2679 = vadd.f32 0.0, %v2678
    %2680 = vmatmul.bf16.gmra.mxu0 %v733
    %v2681 = vpop.f32.mrf.mxu0
    %v2682 = vadd.f32 0.0, %v2681
    %v2683 = vpop.f32.mrf.mxu0
    %v2684 = vadd.f32 0.0, %v2683
    %2685 = vmatmul.bf16.gmra.mxu0 %v736
    %v2686 = vpop.f32.mrf.mxu0
    %v2687 = vadd.f32 0.0, %v2686
    %v2688 = vpop.f32.mrf.mxu0
    %v2689 = vadd.f32 0.0, %v2688
    %2690 = vmatmul.bf16.gmra.mxu0 %v739
    %v2691 = vpop.f32.mrf.mxu0
    %v2692 = vadd.f32 0.0, %v2691
    %v2693 = vpop.f32.mrf.mxu0
    %v2694 = vadd.f32 0.0, %v2693
    %2695 = vmatmul.bf16.gmra.mxu0 %v742
    %v2696 = vpop.f32.mrf.mxu0
    %v2697 = vadd.f32 0.0, %v2696
    %v2698 = vpop.f32.mrf.mxu0
    %v2699 = vadd.f32 0.0, %v2698
    %2700 = vmatmul.bf16.gmra.mxu0 %v745
    %v2701 = vpop.f32.mrf.mxu0
    %v2702 = vadd.f32 0.0, %v2701
    %v2703 = vpop.f32.mrf.mxu0
    %v2704 = vadd.f32 0.0, %v2703
    %2705 = vmatmul.bf16.gmra.mxu0 %v748
    %v2706 = vpop.f32.mrf.mxu0
    %v2707 = vadd.f32 0.0, %v2706
    %v2708 = vpop.f32.mrf.mxu0
    %v2709 = vadd.f32 0.0, %v2708
    %2710 = vmatmul.bf16.gmra.mxu0 %v751
    %v2711 = vpop.f32.mrf.mxu0
    %v2712 = vadd.f32 0.0, %v2711
    %v2713 = vpop.f32.mrf.mxu0
    %v2714 = vadd.f32 0.0, %v2713
    %2715 = vmatmul.bf16.gmra.mxu0 %v754
    %v2716 = vpop.f32.mrf.mxu0
    %v2717 = vadd.f32 0.0, %v2716
    %v2718 = vpop.f32.mrf.mxu0
    %v2719 = vadd.f32 0.0, %v2718
    %2720 = vmatmul.bf16.gmra.mxu0 %v757
    %v2721 = vpop.f32.mrf.mxu0
    %v2722 = vadd.f32 0.0, %v2721
    %v2723 = vpop.f32.mrf.mxu0
    %v2724 = vadd.f32 0.0, %v2723
    %2725 = vmatmul.bf16.gmra.mxu0 %v760
    %v2726 = vpop.f32.mrf.mxu0
    %v2727 = vadd.f32 0.0, %v2726
    %v2728 = vpop.f32.mrf.mxu0
    %v2729 = vadd.f32 0.0, %v2728
    %2730 = vmatmul.bf16.gmra.mxu0 %v763
    %v2731 = vpop.f32.mrf.mxu0
    %v2732 = vadd.f32 0.0, %v2731
    %v2733 = vpop.f32.mrf.mxu0
    %v2734 = vadd.f32 0.0, %v2733
    %2735 = vmatmul.bf16.gmra.mxu0 %v766
    %v2736 = vpop.f32.mrf.mxu0
    %v2737 = vadd.f32 0.0, %v2736
    %v2738 = vpop.f32.mrf.mxu0
    %v2739 = vadd.f32 0.0, %v2738
    %2740 = vmatmul.bf16.gmra.mxu0 %v769
    %v2741 = vpop.f32.mrf.mxu0
    %v2742 = vadd.f32 0.0, %v2741
    %v2743 = vpop.f32.mrf.mxu0
    %v2744 = vadd.f32 0.0, %v2743
    %2745 = vmatmul.bf16.gmra.mxu0 %v772
    %v2746 = vpop.f32.mrf.mxu0
    %v2747 = vadd.f32 0.0, %v2746
    %v2748 = vpop.f32.mrf.mxu0
    %v2749 = vadd.f32 0.0, %v2748
    %2750 = vmatmul.bf16.gmra.mxu0 %v775
    %v2751 = vpop.f32.mrf.mxu0
    %v2752 = vadd.f32 0.0, %v2751
    %v2753 = vpop.f32.mrf.mxu0
    %v2754 = vadd.f32 0.0, %v2753
    %2755 = vmatmul.bf16.gmra.mxu0 %v778
    %v2756 = vpop.f32.mrf.mxu0
    %v2757 = vadd.f32 0.0, %v2756
    %v2758 = vpop.f32.mrf.mxu0
    %v2759 = vadd.f32 0.0, %v2758
    %2760 = vmatmul.bf16.gmra.mxu0 %v781
    %v2761 = vpop.f32.mrf.mxu0
    %v2762 = vadd.f32 0.0, %v2761
    %v2763 = vpop.f32.mrf.mxu0
    %v2764 = vadd.f32 0.0, %v2763
    %2765 = vmatmul.bf16.gmra.mxu0 %v784
    %v2766 = vpop.f32.mrf.mxu0
    %v2767 = vadd.f32 0.0, %v2766
    %v2768 = vpop.f32.mrf.mxu0
    %v2769 = vadd.f32 0.0, %v2768
    %2770 = vmatmul.bf16.gmra.mxu0 %v787
    %v2771 = vpop.f32.mrf.mxu0
    %v2772 = vadd.f32 0.0, %v2771
    %v2773 = vpop.f32.mrf.mxu0
    %v2774 = vadd.f32 0.0, %v2773
    %2775 = vmatmul.bf16.gmra.mxu0 %v790
    %v2776 = vpop.f32.mrf.mxu0
    %v2777 = vadd.f32 0.0, %v2776
    %v2778 = vpop.f32.mrf.mxu0
    %v2779 = vadd.f32 0.0, %v2778
    %2780 = vmatmul.bf16.gmra.mxu0 %v793
    %v2781 = vpop.f32.mrf.mxu0
    %v2782 = vadd.f32 0.0, %v2781
    %v2783 = vpop.f32.mrf.mxu0
    %v2784 = vadd.f32 0.0, %v2783
    %2785 = vmatmul.bf16.gmra.mxu0 %v796
    %v2786 = vpop.f32.mrf.mxu0
    %v2787 = vadd.f32 0.0, %v2786
    %v2788 = vpop.f32.mrf.mxu0
    %v2789 = vadd.f32 0.0, %v2788
    %2790 = vmatmul.bf16.gmra.mxu0 %v799
    %v2791 = vpop.f32.mrf.mxu0
    %v2792 = vadd.f32 0.0, %v2791
    %v2793 = vpop.f32.mrf.mxu0
    %v2794 = vadd.f32 0.0, %v2793
    %2795 = vmatmul.bf16.gmra.mxu0 %v802
    %v2796 = vpop.f32.mrf.mxu0
    %v2797 = vadd.f32 0.0, %v2796
    %v2798 = vpop.f32.mrf.mxu0
    %v2799 = vadd.f32 0.0, %v2798
    %2800 = vmatmul.bf16.gmra.mxu0 %v805
    %v2801 = vpop.f32.mrf.mxu0
    %v2802 = vadd.f32 0.0, %v2801
    %v2803 = vpop.f32.mrf.mxu0
    %v2804 = vadd.f32 0.0, %v2803
    %2805 = vdwg.mxu0
    %2806 = vmatpush.bf16.msra.mxu0 0
    %2807 = vmatpush.bf16.msra.mxu0 0
    %2808 = vmatpush.bf16.msra.mxu0 0
    %2809 = vmatpush.bf16.msra.mxu0 0
    %2810 = vmatpush.bf16.msra.mxu0 0
    %2811 = vmatpush.bf16.msra.mxu0 %v827
    %2812 = vmatpush.bf16.msra.mxu0 %v588
    %2813 = vmatpush.bf16.msra.mxu0 %v580
    %2814 = vmatmul.bf16.gmra.mxu0 %v616
    %v2815 = vpop.f32.mrf.mxu0
    %v2816 = vadd.f32 0.0, %v2815
    %v2817 = vpop.f32.mrf.mxu0
    %v2818 = vadd.f32 0.0, %v2817
    %2819 = vmatmul.bf16.gmra.mxu0 %v619
    %v2820 = vpop.f32.mrf.mxu0
    %v2821 = vadd.f32 0.0, %v2820
    %v2822 = vpop.f32.mrf.mxu0
    %v2823 = vadd.f32 0.0, %v2822
    %2824 = vmatmul.bf16.gmra.mxu0 %v622
    %v2825 = vpop.f32.mrf.mxu0
    %v2826 = vadd.f32 0.0, %v2825
    %v2827 = vpop.f32.mrf.mxu0
    %v2828 = vadd.f32 0.0, %v2827
    %2829 = vmatmul.bf16.gmra.mxu0 %v625
    %v2830 = vpop.f32.mrf.mxu0
    %v2831 = vadd.f32 0.0, %v2830
    %v2832 = vpop.f32.mrf.mxu0
    %v2833 = vadd.f32 0.0, %v2832
    %2834 = vmatmul.bf16.gmra.mxu0 %v628
    %v2835 = vpop.f32.mrf.mxu0
    %v2836 = vadd.f32 0.0, %v2835
    %v2837 = vpop.f32.mrf.mxu0
    %v2838 = vadd.f32 0.0, %v2837
    %2839 = vmatmul.bf16.gmra.mxu0 %v631
    %v2840 = vpop.f32.mrf.mxu0
    %v2841 = vadd.f32 0.0, %v2840
    %v2842 = vpop.f32.mrf.mxu0
    %v2843 = vadd.f32 0.0, %v2842
    %2844 = vmatmul.bf16.gmra.mxu0 %v634
    %v2845 = vpop.f32.mrf.mxu0
    %v2846 = vadd.f32 0.0, %v2845
    %v2847 = vpop.f32.mrf.mxu0
    %v2848 = vadd.f32 0.0, %v2847
    %2849 = vmatmul.bf16.gmra.mxu0 %v637
    %v2850 = vpop.f32.mrf.mxu0
    %v2851 = vadd.f32 0.0, %v2850
    %v2852 = vpop.f32.mrf.mxu0
    %v2853 = vadd.f32 0.0, %v2852
    %2854 = vmatmul.bf16.gmra.mxu0 %v640
    %v2855 = vpop.f32.mrf.mxu0
    %v2856 = vadd.f32 0.0, %v2855
    %v2857 = vpop.f32.mrf.mxu0
    %v2858 = vadd.f32 0.0, %v2857
    %2859 = vmatmul.bf16.gmra.mxu0 %v643
    %v2860 = vpop.f32.mrf.mxu0
    %v2861 = vadd.f32 0.0, %v2860
    %v2862 = vpop.f32.mrf.mxu0
    %v2863 = vadd.f32 0.0, %v2862
    %2864 = vmatmul.bf16.gmra.mxu0 %v646
    %v2865 = vpop.f32.mrf.mxu0
    %v2866 = vadd.f32 0.0, %v2865
    %v2867 = vpop.f32.mrf.mxu0
    %v2868 = vadd.f32 0.0, %v2867
    %2869 = vmatmul.bf16.gmra.mxu0 %v649
    %v2870 = vpop.f32.mrf.mxu0
    %v2871 = vadd.f32 0.0, %v2870
    %v2872 = vpop.f32.mrf.mxu0
    %v2873 = vadd.f32 0.0, %v2872
    %2874 = vmatmul.bf16.gmra.mxu0 %v652
    %v2875 = vpop.f32.mrf.mxu0
    %v2876 = vadd.f32 0.0, %v2875
    %v2877 = vpop.f32.mrf.mxu0
    %v2878 = vadd.f32 0.0, %v2877
    %2879 = vmatmul.bf16.gmra.mxu0 %v655
    %v2880 = vpop.f32.mrf.mxu0
    %v2881 = vadd.f32 0.0, %v2880
    %v2882 = vpop.f32.mrf.mxu0
    %v2883 = vadd.f32 0.0, %v2882
    %2884 = vmatmul.bf16.gmra.mxu0 %v658
    %v2885 = vpop.f32.mrf.mxu0
    %v2886 = vadd.f32 0.0, %v2885
    %v2887 = vpop.f32.mrf.mxu0
    %v2888 = vadd.f32 0.0, %v2887
    %2889 = vmatmul.bf16.gmra.mxu0 %v661
    %v2890 = vpop.f32.mrf.mxu0
    %v2891 = vadd.f32 0.0, %v2890
    %v2892 = vpop.f32.mrf.mxu0
    %v2893 = vadd.f32 0.0, %v2892
    %2894 = vmatmul.bf16.gmra.mxu0 %v664
    %v2895 = vpop.f32.mrf.mxu0
    %v2896 = vadd.f32 0.0, %v2895
    %v2897 = vpop.f32.mrf.mxu0
    %v2898 = vadd.f32 0.0, %v2897
    %2899 = vmatmul.bf16.gmra.mxu0 %v667
    %v2900 = vpop.f32.mrf.mxu0
    %v2901 = vadd.f32 0.0, %v2900
    %v2902 = vpop.f32.mrf.mxu0
    %v2903 = vadd.f32 0.0, %v2902
    %2904 = vmatmul.bf16.gmra.mxu0 %v670
    %v2905 = vpop.f32.mrf.mxu0
    %v2906 = vadd.f32 0.0, %v2905
    %v2907 = vpop.f32.mrf.mxu0
    %v2908 = vadd.f32 0.0, %v2907
    %2909 = vmatmul.bf16.gmra.mxu0 %v673
    %v2910 = vpop.f32.mrf.mxu0
    %v2911 = vadd.f32 0.0, %v2910
    %v2912 = vpop.f32.mrf.mxu0
    %v2913 = vadd.f32 0.0, %v2912
    %2914 = vmatmul.bf16.gmra.mxu0 %v676
    %v2915 = vpop.f32.mrf.mxu0
    %v2916 = vadd.f32 0.0, %v2915
    %v2917 = vpop.f32.mrf.mxu0
    %v2918 = vadd.f32 0.0, %v2917
    %2919 = vmatmul.bf16.gmra.mxu0 %v679
    %v2920 = vpop.f32.mrf.mxu0
    %v2921 = vadd.f32 0.0, %v2920
    %v2922 = vpop.f32.mrf.mxu0
    %v2923 = vadd.f32 0.0, %v2922
    %2924 = vmatmul.bf16.gmra.mxu0 %v682
    %v2925 = vpop.f32.mrf.mxu0
    %v2926 = vadd.f32 0.0, %v2925
    %v2927 = vpop.f32.mrf.mxu0
    %v2928 = vadd.f32 0.0, %v2927
    %2929 = vmatmul.bf16.gmra.mxu0 %v685
    %v2930 = vpop.f32.mrf.mxu0
    %v2931 = vadd.f32 0.0, %v2930
    %v2932 = vpop.f32.mrf.mxu0
    %v2933 = vadd.f32 0.0, %v2932
    %2934 = vmatmul.bf16.gmra.mxu0 %v688
    %v2935 = vpop.f32.mrf.mxu0
    %v2936 = vadd.f32 0.0, %v2935
    %v2937 = vpop.f32.mrf.mxu0
    %v2938 = vadd.f32 0.0, %v2937
    %2939 = vmatmul.bf16.gmra.mxu0 %v691
    %v2940 = vpop.f32.mrf.mxu0
    %v2941 = vadd.f32 0.0, %v2940
    %v2942 = vpop.f32.mrf.mxu0
    %v2943 = vadd.f32 0.0, %v2942
    %2944 = vmatmul.bf16.gmra.mxu0 %v694
    %v2945 = vpop.f32.mrf.mxu0
    %v2946 = vadd.f32 0.0, %v2945
    %v2947 = vpop.f32.mrf.mxu0
    %v2948 = vadd.f32 0.0, %v2947
    %2949 = vmatmul.bf16.gmra.mxu0 %v697
    %v2950 = vpop.f32.mrf.mxu0
    %v2951 = vadd.f32 0.0, %v2950
    %v2952 = vpop.f32.mrf.mxu0
    %v2953 = vadd.f32 0.0, %v2952
    %2954 = vmatmul.bf16.gmra.mxu0 %v700
    %v2955 = vpop.f32.mrf.mxu0
    %v2956 = vadd.f32 0.0, %v2955
    %v2957 = vpop.f32.mrf.mxu0
    %v2958 = vadd.f32 0.0, %v2957
    %2959 = vmatmul.bf16.gmra.mxu0 %v703
    %v2960 = vpop.f32.mrf.mxu0
    %v2961 = vadd.f32 0.0, %v2960
    %v2962 = vpop.f32.mrf.mxu0
    %v2963 = vadd.f32 0.0, %v2962
    %2964 = vmatmul.bf16.gmra.mxu0 %v706
    %v2965 = vpop.f32.mrf.mxu0
    %v2966 = vadd.f32 0.0, %v2965
    %v2967 = vpop.f32.mrf.mxu0
    %v2968 = vadd.f32 0.0, %v2967
    %2969 = vmatmul.bf16.gmra.mxu0 %v709
    %v2970 = vpop.f32.mrf.mxu0
    %v2971 = vadd.f32 0.0, %v2970
    %v2972 = vpop.f32.mrf.mxu0
    %v2973 = vadd.f32 0.0, %v2972
    %2974 = vmatmul.bf16.gmra.mxu0 %v712
    %v2975 = vpop.f32.mrf.mxu0
    %v2976 = vadd.f32 0.0, %v2975
    %v2977 = vpop.f32.mrf.mxu0
    %v2978 = vadd.f32 0.0, %v2977
    %2979 = vmatmul.bf16.gmra.mxu0 %v715
    %v2980 = vpop.f32.mrf.mxu0
    %v2981 = vadd.f32 0.0, %v2980
    %v2982 = vpop.f32.mrf.mxu0
    %v2983 = vadd.f32 0.0, %v2982
    %2984 = vmatmul.bf16.gmra.mxu0 %v718
    %v2985 = vpop.f32.mrf.mxu0
    %v2986 = vadd.f32 0.0, %v2985
    %v2987 = vpop.f32.mrf.mxu0
    %v2988 = vadd.f32 0.0, %v2987
    %2989 = vmatmul.bf16.gmra.mxu0 %v721
    %v2990 = vpop.f32.mrf.mxu0
    %v2991 = vadd.f32 0.0, %v2990
    %v2992 = vpop.f32.mrf.mxu0
    %v2993 = vadd.f32 0.0, %v2992
    %2994 = vmatmul.bf16.gmra.mxu0 %v724
    %v2995 = vpop.f32.mrf.mxu0
    %v2996 = vadd.f32 0.0, %v2995
    %v2997 = vpop.f32.mrf.mxu0
    %v2998 = vadd.f32 0.0, %v2997
    %2999 = vmatmul.bf16.gmra.mxu0 %v727
    %v3000 = vpop.f32.mrf.mxu0
    %v3001 = vadd.f32 0.0, %v3000
    %v3002 = vpop.f32.mrf.mxu0
    %v3003 = vadd.f32 0.0, %v3002
    %3004 = vmatmul.bf16.gmra.mxu0 %v730
    %v3005 = vpop.f32.mrf.mxu0
    %v3006 = vadd.f32 0.0, %v3005
    %v3007 = vpop.f32.mrf.mxu0
    %v3008 = vadd.f32 0.0, %v3007
    %3009 = vmatmul.bf16.gmra.mxu0 %v733
    %v3010 = vpop.f32.mrf.mxu0
    %v3011 = vadd.f32 0.0, %v3010
    %v3012 = vpop.f32.mrf.mxu0
    %v3013 = vadd.f32 0.0, %v3012
    %3014 = vmatmul.bf16.gmra.mxu0 %v736
    %v3015 = vpop.f32.mrf.mxu0
    %v3016 = vadd.f32 0.0, %v3015
    %v3017 = vpop.f32.mrf.mxu0
    %v3018 = vadd.f32 0.0, %v3017
    %3019 = vmatmul.bf16.gmra.mxu0 %v739
    %v3020 = vpop.f32.mrf.mxu0
    %v3021 = vadd.f32 0.0, %v3020
    %v3022 = vpop.f32.mrf.mxu0
    %v3023 = vadd.f32 0.0, %v3022
    %3024 = vmatmul.bf16.gmra.mxu0 %v742
    %v3025 = vpop.f32.mrf.mxu0
    %v3026 = vadd.f32 0.0, %v3025
    %v3027 = vpop.f32.mrf.mxu0
    %v3028 = vadd.f32 0.0, %v3027
    %3029 = vmatmul.bf16.gmra.mxu0 %v745
    %v3030 = vpop.f32.mrf.mxu0
    %v3031 = vadd.f32 0.0, %v3030
    %v3032 = vpop.f32.mrf.mxu0
    %v3033 = vadd.f32 0.0, %v3032
    %3034 = vmatmul.bf16.gmra.mxu0 %v748
    %v3035 = vpop.f32.mrf.mxu0
    %v3036 = vadd.f32 0.0, %v3035
    %v3037 = vpop.f32.mrf.mxu0
    %v3038 = vadd.f32 0.0, %v3037
    %3039 = vmatmul.bf16.gmra.mxu0 %v751
    %v3040 = vpop.f32.mrf.mxu0
    %v3041 = vadd.f32 0.0, %v3040
    %v3042 = vpop.f32.mrf.mxu0
    %v3043 = vadd.f32 0.0, %v3042
    %3044 = vmatmul.bf16.gmra.mxu0 %v754
    %v3045 = vpop.f32.mrf.mxu0
    %v3046 = vadd.f32 0.0, %v3045
    %v3047 = vpop.f32.mrf.mxu0
    %v3048 = vadd.f32 0.0, %v3047
    %3049 = vmatmul.bf16.gmra.mxu0 %v757
    %v3050 = vpop.f32.mrf.mxu0
    %v3051 = vadd.f32 0.0, %v3050
    %v3052 = vpop.f32.mrf.mxu0
    %v3053 = vadd.f32 0.0, %v3052
    %3054 = vmatmul.bf16.gmra.mxu0 %v760
    %v3055 = vpop.f32.mrf.mxu0
    %v3056 = vadd.f32 0.0, %v3055
    %v3057 = vpop.f32.mrf.mxu0
    %v3058 = vadd.f32 0.0, %v3057
    %3059 = vmatmul.bf16.gmra.mxu0 %v763
    %v3060 = vpop.f32.mrf.mxu0
    %v3061 = vadd.f32 0.0, %v3060
    %v3062 = vpop.f32.mrf.mxu0
    %v3063 = vadd.f32 0.0, %v3062
    %3064 = vmatmul.bf16.gmra.mxu0 %v766
    %v3065 = vpop.f32.mrf.mxu0
    %v3066 = vadd.f32 0.0, %v3065
    %v3067 = vpop.f32.mrf.mxu0
    %v3068 = vadd.f32 0.0, %v3067
    %3069 = vmatmul.bf16.gmra.mxu0 %v769
    %v3070 = vpop.f32.mrf.mxu0
    %v3071 = vadd.f32 0.0, %v3070
    %v3072 = vpop.f32.mrf.mxu0
    %v3073 = vadd.f32 0.0, %v3072
    %3074 = vmatmul.bf16.gmra.mxu0 %v772
    %v3075 = vpop.f32.mrf.mxu0
    %v3076 = vadd.f32 0.0, %v3075
    %v3077 = vpop.f32.mrf.mxu0
    %v3078 = vadd.f32 0.0, %v3077
    %3079 = vmatmul.bf16.gmra.mxu0 %v775
    %v3080 = vpop.f32.mrf.mxu0
    %v3081 = vadd.f32 0.0, %v3080
    %v3082 = vpop.f32.mrf.mxu0
    %v3083 = vadd.f32 0.0, %v3082
    %3084 = vmatmul.bf16.gmra.mxu0 %v778
    %v3085 = vpop.f32.mrf.mxu0
    %v3086 = vadd.f32 0.0, %v3085
    %v3087 = vpop.f32.mrf.mxu0
    %v3088 = vadd.f32 0.0, %v3087
    %3089 = vmatmul.bf16.gmra.mxu0 %v781
    %v3090 = vpop.f32.mrf.mxu0
    %v3091 = vadd.f32 0.0, %v3090
    %v3092 = vpop.f32.mrf.mxu0
    %v3093 = vadd.f32 0.0, %v3092
    %3094 = vmatmul.bf16.gmra.mxu0 %v784
    %v3095 = vpop.f32.mrf.mxu0
    %v3096 = vadd.f32 0.0, %v3095
    %v3097 = vpop.f32.mrf.mxu0
    %v3098 = vadd.f32 0.0, %v3097
    %3099 = vmatmul.bf16.gmra.mxu0 %v787
    %v3100 = vpop.f32.mrf.mxu0
    %v3101 = vadd.f32 0.0, %v3100
    %v3102 = vpop.f32.mrf.mxu0
    %v3103 = vadd.f32 0.0, %v3102
    %3104 = vmatmul.bf16.gmra.mxu0 %v790
    %v3105 = vpop.f32.mrf.mxu0
    %v3106 = vadd.f32 0.0, %v3105
    %v3107 = vpop.f32.mrf.mxu0
    %v3108 = vadd.f32 0.0, %v3107
    %3109 = vmatmul.bf16.gmra.mxu0 %v793
    %v3110 = vpop.f32.mrf.mxu0
    %v3111 = vadd.f32 0.0, %v3110
    %v3112 = vpop.f32.mrf.mxu0
    %v3113 = vadd.f32 0.0, %v3112
    %3114 = vmatmul.bf16.gmra.mxu0 %v796
    %v3115 = vpop.f32.mrf.mxu0
    %v3116 = vadd.f32 0.0, %v3115
    %v3117 = vpop.f32.mrf.mxu0
    %v3118 = vadd.f32 0.0, %v3117
    %3119 = vmatmul.bf16.gmra.mxu0 %v799
    %v3120 = vpop.f32.mrf.mxu0
    %v3121 = vadd.f32 0.0, %v3120
    %v3122 = vpop.f32.mrf.mxu0
    %v3123 = vadd.f32 0.0, %v3122
    %3124 = vmatmul.bf16.gmra.mxu0 %v802
    %v3125 = vpop.f32.mrf.mxu0
    %v3126 = vadd.f32 0.0, %v3125
    %v3127 = vpop.f32.mrf.mxu0
    %v3128 = vadd.f32 0.0, %v3127
    %3129 = vmatmul.bf16.gmra.mxu0 %v805
    %v3130 = vpop.f32.mrf.mxu0
    %v3131 = vadd.f32 0.0, %v3130
    %v3132 = vpop.f32.mrf.mxu0
    %v3133 = vadd.f32 0.0, %v3132
    %3134 = vdwg.mxu0
    %3135 = vmatpush.bf16.msra.mxu0 0
    %3136 = vmatpush.bf16.msra.mxu0 0
    %3137 = vmatpush.bf16.msra.mxu0 0
    %3138 = vmatpush.bf16.msra.mxu0 0
    %3139 = vmatpush.bf16.msra.mxu0 0
    %3140 = vmatpush.bf16.msra.mxu0 %v830
    %3141 = vmatpush.bf16.msra.mxu0 %v589
    %3142 = vmatpush.bf16.msra.mxu0 %v581
    %3143 = vmatmul.bf16.gmra.mxu0 %v616
    %v3144 = vpop.f32.mrf.mxu0
    %v3145 = vadd.f32 0.0, %v3144
    %v3146 = vpop.f32.mrf.mxu0
    %v3147 = vadd.f32 0.0, %v3146
    %3148 = vmatmul.bf16.gmra.mxu0 %v619
    %v3149 = vpop.f32.mrf.mxu0
    %v3150 = vadd.f32 0.0, %v3149
    %v3151 = vpop.f32.mrf.mxu0
    %v3152 = vadd.f32 0.0, %v3151
    %3153 = vmatmul.bf16.gmra.mxu0 %v622
    %v3154 = vpop.f32.mrf.mxu0
    %v3155 = vadd.f32 0.0, %v3154
    %v3156 = vpop.f32.mrf.mxu0
    %v3157 = vadd.f32 0.0, %v3156
    %3158 = vmatmul.bf16.gmra.mxu0 %v625
    %v3159 = vpop.f32.mrf.mxu0
    %v3160 = vadd.f32 0.0, %v3159
    %v3161 = vpop.f32.mrf.mxu0
    %v3162 = vadd.f32 0.0, %v3161
    %3163 = vmatmul.bf16.gmra.mxu0 %v628
    %v3164 = vpop.f32.mrf.mxu0
    %v3165 = vadd.f32 0.0, %v3164
    %v3166 = vpop.f32.mrf.mxu0
    %v3167 = vadd.f32 0.0, %v3166
    %3168 = vmatmul.bf16.gmra.mxu0 %v631
    %v3169 = vpop.f32.mrf.mxu0
    %v3170 = vadd.f32 0.0, %v3169
    %v3171 = vpop.f32.mrf.mxu0
    %v3172 = vadd.f32 0.0, %v3171
    %3173 = vmatmul.bf16.gmra.mxu0 %v634
    %v3174 = vpop.f32.mrf.mxu0
    %v3175 = vadd.f32 0.0, %v3174
    %v3176 = vpop.f32.mrf.mxu0
    %v3177 = vadd.f32 0.0, %v3176
    %3178 = vmatmul.bf16.gmra.mxu0 %v637
    %v3179 = vpop.f32.mrf.mxu0
    %v3180 = vadd.f32 0.0, %v3179
    %v3181 = vpop.f32.mrf.mxu0
    %v3182 = vadd.f32 0.0, %v3181
    %3183 = vmatmul.bf16.gmra.mxu0 %v640
    %v3184 = vpop.f32.mrf.mxu0
    %v3185 = vadd.f32 0.0, %v3184
    %v3186 = vpop.f32.mrf.mxu0
    %v3187 = vadd.f32 0.0, %v3186
    %3188 = vmatmul.bf16.gmra.mxu0 %v643
    %v3189 = vpop.f32.mrf.mxu0
    %v3190 = vadd.f32 0.0, %v3189
    %v3191 = vpop.f32.mrf.mxu0
    %v3192 = vadd.f32 0.0, %v3191
    %3193 = vmatmul.bf16.gmra.mxu0 %v646
    %v3194 = vpop.f32.mrf.mxu0
    %v3195 = vadd.f32 0.0, %v3194
    %v3196 = vpop.f32.mrf.mxu0
    %v3197 = vadd.f32 0.0, %v3196
    %3198 = vmatmul.bf16.gmra.mxu0 %v649
    %v3199 = vpop.f32.mrf.mxu0
    %v3200 = vadd.f32 0.0, %v3199
    %v3201 = vpop.f32.mrf.mxu0
    %v3202 = vadd.f32 0.0, %v3201
    %3203 = vmatmul.bf16.gmra.mxu0 %v652
    %v3204 = vpop.f32.mrf.mxu0
    %v3205 = vadd.f32 0.0, %v3204
    %v3206 = vpop.f32.mrf.mxu0
    %v3207 = vadd.f32 0.0, %v3206
    %3208 = vmatmul.bf16.gmra.mxu0 %v655
    %v3209 = vpop.f32.mrf.mxu0
    %v3210 = vadd.f32 0.0, %v3209
    %v3211 = vpop.f32.mrf.mxu0
    %v3212 = vadd.f32 0.0, %v3211
    %3213 = vmatmul.bf16.gmra.mxu0 %v658
    %v3214 = vpop.f32.mrf.mxu0
    %v3215 = vadd.f32 0.0, %v3214
    %v3216 = vpop.f32.mrf.mxu0
    %v3217 = vadd.f32 0.0, %v3216
    %3218 = vmatmul.bf16.gmra.mxu0 %v661
    %v3219 = vpop.f32.mrf.mxu0
    %v3220 = vadd.f32 0.0, %v3219
    %v3221 = vpop.f32.mrf.mxu0
    %v3222 = vadd.f32 0.0, %v3221
    %3223 = vmatmul.bf16.gmra.mxu0 %v664
    %v3224 = vpop.f32.mrf.mxu0
    %v3225 = vadd.f32 0.0, %v3224
    %v3226 = vpop.f32.mrf.mxu0
    %v3227 = vadd.f32 0.0, %v3226
    %3228 = vmatmul.bf16.gmra.mxu0 %v667
    %v3229 = vpop.f32.mrf.mxu0
    %v3230 = vadd.f32 0.0, %v3229
    %v3231 = vpop.f32.mrf.mxu0
    %v3232 = vadd.f32 0.0, %v3231
    %3233 = vmatmul.bf16.gmra.mxu0 %v670
    %v3234 = vpop.f32.mrf.mxu0
    %v3235 = vadd.f32 0.0, %v3234
    %v3236 = vpop.f32.mrf.mxu0
    %v3237 = vadd.f32 0.0, %v3236
    %3238 = vmatmul.bf16.gmra.mxu0 %v673
    %v3239 = vpop.f32.mrf.mxu0
    %v3240 = vadd.f32 0.0, %v3239
    %v3241 = vpop.f32.mrf.mxu0
    %v3242 = vadd.f32 0.0, %v3241
    %3243 = vmatmul.bf16.gmra.mxu0 %v676
    %v3244 = vpop.f32.mrf.mxu0
    %v3245 = vadd.f32 0.0, %v3244
    %v3246 = vpop.f32.mrf.mxu0
    %v3247 = vadd.f32 0.0, %v3246
    %3248 = vmatmul.bf16.gmra.mxu0 %v679
    %v3249 = vpop.f32.mrf.mxu0
    %v3250 = vadd.f32 0.0, %v3249
    %v3251 = vpop.f32.mrf.mxu0
    %v3252 = vadd.f32 0.0, %v3251
    %3253 = vmatmul.bf16.gmra.mxu0 %v682
    %v3254 = vpop.f32.mrf.mxu0
    %v3255 = vadd.f32 0.0, %v3254
    %v3256 = vpop.f32.mrf.mxu0
    %v3257 = vadd.f32 0.0, %v3256
    %3258 = vmatmul.bf16.gmra.mxu0 %v685
    %v3259 = vpop.f32.mrf.mxu0
    %v3260 = vadd.f32 0.0, %v3259
    %v3261 = vpop.f32.mrf.mxu0
    %v3262 = vadd.f32 0.0, %v3261
    %3263 = vmatmul.bf16.gmra.mxu0 %v688
    %v3264 = vpop.f32.mrf.mxu0
    %v3265 = vadd.f32 0.0, %v3264
    %v3266 = vpop.f32.mrf.mxu0
    %v3267 = vadd.f32 0.0, %v3266
    %3268 = vmatmul.bf16.gmra.mxu0 %v691
    %v3269 = vpop.f32.mrf.mxu0
    %v3270 = vadd.f32 0.0, %v3269
    %v3271 = vpop.f32.mrf.mxu0
    %v3272 = vadd.f32 0.0, %v3271
    %3273 = vmatmul.bf16.gmra.mxu0 %v694
    %v3274 = vpop.f32.mrf.mxu0
    %v3275 = vadd.f32 0.0, %v3274
    %v3276 = vpop.f32.mrf.mxu0
    %v3277 = vadd.f32 0.0, %v3276
    %3278 = vmatmul.bf16.gmra.mxu0 %v697
    %v3279 = vpop.f32.mrf.mxu0
    %v3280 = vadd.f32 0.0, %v3279
    %v3281 = vpop.f32.mrf.mxu0
    %v3282 = vadd.f32 0.0, %v3281
    %3283 = vmatmul.bf16.gmra.mxu0 %v700
    %v3284 = vpop.f32.mrf.mxu0
    %v3285 = vadd.f32 0.0, %v3284
    %v3286 = vpop.f32.mrf.mxu0
    %v3287 = vadd.f32 0.0, %v3286
    %3288 = vmatmul.bf16.gmra.mxu0 %v703
    %v3289 = vpop.f32.mrf.mxu0
    %v3290 = vadd.f32 0.0, %v3289
    %v3291 = vpop.f32.mrf.mxu0
    %v3292 = vadd.f32 0.0, %v3291
    %3293 = vmatmul.bf16.gmra.mxu0 %v706
    %v3294 = vpop.f32.mrf.mxu0
    %v3295 = vadd.f32 0.0, %v3294
    %v3296 = vpop.f32.mrf.mxu0
    %v3297 = vadd.f32 0.0, %v3296
    %3298 = vmatmul.bf16.gmra.mxu0 %v709
    %v3299 = vpop.f32.mrf.mxu0
    %v3300 = vadd.f32 0.0, %v3299
    %v3301 = vpop.f32.mrf.mxu0
    %v3302 = vadd.f32 0.0, %v3301
    %3303 = vmatmul.bf16.gmra.mxu0 %v712
    %v3304 = vpop.f32.mrf.mxu0
    %v3305 = vadd.f32 0.0, %v3304
    %v3306 = vpop.f32.mrf.mxu0
    %v3307 = vadd.f32 0.0, %v3306
    %3308 = vmatmul.bf16.gmra.mxu0 %v715
    %v3309 = vpop.f32.mrf.mxu0
    %v3310 = vadd.f32 0.0, %v3309
    %v3311 = vpop.f32.mrf.mxu0
    %v3312 = vadd.f32 0.0, %v3311
    %3313 = vmatmul.bf16.gmra.mxu0 %v718
    %v3314 = vpop.f32.mrf.mxu0
    %v3315 = vadd.f32 0.0, %v3314
    %v3316 = vpop.f32.mrf.mxu0
    %v3317 = vadd.f32 0.0, %v3316
    %3318 = vmatmul.bf16.gmra.mxu0 %v721
    %v3319 = vpop.f32.mrf.mxu0
    %v3320 = vadd.f32 0.0, %v3319
    %v3321 = vpop.f32.mrf.mxu0
    %v3322 = vadd.f32 0.0, %v3321
    %3323 = vmatmul.bf16.gmra.mxu0 %v724
    %v3324 = vpop.f32.mrf.mxu0
    %v3325 = vadd.f32 0.0, %v3324
    %v3326 = vpop.f32.mrf.mxu0
    %v3327 = vadd.f32 0.0, %v3326
    %3328 = vmatmul.bf16.gmra.mxu0 %v727
    %v3329 = vpop.f32.mrf.mxu0
    %v3330 = vadd.f32 0.0, %v3329
    %v3331 = vpop.f32.mrf.mxu0
    %v3332 = vadd.f32 0.0, %v3331
    %3333 = vmatmul.bf16.gmra.mxu0 %v730
    %v3334 = vpop.f32.mrf.mxu0
    %v3335 = vadd.f32 0.0, %v3334
    %v3336 = vpop.f32.mrf.mxu0
    %v3337 = vadd.f32 0.0, %v3336
    %3338 = vmatmul.bf16.gmra.mxu0 %v733
    %v3339 = vpop.f32.mrf.mxu0
    %v3340 = vadd.f32 0.0, %v3339
    %v3341 = vpop.f32.mrf.mxu0
    %v3342 = vadd.f32 0.0, %v3341
    %3343 = vmatmul.bf16.gmra.mxu0 %v736
    %v3344 = vpop.f32.mrf.mxu0
    %v3345 = vadd.f32 0.0, %v3344
    %v3346 = vpop.f32.mrf.mxu0
    %v3347 = vadd.f32 0.0, %v3346
    %3348 = vmatmul.bf16.gmra.mxu0 %v739
    %v3349 = vpop.f32.mrf.mxu0
    %v3350 = vadd.f32 0.0, %v3349
    %v3351 = vpop.f32.mrf.mxu0
    %v3352 = vadd.f32 0.0, %v3351
    %3353 = vmatmul.bf16.gmra.mxu0 %v742
    %v3354 = vpop.f32.mrf.mxu0
    %v3355 = vadd.f32 0.0, %v3354
    %v3356 = vpop.f32.mrf.mxu0
    %v3357 = vadd.f32 0.0, %v3356
    %3358 = vmatmul.bf16.gmra.mxu0 %v745
    %v3359 = vpop.f32.mrf.mxu0
    %v3360 = vadd.f32 0.0, %v3359
    %v3361 = vpop.f32.mrf.mxu0
    %v3362 = vadd.f32 0.0, %v3361
    %3363 = vmatmul.bf16.gmra.mxu0 %v748
    %v3364 = vpop.f32.mrf.mxu0
    %v3365 = vadd.f32 0.0, %v3364
    %v3366 = vpop.f32.mrf.mxu0
    %v3367 = vadd.f32 0.0, %v3366
    %3368 = vmatmul.bf16.gmra.mxu0 %v751
    %v3369 = vpop.f32.mrf.mxu0
    %v3370 = vadd.f32 0.0, %v3369
    %v3371 = vpop.f32.mrf.mxu0
    %v3372 = vadd.f32 0.0, %v3371
    %3373 = vmatmul.bf16.gmra.mxu0 %v754
    %v3374 = vpop.f32.mrf.mxu0
    %v3375 = vadd.f32 0.0, %v3374
    %v3376 = vpop.f32.mrf.mxu0
    %v3377 = vadd.f32 0.0, %v3376
    %3378 = vmatmul.bf16.gmra.mxu0 %v757
    %v3379 = vpop.f32.mrf.mxu0
    %v3380 = vadd.f32 0.0, %v3379
    %v3381 = vpop.f32.mrf.mxu0
    %v3382 = vadd.f32 0.0, %v3381
    %3383 = vmatmul.bf16.gmra.mxu0 %v760
    %v3384 = vpop.f32.mrf.mxu0
    %v3385 = vadd.f32 0.0, %v3384
    %v3386 = vpop.f32.mrf.mxu0
    %v3387 = vadd.f32 0.0, %v3386
    %3388 = vmatmul.bf16.gmra.mxu0 %v763
    %v3389 = vpop.f32.mrf.mxu0
    %v3390 = vadd.f32 0.0, %v3389
    %v3391 = vpop.f32.mrf.mxu0
    %v3392 = vadd.f32 0.0, %v3391
    %3393 = vmatmul.bf16.gmra.mxu0 %v766
    %v3394 = vpop.f32.mrf.mxu0
    %v3395 = vadd.f32 0.0, %v3394
    %v3396 = vpop.f32.mrf.mxu0
    %v3397 = vadd.f32 0.0, %v3396
    %3398 = vmatmul.bf16.gmra.mxu0 %v769
    %v3399 = vpop.f32.mrf.mxu0
    %v3400 = vadd.f32 0.0, %v3399
    %v3401 = vpop.f32.mrf.mxu0
    %v3402 = vadd.f32 0.0, %v3401
    %3403 = vmatmul.bf16.gmra.mxu0 %v772
    %v3404 = vpop.f32.mrf.mxu0
    %v3405 = vadd.f32 0.0, %v3404
    %v3406 = vpop.f32.mrf.mxu0
    %v3407 = vadd.f32 0.0, %v3406
    %3408 = vmatmul.bf16.gmra.mxu0 %v775
    %v3409 = vpop.f32.mrf.mxu0
    %v3410 = vadd.f32 0.0, %v3409
    %v3411 = vpop.f32.mrf.mxu0
    %v3412 = vadd.f32 0.0, %v3411
    %3413 = vmatmul.bf16.gmra.mxu0 %v778
    %v3414 = vpop.f32.mrf.mxu0
    %v3415 = vadd.f32 0.0, %v3414
    %v3416 = vpop.f32.mrf.mxu0
    %v3417 = vadd.f32 0.0, %v3416
    %3418 = vmatmul.bf16.gmra.mxu0 %v781
    %v3419 = vpop.f32.mrf.mxu0
    %v3420 = vadd.f32 0.0, %v3419
    %v3421 = vpop.f32.mrf.mxu0
    %v3422 = vadd.f32 0.0, %v3421
    %3423 = vmatmul.bf16.gmra.mxu0 %v784
    %v3424 = vpop.f32.mrf.mxu0
    %v3425 = vadd.f32 0.0, %v3424
    %v3426 = vpop.f32.mrf.mxu0
    %v3427 = vadd.f32 0.0, %v3426
    %3428 = vmatmul.bf16.gmra.mxu0 %v787
    %v3429 = vpop.f32.mrf.mxu0
    %v3430 = vadd.f32 0.0, %v3429
    %v3431 = vpop.f32.mrf.mxu0
    %v3432 = vadd.f32 0.0, %v3431
    %3433 = vmatmul.bf16.gmra.mxu0 %v790
    %v3434 = vpop.f32.mrf.mxu0
    %v3435 = vadd.f32 0.0, %v3434
    %v3436 = vpop.f32.mrf.mxu0
    %v3437 = vadd.f32 0.0, %v3436
    %3438 = vmatmul.bf16.gmra.mxu0 %v793
    %v3439 = vpop.f32.mrf.mxu0
    %v3440 = vadd.f32 0.0, %v3439
    %v3441 = vpop.f32.mrf.mxu0
    %v3442 = vadd.f32 0.0, %v3441
    %3443 = vmatmul.bf16.gmra.mxu0 %v796
    %v3444 = vpop.f32.mrf.mxu0
    %v3445 = vadd.f32 0.0, %v3444
    %v3446 = vpop.f32.mrf.mxu0
    %v3447 = vadd.f32 0.0, %v3446
    %3448 = vmatmul.bf16.gmra.mxu0 %v799
    %v3449 = vpop.f32.mrf.mxu0
    %v3450 = vadd.f32 0.0, %v3449
    %v3451 = vpop.f32.mrf.mxu0
    %v3452 = vadd.f32 0.0, %v3451
    %3453 = vmatmul.bf16.gmra.mxu0 %v802
    %v3454 = vpop.f32.mrf.mxu0
    %v3455 = vadd.f32 0.0, %v3454
    %v3456 = vpop.f32.mrf.mxu0
    %v3457 = vadd.f32 0.0, %v3456
    %3458 = vmatmul.bf16.gmra.mxu0 %v805
    %v3459 = vpop.f32.mrf.mxu0
    %v3460 = vadd.f32 0.0, %v3459
    %v3461 = vpop.f32.mrf.mxu0
    %v3462 = vadd.f32 0.0, %v3461
    %3463 = vdwg.mxu0
    %v3464 = vmul.f32 %v842, 0.01
    %v3465 = vmul.f32 %v1171, 0.01
    %v3466 = vmul.f32 %v1500, 0.01
    %v3467 = vmul.f32 %v1829, 0.01
    %v3468 = vmul.f32 %v844, 0.01
    %v3469 = vmul.f32 %v1173, 0.01
    %v3470 = vmul.f32 %v1502, 0.01
    %v3471 = vmul.f32 %v1831, 0.01
    %v3472 = vmul.f32 %v847, 0.01
    %v3473 = vmul.f32 %v1176, 0.01
    %v3474 = vmul.f32 %v1505, 0.01
    %v3475 = vmul.f32 %v1834, 0.01
    %v3476 = vmul.f32 %v849, 0.01
    %v3477 = vmul.f32 %v1178, 0.01
    %v3478 = vmul.f32 %v1507, 0.01
    %v3479 = vmul.f32 %v1836, 0.01
    %v3480 = vmul.f32 %v852, 0.01
    %v3481 = vmul.f32 %v1181, 0.01
    %v3482 = vmul.f32 %v1510, 0.01
    %v3483 = vmul.f32 %v1839, 0.01
    %v3484 = vmul.f32 %v854, 0.01
    %v3485 = vmul.f32 %v1183, 0.01
    %v3486 = vmul.f32 %v1512, 0.01
    %v3487 = vmul.f32 %v1841, 0.01
    %v3488 = vmul.f32 %v857, 0.01
    %v3489 = vmul.f32 %v1186, 0.01
    %v3490 = vmul.f32 %v1515, 0.01
    %v3491 = vmul.f32 %v1844, 0.01
    %v3492 = vmul.f32 %v859, 0.01
    %v3493 = vmul.f32 %v1188, 0.01
    %v3494 = vmul.f32 %v1517, 0.01
    %v3495 = vmul.f32 %v1846, 0.01
    %v3496 = vmul.f32 %v862, 0.01
    %v3497 = vmul.f32 %v1191, 0.01
    %v3498 = vmul.f32 %v1520, 0.01
    %v3499 = vmul.f32 %v1849, 0.01
    %v3500 = vmul.f32 %v864, 0.01
    %v3501 = vmul.f32 %v1193, 0.01
    %v3502 = vmul.f32 %v1522, 0.01
    %v3503 = vmul.f32 %v1851, 0.01
    %v3504 = vmul.f32 %v867, 0.01
    %v3505 = vmul.f32 %v1196, 0.01
    %v3506 = vmul.f32 %v1525, 0.01
    %v3507 = vmul.f32 %v1854, 0.01
    %v3508 = vmul.f32 %v869, 0.01
    %v3509 = vmul.f32 %v1198, 0.01
    %v3510 = vmul.f32 %v1527, 0.01
    %v3511 = vmul.f32 %v1856, 0.01
    %v3512 = vmul.f32 %v872, 0.01
    %v3513 = vmul.f32 %v1201, 0.01
    %v3514 = vmul.f32 %v1530, 0.01
    %v3515 = vmul.f32 %v1859, 0.01
    %v3516 = vmul.f32 %v874, 0.01
    %v3517 = vmul.f32 %v1203, 0.01
    %v3518 = vmul.f32 %v1532, 0.01
    %v3519 = vmul.f32 %v1861, 0.01
    %v3520 = vmul.f32 %v877, 0.01
    %v3521 = vmul.f32 %v1206, 0.01
    %v3522 = vmul.f32 %v1535, 0.01
    %v3523 = vmul.f32 %v1864, 0.01
    %v3524 = vmul.f32 %v879, 0.01
    %v3525 = vmul.f32 %v1208, 0.01
    %v3526 = vmul.f32 %v1537, 0.01
    %v3527 = vmul.f32 %v1866, 0.01
    %v3528 = vmul.f32 %v882, 0.01
    %v3529 = vmul.f32 %v1211, 0.01
    %v3530 = vmul.f32 %v1540, 0.01
    %v3531 = vmul.f32 %v1869, 0.01
    %v3532 = vmul.f32 %v884, 0.01
    %v3533 = vmul.f32 %v1213, 0.01
    %v3534 = vmul.f32 %v1542, 0.01
    %v3535 = vmul.f32 %v1871, 0.01
    %v3536 = vmul.f32 %v887, 0.01
    %v3537 = vmul.f32 %v1216, 0.01
    %v3538 = vmul.f32 %v1545, 0.01
    %v3539 = vmul.f32 %v1874, 0.01
    %v3540 = vmul.f32 %v889, 0.01
    %v3541 = vmul.f32 %v1218, 0.01
    %v3542 = vmul.f32 %v1547, 0.01
    %v3543 = vmul.f32 %v1876, 0.01
    %v3544 = vmul.f32 %v892, 0.01
    %v3545 = vmul.f32 %v1221, 0.01
    %v3546 = vmul.f32 %v1550, 0.01
    %v3547 = vmul.f32 %v1879, 0.01
    %v3548 = vmul.f32 %v894, 0.01
    %v3549 = vmul.f32 %v1223, 0.01
    %v3550 = vmul.f32 %v1552, 0.01
    %v3551 = vmul.f32 %v1881, 0.01
    %v3552 = vmul.f32 %v897, 0.01
    %v3553 = vmul.f32 %v1226, 0.01
    %v3554 = vmul.f32 %v1555, 0.01
    %v3555 = vmul.f32 %v1884, 0.01
    %v3556 = vmul.f32 %v899, 0.01
    %v3557 = vmul.f32 %v1228, 0.01
    %v3558 = vmul.f32 %v1557, 0.01
    %v3559 = vmul.f32 %v1886, 0.01
    %v3560 = vmul.f32 %v902, 0.01
    %v3561 = vmul.f32 %v1231, 0.01
    %v3562 = vmul.f32 %v1560, 0.01
    %v3563 = vmul.f32 %v1889, 0.01
    %v3564 = vmul.f32 %v904, 0.01
    %v3565 = vmul.f32 %v1233, 0.01
    %v3566 = vmul.f32 %v1562, 0.01
    %v3567 = vmul.f32 %v1891, 0.01
    %v3568 = vmul.f32 %v907, 0.01
    %v3569 = vmul.f32 %v1236, 0.01
    %v3570 = vmul.f32 %v1565, 0.01
    %v3571 = vmul.f32 %v1894, 0.01
    %v3572 = vmul.f32 %v909, 0.01
    %v3573 = vmul.f32 %v1238, 0.01
    %v3574 = vmul.f32 %v1567, 0.01
    %v3575 = vmul.f32 %v1896, 0.01
    %v3576 = vmul.f32 %v912, 0.01
    %v3577 = vmul.f32 %v1241, 0.01
    %v3578 = vmul.f32 %v1570, 0.01
    %v3579 = vmul.f32 %v1899, 0.01
    %v3580 = vmul.f32 %v914, 0.01
    %v3581 = vmul.f32 %v1243, 0.01
    %v3582 = vmul.f32 %v1572, 0.01
    %v3583 = vmul.f32 %v1901, 0.01
    %v3584 = vmul.f32 %v917, 0.01
    %v3585 = vmul.f32 %v1246, 0.01
    %v3586 = vmul.f32 %v1575, 0.01
    %v3587 = vmul.f32 %v1904, 0.01
    %v3588 = vmul.f32 %v919, 0.01
    %v3589 = vmul.f32 %v1248, 0.01
    %v3590 = vmul.f32 %v1577, 0.01
    %v3591 = vmul.f32 %v1906, 0.01
    %v3592 = vmul.f32 %v922, 0.01
    %v3593 = vmul.f32 %v1251, 0.01
    %v3594 = vmul.f32 %v1580, 0.01
    %v3595 = vmul.f32 %v1909, 0.01
    %v3596 = vmul.f32 %v924, 0.01
    %v3597 = vmul.f32 %v1253, 0.01
    %v3598 = vmul.f32 %v1582, 0.01
    %v3599 = vmul.f32 %v1911, 0.01
    %v3600 = vmul.f32 %v927, 0.01
    %v3601 = vmul.f32 %v1256, 0.01
    %v3602 = vmul.f32 %v1585, 0.01
    %v3603 = vmul.f32 %v1914, 0.01
    %v3604 = vmul.f32 %v929, 0.01
    %v3605 = vmul.f32 %v1258, 0.01
    %v3606 = vmul.f32 %v1587, 0.01
    %v3607 = vmul.f32 %v1916, 0.01
    %v3608 = vmul.f32 %v932, 0.01
    %v3609 = vmul.f32 %v1261, 0.01
    %v3610 = vmul.f32 %v1590, 0.01
    %v3611 = vmul.f32 %v1919, 0.01
    %v3612 = vmul.f32 %v934, 0.01
    %v3613 = vmul.f32 %v1263, 0.01
    %v3614 = vmul.f32 %v1592, 0.01
    %v3615 = vmul.f32 %v1921, 0.01
    %v3616 = vmul.f32 %v937, 0.01
    %v3617 = vmul.f32 %v1266, 0.01
    %v3618 = vmul.f32 %v1595, 0.01
    %v3619 = vmul.f32 %v1924, 0.01
    %v3620 = vmul.f32 %v939, 0.01
    %v3621 = vmul.f32 %v1268, 0.01
    %v3622 = vmul.f32 %v1597, 0.01
    %v3623 = vmul.f32 %v1926, 0.01
    %v3624 = vmul.f32 %v942, 0.01
    %v3625 = vmul.f32 %v1271, 0.01
    %v3626 = vmul.f32 %v1600, 0.01
    %v3627 = vmul.f32 %v1929, 0.01
    %v3628 = vmul.f32 %v944, 0.01
    %v3629 = vmul.f32 %v1273, 0.01
    %v3630 = vmul.f32 %v1602, 0.01
    %v3631 = vmul.f32 %v1931, 0.01
    %v3632 = vmul.f32 %v947, 0.01
    %v3633 = vmul.f32 %v1276, 0.01
    %v3634 = vmul.f32 %v1605, 0.01
    %v3635 = vmul.f32 %v1934, 0.01
    %v3636 = vmul.f32 %v949, 0.01
    %v3637 = vmul.f32 %v1278, 0.01
    %v3638 = vmul.f32 %v1607, 0.01
    %v3639 = vmul.f32 %v1936, 0.01
    %v3640 = vmul.f32 %v952, 0.01
    %v3641 = vmul.f32 %v1281, 0.01
    %v3642 = vmul.f32 %v1610, 0.01
    %v3643 = vmul.f32 %v1939, 0.01
    %v3644 = vmul.f32 %v954, 0.01
    %v3645 = vmul.f32 %v1283, 0.01
    %v3646 = vmul.f32 %v1612, 0.01
    %v3647 = vmul.f32 %v1941, 0.01
    %v3648 = vmul.f32 %v957, 0.01
    %v3649 = vmul.f32 %v1286, 0.01
    %v3650 = vmul.f32 %v1615, 0.01
    %v3651 = vmul.f32 %v1944, 0.01
    %v3652 = vmul.f32 %v959, 0.01
    %v3653 = vmul.f32 %v1288, 0.01
    %v3654 = vmul.f32 %v1617, 0.01
    %v3655 = vmul.f32 %v1946, 0.01
    %v3656 = vmul.f32 %v962, 0.01
    %v3657 = vmul.f32 %v1291, 0.01
    %v3658 = vmul.f32 %v1620, 0.01
    %v3659 = vmul.f32 %v1949, 0.01
    %v3660 = vmul.f32 %v964, 0.01
    %v3661 = vmul.f32 %v1293, 0.01
    %v3662 = vmul.f32 %v1622, 0.01
    %v3663 = vmul.f32 %v1951, 0.01
    %v3664 = vmul.f32 %v967, 0.01
    %v3665 = vmul.f32 %v1296, 0.01
    %v3666 = vmul.f32 %v1625, 0.01
    %v3667 = vmul.f32 %v1954, 0.01
    %v3668 = vmul.f32 %v969, 0.01
    %v3669 = vmul.f32 %v1298, 0.01
    %v3670 = vmul.f32 %v1627, 0.01
    %v3671 = vmul.f32 %v1956, 0.01
    %v3672 = vmul.f32 %v972, 0.01
    %v3673 = vmul.f32 %v1301, 0.01
    %v3674 = vmul.f32 %v1630, 0.01
    %v3675 = vmul.f32 %v1959, 0.01
    %v3676 = vmul.f32 %v974, 0.01
    %v3677 = vmul.f32 %v1303, 0.01
    %v3678 = vmul.f32 %v1632, 0.01
    %v3679 = vmul.f32 %v1961, 0.01
    %v3680 = vmul.f32 %v977, 0.01
    %v3681 = vmul.f32 %v1306, 0.01
    %v3682 = vmul.f32 %v1635, 0.01
    %v3683 = vmul.f32 %v1964, 0.01
    %v3684 = vmul.f32 %v979, 0.01
    %v3685 = vmul.f32 %v1308, 0.01
    %v3686 = vmul.f32 %v1637, 0.01
    %v3687 = vmul.f32 %v1966, 0.01
    %v3688 = vmul.f32 %v982, 0.01
    %v3689 = vmul.f32 %v1311, 0.01
    %v3690 = vmul.f32 %v1640, 0.01
    %v3691 = vmul.f32 %v1969, 0.01
    %v3692 = vmul.f32 %v984, 0.01
    %v3693 = vmul.f32 %v1313, 0.01
    %v3694 = vmul.f32 %v1642, 0.01
    %v3695 = vmul.f32 %v1971, 0.01
    %v3696 = vmul.f32 %v987, 0.01
    %v3697 = vmul.f32 %v1316, 0.01
    %v3698 = vmul.f32 %v1645, 0.01
    %v3699 = vmul.f32 %v1974, 0.01
    %v3700 = vmul.f32 %v989, 0.01
    %v3701 = vmul.f32 %v1318, 0.01
    %v3702 = vmul.f32 %v1647, 0.01
    %v3703 = vmul.f32 %v1976, 0.01
    %v3704 = vmul.f32 %v992, 0.01
    %v3705 = vmul.f32 %v1321, 0.01
    %v3706 = vmul.f32 %v1650, 0.01
    %v3707 = vmul.f32 %v1979, 0.01
    %v3708 = vmul.f32 %v994, 0.01
    %v3709 = vmul.f32 %v1323, 0.01
    %v3710 = vmul.f32 %v1652, 0.01
    %v3711 = vmul.f32 %v1981, 0.01
    %v3712 = vmul.f32 %v997, 0.01
    %v3713 = vmul.f32 %v1326, 0.01
    %v3714 = vmul.f32 %v1655, 0.01
    %v3715 = vmul.f32 %v1984, 0.01
    %v3716 = vmul.f32 %v999, 0.01
    %v3717 = vmul.f32 %v1328, 0.01
    %v3718 = vmul.f32 %v1657, 0.01
    %v3719 = vmul.f32 %v1986, 0.01
    %v3720 = vmul.f32 %v1002, 0.01
    %v3721 = vmul.f32 %v1331, 0.01
    %v3722 = vmul.f32 %v1660, 0.01
    %v3723 = vmul.f32 %v1989, 0.01
    %v3724 = vmul.f32 %v1004, 0.01
    %v3725 = vmul.f32 %v1333, 0.01
    %v3726 = vmul.f32 %v1662, 0.01
    %v3727 = vmul.f32 %v1991, 0.01
    %v3728 = vmul.f32 %v1007, 0.01
    %v3729 = vmul.f32 %v1336, 0.01
    %v3730 = vmul.f32 %v1665, 0.01
    %v3731 = vmul.f32 %v1994, 0.01
    %v3732 = vmul.f32 %v1009, 0.01
    %v3733 = vmul.f32 %v1338, 0.01
    %v3734 = vmul.f32 %v1667, 0.01
    %v3735 = vmul.f32 %v1996, 0.01
    %v3736 = vmul.f32 %v1012, 0.01
    %v3737 = vmul.f32 %v1341, 0.01
    %v3738 = vmul.f32 %v1670, 0.01
    %v3739 = vmul.f32 %v1999, 0.01
    %v3740 = vmul.f32 %v1014, 0.01
    %v3741 = vmul.f32 %v1343, 0.01
    %v3742 = vmul.f32 %v1672, 0.01
    %v3743 = vmul.f32 %v2001, 0.01
    %v3744 = vmul.f32 %v1017, 0.01
    %v3745 = vmul.f32 %v1346, 0.01
    %v3746 = vmul.f32 %v1675, 0.01
    %v3747 = vmul.f32 %v2004, 0.01
    %v3748 = vmul.f32 %v1019, 0.01
    %v3749 = vmul.f32 %v1348, 0.01
    %v3750 = vmul.f32 %v1677, 0.01
    %v3751 = vmul.f32 %v2006, 0.01
    %v3752 = vmul.f32 %v1022, 0.01
    %v3753 = vmul.f32 %v1351, 0.01
    %v3754 = vmul.f32 %v1680, 0.01
    %v3755 = vmul.f32 %v2009, 0.01
    %v3756 = vmul.f32 %v1024, 0.01
    %v3757 = vmul.f32 %v1353, 0.01
    %v3758 = vmul.f32 %v1682, 0.01
    %v3759 = vmul.f32 %v2011, 0.01
    %v3760 = vmul.f32 %v1027, 0.01
    %v3761 = vmul.f32 %v1356, 0.01
    %v3762 = vmul.f32 %v1685, 0.01
    %v3763 = vmul.f32 %v2014, 0.01
    %v3764 = vmul.f32 %v1029, 0.01
    %v3765 = vmul.f32 %v1358, 0.01
    %v3766 = vmul.f32 %v1687, 0.01
    %v3767 = vmul.f32 %v2016, 0.01
    %v3768 = vmul.f32 %v1032, 0.01
    %v3769 = vmul.f32 %v1361, 0.01
    %v3770 = vmul.f32 %v1690, 0.01
    %v3771 = vmul.f32 %v2019, 0.01
    %v3772 = vmul.f32 %v1034, 0.01
    %v3773 = vmul.f32 %v1363, 0.01
    %v3774 = vmul.f32 %v1692, 0.01
    %v3775 = vmul.f32 %v2021, 0.01
    %v3776 = vmul.f32 %v1037, 0.01
    %v3777 = vmul.f32 %v1366, 0.01
    %v3778 = vmul.f32 %v1695, 0.01
    %v3779 = vmul.f32 %v2024, 0.01
    %v3780 = vmul.f32 %v1039, 0.01
    %v3781 = vmul.f32 %v1368, 0.01
    %v3782 = vmul.f32 %v1697, 0.01
    %v3783 = vmul.f32 %v2026, 0.01
    %v3784 = vmul.f32 %v1042, 0.01
    %v3785 = vmul.f32 %v1371, 0.01
    %v3786 = vmul.f32 %v1700, 0.01
    %v3787 = vmul.f32 %v2029, 0.01
    %v3788 = vmul.f32 %v1044, 0.01
    %v3789 = vmul.f32 %v1373, 0.01
    %v3790 = vmul.f32 %v1702, 0.01
    %v3791 = vmul.f32 %v2031, 0.01
    %v3792 = vmul.f32 %v1047, 0.01
    %v3793 = vmul.f32 %v1376, 0.01
    %v3794 = vmul.f32 %v1705, 0.01
    %v3795 = vmul.f32 %v2034, 0.01
    %v3796 = vmul.f32 %v1049, 0.01
    %v3797 = vmul.f32 %v1378, 0.01
    %v3798 = vmul.f32 %v1707, 0.01
    %v3799 = vmul.f32 %v2036, 0.01
    %v3800 = vmul.f32 %v1052, 0.01
    %v3801 = vmul.f32 %v1381, 0.01
    %v3802 = vmul.f32 %v1710, 0.01
    %v3803 = vmul.f32 %v2039, 0.01
    %v3804 = vmul.f32 %v1054, 0.01
    %v3805 = vmul.f32 %v1383, 0.01
    %v3806 = vmul.f32 %v1712, 0.01
    %v3807 = vmul.f32 %v2041, 0.01
    %v3808 = vmul.f32 %v1057, 0.01
    %v3809 = vmul.f32 %v1386, 0.01
    %v3810 = vmul.f32 %v1715, 0.01
    %v3811 = vmul.f32 %v2044, 0.01
    %v3812 = vmul.f32 %v1059, 0.01
    %v3813 = vmul.f32 %v1388, 0.01
    %v3814 = vmul.f32 %v1717, 0.01
    %v3815 = vmul.f32 %v2046, 0.01
    %v3816 = vmul.f32 %v1062, 0.01
    %v3817 = vmul.f32 %v1391, 0.01
    %v3818 = vmul.f32 %v1720, 0.01
    %v3819 = vmul.f32 %v2049, 0.01
    %v3820 = vmul.f32 %v1064, 0.01
    %v3821 = vmul.f32 %v1393, 0.01
    %v3822 = vmul.f32 %v1722, 0.01
    %v3823 = vmul.f32 %v2051, 0.01
    %v3824 = vmul.f32 %v1067, 0.01
    %v3825 = vmul.f32 %v1396, 0.01
    %v3826 = vmul.f32 %v1725, 0.01
    %v3827 = vmul.f32 %v2054, 0.01
    %v3828 = vmul.f32 %v1069, 0.01
    %v3829 = vmul.f32 %v1398, 0.01
    %v3830 = vmul.f32 %v1727, 0.01
    %v3831 = vmul.f32 %v2056, 0.01
    %v3832 = vmul.f32 %v1072, 0.01
    %v3833 = vmul.f32 %v1401, 0.01
    %v3834 = vmul.f32 %v1730, 0.01
    %v3835 = vmul.f32 %v2059, 0.01
    %v3836 = vmul.f32 %v1074, 0.01
    %v3837 = vmul.f32 %v1403, 0.01
    %v3838 = vmul.f32 %v1732, 0.01
    %v3839 = vmul.f32 %v2061, 0.01
    %v3840 = vmul.f32 %v1077, 0.01
    %v3841 = vmul.f32 %v1406, 0.01
    %v3842 = vmul.f32 %v1735, 0.01
    %v3843 = vmul.f32 %v2064, 0.01
    %v3844 = vmul.f32 %v1079, 0.01
    %v3845 = vmul.f32 %v1408, 0.01
    %v3846 = vmul.f32 %v1737, 0.01
    %v3847 = vmul.f32 %v2066, 0.01
    %v3848 = vmul.f32 %v1082, 0.01
    %v3849 = vmul.f32 %v1411, 0.01
    %v3850 = vmul.f32 %v1740, 0.01
    %v3851 = vmul.f32 %v2069, 0.01
    %v3852 = vmul.f32 %v1084, 0.01
    %v3853 = vmul.f32 %v1413, 0.01
    %v3854 = vmul.f32 %v1742, 0.01
    %v3855 = vmul.f32 %v2071, 0.01
    %v3856 = vmul.f32 %v1087, 0.01
    %v3857 = vmul.f32 %v1416, 0.01
    %v3858 = vmul.f32 %v1745, 0.01
    %v3859 = vmul.f32 %v2074, 0.01
    %v3860 = vmul.f32 %v1089, 0.01
    %v3861 = vmul.f32 %v1418, 0.01
    %v3862 = vmul.f32 %v1747, 0.01
    %v3863 = vmul.f32 %v2076, 0.01
    %v3864 = vmul.f32 %v1092, 0.01
    %v3865 = vmul.f32 %v1421, 0.01
    %v3866 = vmul.f32 %v1750, 0.01
    %v3867 = vmul.f32 %v2079, 0.01
    %v3868 = vmul.f32 %v1094, 0.01
    %v3869 = vmul.f32 %v1423, 0.01
    %v3870 = vmul.f32 %v1752, 0.01
    %v3871 = vmul.f32 %v2081, 0.01
    %v3872 = vmul.f32 %v1097, 0.01
    %v3873 = vmul.f32 %v1426, 0.01
    %v3874 = vmul.f32 %v1755, 0.01
    %v3875 = vmul.f32 %v2084, 0.01
    %v3876 = vmul.f32 %v1099, 0.01
    %v3877 = vmul.f32 %v1428, 0.01
    %v3878 = vmul.f32 %v1757, 0.01
    %v3879 = vmul.f32 %v2086, 0.01
    %v3880 = vmul.f32 %v1102, 0.01
    %v3881 = vmul.f32 %v1431, 0.01
    %v3882 = vmul.f32 %v1760, 0.01
    %v3883 = vmul.f32 %v2089, 0.01
    %v3884 = vmul.f32 %v1104, 0.01
    %v3885 = vmul.f32 %v1433, 0.01
    %v3886 = vmul.f32 %v1762, 0.01
    %v3887 = vmul.f32 %v2091, 0.01
    %v3888 = vmul.f32 %v1107, 0.01
    %v3889 = vmul.f32 %v1436, 0.01
    %v3890 = vmul.f32 %v1765, 0.01
    %v3891 = vmul.f32 %v2094, 0.01
    %v3892 = vmul.f32 %v1109, 0.01
    %v3893 = vmul.f32 %v1438, 0.01
    %v3894 = vmul.f32 %v1767, 0.01
    %v3895 = vmul.f32 %v2096, 0.01
    %v3896 = vmul.f32 %v1112, 0.01
    %v3897 = vmul.f32 %v1441, 0.01
    %v3898 = vmul.f32 %v1770, 0.01
    %v3899 = vmul.f32 %v2099, 0.01
    %v3900 = vmul.f32 %v1114, 0.01
    %v3901 = vmul.f32 %v1443, 0.01
    %v3902 = vmul.f32 %v1772, 0.01
    %v3903 = vmul.f32 %v2101, 0.01
    %v3904 = vmul.f32 %v1117, 0.01
    %v3905 = vmul.f32 %v1446, 0.01
    %v3906 = vmul.f32 %v1775, 0.01
    %v3907 = vmul.f32 %v2104, 0.01
    %v3908 = vmul.f32 %v1119, 0.01
    %v3909 = vmul.f32 %v1448, 0.01
    %v3910 = vmul.f32 %v1777, 0.01
    %v3911 = vmul.f32 %v2106, 0.01
    %v3912 = vmul.f32 %v1122, 0.01
    %v3913 = vmul.f32 %v1451, 0.01
    %v3914 = vmul.f32 %v1780, 0.01
    %v3915 = vmul.f32 %v2109, 0.01
    %v3916 = vmul.f32 %v1124, 0.01
    %v3917 = vmul.f32 %v1453, 0.01
    %v3918 = vmul.f32 %v1782, 0.01
    %v3919 = vmul.f32 %v2111, 0.01
    %v3920 = vmul.f32 %v1127, 0.01
    %v3921 = vmul.f32 %v1456, 0.01
    %v3922 = vmul.f32 %v1785, 0.01
    %v3923 = vmul.f32 %v2114, 0.01
    %v3924 = vmul.f32 %v1129, 0.01
    %v3925 = vmul.f32 %v1458, 0.01
    %v3926 = vmul.f32 %v1787, 0.01
    %v3927 = vmul.f32 %v2116, 0.01
    %v3928 = vmul.f32 %v1132, 0.01
    %v3929 = vmul.f32 %v1461, 0.01
    %v3930 = vmul.f32 %v1790, 0.01
    %v3931 = vmul.f32 %v2119, 0.01
    %v3932 = vmul.f32 %v1134, 0.01
    %v3933 = vmul.f32 %v1463, 0.01
    %v3934 = vmul.f32 %v1792, 0.01
    %v3935 = vmul.f32 %v2121, 0.01
    %v3936 = vmul.f32 %v1137, 0.01
    %v3937 = vmul.f32 %v1466, 0.01
    %v3938 = vmul.f32 %v1795, 0.01
    %v3939 = vmul.f32 %v2124, 0.01
    %v3940 = vmul.f32 %v1139, 0.01
    %v3941 = vmul.f32 %v1468, 0.01
    %v3942 = vmul.f32 %v1797, 0.01
    %v3943 = vmul.f32 %v2126, 0.01
    %v3944 = vmul.f32 %v1142, 0.01
    %v3945 = vmul.f32 %v1471, 0.01
    %v3946 = vmul.f32 %v1800, 0.01
    %v3947 = vmul.f32 %v2129, 0.01
    %v3948 = vmul.f32 %v1144, 0.01
    %v3949 = vmul.f32 %v1473, 0.01
    %v3950 = vmul.f32 %v1802, 0.01
    %v3951 = vmul.f32 %v2131, 0.01
    %v3952 = vmul.f32 %v1147, 0.01
    %v3953 = vmul.f32 %v1476, 0.01
    %v3954 = vmul.f32 %v1805, 0.01
    %v3955 = vmul.f32 %v2134, 0.01
    %v3956 = vmul.f32 %v1149, 0.01
    %v3957 = vmul.f32 %v1478, 0.01
    %v3958 = vmul.f32 %v1807, 0.01
    %v3959 = vmul.f32 %v2136, 0.01
    %v3960 = vmul.f32 %v1152, 0.01
    %v3961 = vmul.f32 %v1481, 0.01
    %v3962 = vmul.f32 %v1810, 0.01
    %v3963 = vmul.f32 %v2139, 0.01
    %v3964 = vmul.f32 %v1154, 0.01
    %v3965 = vmul.f32 %v1483, 0.01
    %v3966 = vmul.f32 %v1812, 0.01
    %v3967 = vmul.f32 %v2141, 0.01
    %v3968 = vmul.f32 %v1157, 0.01
    %v3969 = vmul.f32 %v1486, 0.01
    %v3970 = vmul.f32 %v1815, 0.01
    %v3971 = vmul.f32 %v2144, 0.01
    %v3972 = vmul.f32 %v1159, 0.01
    %v3973 = vmul.f32 %v1488, 0.01
    %v3974 = vmul.f32 %v1817, 0.01
    %v3975 = vmul.f32 %v2146, 0.01
    %v3976 = vmax.f32 %v842, %v3464
    %v3977 = vmax.f32 %v1171, %v3465
    %v3978 = vmax.f32 %v1500, %v3466
    %v3979 = vmax.f32 %v1829, %v3467
    %v3980 = vmax.f32 %v844, %v3468
    %v3981 = vmax.f32 %v1173, %v3469
    %v3982 = vmax.f32 %v1502, %v3470
    %v3983 = vmax.f32 %v1831, %v3471
    %v3984 = vmax.f32 %v847, %v3472
    %v3985 = vmax.f32 %v1176, %v3473
    %v3986 = vmax.f32 %v1505, %v3474
    %v3987 = vmax.f32 %v1834, %v3475
    %v3988 = vmax.f32 %v849, %v3476
    %v3989 = vmax.f32 %v1178, %v3477
    %v3990 = vmax.f32 %v1507, %v3478
    %v3991 = vmax.f32 %v1836, %v3479
    %v3992 = vmax.f32 %v852, %v3480
    %v3993 = vmax.f32 %v1181, %v3481
    %v3994 = vmax.f32 %v1510, %v3482
    %v3995 = vmax.f32 %v1839, %v3483
    %v3996 = vmax.f32 %v854, %v3484
    %v3997 = vmax.f32 %v1183, %v3485
    %v3998 = vmax.f32 %v1512, %v3486
    %v3999 = vmax.f32 %v1841, %v3487
    %v4000 = vmax.f32 %v857, %v3488
    %v4001 = vmax.f32 %v1186, %v3489
    %v4002 = vmax.f32 %v1515, %v3490
    %v4003 = vmax.f32 %v1844, %v3491
    %v4004 = vmax.f32 %v859, %v3492
    %v4005 = vmax.f32 %v1188, %v3493
    %v4006 = vmax.f32 %v1517, %v3494
    %v4007 = vmax.f32 %v1846, %v3495
    %v4008 = vmax.f32 %v862, %v3496
    %v4009 = vmax.f32 %v1191, %v3497
    %v4010 = vmax.f32 %v1520, %v3498
    %v4011 = vmax.f32 %v1849, %v3499
    %v4012 = vmax.f32 %v864, %v3500
    %v4013 = vmax.f32 %v1193, %v3501
    %v4014 = vmax.f32 %v1522, %v3502
    %v4015 = vmax.f32 %v1851, %v3503
    %v4016 = vmax.f32 %v867, %v3504
    %v4017 = vmax.f32 %v1196, %v3505
    %v4018 = vmax.f32 %v1525, %v3506
    %v4019 = vmax.f32 %v1854, %v3507
    %v4020 = vmax.f32 %v869, %v3508
    %v4021 = vmax.f32 %v1198, %v3509
    %v4022 = vmax.f32 %v1527, %v3510
    %v4023 = vmax.f32 %v1856, %v3511
    %v4024 = vmax.f32 %v872, %v3512
    %v4025 = vmax.f32 %v1201, %v3513
    %v4026 = vmax.f32 %v1530, %v3514
    %v4027 = vmax.f32 %v1859, %v3515
    %v4028 = vmax.f32 %v874, %v3516
    %v4029 = vmax.f32 %v1203, %v3517
    %v4030 = vmax.f32 %v1532, %v3518
    %v4031 = vmax.f32 %v1861, %v3519
    %v4032 = vmax.f32 %v877, %v3520
    %v4033 = vmax.f32 %v1206, %v3521
    %v4034 = vmax.f32 %v1535, %v3522
    %v4035 = vmax.f32 %v1864, %v3523
    %v4036 = vmax.f32 %v879, %v3524
    %v4037 = vmax.f32 %v1208, %v3525
    %v4038 = vmax.f32 %v1537, %v3526
    %v4039 = vmax.f32 %v1866, %v3527
    %v4040 = vmax.f32 %v882, %v3528
    %v4041 = vmax.f32 %v1211, %v3529
    %v4042 = vmax.f32 %v1540, %v3530
    %v4043 = vmax.f32 %v1869, %v3531
    %v4044 = vmax.f32 %v884, %v3532
    %v4045 = vmax.f32 %v1213, %v3533
    %v4046 = vmax.f32 %v1542, %v3534
    %v4047 = vmax.f32 %v1871, %v3535
    %v4048 = vmax.f32 %v887, %v3536
    %v4049 = vmax.f32 %v1216, %v3537
    %v4050 = vmax.f32 %v1545, %v3538
    %v4051 = vmax.f32 %v1874, %v3539
    %v4052 = vmax.f32 %v889, %v3540
    %v4053 = vmax.f32 %v1218, %v3541
    %v4054 = vmax.f32 %v1547, %v3542
    %v4055 = vmax.f32 %v1876, %v3543
    %v4056 = vmax.f32 %v892, %v3544
    %v4057 = vmax.f32 %v1221, %v3545
    %v4058 = vmax.f32 %v1550, %v3546
    %v4059 = vmax.f32 %v1879, %v3547
    %v4060 = vmax.f32 %v894, %v3548
    %v4061 = vmax.f32 %v1223, %v3549
    %v4062 = vmax.f32 %v1552, %v3550
    %v4063 = vmax.f32 %v1881, %v3551
    %v4064 = vmax.f32 %v897, %v3552
    %v4065 = vmax.f32 %v1226, %v3553
    %v4066 = vmax.f32 %v1555, %v3554
    %v4067 = vmax.f32 %v1884, %v3555
    %v4068 = vmax.f32 %v899, %v3556
    %v4069 = vmax.f32 %v1228, %v3557
    %v4070 = vmax.f32 %v1557, %v3558
    %v4071 = vmax.f32 %v1886, %v3559
    %v4072 = vmax.f32 %v902, %v3560
    %v4073 = vmax.f32 %v1231, %v3561
    %v4074 = vmax.f32 %v1560, %v3562
    %v4075 = vmax.f32 %v1889, %v3563
    %v4076 = vmax.f32 %v904, %v3564
    %v4077 = vmax.f32 %v1233, %v3565
    %v4078 = vmax.f32 %v1562, %v3566
    %v4079 = vmax.f32 %v1891, %v3567
    %v4080 = vmax.f32 %v907, %v3568
    %v4081 = vmax.f32 %v1236, %v3569
    %v4082 = vmax.f32 %v1565, %v3570
    %v4083 = vmax.f32 %v1894, %v3571
    %v4084 = vmax.f32 %v909, %v3572
    %v4085 = vmax.f32 %v1238, %v3573
    %v4086 = vmax.f32 %v1567, %v3574
    %v4087 = vmax.f32 %v1896, %v3575
    %v4088 = vmax.f32 %v912, %v3576
    %v4089 = vmax.f32 %v1241, %v3577
    %v4090 = vmax.f32 %v1570, %v3578
    %v4091 = vmax.f32 %v1899, %v3579
    %v4092 = vmax.f32 %v914, %v3580
    %v4093 = vmax.f32 %v1243, %v3581
    %v4094 = vmax.f32 %v1572, %v3582
    %v4095 = vmax.f32 %v1901, %v3583
    %v4096 = vmax.f32 %v917, %v3584
    %v4097 = vmax.f32 %v1246, %v3585
    %v4098 = vmax.f32 %v1575, %v3586
    %v4099 = vmax.f32 %v1904, %v3587
    %v4100 = vmax.f32 %v919, %v3588
    %v4101 = vmax.f32 %v1248, %v3589
    %v4102 = vmax.f32 %v1577, %v3590
    %v4103 = vmax.f32 %v1906, %v3591
    %v4104 = vmax.f32 %v922, %v3592
    %v4105 = vmax.f32 %v1251, %v3593
    %v4106 = vmax.f32 %v1580, %v3594
    %v4107 = vmax.f32 %v1909, %v3595
    %v4108 = vmax.f32 %v924, %v3596
    %v4109 = vmax.f32 %v1253, %v3597
    %v4110 = vmax.f32 %v1582, %v3598
    %v4111 = vmax.f32 %v1911, %v3599
    %v4112 = vmax.f32 %v927, %v3600
    %v4113 = vmax.f32 %v1256, %v3601
    %v4114 = vmax.f32 %v1585, %v3602
    %v4115 = vmax.f32 %v1914, %v3603
    %v4116 = vmax.f32 %v929, %v3604
    %v4117 = vmax.f32 %v1258, %v3605
    %v4118 = vmax.f32 %v1587, %v3606
    %v4119 = vmax.f32 %v1916, %v3607
    %v4120 = vmax.f32 %v932, %v3608
    %v4121 = vmax.f32 %v1261, %v3609
    %v4122 = vmax.f32 %v1590, %v3610
    %v4123 = vmax.f32 %v1919, %v3611
    %v4124 = vmax.f32 %v934, %v3612
    %v4125 = vmax.f32 %v1263, %v3613
    %v4126 = vmax.f32 %v1592, %v3614
    %v4127 = vmax.f32 %v1921, %v3615
    %v4128 = vmax.f32 %v937, %v3616
    %v4129 = vmax.f32 %v1266, %v3617
    %v4130 = vmax.f32 %v1595, %v3618
    %v4131 = vmax.f32 %v1924, %v3619
    %v4132 = vmax.f32 %v939, %v3620
    %v4133 = vmax.f32 %v1268, %v3621
    %v4134 = vmax.f32 %v1597, %v3622
    %v4135 = vmax.f32 %v1926, %v3623
    %v4136 = vmax.f32 %v942, %v3624
    %v4137 = vmax.f32 %v1271, %v3625
    %v4138 = vmax.f32 %v1600, %v3626
    %v4139 = vmax.f32 %v1929, %v3627
    %v4140 = vmax.f32 %v944, %v3628
    %v4141 = vmax.f32 %v1273, %v3629
    %v4142 = vmax.f32 %v1602, %v3630
    %v4143 = vmax.f32 %v1931, %v3631
    %v4144 = vmax.f32 %v947, %v3632
    %v4145 = vmax.f32 %v1276, %v3633
    %v4146 = vmax.f32 %v1605, %v3634
    %v4147 = vmax.f32 %v1934, %v3635
    %v4148 = vmax.f32 %v949, %v3636
    %v4149 = vmax.f32 %v1278, %v3637
    %v4150 = vmax.f32 %v1607, %v3638
    %v4151 = vmax.f32 %v1936, %v3639
    %v4152 = vmax.f32 %v952, %v3640
    %v4153 = vmax.f32 %v1281, %v3641
    %v4154 = vmax.f32 %v1610, %v3642
    %v4155 = vmax.f32 %v1939, %v3643
    %v4156 = vmax.f32 %v954, %v3644
    %v4157 = vmax.f32 %v1283, %v3645
    %v4158 = vmax.f32 %v1612, %v3646
    %v4159 = vmax.f32 %v1941, %v3647
    %v4160 = vmax.f32 %v957, %v3648
    %v4161 = vmax.f32 %v1286, %v3649
    %v4162 = vmax.f32 %v1615, %v3650
    %v4163 = vmax.f32 %v1944, %v3651
    %v4164 = vmax.f32 %v959, %v3652
    %v4165 = vmax.f32 %v1288, %v3653
    %v4166 = vmax.f32 %v1617, %v3654
    %v4167 = vmax.f32 %v1946, %v3655
    %v4168 = vmax.f32 %v962, %v3656
    %v4169 = vmax.f32 %v1291, %v3657
    %v4170 = vmax.f32 %v1620, %v3658
    %v4171 = vmax.f32 %v1949, %v3659
    %v4172 = vmax.f32 %v964, %v3660
    %v4173 = vmax.f32 %v1293, %v3661
    %v4174 = vmax.f32 %v1622, %v3662
    %v4175 = vmax.f32 %v1951, %v3663
    %v4176 = vmax.f32 %v967, %v3664
    %v4177 = vmax.f32 %v1296, %v3665
    %v4178 = vmax.f32 %v1625, %v3666
    %v4179 = vmax.f32 %v1954, %v3667
    %v4180 = vmax.f32 %v969, %v3668
    %v4181 = vmax.f32 %v1298, %v3669
    %v4182 = vmax.f32 %v1627, %v3670
    %v4183 = vmax.f32 %v1956, %v3671
    %v4184 = vmax.f32 %v972, %v3672
    %v4185 = vmax.f32 %v1301, %v3673
    %v4186 = vmax.f32 %v1630, %v3674
    %v4187 = vmax.f32 %v1959, %v3675
    %v4188 = vmax.f32 %v974, %v3676
    %v4189 = vmax.f32 %v1303, %v3677
    %v4190 = vmax.f32 %v1632, %v3678
    %v4191 = vmax.f32 %v1961, %v3679
    %v4192 = vmax.f32 %v977, %v3680
    %v4193 = vmax.f32 %v1306, %v3681
    %v4194 = vmax.f32 %v1635, %v3682
    %v4195 = vmax.f32 %v1964, %v3683
    %v4196 = vmax.f32 %v979, %v3684
    %v4197 = vmax.f32 %v1308, %v3685
    %v4198 = vmax.f32 %v1637, %v3686
    %v4199 = vmax.f32 %v1966, %v3687
    %v4200 = vmax.f32 %v982, %v3688
    %v4201 = vmax.f32 %v1311, %v3689
    %v4202 = vmax.f32 %v1640, %v3690
    %v4203 = vmax.f32 %v1969, %v3691
    %v4204 = vmax.f32 %v984, %v3692
    %v4205 = vmax.f32 %v1313, %v3693
    %v4206 = vmax.f32 %v1642, %v3694
    %v4207 = vmax.f32 %v1971, %v3695
    %v4208 = vmax.f32 %v987, %v3696
    %v4209 = vmax.f32 %v1316, %v3697
    %v4210 = vmax.f32 %v1645, %v3698
    %v4211 = vmax.f32 %v1974, %v3699
    %v4212 = vmax.f32 %v989, %v3700
    %v4213 = vmax.f32 %v1318, %v3701
    %v4214 = vmax.f32 %v1647, %v3702
    %v4215 = vmax.f32 %v1976, %v3703
    %v4216 = vmax.f32 %v992, %v3704
    %v4217 = vmax.f32 %v1321, %v3705
    %v4218 = vmax.f32 %v1650, %v3706
    %v4219 = vmax.f32 %v1979, %v3707
    %v4220 = vmax.f32 %v994, %v3708
    %v4221 = vmax.f32 %v1323, %v3709
    %v4222 = vmax.f32 %v1652, %v3710
    %v4223 = vmax.f32 %v1981, %v3711
    %v4224 = vmax.f32 %v997, %v3712
    %v4225 = vmax.f32 %v1326, %v3713
    %v4226 = vmax.f32 %v1655, %v3714
    %v4227 = vmax.f32 %v1984, %v3715
    %v4228 = vmax.f32 %v999, %v3716
    %v4229 = vmax.f32 %v1328, %v3717
    %v4230 = vmax.f32 %v1657, %v3718
    %v4231 = vmax.f32 %v1986, %v3719
    %v4232 = vmax.f32 %v1002, %v3720
    %v4233 = vmax.f32 %v1331, %v3721
    %v4234 = vmax.f32 %v1660, %v3722
    %v4235 = vmax.f32 %v1989, %v3723
    %v4236 = vmax.f32 %v1004, %v3724
    %v4237 = vmax.f32 %v1333, %v3725
    %v4238 = vmax.f32 %v1662, %v3726
    %v4239 = vmax.f32 %v1991, %v3727
    %v4240 = vmax.f32 %v1007, %v3728
    %v4241 = vmax.f32 %v1336, %v3729
    %v4242 = vmax.f32 %v1665, %v3730
    %v4243 = vmax.f32 %v1994, %v3731
    %v4244 = vmax.f32 %v1009, %v3732
    %v4245 = vmax.f32 %v1338, %v3733
    %v4246 = vmax.f32 %v1667, %v3734
    %v4247 = vmax.f32 %v1996, %v3735
    %v4248 = vmax.f32 %v1012, %v3736
    %v4249 = vmax.f32 %v1341, %v3737
    %v4250 = vmax.f32 %v1670, %v3738
    %v4251 = vmax.f32 %v1999, %v3739
    %v4252 = vmax.f32 %v1014, %v3740
    %v4253 = vmax.f32 %v1343, %v3741
    %v4254 = vmax.f32 %v1672, %v3742
    %v4255 = vmax.f32 %v2001, %v3743
    %v4256 = vmax.f32 %v1017, %v3744
    %v4257 = vmax.f32 %v1346, %v3745
    %v4258 = vmax.f32 %v1675, %v3746
    %v4259 = vmax.f32 %v2004, %v3747
    %v4260 = vmax.f32 %v1019, %v3748
    %v4261 = vmax.f32 %v1348, %v3749
    %v4262 = vmax.f32 %v1677, %v3750
    %v4263 = vmax.f32 %v2006, %v3751
    %v4264 = vmax.f32 %v1022, %v3752
    %v4265 = vmax.f32 %v1351, %v3753
    %v4266 = vmax.f32 %v1680, %v3754
    %v4267 = vmax.f32 %v2009, %v3755
    %v4268 = vmax.f32 %v1024, %v3756
    %v4269 = vmax.f32 %v1353, %v3757
    %v4270 = vmax.f32 %v1682, %v3758
    %v4271 = vmax.f32 %v2011, %v3759
    %v4272 = vmax.f32 %v1027, %v3760
    %v4273 = vmax.f32 %v1356, %v3761
    %v4274 = vmax.f32 %v1685, %v3762
    %v4275 = vmax.f32 %v2014, %v3763
    %v4276 = vmax.f32 %v1029, %v3764
    %v4277 = vmax.f32 %v1358, %v3765
    %v4278 = vmax.f32 %v1687, %v3766
    %v4279 = vmax.f32 %v2016, %v3767
    %v4280 = vmax.f32 %v1032, %v3768
    %v4281 = vmax.f32 %v1361, %v3769
    %v4282 = vmax.f32 %v1690, %v3770
    %v4283 = vmax.f32 %v2019, %v3771
    %v4284 = vmax.f32 %v1034, %v3772
    %v4285 = vmax.f32 %v1363, %v3773
    %v4286 = vmax.f32 %v1692, %v3774
    %v4287 = vmax.f32 %v2021, %v3775
    %v4288 = vmax.f32 %v1037, %v3776
    %v4289 = vmax.f32 %v1366, %v3777
    %v4290 = vmax.f32 %v1695, %v3778
    %v4291 = vmax.f32 %v2024, %v3779
    %v4292 = vmax.f32 %v1039, %v3780
    %v4293 = vmax.f32 %v1368, %v3781
    %v4294 = vmax.f32 %v1697, %v3782
    %v4295 = vmax.f32 %v2026, %v3783
    %v4296 = vmax.f32 %v1042, %v3784
    %v4297 = vmax.f32 %v1371, %v3785
    %v4298 = vmax.f32 %v1700, %v3786
    %v4299 = vmax.f32 %v2029, %v3787
    %v4300 = vmax.f32 %v1044, %v3788
    %v4301 = vmax.f32 %v1373, %v3789
    %v4302 = vmax.f32 %v1702, %v3790
    %v4303 = vmax.f32 %v2031, %v3791
    %v4304 = vmax.f32 %v1047, %v3792
    %v4305 = vmax.f32 %v1376, %v3793
    %v4306 = vmax.f32 %v1705, %v3794
    %v4307 = vmax.f32 %v2034, %v3795
    %v4308 = vmax.f32 %v1049, %v3796
    %v4309 = vmax.f32 %v1378, %v3797
    %v4310 = vmax.f32 %v1707, %v3798
    %v4311 = vmax.f32 %v2036, %v3799
    %v4312 = vmax.f32 %v1052, %v3800
    %v4313 = vmax.f32 %v1381, %v3801
    %v4314 = vmax.f32 %v1710, %v3802
    %v4315 = vmax.f32 %v2039, %v3803
    %v4316 = vmax.f32 %v1054, %v3804
    %v4317 = vmax.f32 %v1383, %v3805
    %v4318 = vmax.f32 %v1712, %v3806
    %v4319 = vmax.f32 %v2041, %v3807
    %v4320 = vmax.f32 %v1057, %v3808
    %v4321 = vmax.f32 %v1386, %v3809
    %v4322 = vmax.f32 %v1715, %v3810
    %v4323 = vmax.f32 %v2044, %v3811
    %v4324 = vmax.f32 %v1059, %v3812
    %v4325 = vmax.f32 %v1388, %v3813
    %v4326 = vmax.f32 %v1717, %v3814
    %v4327 = vmax.f32 %v2046, %v3815
    %v4328 = vmax.f32 %v1062, %v3816
    %v4329 = vmax.f32 %v1391, %v3817
    %v4330 = vmax.f32 %v1720, %v3818
    %v4331 = vmax.f32 %v2049, %v3819
    %v4332 = vmax.f32 %v1064, %v3820
    %v4333 = vmax.f32 %v1393, %v3821
    %v4334 = vmax.f32 %v1722, %v3822
    %v4335 = vmax.f32 %v2051, %v3823
    %v4336 = vmax.f32 %v1067, %v3824
    %v4337 = vmax.f32 %v1396, %v3825
    %v4338 = vmax.f32 %v1725, %v3826
    %v4339 = vmax.f32 %v2054, %v3827
    %v4340 = vmax.f32 %v1069, %v3828
    %v4341 = vmax.f32 %v1398, %v3829
    %v4342 = vmax.f32 %v1727, %v3830
    %v4343 = vmax.f32 %v2056, %v3831
    %v4344 = vmax.f32 %v1072, %v3832
    %v4345 = vmax.f32 %v1401, %v3833
    %v4346 = vmax.f32 %v1730, %v3834
    %v4347 = vmax.f32 %v2059, %v3835
    %v4348 = vmax.f32 %v1074, %v3836
    %v4349 = vmax.f32 %v1403, %v3837
    %v4350 = vmax.f32 %v1732, %v3838
    %v4351 = vmax.f32 %v2061, %v3839
    %v4352 = vmax.f32 %v1077, %v3840
    %v4353 = vmax.f32 %v1406, %v3841
    %v4354 = vmax.f32 %v1735, %v3842
    %v4355 = vmax.f32 %v2064, %v3843
    %v4356 = vmax.f32 %v1079, %v3844
    %v4357 = vmax.f32 %v1408, %v3845
    %v4358 = vmax.f32 %v1737, %v3846
    %v4359 = vmax.f32 %v2066, %v3847
    %v4360 = vmax.f32 %v1082, %v3848
    %v4361 = vmax.f32 %v1411, %v3849
    %v4362 = vmax.f32 %v1740, %v3850
    %v4363 = vmax.f32 %v2069, %v3851
    %v4364 = vmax.f32 %v1084, %v3852
    %v4365 = vmax.f32 %v1413, %v3853
    %v4366 = vmax.f32 %v1742, %v3854
    %v4367 = vmax.f32 %v2071, %v3855
    %v4368 = vmax.f32 %v1087, %v3856
    %v4369 = vmax.f32 %v1416, %v3857
    %v4370 = vmax.f32 %v1745, %v3858
    %v4371 = vmax.f32 %v2074, %v3859
    %v4372 = vmax.f32 %v1089, %v3860
    %v4373 = vmax.f32 %v1418, %v3861
    %v4374 = vmax.f32 %v1747, %v3862
    %v4375 = vmax.f32 %v2076, %v3863
    %v4376 = vmax.f32 %v1092, %v3864
    %v4377 = vmax.f32 %v1421, %v3865
    %v4378 = vmax.f32 %v1750, %v3866
    %v4379 = vmax.f32 %v2079, %v3867
    %v4380 = vmax.f32 %v1094, %v3868
    %v4381 = vmax.f32 %v1423, %v3869
    %v4382 = vmax.f32 %v1752, %v3870
    %v4383 = vmax.f32 %v2081, %v3871
    %v4384 = vmax.f32 %v1097, %v3872
    %v4385 = vmax.f32 %v1426, %v3873
    %v4386 = vmax.f32 %v1755, %v3874
    %v4387 = vmax.f32 %v2084, %v3875
    %v4388 = vmax.f32 %v1099, %v3876
    %v4389 = vmax.f32 %v1428, %v3877
    %v4390 = vmax.f32 %v1757, %v3878
    %v4391 = vmax.f32 %v2086, %v3879
    %v4392 = vmax.f32 %v1102, %v3880
    %v4393 = vmax.f32 %v1431, %v3881
    %v4394 = vmax.f32 %v1760, %v3882
    %v4395 = vmax.f32 %v2089, %v3883
    %v4396 = vmax.f32 %v1104, %v3884
    %v4397 = vmax.f32 %v1433, %v3885
    %v4398 = vmax.f32 %v1762, %v3886
    %v4399 = vmax.f32 %v2091, %v3887
    %v4400 = vmax.f32 %v1107, %v3888
    %v4401 = vmax.f32 %v1436, %v3889
    %v4402 = vmax.f32 %v1765, %v3890
    %v4403 = vmax.f32 %v2094, %v3891
    %v4404 = vmax.f32 %v1109, %v3892
    %v4405 = vmax.f32 %v1438, %v3893
    %v4406 = vmax.f32 %v1767, %v3894
    %v4407 = vmax.f32 %v2096, %v3895
    %v4408 = vmax.f32 %v1112, %v3896
    %v4409 = vmax.f32 %v1441, %v3897
    %v4410 = vmax.f32 %v1770, %v3898
    %v4411 = vmax.f32 %v2099, %v3899
    %v4412 = vmax.f32 %v1114, %v3900
    %v4413 = vmax.f32 %v1443, %v3901
    %v4414 = vmax.f32 %v1772, %v3902
    %v4415 = vmax.f32 %v2101, %v3903
    %v4416 = vmax.f32 %v1117, %v3904
    %v4417 = vmax.f32 %v1446, %v3905
    %v4418 = vmax.f32 %v1775, %v3906
    %v4419 = vmax.f32 %v2104, %v3907
    %v4420 = vmax.f32 %v1119, %v3908
    %v4421 = vmax.f32 %v1448, %v3909
    %v4422 = vmax.f32 %v1777, %v3910
    %v4423 = vmax.f32 %v2106, %v3911
    %v4424 = vmax.f32 %v1122, %v3912
    %v4425 = vmax.f32 %v1451, %v3913
    %v4426 = vmax.f32 %v1780, %v3914
    %v4427 = vmax.f32 %v2109, %v3915
    %v4428 = vmax.f32 %v1124, %v3916
    %v4429 = vmax.f32 %v1453, %v3917
    %v4430 = vmax.f32 %v1782, %v3918
    %v4431 = vmax.f32 %v2111, %v3919
    %v4432 = vmax.f32 %v1127, %v3920
    %v4433 = vmax.f32 %v1456, %v3921
    %v4434 = vmax.f32 %v1785, %v3922
    %v4435 = vmax.f32 %v2114, %v3923
    %v4436 = vmax.f32 %v1129, %v3924
    %v4437 = vmax.f32 %v1458, %v3925
    %v4438 = vmax.f32 %v1787, %v3926
    %v4439 = vmax.f32 %v2116, %v3927
    %v4440 = vmax.f32 %v1132, %v3928
    %v4441 = vmax.f32 %v1461, %v3929
    %v4442 = vmax.f32 %v1790, %v3930
    %v4443 = vmax.f32 %v2119, %v3931
    %v4444 = vmax.f32 %v1134, %v3932
    %v4445 = vmax.f32 %v1463, %v3933
    %v4446 = vmax.f32 %v1792, %v3934
    %v4447 = vmax.f32 %v2121, %v3935
    %v4448 = vmax.f32 %v1137, %v3936
    %v4449 = vmax.f32 %v1466, %v3937
    %v4450 = vmax.f32 %v1795, %v3938
    %v4451 = vmax.f32 %v2124, %v3939
    %v4452 = vmax.f32 %v1139, %v3940
    %v4453 = vmax.f32 %v1468, %v3941
    %v4454 = vmax.f32 %v1797, %v3942
    %v4455 = vmax.f32 %v2126, %v3943
    %v4456 = vmax.f32 %v1142, %v3944
    %v4457 = vmax.f32 %v1471, %v3945
    %v4458 = vmax.f32 %v1800, %v3946
    %v4459 = vmax.f32 %v2129, %v3947
    %v4460 = vmax.f32 %v1144, %v3948
    %v4461 = vmax.f32 %v1473, %v3949
    %v4462 = vmax.f32 %v1802, %v3950
    %v4463 = vmax.f32 %v2131, %v3951
    %v4464 = vmax.f32 %v1147, %v3952
    %v4465 = vmax.f32 %v1476, %v3953
    %v4466 = vmax.f32 %v1805, %v3954
    %v4467 = vmax.f32 %v2134, %v3955
    %v4468 = vmax.f32 %v1149, %v3956
    %v4469 = vmax.f32 %v1478, %v3957
    %v4470 = vmax.f32 %v1807, %v3958
    %v4471 = vmax.f32 %v2136, %v3959
    %v4472 = vmax.f32 %v1152, %v3960
    %v4473 = vmax.f32 %v1481, %v3961
    %v4474 = vmax.f32 %v1810, %v3962
    %v4475 = vmax.f32 %v2139, %v3963
    %v4476 = vmax.f32 %v1154, %v3964
    %v4477 = vmax.f32 %v1483, %v3965
    %v4478 = vmax.f32 %v1812, %v3966
    %v4479 = vmax.f32 %v2141, %v3967
    %v4480 = vmax.f32 %v1157, %v3968
    %v4481 = vmax.f32 %v1486, %v3969
    %v4482 = vmax.f32 %v1815, %v3970
    %v4483 = vmax.f32 %v2144, %v3971
    %v4484 = vmax.f32 %v1159, %v3972
    %v4485 = vmax.f32 %v1488, %v3973
    %v4486 = vmax.f32 %v1817, %v3974
    %v4487 = vmax.f32 %v2146, %v3975
    %v4488 = vpack.c.bf16 %v3980, %v3976
    %v4489 = vpack.c.bf16 %v3981, %v3977
    %v4490 = vpack.c.bf16 %v3982, %v3978
    %v4491 = vpack.c.bf16 %v3983, %v3979
    %v4492 = vpack.c.bf16 %v3988, %v3984
    %v4493 = vpack.c.bf16 %v3989, %v3985
    %v4494 = vpack.c.bf16 %v3990, %v3986
    %v4495 = vpack.c.bf16 %v3991, %v3987
    %v4496 = vpack.c.bf16 %v3996, %v3992
    %v4497 = vpack.c.bf16 %v3997, %v3993
    %v4498 = vpack.c.bf16 %v3998, %v3994
    %v4499 = vpack.c.bf16 %v3999, %v3995
    %v4500 = vpack.c.bf16 %v4004, %v4000
    %v4501 = vpack.c.bf16 %v4005, %v4001
    %v4502 = vpack.c.bf16 %v4006, %v4002
    %v4503 = vpack.c.bf16 %v4007, %v4003
    %v4504 = vpack.c.bf16 %v4012, %v4008
    %v4505 = vpack.c.bf16 %v4013, %v4009
    %v4506 = vpack.c.bf16 %v4014, %v4010
    %v4507 = vpack.c.bf16 %v4015, %v4011
    %v4508 = vpack.c.bf16 %v4020, %v4016
    %v4509 = vpack.c.bf16 %v4021, %v4017
    %v4510 = vpack.c.bf16 %v4022, %v4018
    %v4511 = vpack.c.bf16 %v4023, %v4019
    %v4512 = vpack.c.bf16 %v4028, %v4024
    %v4513 = vpack.c.bf16 %v4029, %v4025
    %v4514 = vpack.c.bf16 %v4030, %v4026
    %v4515 = vpack.c.bf16 %v4031, %v4027
    %v4516 = vpack.c.bf16 %v4036, %v4032
    %v4517 = vpack.c.bf16 %v4037, %v4033
    %v4518 = vpack.c.bf16 %v4038, %v4034
    %v4519 = vpack.c.bf16 %v4039, %v4035
    %v4520 = vpack.c.bf16 %v4044, %v4040
    %v4521 = vpack.c.bf16 %v4045, %v4041
    %v4522 = vpack.c.bf16 %v4046, %v4042
    %v4523 = vpack.c.bf16 %v4047, %v4043
    %v4524 = vpack.c.bf16 %v4052, %v4048
    %v4525 = vpack.c.bf16 %v4053, %v4049
    %v4526 = vpack.c.bf16 %v4054, %v4050
    %v4527 = vpack.c.bf16 %v4055, %v4051
    %v4528 = vpack.c.bf16 %v4060, %v4056
    %v4529 = vpack.c.bf16 %v4061, %v4057
    %v4530 = vpack.c.bf16 %v4062, %v4058
    %v4531 = vpack.c.bf16 %v4063, %v4059
    %v4532 = vpack.c.bf16 %v4068, %v4064
    %v4533 = vpack.c.bf16 %v4069, %v4065
    %v4534 = vpack.c.bf16 %v4070, %v4066
    %v4535 = vpack.c.bf16 %v4071, %v4067
    %v4536 = vpack.c.bf16 %v4076, %v4072
    %v4537 = vpack.c.bf16 %v4077, %v4073
    %v4538 = vpack.c.bf16 %v4078, %v4074
    %v4539 = vpack.c.bf16 %v4079, %v4075
    %v4540 = vpack.c.bf16 %v4084, %v4080
    %v4541 = vpack.c.bf16 %v4085, %v4081
    %v4542 = vpack.c.bf16 %v4086, %v4082
    %v4543 = vpack.c.bf16 %v4087, %v4083
    %v4544 = vpack.c.bf16 %v4092, %v4088
    %v4545 = vpack.c.bf16 %v4093, %v4089
    %v4546 = vpack.c.bf16 %v4094, %v4090
    %v4547 = vpack.c.bf16 %v4095, %v4091
    %v4548 = vpack.c.bf16 %v4100, %v4096
    %v4549 = vpack.c.bf16 %v4101, %v4097
    %v4550 = vpack.c.bf16 %v4102, %v4098
    %v4551 = vpack.c.bf16 %v4103, %v4099
    %v4552 = vpack.c.bf16 %v4108, %v4104
    %v4553 = vpack.c.bf16 %v4109, %v4105
    %v4554 = vpack.c.bf16 %v4110, %v4106
    %v4555 = vpack.c.bf16 %v4111, %v4107
    %v4556 = vpack.c.bf16 %v4116, %v4112
    %v4557 = vpack.c.bf16 %v4117, %v4113
    %v4558 = vpack.c.bf16 %v4118, %v4114
    %v4559 = vpack.c.bf16 %v4119, %v4115
    %v4560 = vpack.c.bf16 %v4124, %v4120
    %v4561 = vpack.c.bf16 %v4125, %v4121
    %v4562 = vpack.c.bf16 %v4126, %v4122
    %v4563 = vpack.c.bf16 %v4127, %v4123
    %v4564 = vpack.c.bf16 %v4132, %v4128
    %v4565 = vpack.c.bf16 %v4133, %v4129
    %v4566 = vpack.c.bf16 %v4134, %v4130
    %v4567 = vpack.c.bf16 %v4135, %v4131
    %v4568 = vpack.c.bf16 %v4140, %v4136
    %v4569 = vpack.c.bf16 %v4141, %v4137
    %v4570 = vpack.c.bf16 %v4142, %v4138
    %v4571 = vpack.c.bf16 %v4143, %v4139
    %v4572 = vpack.c.bf16 %v4148, %v4144
    %v4573 = vpack.c.bf16 %v4149, %v4145
    %v4574 = vpack.c.bf16 %v4150, %v4146
    %v4575 = vpack.c.bf16 %v4151, %v4147
    %v4576 = vpack.c.bf16 %v4156, %v4152
    %v4577 = vpack.c.bf16 %v4157, %v4153
    %v4578 = vpack.c.bf16 %v4158, %v4154
    %v4579 = vpack.c.bf16 %v4159, %v4155
    %v4580 = vpack.c.bf16 %v4164, %v4160
    %v4581 = vpack.c.bf16 %v4165, %v4161
    %v4582 = vpack.c.bf16 %v4166, %v4162
    %v4583 = vpack.c.bf16 %v4167, %v4163
    %v4584 = vpack.c.bf16 %v4172, %v4168
    %v4585 = vpack.c.bf16 %v4173, %v4169
    %v4586 = vpack.c.bf16 %v4174, %v4170
    %v4587 = vpack.c.bf16 %v4175, %v4171
    %v4588 = vpack.c.bf16 %v4180, %v4176
    %v4589 = vpack.c.bf16 %v4181, %v4177
    %v4590 = vpack.c.bf16 %v4182, %v4178
    %v4591 = vpack.c.bf16 %v4183, %v4179
    %v4592 = vpack.c.bf16 %v4188, %v4184
    %v4593 = vpack.c.bf16 %v4189, %v4185
    %v4594 = vpack.c.bf16 %v4190, %v4186
    %v4595 = vpack.c.bf16 %v4191, %v4187
    %v4596 = vpack.c.bf16 %v4196, %v4192
    %v4597 = vpack.c.bf16 %v4197, %v4193
    %v4598 = vpack.c.bf16 %v4198, %v4194
    %v4599 = vpack.c.bf16 %v4199, %v4195
    %v4600 = vpack.c.bf16 %v4204, %v4200
    %v4601 = vpack.c.bf16 %v4205, %v4201
    %v4602 = vpack.c.bf16 %v4206, %v4202
    %v4603 = vpack.c.bf16 %v4207, %v4203
    %v4604 = vpack.c.bf16 %v4212, %v4208
    %v4605 = vpack.c.bf16 %v4213, %v4209
    %v4606 = vpack.c.bf16 %v4214, %v4210
    %v4607 = vpack.c.bf16 %v4215, %v4211
    %v4608 = vpack.c.bf16 %v4220, %v4216
    %v4609 = vpack.c.bf16 %v4221, %v4217
    %v4610 = vpack.c.bf16 %v4222, %v4218
    %v4611 = vpack.c.bf16 %v4223, %v4219
    %v4612 = vpack.c.bf16 %v4228, %v4224
    %v4613 = vpack.c.bf16 %v4229, %v4225
    %v4614 = vpack.c.bf16 %v4230, %v4226
    %v4615 = vpack.c.bf16 %v4231, %v4227
    %v4616 = vpack.c.bf16 %v4236, %v4232
    %v4617 = vpack.c.bf16 %v4237, %v4233
    %v4618 = vpack.c.bf16 %v4238, %v4234
    %v4619 = vpack.c.bf16 %v4239, %v4235
    %v4620 = vpack.c.bf16 %v4244, %v4240
    %v4621 = vpack.c.bf16 %v4245, %v4241
    %v4622 = vpack.c.bf16 %v4246, %v4242
    %v4623 = vpack.c.bf16 %v4247, %v4243
    %v4624 = vpack.c.bf16 %v4252, %v4248
    %v4625 = vpack.c.bf16 %v4253, %v4249
    %v4626 = vpack.c.bf16 %v4254, %v4250
    %v4627 = vpack.c.bf16 %v4255, %v4251
    %v4628 = vpack.c.bf16 %v4260, %v4256
    %v4629 = vpack.c.bf16 %v4261, %v4257
    %v4630 = vpack.c.bf16 %v4262, %v4258
    %v4631 = vpack.c.bf16 %v4263, %v4259
    %v4632 = vpack.c.bf16 %v4268, %v4264
    %v4633 = vpack.c.bf16 %v4269, %v4265
    %v4634 = vpack.c.bf16 %v4270, %v4266
    %v4635 = vpack.c.bf16 %v4271, %v4267
    %v4636 = vpack.c.bf16 %v4276, %v4272
    %v4637 = vpack.c.bf16 %v4277, %v4273
    %v4638 = vpack.c.bf16 %v4278, %v4274
    %v4639 = vpack.c.bf16 %v4279, %v4275
    %v4640 = vpack.c.bf16 %v4284, %v4280
    %v4641 = vpack.c.bf16 %v4285, %v4281
    %v4642 = vpack.c.bf16 %v4286, %v4282
    %v4643 = vpack.c.bf16 %v4287, %v4283
    %v4644 = vpack.c.bf16 %v4292, %v4288
    %v4645 = vpack.c.bf16 %v4293, %v4289
    %v4646 = vpack.c.bf16 %v4294, %v4290
    %v4647 = vpack.c.bf16 %v4295, %v4291
    %v4648 = vpack.c.bf16 %v4300, %v4296
    %v4649 = vpack.c.bf16 %v4301, %v4297
    %v4650 = vpack.c.bf16 %v4302, %v4298
    %v4651 = vpack.c.bf16 %v4303, %v4299
    %v4652 = vpack.c.bf16 %v4308, %v4304
    %v4653 = vpack.c.bf16 %v4309, %v4305
    %v4654 = vpack.c.bf16 %v4310, %v4306
    %v4655 = vpack.c.bf16 %v4311, %v4307
    %v4656 = vpack.c.bf16 %v4316, %v4312
    %v4657 = vpack.c.bf16 %v4317, %v4313
    %v4658 = vpack.c.bf16 %v4318, %v4314
    %v4659 = vpack.c.bf16 %v4319, %v4315
    %v4660 = vpack.c.bf16 %v4324, %v4320
    %v4661 = vpack.c.bf16 %v4325, %v4321
    %v4662 = vpack.c.bf16 %v4326, %v4322
    %v4663 = vpack.c.bf16 %v4327, %v4323
    %v4664 = vpack.c.bf16 %v4332, %v4328
    %v4665 = vpack.c.bf16 %v4333, %v4329
    %v4666 = vpack.c.bf16 %v4334, %v4330
    %v4667 = vpack.c.bf16 %v4335, %v4331
    %v4668 = vpack.c.bf16 %v4340, %v4336
    %v4669 = vpack.c.bf16 %v4341, %v4337
    %v4670 = vpack.c.bf16 %v4342, %v4338
    %v4671 = vpack.c.bf16 %v4343, %v4339
    %v4672 = vpack.c.bf16 %v4348, %v4344
    %v4673 = vpack.c.bf16 %v4349, %v4345
    %v4674 = vpack.c.bf16 %v4350, %v4346
    %v4675 = vpack.c.bf16 %v4351, %v4347
    %v4676 = vpack.c.bf16 %v4356, %v4352
    %v4677 = vpack.c.bf16 %v4357, %v4353
    %v4678 = vpack.c.bf16 %v4358, %v4354
    %v4679 = vpack.c.bf16 %v4359, %v4355
    %v4680 = vpack.c.bf16 %v4364, %v4360
    %v4681 = vpack.c.bf16 %v4365, %v4361
    %v4682 = vpack.c.bf16 %v4366, %v4362
    %v4683 = vpack.c.bf16 %v4367, %v4363
    %v4684 = vpack.c.bf16 %v4372, %v4368
    %v4685 = vpack.c.bf16 %v4373, %v4369
    %v4686 = vpack.c.bf16 %v4374, %v4370
    %v4687 = vpack.c.bf16 %v4375, %v4371
    %v4688 = vpack.c.bf16 %v4380, %v4376
    %v4689 = vpack.c.bf16 %v4381, %v4377
    %v4690 = vpack.c.bf16 %v4382, %v4378
    %v4691 = vpack.c.bf16 %v4383, %v4379
    %v4692 = vpack.c.bf16 %v4388, %v4384
    %v4693 = vpack.c.bf16 %v4389, %v4385
    %v4694 = vpack.c.bf16 %v4390, %v4386
    %v4695 = vpack.c.bf16 %v4391, %v4387
    %v4696 = vpack.c.bf16 %v4396, %v4392
    %v4697 = vpack.c.bf16 %v4397, %v4393
    %v4698 = vpack.c.bf16 %v4398, %v4394
    %v4699 = vpack.c.bf16 %v4399, %v4395
    %v4700 = vpack.c.bf16 %v4404, %v4400
    %v4701 = vpack.c.bf16 %v4405, %v4401
    %v4702 = vpack.c.bf16 %v4406, %v4402
    %v4703 = vpack.c.bf16 %v4407, %v4403
    %v4704 = vpack.c.bf16 %v4412, %v4408
    %v4705 = vpack.c.bf16 %v4413, %v4409
    %v4706 = vpack.c.bf16 %v4414, %v4410
    %v4707 = vpack.c.bf16 %v4415, %v4411
    %v4708 = vpack.c.bf16 %v4420, %v4416
    %v4709 = vpack.c.bf16 %v4421, %v4417
    %v4710 = vpack.c.bf16 %v4422, %v4418
    %v4711 = vpack.c.bf16 %v4423, %v4419
    %v4712 = vpack.c.bf16 %v4428, %v4424
    %v4713 = vpack.c.bf16 %v4429, %v4425
    %v4714 = vpack.c.bf16 %v4430, %v4426
    %v4715 = vpack.c.bf16 %v4431, %v4427
    %v4716 = vpack.c.bf16 %v4436, %v4432
    %v4717 = vpack.c.bf16 %v4437, %v4433
    %v4718 = vpack.c.bf16 %v4438, %v4434
    %v4719 = vpack.c.bf16 %v4439, %v4435
    %v4720 = vpack.c.bf16 %v4444, %v4440
    %v4721 = vpack.c.bf16 %v4445, %v4441
    %v4722 = vpack.c.bf16 %v4446, %v4442
    %v4723 = vpack.c.bf16 %v4447, %v4443
    %v4724 = vpack.c.bf16 %v4452, %v4448
    %v4725 = vpack.c.bf16 %v4453, %v4449
    %v4726 = vpack.c.bf16 %v4454, %v4450
    %v4727 = vpack.c.bf16 %v4455, %v4451
    %v4728 = vpack.c.bf16 %v4460, %v4456
    %v4729 = vpack.c.bf16 %v4461, %v4457
    %v4730 = vpack.c.bf16 %v4462, %v4458
    %v4731 = vpack.c.bf16 %v4463, %v4459
    %v4732 = vpack.c.bf16 %v4468, %v4464
    %v4733 = vpack.c.bf16 %v4469, %v4465
    %v4734 = vpack.c.bf16 %v4470, %v4466
    %v4735 = vpack.c.bf16 %v4471, %v4467
    %v4736 = vpack.c.bf16 %v4476, %v4472
    %v4737 = vpack.c.bf16 %v4477, %v4473
    %v4738 = vpack.c.bf16 %v4478, %v4474
    %v4739 = vpack.c.bf16 %v4479, %v4475
    %v4740 = vpack.c.bf16 %v4484, %v4480
    %v4741 = vpack.c.bf16 %v4485, %v4481
    %v4742 = vpack.c.bf16 %v4486, %v4482
    %v4743 = vpack.c.bf16 %v4487, %v4483
    %v4744 = vld [vmem:[%s2] sm:$0xff]
    %v4745 = vld [vmem:[%s2 + $0x8] sm:$0xff]
    %v4746 = vld [vmem:[%s2 + $0x10] sm:$0xff]
    %v4747 = vld [vmem:[%s2 + $0x18] sm:$0xff]
    %v4748 = vld [vmem:[%s2 + $0x20] sm:$0xff]
    %v4749 = vld [vmem:[%s2 + $0x28] sm:$0xff]
    %v4750 = vld [vmem:[%s2 + $0x30] sm:$0xff]
    %v4751 = vld [vmem:[%s2 + $0x38] sm:$0xff]
    %v4752 = vld [vmem:[%s2 + $0x40] sm:$0xff]
    %v4753 = vld [vmem:[%s2 + $0x48] sm:$0xff]
    %v4754 = vld [vmem:[%s2 + $0x50] sm:$0xff]
    %v4755 = vld [vmem:[%s2 + $0x58] sm:$0xff]
    %v4756 = vld [vmem:[%s2 + $0x60] sm:$0xff]
    %v4757 = vld [vmem:[%s2 + $0x68] sm:$0xff]
    %v4758 = vld [vmem:[%s2 + $0x70] sm:$0xff]
    %v4759 = vld [vmem:[%s2 + $0x78] sm:$0xff]
    %v4760 = vld [vmem:[%s2 + $0x80] sm:$0xff]
    %v4761 = vld [vmem:[%s2 + $0x88] sm:$0xff]
    %v4762 = vld [vmem:[%s2 + $0x90] sm:$0xff]
    %v4763 = vld [vmem:[%s2 + $0x98] sm:$0xff]
    %v4764 = vld [vmem:[%s2 + $0xa0] sm:$0xff]
    %v4765 = vld [vmem:[%s2 + $0xa8] sm:$0xff]
    %v4766 = vld [vmem:[%s2 + $0xb0] sm:$0xff]
    %v4767 = vld [vmem:[%s2 + $0xb8] sm:$0xff]
    %v4768 = vld [vmem:[%s2 + $0xc0] sm:$0xff]
    %v4769 = vld [vmem:[%s2 + $0xc8] sm:$0xff]
    %v4770 = vld [vmem:[%s2 + $0xd0] sm:$0xff]
    %v4771 = vld [vmem:[%s2 + $0xd8] sm:$0xff]
    %v4772 = vld [vmem:[%s2 + $0xe0] sm:$0xff]
    %v4773 = vld [vmem:[%s2 + $0xe8] sm:$0xff]
    %v4774 = vld [vmem:[%s2 + $0xf0] sm:$0xff]
    %v4775 = vld [vmem:[%s2 + $0xf8] sm:$0xff]
    %v4776 = vld [vmem:[%s2 + $0x100] sm:$0xff]
    %v4777 = vld [vmem:[%s2 + $0x108] sm:$0xff]
    %v4778 = vld [vmem:[%s2 + $0x110] sm:$0xff]
    %v4779 = vld [vmem:[%s2 + $0x118] sm:$0xff]
    %v4780 = vld [vmem:[%s2 + $0x120] sm:$0xff]
    %v4781 = vld [vmem:[%s2 + $0x128] sm:$0xff]
    %v4782 = vld [vmem:[%s2 + $0x130] sm:$0xff]
    %v4783 = vld [vmem:[%s2 + $0x138] sm:$0xff]
    %v4784 = vld [vmem:[%s2 + $0x140] sm:$0xff]
    %v4785 = vld [vmem:[%s2 + $0x148] sm:$0xff]
    %v4786 = vld [vmem:[%s2 + $0x150] sm:$0xff]
    %v4787 = vld [vmem:[%s2 + $0x158] sm:$0xff]
    %v4788 = vld [vmem:[%s2 + $0x160] sm:$0xff]
    %v4789 = vld [vmem:[%s2 + $0x168] sm:$0xff]
    %v4790 = vld [vmem:[%s2 + $0x170] sm:$0xff]
    %v4791 = vld [vmem:[%s2 + $0x178] sm:$0xff]
    %v4792 = vld [vmem:[%s2 + $0x180] sm:$0xff]
    %v4793 = vld [vmem:[%s2 + $0x188] sm:$0xff]
    %v4794 = vld [vmem:[%s2 + $0x190] sm:$0xff]
    %v4795 = vld [vmem:[%s2 + $0x198] sm:$0xff]
    %v4796 = vld [vmem:[%s2 + $0x1a0] sm:$0xff]
    %v4797 = vld [vmem:[%s2 + $0x1a8] sm:$0xff]
    %v4798 = vld [vmem:[%s2 + $0x1b0] sm:$0xff]
    %v4799 = vld [vmem:[%s2 + $0x1b8] sm:$0xff]
    %v4800 = vld [vmem:[%s2 + $0x1c0] sm:$0xff]
    %v4801 = vld [vmem:[%s2 + $0x1c8] sm:$0xff]
    %v4802 = vld [vmem:[%s2 + $0x1d0] sm:$0xff]
    %v4803 = vld [vmem:[%s2 + $0x1d8] sm:$0xff]
    %v4804 = vld [vmem:[%s2 + $0x1e0] sm:$0xff]
    %v4805 = vld [vmem:[%s2 + $0x1e8] sm:$0xff]
    %v4806 = vld [vmem:[%s2 + $0x1f0] sm:$0xff]
    %v4807 = vld [vmem:[%s2 + $0x1f8] sm:$0xff]
    %v4872 = vunpack.c.l.b16 %v4744
    %v4873 = vunpack.c.h.b16 %v4744
    %v4874 = vunpack.c.l.b16 %v4745
    %v4875 = vunpack.c.h.b16 %v4745
    %v4876 = vunpack.c.l.b16 %v4746
    %v4877 = vunpack.c.h.b16 %v4746
    %v4878 = vunpack.c.l.b16 %v4747
    %v4879 = vunpack.c.h.b16 %v4747
    %v4880 = vunpack.c.l.b16 %v4748
    %v4881 = vunpack.c.h.b16 %v4748
    %v4882 = vunpack.c.l.b16 %v4749
    %v4883 = vunpack.c.h.b16 %v4749
    %v4884 = vunpack.c.l.b16 %v4750
    %v4885 = vunpack.c.h.b16 %v4750
    %v4886 = vunpack.c.l.b16 %v4751
    %v4887 = vunpack.c.h.b16 %v4751
    %v4888 = vunpack.c.l.b16 %v4752
    %v4889 = vunpack.c.h.b16 %v4752
    %v4890 = vunpack.c.l.b16 %v4753
    %v4891 = vunpack.c.h.b16 %v4753
    %v4892 = vunpack.c.l.b16 %v4754
    %v4893 = vunpack.c.h.b16 %v4754
    %v4894 = vunpack.c.l.b16 %v4755
    %v4895 = vunpack.c.h.b16 %v4755
    %v4896 = vunpack.c.l.b16 %v4756
    %v4897 = vunpack.c.h.b16 %v4756
    %v4898 = vunpack.c.l.b16 %v4757
    %v4899 = vunpack.c.h.b16 %v4757
    %v4900 = vunpack.c.l.b16 %v4758
    %v4901 = vunpack.c.h.b16 %v4758
    %v4902 = vunpack.c.l.b16 %v4759
    %v4903 = vunpack.c.h.b16 %v4759
    %v4904 = vunpack.c.l.b16 %v4760
    %v4905 = vunpack.c.h.b16 %v4760
    %v4906 = vunpack.c.l.b16 %v4761
    %v4907 = vunpack.c.h.b16 %v4761
    %v4908 = vunpack.c.l.b16 %v4762
    %v4909 = vunpack.c.h.b16 %v4762
    %v4910 = vunpack.c.l.b16 %v4763
    %v4911 = vunpack.c.h.b16 %v4763
    %v4912 = vunpack.c.l.b16 %v4764
    %v4913 = vunpack.c.h.b16 %v4764
    %v4914 = vunpack.c.l.b16 %v4765
    %v4915 = vunpack.c.h.b16 %v4765
    %v4916 = vunpack.c.l.b16 %v4766
    %v4917 = vunpack.c.h.b16 %v4766
    %v4918 = vunpack.c.l.b16 %v4767
    %v4919 = vunpack.c.h.b16 %v4767
    %v4920 = vunpack.c.l.b16 %v4768
    %v4921 = vunpack.c.h.b16 %v4768
    %v4922 = vunpack.c.l.b16 %v4769
    %v4923 = vunpack.c.h.b16 %v4769
    %v4924 = vunpack.c.l.b16 %v4770
    %v4925 = vunpack.c.h.b16 %v4770
    %v4926 = vunpack.c.l.b16 %v4771
    %v4927 = vunpack.c.h.b16 %v4771
    %v4928 = vunpack.c.l.b16 %v4772
    %v4929 = vunpack.c.h.b16 %v4772
    %v4930 = vunpack.c.l.b16 %v4773
    %v4931 = vunpack.c.h.b16 %v4773
    %v4932 = vunpack.c.l.b16 %v4774
    %v4933 = vunpack.c.h.b16 %v4774
    %v4934 = vunpack.c.l.b16 %v4775
    %v4935 = vunpack.c.h.b16 %v4775
    %v4936 = vunpack.c.l.b16 %v4776
    %v4937 = vunpack.c.h.b16 %v4776
    %v4938 = vunpack.c.l.b16 %v4777
    %v4939 = vunpack.c.h.b16 %v4777
    %v4940 = vunpack.c.l.b16 %v4778
    %v4941 = vunpack.c.h.b16 %v4778
    %v4942 = vunpack.c.l.b16 %v4779
    %v4943 = vunpack.c.h.b16 %v4779
    %v4944 = vunpack.c.l.b16 %v4780
    %v4945 = vunpack.c.h.b16 %v4780
    %v4946 = vunpack.c.l.b16 %v4781
    %v4947 = vunpack.c.h.b16 %v4781
    %v4948 = vunpack.c.l.b16 %v4782
    %v4949 = vunpack.c.h.b16 %v4782
    %v4950 = vunpack.c.l.b16 %v4783
    %v4951 = vunpack.c.h.b16 %v4783
    %v4952 = vunpack.c.l.b16 %v4784
    %v4953 = vunpack.c.h.b16 %v4784
    %v4954 = vunpack.c.l.b16 %v4785
    %v4955 = vunpack.c.h.b16 %v4785
    %v4956 = vunpack.c.l.b16 %v4786
    %v4957 = vunpack.c.h.b16 %v4786
    %v4958 = vunpack.c.l.b16 %v4787
    %v4959 = vunpack.c.h.b16 %v4787
    %v4960 = vunpack.c.l.b16 %v4788
    %v4961 = vunpack.c.h.b16 %v4788
    %v4962 = vunpack.c.l.b16 %v4789
    %v4963 = vunpack.c.h.b16 %v4789
    %v4964 = vunpack.c.l.b16 %v4790
    %v4965 = vunpack.c.h.b16 %v4790
    %v4966 = vunpack.c.l.b16 %v4791
    %v4967 = vunpack.c.h.b16 %v4791
    %v4968 = vunpack.c.l.b16 %v4792
    %v4969 = vunpack.c.h.b16 %v4792
    %v4970 = vunpack.c.l.b16 %v4793
    %v4971 = vunpack.c.h.b16 %v4793
    %v4972 = vunpack.c.l.b16 %v4794
    %v4973 = vunpack.c.h.b16 %v4794
    %v4974 = vunpack.c.l.b16 %v4795
    %v4975 = vunpack.c.h.b16 %v4795
    %v4976 = vunpack.c.l.b16 %v4796
    %v4977 = vunpack.c.h.b16 %v4796
    %v4978 = vunpack.c.l.b16 %v4797
    %v4979 = vunpack.c.h.b16 %v4797
    %v4980 = vunpack.c.l.b16 %v4798
    %v4981 = vunpack.c.h.b16 %v4798
    %v4982 = vunpack.c.l.b16 %v4799
    %v4983 = vunpack.c.h.b16 %v4799
    %v4984 = vunpack.c.l.b16 %v4800
    %v4985 = vunpack.c.h.b16 %v4800
    %v4986 = vunpack.c.l.b16 %v4801
    %v4987 = vunpack.c.h.b16 %v4801
    %v4988 = vunpack.c.l.b16 %v4802
    %v4989 = vunpack.c.h.b16 %v4802
    %v4990 = vunpack.c.l.b16 %v4803
    %v4991 = vunpack.c.h.b16 %v4803
    %v4992 = vunpack.c.l.b16 %v4804
    %v4993 = vunpack.c.h.b16 %v4804
    %v4994 = vunpack.c.l.b16 %v4805
    %v4995 = vunpack.c.h.b16 %v4805
    %v4996 = vunpack.c.l.b16 %v4806
    %v4997 = vunpack.c.h.b16 %v4806
    %v4998 = vunpack.c.l.b16 %v4807
    %v4999 = vunpack.c.h.b16 %v4807
    %v5000 = vpack.c.b16 %v4874, %v4872
    %v5001 = vpack.c.b16 %v4875, %v4873
    %v5002 = vpack.c.b16 %v4878, %v4876
    %v5003 = vpack.c.b16 %v4879, %v4877
    %v5004 = vpack.c.b16 %v4882, %v4880
    %v5005 = vpack.c.b16 %v4883, %v4881
    %v5006 = vpack.c.b16 %v4886, %v4884
    %v5007 = vpack.c.b16 %v4887, %v4885
    %v5008 = vpack.c.b16 %v4890, %v4888
    %v5009 = vpack.c.b16 %v4891, %v4889
    %v5010 = vpack.c.b16 %v4894, %v4892
    %v5011 = vpack.c.b16 %v4895, %v4893
    %v5012 = vpack.c.b16 %v4898, %v4896
    %v5013 = vpack.c.b16 %v4899, %v4897
    %v5014 = vpack.c.b16 %v4902, %v4900
    %v5015 = vpack.c.b16 %v4903, %v4901
    %v5016 = vpack.c.b16 %v4906, %v4904
    %v5017 = vpack.c.b16 %v4907, %v4905
    %v5018 = vpack.c.b16 %v4910, %v4908
    %v5019 = vpack.c.b16 %v4911, %v4909
    %v5020 = vpack.c.b16 %v4914, %v4912
    %v5021 = vpack.c.b16 %v4915, %v4913
    %v5022 = vpack.c.b16 %v4918, %v4916
    %v5023 = vpack.c.b16 %v4919, %v4917
    %v5024 = vpack.c.b16 %v4922, %v4920
    %v5025 = vpack.c.b16 %v4923, %v4921
    %v5026 = vpack.c.b16 %v4926, %v4924
    %v5027 = vpack.c.b16 %v4927, %v4925
    %v5028 = vpack.c.b16 %v4930, %v4928
    %v5029 = vpack.c.b16 %v4931, %v4929
    %v5030 = vpack.c.b16 %v4934, %v4932
    %v5031 = vpack.c.b16 %v4935, %v4933
    %v5032 = vpack.c.b16 %v4938, %v4936
    %v5033 = vpack.c.b16 %v4939, %v4937
    %v5034 = vpack.c.b16 %v4942, %v4940
    %v5035 = vpack.c.b16 %v4943, %v4941
    %v5036 = vpack.c.b16 %v4946, %v4944
    %v5037 = vpack.c.b16 %v4947, %v4945
    %v5038 = vpack.c.b16 %v4950, %v4948
    %v5039 = vpack.c.b16 %v4951, %v4949
    %v5040 = vpack.c.b16 %v4954, %v4952
    %v5041 = vpack.c.b16 %v4955, %v4953
    %v5042 = vpack.c.b16 %v4958, %v4956
    %v5043 = vpack.c.b16 %v4959, %v4957
    %v5044 = vpack.c.b16 %v4962, %v4960
    %v5045 = vpack.c.b16 %v4963, %v4961
    %v5046 = vpack.c.b16 %v4966, %v4964
    %v5047 = vpack.c.b16 %v4967, %v4965
    %v5048 = vpack.c.b16 %v4970, %v4968
    %v5049 = vpack.c.b16 %v4971, %v4969
    %v5050 = vpack.c.b16 %v4974, %v4972
    %v5051 = vpack.c.b16 %v4975, %v4973
    %v5052 = vpack.c.b16 %v4978, %v4976
    %v5053 = vpack.c.b16 %v4979, %v4977
    %v5054 = vpack.c.b16 %v4982, %v4980
    %v5055 = vpack.c.b16 %v4983, %v4981
    %v5056 = vpack.c.b16 %v4986, %v4984
    %v5057 = vpack.c.b16 %v4987, %v4985
    %v5058 = vpack.c.b16 %v4990, %v4988
    %v5059 = vpack.c.b16 %v4991, %v4989
    %v5060 = vpack.c.b16 %v4994, %v4992
    %v5061 = vpack.c.b16 %v4995, %v4993
    %v5062 = vpack.c.b16 %v4998, %v4996
    %v5063 = vpack.c.b16 %v4999, %v4997
    %5128 = vmatpush.bf16.msra.mxu0 %v5014
    %5129 = vmatpush.bf16.msra.mxu0 %v5012
    %5130 = vmatpush.bf16.msra.mxu0 %v5010
    %5131 = vmatpush.bf16.msra.mxu0 %v5008
    %5132 = vmatpush.bf16.msra.mxu0 %v5006
    %5133 = vmatpush.bf16.msra.mxu0 %v5004
    %5134 = vmatpush.bf16.msra.mxu0 %v5002
    %5135 = vmatpush.bf16.msra.mxu0 %v5000
    %5136 = vmatmul.bf16.gmra.mxu0 %v4488
    %v5137 = vpop.f32.mrf.mxu0
    %v5138 = vadd.f32 %v2158, %v5137
    %v5139 = vpop.f32.mrf.mxu0
    %v5140 = vadd.f32 %v2160, %v5139
    %5141 = vmatmul.bf16.gmra.mxu0 %v4492
    %v5142 = vpop.f32.mrf.mxu0
    %v5143 = vadd.f32 %v2163, %v5142
    %v5144 = vpop.f32.mrf.mxu0
    %v5145 = vadd.f32 %v2165, %v5144
    %5146 = vmatmul.bf16.gmra.mxu0 %v4496
    %v5147 = vpop.f32.mrf.mxu0
    %v5148 = vadd.f32 %v2168, %v5147
    %v5149 = vpop.f32.mrf.mxu0
    %v5150 = vadd.f32 %v2170, %v5149
    %5151 = vmatmul.bf16.gmra.mxu0 %v4500
    %v5152 = vpop.f32.mrf.mxu0
    %v5153 = vadd.f32 %v2173, %v5152
    %v5154 = vpop.f32.mrf.mxu0
    %v5155 = vadd.f32 %v2175, %v5154
    %5156 = vmatmul.bf16.gmra.mxu0 %v4504
    %v5157 = vpop.f32.mrf.mxu0
    %v5158 = vadd.f32 %v2178, %v5157
    %v5159 = vpop.f32.mrf.mxu0
    %v5160 = vadd.f32 %v2180, %v5159
    %5161 = vmatmul.bf16.gmra.mxu0 %v4508
    %v5162 = vpop.f32.mrf.mxu0
    %v5163 = vadd.f32 %v2183, %v5162
    %v5164 = vpop.f32.mrf.mxu0
    %v5165 = vadd.f32 %v2185, %v5164
    %5166 = vmatmul.bf16.gmra.mxu0 %v4512
    %v5167 = vpop.f32.mrf.mxu0
    %v5168 = vadd.f32 %v2188, %v5167
    %v5169 = vpop.f32.mrf.mxu0
    %v5170 = vadd.f32 %v2190, %v5169
    %5171 = vmatmul.bf16.gmra.mxu0 %v4516
    %v5172 = vpop.f32.mrf.mxu0
    %v5173 = vadd.f32 %v2193, %v5172
    %v5174 = vpop.f32.mrf.mxu0
    %v5175 = vadd.f32 %v2195, %v5174
    %5176 = vmatmul.bf16.gmra.mxu0 %v4520
    %v5177 = vpop.f32.mrf.mxu0
    %v5178 = vadd.f32 %v2198, %v5177
    %v5179 = vpop.f32.mrf.mxu0
    %v5180 = vadd.f32 %v2200, %v5179
    %5181 = vmatmul.bf16.gmra.mxu0 %v4524
    %v5182 = vpop.f32.mrf.mxu0
    %v5183 = vadd.f32 %v2203, %v5182
    %v5184 = vpop.f32.mrf.mxu0
    %v5185 = vadd.f32 %v2205, %v5184
    %5186 = vmatmul.bf16.gmra.mxu0 %v4528
    %v5187 = vpop.f32.mrf.mxu0
    %v5188 = vadd.f32 %v2208, %v5187
    %v5189 = vpop.f32.mrf.mxu0
    %v5190 = vadd.f32 %v2210, %v5189
    %5191 = vmatmul.bf16.gmra.mxu0 %v4532
    %v5192 = vpop.f32.mrf.mxu0
    %v5193 = vadd.f32 %v2213, %v5192
    %v5194 = vpop.f32.mrf.mxu0
    %v5195 = vadd.f32 %v2215, %v5194
    %5196 = vmatmul.bf16.gmra.mxu0 %v4536
    %v5197 = vpop.f32.mrf.mxu0
    %v5198 = vadd.f32 %v2218, %v5197
    %v5199 = vpop.f32.mrf.mxu0
    %v5200 = vadd.f32 %v2220, %v5199
    %5201 = vmatmul.bf16.gmra.mxu0 %v4540
    %v5202 = vpop.f32.mrf.mxu0
    %v5203 = vadd.f32 %v2223, %v5202
    %v5204 = vpop.f32.mrf.mxu0
    %v5205 = vadd.f32 %v2225, %v5204
    %5206 = vmatmul.bf16.gmra.mxu0 %v4544
    %v5207 = vpop.f32.mrf.mxu0
    %v5208 = vadd.f32 %v2228, %v5207
    %v5209 = vpop.f32.mrf.mxu0
    %v5210 = vadd.f32 %v2230, %v5209
    %5211 = vmatmul.bf16.gmra.mxu0 %v4548
    %v5212 = vpop.f32.mrf.mxu0
    %v5213 = vadd.f32 %v2233, %v5212
    %v5214 = vpop.f32.mrf.mxu0
    %v5215 = vadd.f32 %v2235, %v5214
    %5216 = vmatmul.bf16.gmra.mxu0 %v4552
    %v5217 = vpop.f32.mrf.mxu0
    %v5218 = vadd.f32 %v2238, %v5217
    %v5219 = vpop.f32.mrf.mxu0
    %v5220 = vadd.f32 %v2240, %v5219
    %5221 = vmatmul.bf16.gmra.mxu0 %v4556
    %v5222 = vpop.f32.mrf.mxu0
    %v5223 = vadd.f32 %v2243, %v5222
    %v5224 = vpop.f32.mrf.mxu0
    %v5225 = vadd.f32 %v2245, %v5224
    %5226 = vmatmul.bf16.gmra.mxu0 %v4560
    %v5227 = vpop.f32.mrf.mxu0
    %v5228 = vadd.f32 %v2248, %v5227
    %v5229 = vpop.f32.mrf.mxu0
    %v5230 = vadd.f32 %v2250, %v5229
    %5231 = vmatmul.bf16.gmra.mxu0 %v4564
    %v5232 = vpop.f32.mrf.mxu0
    %v5233 = vadd.f32 %v2253, %v5232
    %v5234 = vpop.f32.mrf.mxu0
    %v5235 = vadd.f32 %v2255, %v5234
    %5236 = vmatmul.bf16.gmra.mxu0 %v4568
    %v5237 = vpop.f32.mrf.mxu0
    %v5238 = vadd.f32 %v2258, %v5237
    %v5239 = vpop.f32.mrf.mxu0
    %v5240 = vadd.f32 %v2260, %v5239
    %5241 = vmatmul.bf16.gmra.mxu0 %v4572
    %v5242 = vpop.f32.mrf.mxu0
    %v5243 = vadd.f32 %v2263, %v5242
    %v5244 = vpop.f32.mrf.mxu0
    %v5245 = vadd.f32 %v2265, %v5244
    %5246 = vmatmul.bf16.gmra.mxu0 %v4576
    %v5247 = vpop.f32.mrf.mxu0
    %v5248 = vadd.f32 %v2268, %v5247
    %v5249 = vpop.f32.mrf.mxu0
    %v5250 = vadd.f32 %v2270, %v5249
    %5251 = vmatmul.bf16.gmra.mxu0 %v4580
    %v5252 = vpop.f32.mrf.mxu0
    %v5253 = vadd.f32 %v2273, %v5252
    %v5254 = vpop.f32.mrf.mxu0
    %v5255 = vadd.f32 %v2275, %v5254
    %5256 = vmatmul.bf16.gmra.mxu0 %v4584
    %v5257 = vpop.f32.mrf.mxu0
    %v5258 = vadd.f32 %v2278, %v5257
    %v5259 = vpop.f32.mrf.mxu0
    %v5260 = vadd.f32 %v2280, %v5259
    %5261 = vmatmul.bf16.gmra.mxu0 %v4588
    %v5262 = vpop.f32.mrf.mxu0
    %v5263 = vadd.f32 %v2283, %v5262
    %v5264 = vpop.f32.mrf.mxu0
    %v5265 = vadd.f32 %v2285, %v5264
    %5266 = vmatmul.bf16.gmra.mxu0 %v4592
    %v5267 = vpop.f32.mrf.mxu0
    %v5268 = vadd.f32 %v2288, %v5267
    %v5269 = vpop.f32.mrf.mxu0
    %v5270 = vadd.f32 %v2290, %v5269
    %5271 = vmatmul.bf16.gmra.mxu0 %v4596
    %v5272 = vpop.f32.mrf.mxu0
    %v5273 = vadd.f32 %v2293, %v5272
    %v5274 = vpop.f32.mrf.mxu0
    %v5275 = vadd.f32 %v2295, %v5274
    %5276 = vmatmul.bf16.gmra.mxu0 %v4600
    %v5277 = vpop.f32.mrf.mxu0
    %v5278 = vadd.f32 %v2298, %v5277
    %v5279 = vpop.f32.mrf.mxu0
    %v5280 = vadd.f32 %v2300, %v5279
    %5281 = vmatmul.bf16.gmra.mxu0 %v4604
    %v5282 = vpop.f32.mrf.mxu0
    %v5283 = vadd.f32 %v2303, %v5282
    %v5284 = vpop.f32.mrf.mxu0
    %v5285 = vadd.f32 %v2305, %v5284
    %5286 = vmatmul.bf16.gmra.mxu0 %v4608
    %v5287 = vpop.f32.mrf.mxu0
    %v5288 = vadd.f32 %v2308, %v5287
    %v5289 = vpop.f32.mrf.mxu0
    %v5290 = vadd.f32 %v2310, %v5289
    %5291 = vmatmul.bf16.gmra.mxu0 %v4612
    %v5292 = vpop.f32.mrf.mxu0
    %v5293 = vadd.f32 %v2313, %v5292
    %v5294 = vpop.f32.mrf.mxu0
    %v5295 = vadd.f32 %v2315, %v5294
    %5296 = vmatmul.bf16.gmra.mxu0 %v4616
    %v5297 = vpop.f32.mrf.mxu0
    %v5298 = vadd.f32 %v2318, %v5297
    %v5299 = vpop.f32.mrf.mxu0
    %v5300 = vadd.f32 %v2320, %v5299
    %5301 = vmatmul.bf16.gmra.mxu0 %v4620
    %v5302 = vpop.f32.mrf.mxu0
    %v5303 = vadd.f32 %v2323, %v5302
    %v5304 = vpop.f32.mrf.mxu0
    %v5305 = vadd.f32 %v2325, %v5304
    %5306 = vmatmul.bf16.gmra.mxu0 %v4624
    %v5307 = vpop.f32.mrf.mxu0
    %v5308 = vadd.f32 %v2328, %v5307
    %v5309 = vpop.f32.mrf.mxu0
    %v5310 = vadd.f32 %v2330, %v5309
    %5311 = vmatmul.bf16.gmra.mxu0 %v4628
    %v5312 = vpop.f32.mrf.mxu0
    %v5313 = vadd.f32 %v2333, %v5312
    %v5314 = vpop.f32.mrf.mxu0
    %v5315 = vadd.f32 %v2335, %v5314
    %5316 = vmatmul.bf16.gmra.mxu0 %v4632
    %v5317 = vpop.f32.mrf.mxu0
    %v5318 = vadd.f32 %v2338, %v5317
    %v5319 = vpop.f32.mrf.mxu0
    %v5320 = vadd.f32 %v2340, %v5319
    %5321 = vmatmul.bf16.gmra.mxu0 %v4636
    %v5322 = vpop.f32.mrf.mxu0
    %v5323 = vadd.f32 %v2343, %v5322
    %v5324 = vpop.f32.mrf.mxu0
    %v5325 = vadd.f32 %v2345, %v5324
    %5326 = vmatmul.bf16.gmra.mxu0 %v4640
    %v5327 = vpop.f32.mrf.mxu0
    %v5328 = vadd.f32 %v2348, %v5327
    %v5329 = vpop.f32.mrf.mxu0
    %v5330 = vadd.f32 %v2350, %v5329
    %5331 = vmatmul.bf16.gmra.mxu0 %v4644
    %v5332 = vpop.f32.mrf.mxu0
    %v5333 = vadd.f32 %v2353, %v5332
    %v5334 = vpop.f32.mrf.mxu0
    %v5335 = vadd.f32 %v2355, %v5334
    %5336 = vmatmul.bf16.gmra.mxu0 %v4648
    %v5337 = vpop.f32.mrf.mxu0
    %v5338 = vadd.f32 %v2358, %v5337
    %v5339 = vpop.f32.mrf.mxu0
    %v5340 = vadd.f32 %v2360, %v5339
    %5341 = vmatmul.bf16.gmra.mxu0 %v4652
    %v5342 = vpop.f32.mrf.mxu0
    %v5343 = vadd.f32 %v2363, %v5342
    %v5344 = vpop.f32.mrf.mxu0
    %v5345 = vadd.f32 %v2365, %v5344
    %5346 = vmatmul.bf16.gmra.mxu0 %v4656
    %v5347 = vpop.f32.mrf.mxu0
    %v5348 = vadd.f32 %v2368, %v5347
    %v5349 = vpop.f32.mrf.mxu0
    %v5350 = vadd.f32 %v2370, %v5349
    %5351 = vmatmul.bf16.gmra.mxu0 %v4660
    %v5352 = vpop.f32.mrf.mxu0
    %v5353 = vadd.f32 %v2373, %v5352
    %v5354 = vpop.f32.mrf.mxu0
    %v5355 = vadd.f32 %v2375, %v5354
    %5356 = vmatmul.bf16.gmra.mxu0 %v4664
    %v5357 = vpop.f32.mrf.mxu0
    %v5358 = vadd.f32 %v2378, %v5357
    %v5359 = vpop.f32.mrf.mxu0
    %v5360 = vadd.f32 %v2380, %v5359
    %5361 = vmatmul.bf16.gmra.mxu0 %v4668
    %v5362 = vpop.f32.mrf.mxu0
    %v5363 = vadd.f32 %v2383, %v5362
    %v5364 = vpop.f32.mrf.mxu0
    %v5365 = vadd.f32 %v2385, %v5364
    %5366 = vmatmul.bf16.gmra.mxu0 %v4672
    %v5367 = vpop.f32.mrf.mxu0
    %v5368 = vadd.f32 %v2388, %v5367
    %v5369 = vpop.f32.mrf.mxu0
    %v5370 = vadd.f32 %v2390, %v5369
    %5371 = vmatmul.bf16.gmra.mxu0 %v4676
    %v5372 = vpop.f32.mrf.mxu0
    %v5373 = vadd.f32 %v2393, %v5372
    %v5374 = vpop.f32.mrf.mxu0
    %v5375 = vadd.f32 %v2395, %v5374
    %5376 = vmatmul.bf16.gmra.mxu0 %v4680
    %v5377 = vpop.f32.mrf.mxu0
    %v5378 = vadd.f32 %v2398, %v5377
    %v5379 = vpop.f32.mrf.mxu0
    %v5380 = vadd.f32 %v2400, %v5379
    %5381 = vmatmul.bf16.gmra.mxu0 %v4684
    %v5382 = vpop.f32.mrf.mxu0
    %v5383 = vadd.f32 %v2403, %v5382
    %v5384 = vpop.f32.mrf.mxu0
    %v5385 = vadd.f32 %v2405, %v5384
    %5386 = vmatmul.bf16.gmra.mxu0 %v4688
    %v5387 = vpop.f32.mrf.mxu0
    %v5388 = vadd.f32 %v2408, %v5387
    %v5389 = vpop.f32.mrf.mxu0
    %v5390 = vadd.f32 %v2410, %v5389
    %5391 = vmatmul.bf16.gmra.mxu0 %v4692
    %v5392 = vpop.f32.mrf.mxu0
    %v5393 = vadd.f32 %v2413, %v5392
    %v5394 = vpop.f32.mrf.mxu0
    %v5395 = vadd.f32 %v2415, %v5394
    %5396 = vmatmul.bf16.gmra.mxu0 %v4696
    %v5397 = vpop.f32.mrf.mxu0
    %v5398 = vadd.f32 %v2418, %v5397
    %v5399 = vpop.f32.mrf.mxu0
    %v5400 = vadd.f32 %v2420, %v5399
    %5401 = vmatmul.bf16.gmra.mxu0 %v4700
    %v5402 = vpop.f32.mrf.mxu0
    %v5403 = vadd.f32 %v2423, %v5402
    %v5404 = vpop.f32.mrf.mxu0
    %v5405 = vadd.f32 %v2425, %v5404
    %5406 = vmatmul.bf16.gmra.mxu0 %v4704
    %v5407 = vpop.f32.mrf.mxu0
    %v5408 = vadd.f32 %v2428, %v5407
    %v5409 = vpop.f32.mrf.mxu0
    %v5410 = vadd.f32 %v2430, %v5409
    %5411 = vmatmul.bf16.gmra.mxu0 %v4708
    %v5412 = vpop.f32.mrf.mxu0
    %v5413 = vadd.f32 %v2433, %v5412
    %v5414 = vpop.f32.mrf.mxu0
    %v5415 = vadd.f32 %v2435, %v5414
    %5416 = vmatmul.bf16.gmra.mxu0 %v4712
    %v5417 = vpop.f32.mrf.mxu0
    %v5418 = vadd.f32 %v2438, %v5417
    %v5419 = vpop.f32.mrf.mxu0
    %v5420 = vadd.f32 %v2440, %v5419
    %5421 = vmatmul.bf16.gmra.mxu0 %v4716
    %v5422 = vpop.f32.mrf.mxu0
    %v5423 = vadd.f32 %v2443, %v5422
    %v5424 = vpop.f32.mrf.mxu0
    %v5425 = vadd.f32 %v2445, %v5424
    %5426 = vmatmul.bf16.gmra.mxu0 %v4720
    %v5427 = vpop.f32.mrf.mxu0
    %v5428 = vadd.f32 %v2448, %v5427
    %v5429 = vpop.f32.mrf.mxu0
    %v5430 = vadd.f32 %v2450, %v5429
    %5431 = vmatmul.bf16.gmra.mxu0 %v4724
    %v5432 = vpop.f32.mrf.mxu0
    %v5433 = vadd.f32 %v2453, %v5432
    %v5434 = vpop.f32.mrf.mxu0
    %v5435 = vadd.f32 %v2455, %v5434
    %5436 = vmatmul.bf16.gmra.mxu0 %v4728
    %v5437 = vpop.f32.mrf.mxu0
    %v5438 = vadd.f32 %v2458, %v5437
    %v5439 = vpop.f32.mrf.mxu0
    %v5440 = vadd.f32 %v2460, %v5439
    %5441 = vmatmul.bf16.gmra.mxu0 %v4732
    %v5442 = vpop.f32.mrf.mxu0
    %v5443 = vadd.f32 %v2463, %v5442
    %v5444 = vpop.f32.mrf.mxu0
    %v5445 = vadd.f32 %v2465, %v5444
    %5446 = vmatmul.bf16.gmra.mxu0 %v4736
    %v5447 = vpop.f32.mrf.mxu0
    %v5448 = vadd.f32 %v2468, %v5447
    %v5449 = vpop.f32.mrf.mxu0
    %v5450 = vadd.f32 %v2470, %v5449
    %5451 = vmatmul.bf16.gmra.mxu0 %v4740
    %v5452 = vpop.f32.mrf.mxu0
    %v5453 = vadd.f32 %v2473, %v5452
    %v5454 = vpop.f32.mrf.mxu0
    %v5455 = vadd.f32 %v2475, %v5454
    %5456 = vdwg.mxu0
    %5457 = vmatpush.bf16.msra.mxu0 %v5030
    %5458 = vmatpush.bf16.msra.mxu0 %v5028
    %5459 = vmatpush.bf16.msra.mxu0 %v5026
    %5460 = vmatpush.bf16.msra.mxu0 %v5024
    %5461 = vmatpush.bf16.msra.mxu0 %v5022
    %5462 = vmatpush.bf16.msra.mxu0 %v5020
    %5463 = vmatpush.bf16.msra.mxu0 %v5018
    %5464 = vmatpush.bf16.msra.mxu0 %v5016
    %5465 = vmatmul.bf16.gmra.mxu0 %v4489
    %v5466 = vpop.f32.mrf.mxu0
    %v5467 = vadd.f32 %v5138, %v5466
    %v5468 = vpop.f32.mrf.mxu0
    %v5469 = vadd.f32 %v5140, %v5468
    %5470 = vmatmul.bf16.gmra.mxu0 %v4493
    %v5471 = vpop.f32.mrf.mxu0
    %v5472 = vadd.f32 %v5143, %v5471
    %v5473 = vpop.f32.mrf.mxu0
    %v5474 = vadd.f32 %v5145, %v5473
    %5475 = vmatmul.bf16.gmra.mxu0 %v4497
    %v5476 = vpop.f32.mrf.mxu0
    %v5477 = vadd.f32 %v5148, %v5476
    %v5478 = vpop.f32.mrf.mxu0
    %v5479 = vadd.f32 %v5150, %v5478
    %5480 = vmatmul.bf16.gmra.mxu0 %v4501
    %v5481 = vpop.f32.mrf.mxu0
    %v5482 = vadd.f32 %v5153, %v5481
    %v5483 = vpop.f32.mrf.mxu0
    %v5484 = vadd.f32 %v5155, %v5483
    %5485 = vmatmul.bf16.gmra.mxu0 %v4505
    %v5486 = vpop.f32.mrf.mxu0
    %v5487 = vadd.f32 %v5158, %v5486
    %v5488 = vpop.f32.mrf.mxu0
    %v5489 = vadd.f32 %v5160, %v5488
    %5490 = vmatmul.bf16.gmra.mxu0 %v4509
    %v5491 = vpop.f32.mrf.mxu0
    %v5492 = vadd.f32 %v5163, %v5491
    %v5493 = vpop.f32.mrf.mxu0
    %v5494 = vadd.f32 %v5165, %v5493
    %5495 = vmatmul.bf16.gmra.mxu0 %v4513
    %v5496 = vpop.f32.mrf.mxu0
    %v5497 = vadd.f32 %v5168, %v5496
    %v5498 = vpop.f32.mrf.mxu0
    %v5499 = vadd.f32 %v5170, %v5498
    %5500 = vmatmul.bf16.gmra.mxu0 %v4517
    %v5501 = vpop.f32.mrf.mxu0
    %v5502 = vadd.f32 %v5173, %v5501
    %v5503 = vpop.f32.mrf.mxu0
    %v5504 = vadd.f32 %v5175, %v5503
    %5505 = vmatmul.bf16.gmra.mxu0 %v4521
    %v5506 = vpop.f32.mrf.mxu0
    %v5507 = vadd.f32 %v5178, %v5506
    %v5508 = vpop.f32.mrf.mxu0
    %v5509 = vadd.f32 %v5180, %v5508
    %5510 = vmatmul.bf16.gmra.mxu0 %v4525
    %v5511 = vpop.f32.mrf.mxu0
    %v5512 = vadd.f32 %v5183, %v5511
    %v5513 = vpop.f32.mrf.mxu0
    %v5514 = vadd.f32 %v5185, %v5513
    %5515 = vmatmul.bf16.gmra.mxu0 %v4529
    %v5516 = vpop.f32.mrf.mxu0
    %v5517 = vadd.f32 %v5188, %v5516
    %v5518 = vpop.f32.mrf.mxu0
    %v5519 = vadd.f32 %v5190, %v5518
    %5520 = vmatmul.bf16.gmra.mxu0 %v4533
    %v5521 = vpop.f32.mrf.mxu0
    %v5522 = vadd.f32 %v5193, %v5521
    %v5523 = vpop.f32.mrf.mxu0
    %v5524 = vadd.f32 %v5195, %v5523
    %5525 = vmatmul.bf16.gmra.mxu0 %v4537
    %v5526 = vpop.f32.mrf.mxu0
    %v5527 = vadd.f32 %v5198, %v5526
    %v5528 = vpop.f32.mrf.mxu0
    %v5529 = vadd.f32 %v5200, %v5528
    %5530 = vmatmul.bf16.gmra.mxu0 %v4541
    %v5531 = vpop.f32.mrf.mxu0
    %v5532 = vadd.f32 %v5203, %v5531
    %v5533 = vpop.f32.mrf.mxu0
    %v5534 = vadd.f32 %v5205, %v5533
    %5535 = vmatmul.bf16.gmra.mxu0 %v4545
    %v5536 = vpop.f32.mrf.mxu0
    %v5537 = vadd.f32 %v5208, %v5536
    %v5538 = vpop.f32.mrf.mxu0
    %v5539 = vadd.f32 %v5210, %v5538
    %5540 = vmatmul.bf16.gmra.mxu0 %v4549
    %v5541 = vpop.f32.mrf.mxu0
    %v5542 = vadd.f32 %v5213, %v5541
    %v5543 = vpop.f32.mrf.mxu0
    %v5544 = vadd.f32 %v5215, %v5543
    %5545 = vmatmul.bf16.gmra.mxu0 %v4553
    %v5546 = vpop.f32.mrf.mxu0
    %v5547 = vadd.f32 %v5218, %v5546
    %v5548 = vpop.f32.mrf.mxu0
    %v5549 = vadd.f32 %v5220, %v5548
    %5550 = vmatmul.bf16.gmra.mxu0 %v4557
    %v5551 = vpop.f32.mrf.mxu0
    %v5552 = vadd.f32 %v5223, %v5551
    %v5553 = vpop.f32.mrf.mxu0
    %v5554 = vadd.f32 %v5225, %v5553
    %5555 = vmatmul.bf16.gmra.mxu0 %v4561
    %v5556 = vpop.f32.mrf.mxu0
    %v5557 = vadd.f32 %v5228, %v5556
    %v5558 = vpop.f32.mrf.mxu0
    %v5559 = vadd.f32 %v5230, %v5558
    %5560 = vmatmul.bf16.gmra.mxu0 %v4565
    %v5561 = vpop.f32.mrf.mxu0
    %v5562 = vadd.f32 %v5233, %v5561
    %v5563 = vpop.f32.mrf.mxu0
    %v5564 = vadd.f32 %v5235, %v5563
    %5565 = vmatmul.bf16.gmra.mxu0 %v4569
    %v5566 = vpop.f32.mrf.mxu0
    %v5567 = vadd.f32 %v5238, %v5566
    %v5568 = vpop.f32.mrf.mxu0
    %v5569 = vadd.f32 %v5240, %v5568
    %5570 = vmatmul.bf16.gmra.mxu0 %v4573
    %v5571 = vpop.f32.mrf.mxu0
    %v5572 = vadd.f32 %v5243, %v5571
    %v5573 = vpop.f32.mrf.mxu0
    %v5574 = vadd.f32 %v5245, %v5573
    %5575 = vmatmul.bf16.gmra.mxu0 %v4577
    %v5576 = vpop.f32.mrf.mxu0
    %v5577 = vadd.f32 %v5248, %v5576
    %v5578 = vpop.f32.mrf.mxu0
    %v5579 = vadd.f32 %v5250, %v5578
    %5580 = vmatmul.bf16.gmra.mxu0 %v4581
    %v5581 = vpop.f32.mrf.mxu0
    %v5582 = vadd.f32 %v5253, %v5581
    %v5583 = vpop.f32.mrf.mxu0
    %v5584 = vadd.f32 %v5255, %v5583
    %5585 = vmatmul.bf16.gmra.mxu0 %v4585
    %v5586 = vpop.f32.mrf.mxu0
    %v5587 = vadd.f32 %v5258, %v5586
    %v5588 = vpop.f32.mrf.mxu0
    %v5589 = vadd.f32 %v5260, %v5588
    %5590 = vmatmul.bf16.gmra.mxu0 %v4589
    %v5591 = vpop.f32.mrf.mxu0
    %v5592 = vadd.f32 %v5263, %v5591
    %v5593 = vpop.f32.mrf.mxu0
    %v5594 = vadd.f32 %v5265, %v5593
    %5595 = vmatmul.bf16.gmra.mxu0 %v4593
    %v5596 = vpop.f32.mrf.mxu0
    %v5597 = vadd.f32 %v5268, %v5596
    %v5598 = vpop.f32.mrf.mxu0
    %v5599 = vadd.f32 %v5270, %v5598
    %5600 = vmatmul.bf16.gmra.mxu0 %v4597
    %v5601 = vpop.f32.mrf.mxu0
    %v5602 = vadd.f32 %v5273, %v5601
    %v5603 = vpop.f32.mrf.mxu0
    %v5604 = vadd.f32 %v5275, %v5603
    %5605 = vmatmul.bf16.gmra.mxu0 %v4601
    %v5606 = vpop.f32.mrf.mxu0
    %v5607 = vadd.f32 %v5278, %v5606
    %v5608 = vpop.f32.mrf.mxu0
    %v5609 = vadd.f32 %v5280, %v5608
    %5610 = vmatmul.bf16.gmra.mxu0 %v4605
    %v5611 = vpop.f32.mrf.mxu0
    %v5612 = vadd.f32 %v5283, %v5611
    %v5613 = vpop.f32.mrf.mxu0
    %v5614 = vadd.f32 %v5285, %v5613
    %5615 = vmatmul.bf16.gmra.mxu0 %v4609
    %v5616 = vpop.f32.mrf.mxu0
    %v5617 = vadd.f32 %v5288, %v5616
    %v5618 = vpop.f32.mrf.mxu0
    %v5619 = vadd.f32 %v5290, %v5618
    %5620 = vmatmul.bf16.gmra.mxu0 %v4613
    %v5621 = vpop.f32.mrf.mxu0
    %v5622 = vadd.f32 %v5293, %v5621
    %v5623 = vpop.f32.mrf.mxu0
    %v5624 = vadd.f32 %v5295, %v5623
    %5625 = vmatmul.bf16.gmra.mxu0 %v4617
    %v5626 = vpop.f32.mrf.mxu0
    %v5627 = vadd.f32 %v5298, %v5626
    %v5628 = vpop.f32.mrf.mxu0
    %v5629 = vadd.f32 %v5300, %v5628
    %5630 = vmatmul.bf16.gmra.mxu0 %v4621
    %v5631 = vpop.f32.mrf.mxu0
    %v5632 = vadd.f32 %v5303, %v5631
    %v5633 = vpop.f32.mrf.mxu0
    %v5634 = vadd.f32 %v5305, %v5633
    %5635 = vmatmul.bf16.gmra.mxu0 %v4625
    %v5636 = vpop.f32.mrf.mxu0
    %v5637 = vadd.f32 %v5308, %v5636
    %v5638 = vpop.f32.mrf.mxu0
    %v5639 = vadd.f32 %v5310, %v5638
    %5640 = vmatmul.bf16.gmra.mxu0 %v4629
    %v5641 = vpop.f32.mrf.mxu0
    %v5642 = vadd.f32 %v5313, %v5641
    %v5643 = vpop.f32.mrf.mxu0
    %v5644 = vadd.f32 %v5315, %v5643
    %5645 = vmatmul.bf16.gmra.mxu0 %v4633
    %v5646 = vpop.f32.mrf.mxu0
    %v5647 = vadd.f32 %v5318, %v5646
    %v5648 = vpop.f32.mrf.mxu0
    %v5649 = vadd.f32 %v5320, %v5648
    %5650 = vmatmul.bf16.gmra.mxu0 %v4637
    %v5651 = vpop.f32.mrf.mxu0
    %v5652 = vadd.f32 %v5323, %v5651
    %v5653 = vpop.f32.mrf.mxu0
    %v5654 = vadd.f32 %v5325, %v5653
    %5655 = vmatmul.bf16.gmra.mxu0 %v4641
    %v5656 = vpop.f32.mrf.mxu0
    %v5657 = vadd.f32 %v5328, %v5656
    %v5658 = vpop.f32.mrf.mxu0
    %v5659 = vadd.f32 %v5330, %v5658
    %5660 = vmatmul.bf16.gmra.mxu0 %v4645
    %v5661 = vpop.f32.mrf.mxu0
    %v5662 = vadd.f32 %v5333, %v5661
    %v5663 = vpop.f32.mrf.mxu0
    %v5664 = vadd.f32 %v5335, %v5663
    %5665 = vmatmul.bf16.gmra.mxu0 %v4649
    %v5666 = vpop.f32.mrf.mxu0
    %v5667 = vadd.f32 %v5338, %v5666
    %v5668 = vpop.f32.mrf.mxu0
    %v5669 = vadd.f32 %v5340, %v5668
    %5670 = vmatmul.bf16.gmra.mxu0 %v4653
    %v5671 = vpop.f32.mrf.mxu0
    %v5672 = vadd.f32 %v5343, %v5671
    %v5673 = vpop.f32.mrf.mxu0
    %v5674 = vadd.f32 %v5345, %v5673
    %5675 = vmatmul.bf16.gmra.mxu0 %v4657
    %v5676 = vpop.f32.mrf.mxu0
    %v5677 = vadd.f32 %v5348, %v5676
    %v5678 = vpop.f32.mrf.mxu0
    %v5679 = vadd.f32 %v5350, %v5678
    %5680 = vmatmul.bf16.gmra.mxu0 %v4661
    %v5681 = vpop.f32.mrf.mxu0
    %v5682 = vadd.f32 %v5353, %v5681
    %v5683 = vpop.f32.mrf.mxu0
    %v5684 = vadd.f32 %v5355, %v5683
    %5685 = vmatmul.bf16.gmra.mxu0 %v4665
    %v5686 = vpop.f32.mrf.mxu0
    %v5687 = vadd.f32 %v5358, %v5686
    %v5688 = vpop.f32.mrf.mxu0
    %v5689 = vadd.f32 %v5360, %v5688
    %5690 = vmatmul.bf16.gmra.mxu0 %v4669
    %v5691 = vpop.f32.mrf.mxu0
    %v5692 = vadd.f32 %v5363, %v5691
    %v5693 = vpop.f32.mrf.mxu0
    %v5694 = vadd.f32 %v5365, %v5693
    %5695 = vmatmul.bf16.gmra.mxu0 %v4673
    %v5696 = vpop.f32.mrf.mxu0
    %v5697 = vadd.f32 %v5368, %v5696
    %v5698 = vpop.f32.mrf.mxu0
    %v5699 = vadd.f32 %v5370, %v5698
    %5700 = vmatmul.bf16.gmra.mxu0 %v4677
    %v5701 = vpop.f32.mrf.mxu0
    %v5702 = vadd.f32 %v5373, %v5701
    %v5703 = vpop.f32.mrf.mxu0
    %v5704 = vadd.f32 %v5375, %v5703
    %5705 = vmatmul.bf16.gmra.mxu0 %v4681
    %v5706 = vpop.f32.mrf.mxu0
    %v5707 = vadd.f32 %v5378, %v5706
    %v5708 = vpop.f32.mrf.mxu0
    %v5709 = vadd.f32 %v5380, %v5708
    %5710 = vmatmul.bf16.gmra.mxu0 %v4685
    %v5711 = vpop.f32.mrf.mxu0
    %v5712 = vadd.f32 %v5383, %v5711
    %v5713 = vpop.f32.mrf.mxu0
    %v5714 = vadd.f32 %v5385, %v5713
    %5715 = vmatmul.bf16.gmra.mxu0 %v4689
    %v5716 = vpop.f32.mrf.mxu0
    %v5717 = vadd.f32 %v5388, %v5716
    %v5718 = vpop.f32.mrf.mxu0
    %v5719 = vadd.f32 %v5390, %v5718
    %5720 = vmatmul.bf16.gmra.mxu0 %v4693
    %v5721 = vpop.f32.mrf.mxu0
    %v5722 = vadd.f32 %v5393, %v5721
    %v5723 = vpop.f32.mrf.mxu0
    %v5724 = vadd.f32 %v5395, %v5723
    %5725 = vmatmul.bf16.gmra.mxu0 %v4697
    %v5726 = vpop.f32.mrf.mxu0
    %v5727 = vadd.f32 %v5398, %v5726
    %v5728 = vpop.f32.mrf.mxu0
    %v5729 = vadd.f32 %v5400, %v5728
    %5730 = vmatmul.bf16.gmra.mxu0 %v4701
    %v5731 = vpop.f32.mrf.mxu0
    %v5732 = vadd.f32 %v5403, %v5731
    %v5733 = vpop.f32.mrf.mxu0
    %v5734 = vadd.f32 %v5405, %v5733
    %5735 = vmatmul.bf16.gmra.mxu0 %v4705
    %v5736 = vpop.f32.mrf.mxu0
    %v5737 = vadd.f32 %v5408, %v5736
    %v5738 = vpop.f32.mrf.mxu0
    %v5739 = vadd.f32 %v5410, %v5738
    %5740 = vmatmul.bf16.gmra.mxu0 %v4709
    %v5741 = vpop.f32.mrf.mxu0
    %v5742 = vadd.f32 %v5413, %v5741
    %v5743 = vpop.f32.mrf.mxu0
    %v5744 = vadd.f32 %v5415, %v5743
    %5745 = vmatmul.bf16.gmra.mxu0 %v4713
    %v5746 = vpop.f32.mrf.mxu0
    %v5747 = vadd.f32 %v5418, %v5746
    %v5748 = vpop.f32.mrf.mxu0
    %v5749 = vadd.f32 %v5420, %v5748
    %5750 = vmatmul.bf16.gmra.mxu0 %v4717
    %v5751 = vpop.f32.mrf.mxu0
    %v5752 = vadd.f32 %v5423, %v5751
    %v5753 = vpop.f32.mrf.mxu0
    %v5754 = vadd.f32 %v5425, %v5753
    %5755 = vmatmul.bf16.gmra.mxu0 %v4721
    %v5756 = vpop.f32.mrf.mxu0
    %v5757 = vadd.f32 %v5428, %v5756
    %v5758 = vpop.f32.mrf.mxu0
    %v5759 = vadd.f32 %v5430, %v5758
    %5760 = vmatmul.bf16.gmra.mxu0 %v4725
    %v5761 = vpop.f32.mrf.mxu0
    %v5762 = vadd.f32 %v5433, %v5761
    %v5763 = vpop.f32.mrf.mxu0
    %v5764 = vadd.f32 %v5435, %v5763
    %5765 = vmatmul.bf16.gmra.mxu0 %v4729
    %v5766 = vpop.f32.mrf.mxu0
    %v5767 = vadd.f32 %v5438, %v5766
    %v5768 = vpop.f32.mrf.mxu0
    %v5769 = vadd.f32 %v5440, %v5768
    %5770 = vmatmul.bf16.gmra.mxu0 %v4733
    %v5771 = vpop.f32.mrf.mxu0
    %v5772 = vadd.f32 %v5443, %v5771
    %v5773 = vpop.f32.mrf.mxu0
    %v5774 = vadd.f32 %v5445, %v5773
    %5775 = vmatmul.bf16.gmra.mxu0 %v4737
    %v5776 = vpop.f32.mrf.mxu0
    %v5777 = vadd.f32 %v5448, %v5776
    %v5778 = vpop.f32.mrf.mxu0
    %v5779 = vadd.f32 %v5450, %v5778
    %5780 = vmatmul.bf16.gmra.mxu0 %v4741
    %v5781 = vpop.f32.mrf.mxu0
    %v5782 = vadd.f32 %v5453, %v5781
    %v5783 = vpop.f32.mrf.mxu0
    %v5784 = vadd.f32 %v5455, %v5783
    %5785 = vdwg.mxu0
    %5786 = vmatpush.bf16.msra.mxu0 %v5046
    %5787 = vmatpush.bf16.msra.mxu0 %v5044
    %5788 = vmatpush.bf16.msra.mxu0 %v5042
    %5789 = vmatpush.bf16.msra.mxu0 %v5040
    %5790 = vmatpush.bf16.msra.mxu0 %v5038
    %5791 = vmatpush.bf16.msra.mxu0 %v5036
    %5792 = vmatpush.bf16.msra.mxu0 %v5034
    %5793 = vmatpush.bf16.msra.mxu0 %v5032
    %5794 = vmatmul.bf16.gmra.mxu0 %v4490
    %v5795 = vpop.f32.mrf.mxu0
    %v5796 = vadd.f32 %v5467, %v5795
    %v5797 = vpop.f32.mrf.mxu0
    %v5798 = vadd.f32 %v5469, %v5797
    %5799 = vmatmul.bf16.gmra.mxu0 %v4494
    %v5800 = vpop.f32.mrf.mxu0
    %v5801 = vadd.f32 %v5472, %v5800
    %v5802 = vpop.f32.mrf.mxu0
    %v5803 = vadd.f32 %v5474, %v5802
    %5804 = vmatmul.bf16.gmra.mxu0 %v4498
    %v5805 = vpop.f32.mrf.mxu0
    %v5806 = vadd.f32 %v5477, %v5805
    %v5807 = vpop.f32.mrf.mxu0
    %v5808 = vadd.f32 %v5479, %v5807
    %5809 = vmatmul.bf16.gmra.mxu0 %v4502
    %v5810 = vpop.f32.mrf.mxu0
    %v5811 = vadd.f32 %v5482, %v5810
    %v5812 = vpop.f32.mrf.mxu0
    %v5813 = vadd.f32 %v5484, %v5812
    %5814 = vmatmul.bf16.gmra.mxu0 %v4506
    %v5815 = vpop.f32.mrf.mxu0
    %v5816 = vadd.f32 %v5487, %v5815
    %v5817 = vpop.f32.mrf.mxu0
    %v5818 = vadd.f32 %v5489, %v5817
    %5819 = vmatmul.bf16.gmra.mxu0 %v4510
    %v5820 = vpop.f32.mrf.mxu0
    %v5821 = vadd.f32 %v5492, %v5820
    %v5822 = vpop.f32.mrf.mxu0
    %v5823 = vadd.f32 %v5494, %v5822
    %5824 = vmatmul.bf16.gmra.mxu0 %v4514
    %v5825 = vpop.f32.mrf.mxu0
    %v5826 = vadd.f32 %v5497, %v5825
    %v5827 = vpop.f32.mrf.mxu0
    %v5828 = vadd.f32 %v5499, %v5827
    %5829 = vmatmul.bf16.gmra.mxu0 %v4518
    %v5830 = vpop.f32.mrf.mxu0
    %v5831 = vadd.f32 %v5502, %v5830
    %v5832 = vpop.f32.mrf.mxu0
    %v5833 = vadd.f32 %v5504, %v5832
    %5834 = vmatmul.bf16.gmra.mxu0 %v4522
    %v5835 = vpop.f32.mrf.mxu0
    %v5836 = vadd.f32 %v5507, %v5835
    %v5837 = vpop.f32.mrf.mxu0
    %v5838 = vadd.f32 %v5509, %v5837
    %5839 = vmatmul.bf16.gmra.mxu0 %v4526
    %v5840 = vpop.f32.mrf.mxu0
    %v5841 = vadd.f32 %v5512, %v5840
    %v5842 = vpop.f32.mrf.mxu0
    %v5843 = vadd.f32 %v5514, %v5842
    %5844 = vmatmul.bf16.gmra.mxu0 %v4530
    %v5845 = vpop.f32.mrf.mxu0
    %v5846 = vadd.f32 %v5517, %v5845
    %v5847 = vpop.f32.mrf.mxu0
    %v5848 = vadd.f32 %v5519, %v5847
    %5849 = vmatmul.bf16.gmra.mxu0 %v4534
    %v5850 = vpop.f32.mrf.mxu0
    %v5851 = vadd.f32 %v5522, %v5850
    %v5852 = vpop.f32.mrf.mxu0
    %v5853 = vadd.f32 %v5524, %v5852
    %5854 = vmatmul.bf16.gmra.mxu0 %v4538
    %v5855 = vpop.f32.mrf.mxu0
    %v5856 = vadd.f32 %v5527, %v5855
    %v5857 = vpop.f32.mrf.mxu0
    %v5858 = vadd.f32 %v5529, %v5857
    %5859 = vmatmul.bf16.gmra.mxu0 %v4542
    %v5860 = vpop.f32.mrf.mxu0
    %v5861 = vadd.f32 %v5532, %v5860
    %v5862 = vpop.f32.mrf.mxu0
    %v5863 = vadd.f32 %v5534, %v5862
    %5864 = vmatmul.bf16.gmra.mxu0 %v4546
    %v5865 = vpop.f32.mrf.mxu0
    %v5866 = vadd.f32 %v5537, %v5865
    %v5867 = vpop.f32.mrf.mxu0
    %v5868 = vadd.f32 %v5539, %v5867
    %5869 = vmatmul.bf16.gmra.mxu0 %v4550
    %v5870 = vpop.f32.mrf.mxu0
    %v5871 = vadd.f32 %v5542, %v5870
    %v5872 = vpop.f32.mrf.mxu0
    %v5873 = vadd.f32 %v5544, %v5872
    %5874 = vmatmul.bf16.gmra.mxu0 %v4554
    %v5875 = vpop.f32.mrf.mxu0
    %v5876 = vadd.f32 %v5547, %v5875
    %v5877 = vpop.f32.mrf.mxu0
    %v5878 = vadd.f32 %v5549, %v5877
    %5879 = vmatmul.bf16.gmra.mxu0 %v4558
    %v5880 = vpop.f32.mrf.mxu0
    %v5881 = vadd.f32 %v5552, %v5880
    %v5882 = vpop.f32.mrf.mxu0
    %v5883 = vadd.f32 %v5554, %v5882
    %5884 = vmatmul.bf16.gmra.mxu0 %v4562
    %v5885 = vpop.f32.mrf.mxu0
    %v5886 = vadd.f32 %v5557, %v5885
    %v5887 = vpop.f32.mrf.mxu0
    %v5888 = vadd.f32 %v5559, %v5887
    %5889 = vmatmul.bf16.gmra.mxu0 %v4566
    %v5890 = vpop.f32.mrf.mxu0
    %v5891 = vadd.f32 %v5562, %v5890
    %v5892 = vpop.f32.mrf.mxu0
    %v5893 = vadd.f32 %v5564, %v5892
    %5894 = vmatmul.bf16.gmra.mxu0 %v4570
    %v5895 = vpop.f32.mrf.mxu0
    %v5896 = vadd.f32 %v5567, %v5895
    %v5897 = vpop.f32.mrf.mxu0
    %v5898 = vadd.f32 %v5569, %v5897
    %5899 = vmatmul.bf16.gmra.mxu0 %v4574
    %v5900 = vpop.f32.mrf.mxu0
    %v5901 = vadd.f32 %v5572, %v5900
    %v5902 = vpop.f32.mrf.mxu0
    %v5903 = vadd.f32 %v5574, %v5902
    %5904 = vmatmul.bf16.gmra.mxu0 %v4578
    %v5905 = vpop.f32.mrf.mxu0
    %v5906 = vadd.f32 %v5577, %v5905
    %v5907 = vpop.f32.mrf.mxu0
    %v5908 = vadd.f32 %v5579, %v5907
    %5909 = vmatmul.bf16.gmra.mxu0 %v4582
    %v5910 = vpop.f32.mrf.mxu0
    %v5911 = vadd.f32 %v5582, %v5910
    %v5912 = vpop.f32.mrf.mxu0
    %v5913 = vadd.f32 %v5584, %v5912
    %5914 = vmatmul.bf16.gmra.mxu0 %v4586
    %v5915 = vpop.f32.mrf.mxu0
    %v5916 = vadd.f32 %v5587, %v5915
    %v5917 = vpop.f32.mrf.mxu0
    %v5918 = vadd.f32 %v5589, %v5917
    %5919 = vmatmul.bf16.gmra.mxu0 %v4590
    %v5920 = vpop.f32.mrf.mxu0
    %v5921 = vadd.f32 %v5592, %v5920
    %v5922 = vpop.f32.mrf.mxu0
    %v5923 = vadd.f32 %v5594, %v5922
    %5924 = vmatmul.bf16.gmra.mxu0 %v4594
    %v5925 = vpop.f32.mrf.mxu0
    %v5926 = vadd.f32 %v5597, %v5925
    %v5927 = vpop.f32.mrf.mxu0
    %v5928 = vadd.f32 %v5599, %v5927
    %5929 = vmatmul.bf16.gmra.mxu0 %v4598
    %v5930 = vpop.f32.mrf.mxu0
    %v5931 = vadd.f32 %v5602, %v5930
    %v5932 = vpop.f32.mrf.mxu0
    %v5933 = vadd.f32 %v5604, %v5932
    %5934 = vmatmul.bf16.gmra.mxu0 %v4602
    %v5935 = vpop.f32.mrf.mxu0
    %v5936 = vadd.f32 %v5607, %v5935
    %v5937 = vpop.f32.mrf.mxu0
    %v5938 = vadd.f32 %v5609, %v5937
    %5939 = vmatmul.bf16.gmra.mxu0 %v4606
    %v5940 = vpop.f32.mrf.mxu0
    %v5941 = vadd.f32 %v5612, %v5940
    %v5942 = vpop.f32.mrf.mxu0
    %v5943 = vadd.f32 %v5614, %v5942
    %5944 = vmatmul.bf16.gmra.mxu0 %v4610
    %v5945 = vpop.f32.mrf.mxu0
    %v5946 = vadd.f32 %v5617, %v5945
    %v5947 = vpop.f32.mrf.mxu0
    %v5948 = vadd.f32 %v5619, %v5947
    %5949 = vmatmul.bf16.gmra.mxu0 %v4614
    %v5950 = vpop.f32.mrf.mxu0
    %v5951 = vadd.f32 %v5622, %v5950
    %v5952 = vpop.f32.mrf.mxu0
    %v5953 = vadd.f32 %v5624, %v5952
    %5954 = vmatmul.bf16.gmra.mxu0 %v4618
    %v5955 = vpop.f32.mrf.mxu0
    %v5956 = vadd.f32 %v5627, %v5955
    %v5957 = vpop.f32.mrf.mxu0
    %v5958 = vadd.f32 %v5629, %v5957
    %5959 = vmatmul.bf16.gmra.mxu0 %v4622
    %v5960 = vpop.f32.mrf.mxu0
    %v5961 = vadd.f32 %v5632, %v5960
    %v5962 = vpop.f32.mrf.mxu0
    %v5963 = vadd.f32 %v5634, %v5962
    %5964 = vmatmul.bf16.gmra.mxu0 %v4626
    %v5965 = vpop.f32.mrf.mxu0
    %v5966 = vadd.f32 %v5637, %v5965
    %v5967 = vpop.f32.mrf.mxu0
    %v5968 = vadd.f32 %v5639, %v5967
    %5969 = vmatmul.bf16.gmra.mxu0 %v4630
    %v5970 = vpop.f32.mrf.mxu0
    %v5971 = vadd.f32 %v5642, %v5970
    %v5972 = vpop.f32.mrf.mxu0
    %v5973 = vadd.f32 %v5644, %v5972
    %5974 = vmatmul.bf16.gmra.mxu0 %v4634
    %v5975 = vpop.f32.mrf.mxu0
    %v5976 = vadd.f32 %v5647, %v5975
    %v5977 = vpop.f32.mrf.mxu0
    %v5978 = vadd.f32 %v5649, %v5977
    %5979 = vmatmul.bf16.gmra.mxu0 %v4638
    %v5980 = vpop.f32.mrf.mxu0
    %v5981 = vadd.f32 %v5652, %v5980
    %v5982 = vpop.f32.mrf.mxu0
    %v5983 = vadd.f32 %v5654, %v5982
    %5984 = vmatmul.bf16.gmra.mxu0 %v4642
    %v5985 = vpop.f32.mrf.mxu0
    %v5986 = vadd.f32 %v5657, %v5985
    %v5987 = vpop.f32.mrf.mxu0
    %v5988 = vadd.f32 %v5659, %v5987
    %5989 = vmatmul.bf16.gmra.mxu0 %v4646
    %v5990 = vpop.f32.mrf.mxu0
    %v5991 = vadd.f32 %v5662, %v5990
    %v5992 = vpop.f32.mrf.mxu0
    %v5993 = vadd.f32 %v5664, %v5992
    %5994 = vmatmul.bf16.gmra.mxu0 %v4650
    %v5995 = vpop.f32.mrf.mxu0
    %v5996 = vadd.f32 %v5667, %v5995
    %v5997 = vpop.f32.mrf.mxu0
    %v5998 = vadd.f32 %v5669, %v5997
    %5999 = vmatmul.bf16.gmra.mxu0 %v4654
    %v6000 = vpop.f32.mrf.mxu0
    %v6001 = vadd.f32 %v5672, %v6000
    %v6002 = vpop.f32.mrf.mxu0
    %v6003 = vadd.f32 %v5674, %v6002
    %6004 = vmatmul.bf16.gmra.mxu0 %v4658
    %v6005 = vpop.f32.mrf.mxu0
    %v6006 = vadd.f32 %v5677, %v6005
    %v6007 = vpop.f32.mrf.mxu0
    %v6008 = vadd.f32 %v5679, %v6007
    %6009 = vmatmul.bf16.gmra.mxu0 %v4662
    %v6010 = vpop.f32.mrf.mxu0
    %v6011 = vadd.f32 %v5682, %v6010
    %v6012 = vpop.f32.mrf.mxu0
    %v6013 = vadd.f32 %v5684, %v6012
    %6014 = vmatmul.bf16.gmra.mxu0 %v4666
    %v6015 = vpop.f32.mrf.mxu0
    %v6016 = vadd.f32 %v5687, %v6015
    %v6017 = vpop.f32.mrf.mxu0
    %v6018 = vadd.f32 %v5689, %v6017
    %6019 = vmatmul.bf16.gmra.mxu0 %v4670
    %v6020 = vpop.f32.mrf.mxu0
    %v6021 = vadd.f32 %v5692, %v6020
    %v6022 = vpop.f32.mrf.mxu0
    %v6023 = vadd.f32 %v5694, %v6022
    %6024 = vmatmul.bf16.gmra.mxu0 %v4674
    %v6025 = vpop.f32.mrf.mxu0
    %v6026 = vadd.f32 %v5697, %v6025
    %v6027 = vpop.f32.mrf.mxu0
    %v6028 = vadd.f32 %v5699, %v6027
    %6029 = vmatmul.bf16.gmra.mxu0 %v4678
    %v6030 = vpop.f32.mrf.mxu0
    %v6031 = vadd.f32 %v5702, %v6030
    %v6032 = vpop.f32.mrf.mxu0
    %v6033 = vadd.f32 %v5704, %v6032
    %6034 = vmatmul.bf16.gmra.mxu0 %v4682
    %v6035 = vpop.f32.mrf.mxu0
    %v6036 = vadd.f32 %v5707, %v6035
    %v6037 = vpop.f32.mrf.mxu0
    %v6038 = vadd.f32 %v5709, %v6037
    %6039 = vmatmul.bf16.gmra.mxu0 %v4686
    %v6040 = vpop.f32.mrf.mxu0
    %v6041 = vadd.f32 %v5712, %v6040
    %v6042 = vpop.f32.mrf.mxu0
    %v6043 = vadd.f32 %v5714, %v6042
    %6044 = vmatmul.bf16.gmra.mxu0 %v4690
    %v6045 = vpop.f32.mrf.mxu0
    %v6046 = vadd.f32 %v5717, %v6045
    %v6047 = vpop.f32.mrf.mxu0
    %v6048 = vadd.f32 %v5719, %v6047
    %6049 = vmatmul.bf16.gmra.mxu0 %v4694
    %v6050 = vpop.f32.mrf.mxu0
    %v6051 = vadd.f32 %v5722, %v6050
    %v6052 = vpop.f32.mrf.mxu0
    %v6053 = vadd.f32 %v5724, %v6052
    %6054 = vmatmul.bf16.gmra.mxu0 %v4698
    %v6055 = vpop.f32.mrf.mxu0
    %v6056 = vadd.f32 %v5727, %v6055
    %v6057 = vpop.f32.mrf.mxu0
    %v6058 = vadd.f32 %v5729, %v6057
    %6059 = vmatmul.bf16.gmra.mxu0 %v4702
    %v6060 = vpop.f32.mrf.mxu0
    %v6061 = vadd.f32 %v5732, %v6060
    %v6062 = vpop.f32.mrf.mxu0
    %v6063 = vadd.f32 %v5734, %v6062
    %6064 = vmatmul.bf16.gmra.mxu0 %v4706
    %v6065 = vpop.f32.mrf.mxu0
    %v6066 = vadd.f32 %v5737, %v6065
    %v6067 = vpop.f32.mrf.mxu0
    %v6068 = vadd.f32 %v5739, %v6067
    %6069 = vmatmul.bf16.gmra.mxu0 %v4710
    %v6070 = vpop.f32.mrf.mxu0
    %v6071 = vadd.f32 %v5742, %v6070
    %v6072 = vpop.f32.mrf.mxu0
    %v6073 = vadd.f32 %v5744, %v6072
    %6074 = vmatmul.bf16.gmra.mxu0 %v4714
    %v6075 = vpop.f32.mrf.mxu0
    %v6076 = vadd.f32 %v5747, %v6075
    %v6077 = vpop.f32.mrf.mxu0
    %v6078 = vadd.f32 %v5749, %v6077
    %6079 = vmatmul.bf16.gmra.mxu0 %v4718
    %v6080 = vpop.f32.mrf.mxu0
    %v6081 = vadd.f32 %v5752, %v6080
    %v6082 = vpop.f32.mrf.mxu0
    %v6083 = vadd.f32 %v5754, %v6082
    %6084 = vmatmul.bf16.gmra.mxu0 %v4722
    %v6085 = vpop.f32.mrf.mxu0
    %v6086 = vadd.f32 %v5757, %v6085
    %v6087 = vpop.f32.mrf.mxu0
    %v6088 = vadd.f32 %v5759, %v6087
    %6089 = vmatmul.bf16.gmra.mxu0 %v4726
    %v6090 = vpop.f32.mrf.mxu0
    %v6091 = vadd.f32 %v5762, %v6090
    %v6092 = vpop.f32.mrf.mxu0
    %v6093 = vadd.f32 %v5764, %v6092
    %6094 = vmatmul.bf16.gmra.mxu0 %v4730
    %v6095 = vpop.f32.mrf.mxu0
    %v6096 = vadd.f32 %v5767, %v6095
    %v6097 = vpop.f32.mrf.mxu0
    %v6098 = vadd.f32 %v5769, %v6097
    %6099 = vmatmul.bf16.gmra.mxu0 %v4734
    %v6100 = vpop.f32.mrf.mxu0
    %v6101 = vadd.f32 %v5772, %v6100
    %v6102 = vpop.f32.mrf.mxu0
    %v6103 = vadd.f32 %v5774, %v6102
    %6104 = vmatmul.bf16.gmra.mxu0 %v4738
    %v6105 = vpop.f32.mrf.mxu0
    %v6106 = vadd.f32 %v5777, %v6105
    %v6107 = vpop.f32.mrf.mxu0
    %v6108 = vadd.f32 %v5779, %v6107
    %6109 = vmatmul.bf16.gmra.mxu0 %v4742
    %v6110 = vpop.f32.mrf.mxu0
    %v6111 = vadd.f32 %v5782, %v6110
    %v6112 = vpop.f32.mrf.mxu0
    %v6113 = vadd.f32 %v5784, %v6112
    %6114 = vdwg.mxu0
    %6115 = vmatpush.bf16.msra.mxu0 %v5062
    %6116 = vmatpush.bf16.msra.mxu0 %v5060
    %6117 = vmatpush.bf16.msra.mxu0 %v5058
    %6118 = vmatpush.bf16.msra.mxu0 %v5056
    %6119 = vmatpush.bf16.msra.mxu0 %v5054
    %6120 = vmatpush.bf16.msra.mxu0 %v5052
    %6121 = vmatpush.bf16.msra.mxu0 %v5050
    %6122 = vmatpush.bf16.msra.mxu0 %v5048
    %6123 = vmatmul.bf16.gmra.mxu0 %v4491
    %v6124 = vpop.f32.mrf.mxu0
    %v6125 = vadd.f32 %v5796, %v6124
    %v6126 = vpop.f32.mrf.mxu0
    %v6127 = vadd.f32 %v5798, %v6126
    %6128 = vmatmul.bf16.gmra.mxu0 %v4495
    %v6129 = vpop.f32.mrf.mxu0
    %v6130 = vadd.f32 %v5801, %v6129
    %v6131 = vpop.f32.mrf.mxu0
    %v6132 = vadd.f32 %v5803, %v6131
    %6133 = vmatmul.bf16.gmra.mxu0 %v4499
    %v6134 = vpop.f32.mrf.mxu0
    %v6135 = vadd.f32 %v5806, %v6134
    %v6136 = vpop.f32.mrf.mxu0
    %v6137 = vadd.f32 %v5808, %v6136
    %6138 = vmatmul.bf16.gmra.mxu0 %v4503
    %v6139 = vpop.f32.mrf.mxu0
    %v6140 = vadd.f32 %v5811, %v6139
    %v6141 = vpop.f32.mrf.mxu0
    %v6142 = vadd.f32 %v5813, %v6141
    %6143 = vmatmul.bf16.gmra.mxu0 %v4507
    %v6144 = vpop.f32.mrf.mxu0
    %v6145 = vadd.f32 %v5816, %v6144
    %v6146 = vpop.f32.mrf.mxu0
    %v6147 = vadd.f32 %v5818, %v6146
    %6148 = vmatmul.bf16.gmra.mxu0 %v4511
    %v6149 = vpop.f32.mrf.mxu0
    %v6150 = vadd.f32 %v5821, %v6149
    %v6151 = vpop.f32.mrf.mxu0
    %v6152 = vadd.f32 %v5823, %v6151
    %6153 = vmatmul.bf16.gmra.mxu0 %v4515
    %v6154 = vpop.f32.mrf.mxu0
    %v6155 = vadd.f32 %v5826, %v6154
    %v6156 = vpop.f32.mrf.mxu0
    %v6157 = vadd.f32 %v5828, %v6156
    %6158 = vmatmul.bf16.gmra.mxu0 %v4519
    %v6159 = vpop.f32.mrf.mxu0
    %v6160 = vadd.f32 %v5831, %v6159
    %v6161 = vpop.f32.mrf.mxu0
    %v6162 = vadd.f32 %v5833, %v6161
    %6163 = vmatmul.bf16.gmra.mxu0 %v4523
    %v6164 = vpop.f32.mrf.mxu0
    %v6165 = vadd.f32 %v5836, %v6164
    %v6166 = vpop.f32.mrf.mxu0
    %v6167 = vadd.f32 %v5838, %v6166
    %6168 = vmatmul.bf16.gmra.mxu0 %v4527
    %v6169 = vpop.f32.mrf.mxu0
    %v6170 = vadd.f32 %v5841, %v6169
    %v6171 = vpop.f32.mrf.mxu0
    %v6172 = vadd.f32 %v5843, %v6171
    %6173 = vmatmul.bf16.gmra.mxu0 %v4531
    %v6174 = vpop.f32.mrf.mxu0
    %v6175 = vadd.f32 %v5846, %v6174
    %v6176 = vpop.f32.mrf.mxu0
    %v6177 = vadd.f32 %v5848, %v6176
    %6178 = vmatmul.bf16.gmra.mxu0 %v4535
    %v6179 = vpop.f32.mrf.mxu0
    %v6180 = vadd.f32 %v5851, %v6179
    %v6181 = vpop.f32.mrf.mxu0
    %v6182 = vadd.f32 %v5853, %v6181
    %6183 = vmatmul.bf16.gmra.mxu0 %v4539
    %v6184 = vpop.f32.mrf.mxu0
    %v6185 = vadd.f32 %v5856, %v6184
    %v6186 = vpop.f32.mrf.mxu0
    %v6187 = vadd.f32 %v5858, %v6186
    %6188 = vmatmul.bf16.gmra.mxu0 %v4543
    %v6189 = vpop.f32.mrf.mxu0
    %v6190 = vadd.f32 %v5861, %v6189
    %v6191 = vpop.f32.mrf.mxu0
    %v6192 = vadd.f32 %v5863, %v6191
    %6193 = vmatmul.bf16.gmra.mxu0 %v4547
    %v6194 = vpop.f32.mrf.mxu0
    %v6195 = vadd.f32 %v5866, %v6194
    %v6196 = vpop.f32.mrf.mxu0
    %v6197 = vadd.f32 %v5868, %v6196
    %6198 = vmatmul.bf16.gmra.mxu0 %v4551
    %v6199 = vpop.f32.mrf.mxu0
    %v6200 = vadd.f32 %v5871, %v6199
    %v6201 = vpop.f32.mrf.mxu0
    %v6202 = vadd.f32 %v5873, %v6201
    %6203 = vmatmul.bf16.gmra.mxu0 %v4555
    %v6204 = vpop.f32.mrf.mxu0
    %v6205 = vadd.f32 %v5876, %v6204
    %v6206 = vpop.f32.mrf.mxu0
    %v6207 = vadd.f32 %v5878, %v6206
    %6208 = vmatmul.bf16.gmra.mxu0 %v4559
    %v6209 = vpop.f32.mrf.mxu0
    %v6210 = vadd.f32 %v5881, %v6209
    %v6211 = vpop.f32.mrf.mxu0
    %v6212 = vadd.f32 %v5883, %v6211
    %6213 = vmatmul.bf16.gmra.mxu0 %v4563
    %v6214 = vpop.f32.mrf.mxu0
    %v6215 = vadd.f32 %v5886, %v6214
    %v6216 = vpop.f32.mrf.mxu0
    %v6217 = vadd.f32 %v5888, %v6216
    %6218 = vmatmul.bf16.gmra.mxu0 %v4567
    %v6219 = vpop.f32.mrf.mxu0
    %v6220 = vadd.f32 %v5891, %v6219
    %v6221 = vpop.f32.mrf.mxu0
    %v6222 = vadd.f32 %v5893, %v6221
    %6223 = vmatmul.bf16.gmra.mxu0 %v4571
    %v6224 = vpop.f32.mrf.mxu0
    %v6225 = vadd.f32 %v5896, %v6224
    %v6226 = vpop.f32.mrf.mxu0
    %v6227 = vadd.f32 %v5898, %v6226
    %6228 = vmatmul.bf16.gmra.mxu0 %v4575
    %v6229 = vpop.f32.mrf.mxu0
    %v6230 = vadd.f32 %v5901, %v6229
    %v6231 = vpop.f32.mrf.mxu0
    %v6232 = vadd.f32 %v5903, %v6231
    %6233 = vmatmul.bf16.gmra.mxu0 %v4579
    %v6234 = vpop.f32.mrf.mxu0
    %v6235 = vadd.f32 %v5906, %v6234
    %v6236 = vpop.f32.mrf.mxu0
    %v6237 = vadd.f32 %v5908, %v6236
    %6238 = vmatmul.bf16.gmra.mxu0 %v4583
    %v6239 = vpop.f32.mrf.mxu0
    %v6240 = vadd.f32 %v5911, %v6239
    %v6241 = vpop.f32.mrf.mxu0
    %v6242 = vadd.f32 %v5913, %v6241
    %6243 = vmatmul.bf16.gmra.mxu0 %v4587
    %v6244 = vpop.f32.mrf.mxu0
    %v6245 = vadd.f32 %v5916, %v6244
    %v6246 = vpop.f32.mrf.mxu0
    %v6247 = vadd.f32 %v5918, %v6246
    %6248 = vmatmul.bf16.gmra.mxu0 %v4591
    %v6249 = vpop.f32.mrf.mxu0
    %v6250 = vadd.f32 %v5921, %v6249
    %v6251 = vpop.f32.mrf.mxu0
    %v6252 = vadd.f32 %v5923, %v6251
    %6253 = vmatmul.bf16.gmra.mxu0 %v4595
    %v6254 = vpop.f32.mrf.mxu0
    %v6255 = vadd.f32 %v5926, %v6254
    %v6256 = vpop.f32.mrf.mxu0
    %v6257 = vadd.f32 %v5928, %v6256
    %6258 = vmatmul.bf16.gmra.mxu0 %v4599
    %v6259 = vpop.f32.mrf.mxu0
    %v6260 = vadd.f32 %v5931, %v6259
    %v6261 = vpop.f32.mrf.mxu0
    %v6262 = vadd.f32 %v5933, %v6261
    %6263 = vmatmul.bf16.gmra.mxu0 %v4603
    %v6264 = vpop.f32.mrf.mxu0
    %v6265 = vadd.f32 %v5936, %v6264
    %v6266 = vpop.f32.mrf.mxu0
    %v6267 = vadd.f32 %v5938, %v6266
    %6268 = vmatmul.bf16.gmra.mxu0 %v4607
    %v6269 = vpop.f32.mrf.mxu0
    %v6270 = vadd.f32 %v5941, %v6269
    %v6271 = vpop.f32.mrf.mxu0
    %v6272 = vadd.f32 %v5943, %v6271
    %6273 = vmatmul.bf16.gmra.mxu0 %v4611
    %v6274 = vpop.f32.mrf.mxu0
    %v6275 = vadd.f32 %v5946, %v6274
    %v6276 = vpop.f32.mrf.mxu0
    %v6277 = vadd.f32 %v5948, %v6276
    %6278 = vmatmul.bf16.gmra.mxu0 %v4615
    %v6279 = vpop.f32.mrf.mxu0
    %v6280 = vadd.f32 %v5951, %v6279
    %v6281 = vpop.f32.mrf.mxu0
    %v6282 = vadd.f32 %v5953, %v6281
    %6283 = vmatmul.bf16.gmra.mxu0 %v4619
    %v6284 = vpop.f32.mrf.mxu0
    %v6285 = vadd.f32 %v5956, %v6284
    %v6286 = vpop.f32.mrf.mxu0
    %v6287 = vadd.f32 %v5958, %v6286
    %6288 = vmatmul.bf16.gmra.mxu0 %v4623
    %v6289 = vpop.f32.mrf.mxu0
    %v6290 = vadd.f32 %v5961, %v6289
    %v6291 = vpop.f32.mrf.mxu0
    %v6292 = vadd.f32 %v5963, %v6291
    %6293 = vmatmul.bf16.gmra.mxu0 %v4627
    %v6294 = vpop.f32.mrf.mxu0
    %v6295 = vadd.f32 %v5966, %v6294
    %v6296 = vpop.f32.mrf.mxu0
    %v6297 = vadd.f32 %v5968, %v6296
    %6298 = vmatmul.bf16.gmra.mxu0 %v4631
    %v6299 = vpop.f32.mrf.mxu0
    %v6300 = vadd.f32 %v5971, %v6299
    %v6301 = vpop.f32.mrf.mxu0
    %v6302 = vadd.f32 %v5973, %v6301
    %6303 = vmatmul.bf16.gmra.mxu0 %v4635
    %v6304 = vpop.f32.mrf.mxu0
    %v6305 = vadd.f32 %v5976, %v6304
    %v6306 = vpop.f32.mrf.mxu0
    %v6307 = vadd.f32 %v5978, %v6306
    %6308 = vmatmul.bf16.gmra.mxu0 %v4639
    %v6309 = vpop.f32.mrf.mxu0
    %v6310 = vadd.f32 %v5981, %v6309
    %v6311 = vpop.f32.mrf.mxu0
    %v6312 = vadd.f32 %v5983, %v6311
    %6313 = vmatmul.bf16.gmra.mxu0 %v4643
    %v6314 = vpop.f32.mrf.mxu0
    %v6315 = vadd.f32 %v5986, %v6314
    %v6316 = vpop.f32.mrf.mxu0
    %v6317 = vadd.f32 %v5988, %v6316
    %6318 = vmatmul.bf16.gmra.mxu0 %v4647
    %v6319 = vpop.f32.mrf.mxu0
    %v6320 = vadd.f32 %v5991, %v6319
    %v6321 = vpop.f32.mrf.mxu0
    %v6322 = vadd.f32 %v5993, %v6321
    %6323 = vmatmul.bf16.gmra.mxu0 %v4651
    %v6324 = vpop.f32.mrf.mxu0
    %v6325 = vadd.f32 %v5996, %v6324
    %v6326 = vpop.f32.mrf.mxu0
    %v6327 = vadd.f32 %v5998, %v6326
    %6328 = vmatmul.bf16.gmra.mxu0 %v4655
    %v6329 = vpop.f32.mrf.mxu0
    %v6330 = vadd.f32 %v6001, %v6329
    %v6331 = vpop.f32.mrf.mxu0
    %v6332 = vadd.f32 %v6003, %v6331
    %6333 = vmatmul.bf16.gmra.mxu0 %v4659
    %v6334 = vpop.f32.mrf.mxu0
    %v6335 = vadd.f32 %v6006, %v6334
    %v6336 = vpop.f32.mrf.mxu0
    %v6337 = vadd.f32 %v6008, %v6336
    %6338 = vmatmul.bf16.gmra.mxu0 %v4663
    %v6339 = vpop.f32.mrf.mxu0
    %v6340 = vadd.f32 %v6011, %v6339
    %v6341 = vpop.f32.mrf.mxu0
    %v6342 = vadd.f32 %v6013, %v6341
    %6343 = vmatmul.bf16.gmra.mxu0 %v4667
    %v6344 = vpop.f32.mrf.mxu0
    %v6345 = vadd.f32 %v6016, %v6344
    %v6346 = vpop.f32.mrf.mxu0
    %v6347 = vadd.f32 %v6018, %v6346
    %6348 = vmatmul.bf16.gmra.mxu0 %v4671
    %v6349 = vpop.f32.mrf.mxu0
    %v6350 = vadd.f32 %v6021, %v6349
    %v6351 = vpop.f32.mrf.mxu0
    %v6352 = vadd.f32 %v6023, %v6351
    %6353 = vmatmul.bf16.gmra.mxu0 %v4675
    %v6354 = vpop.f32.mrf.mxu0
    %v6355 = vadd.f32 %v6026, %v6354
    %v6356 = vpop.f32.mrf.mxu0
    %v6357 = vadd.f32 %v6028, %v6356
    %6358 = vmatmul.bf16.gmra.mxu0 %v4679
    %v6359 = vpop.f32.mrf.mxu0
    %v6360 = vadd.f32 %v6031, %v6359
    %v6361 = vpop.f32.mrf.mxu0
    %v6362 = vadd.f32 %v6033, %v6361
    %6363 = vmatmul.bf16.gmra.mxu0 %v4683
    %v6364 = vpop.f32.mrf.mxu0
    %v6365 = vadd.f32 %v6036, %v6364
    %v6366 = vpop.f32.mrf.mxu0
    %v6367 = vadd.f32 %v6038, %v6366
    %6368 = vmatmul.bf16.gmra.mxu0 %v4687
    %v6369 = vpop.f32.mrf.mxu0
    %v6370 = vadd.f32 %v6041, %v6369
    %v6371 = vpop.f32.mrf.mxu0
    %v6372 = vadd.f32 %v6043, %v6371
    %6373 = vmatmul.bf16.gmra.mxu0 %v4691
    %v6374 = vpop.f32.mrf.mxu0
    %v6375 = vadd.f32 %v6046, %v6374
    %v6376 = vpop.f32.mrf.mxu0
    %v6377 = vadd.f32 %v6048, %v6376
    %6378 = vmatmul.bf16.gmra.mxu0 %v4695
    %v6379 = vpop.f32.mrf.mxu0
    %v6380 = vadd.f32 %v6051, %v6379
    %v6381 = vpop.f32.mrf.mxu0
    %v6382 = vadd.f32 %v6053, %v6381
    %6383 = vmatmul.bf16.gmra.mxu0 %v4699
    %v6384 = vpop.f32.mrf.mxu0
    %v6385 = vadd.f32 %v6056, %v6384
    %v6386 = vpop.f32.mrf.mxu0
    %v6387 = vadd.f32 %v6058, %v6386
    %6388 = vmatmul.bf16.gmra.mxu0 %v4703
    %v6389 = vpop.f32.mrf.mxu0
    %v6390 = vadd.f32 %v6061, %v6389
    %v6391 = vpop.f32.mrf.mxu0
    %v6392 = vadd.f32 %v6063, %v6391
    %6393 = vmatmul.bf16.gmra.mxu0 %v4707
    %v6394 = vpop.f32.mrf.mxu0
    %v6395 = vadd.f32 %v6066, %v6394
    %v6396 = vpop.f32.mrf.mxu0
    %v6397 = vadd.f32 %v6068, %v6396
    %6398 = vmatmul.bf16.gmra.mxu0 %v4711
    %v6399 = vpop.f32.mrf.mxu0
    %v6400 = vadd.f32 %v6071, %v6399
    %v6401 = vpop.f32.mrf.mxu0
    %v6402 = vadd.f32 %v6073, %v6401
    %6403 = vmatmul.bf16.gmra.mxu0 %v4715
    %v6404 = vpop.f32.mrf.mxu0
    %v6405 = vadd.f32 %v6076, %v6404
    %v6406 = vpop.f32.mrf.mxu0
    %v6407 = vadd.f32 %v6078, %v6406
    %6408 = vmatmul.bf16.gmra.mxu0 %v4719
    %v6409 = vpop.f32.mrf.mxu0
    %v6410 = vadd.f32 %v6081, %v6409
    %v6411 = vpop.f32.mrf.mxu0
    %v6412 = vadd.f32 %v6083, %v6411
    %6413 = vmatmul.bf16.gmra.mxu0 %v4723
    %v6414 = vpop.f32.mrf.mxu0
    %v6415 = vadd.f32 %v6086, %v6414
    %v6416 = vpop.f32.mrf.mxu0
    %v6417 = vadd.f32 %v6088, %v6416
    %6418 = vmatmul.bf16.gmra.mxu0 %v4727
    %v6419 = vpop.f32.mrf.mxu0
    %v6420 = vadd.f32 %v6091, %v6419
    %v6421 = vpop.f32.mrf.mxu0
    %v6422 = vadd.f32 %v6093, %v6421
    %6423 = vmatmul.bf16.gmra.mxu0 %v4731
    %v6424 = vpop.f32.mrf.mxu0
    %v6425 = vadd.f32 %v6096, %v6424
    %v6426 = vpop.f32.mrf.mxu0
    %v6427 = vadd.f32 %v6098, %v6426
    %6428 = vmatmul.bf16.gmra.mxu0 %v4735
    %v6429 = vpop.f32.mrf.mxu0
    %v6430 = vadd.f32 %v6101, %v6429
    %v6431 = vpop.f32.mrf.mxu0
    %v6432 = vadd.f32 %v6103, %v6431
    %6433 = vmatmul.bf16.gmra.mxu0 %v4739
    %v6434 = vpop.f32.mrf.mxu0
    %v6435 = vadd.f32 %v6106, %v6434
    %v6436 = vpop.f32.mrf.mxu0
    %v6437 = vadd.f32 %v6108, %v6436
    %6438 = vmatmul.bf16.gmra.mxu0 %v4743
    %v6439 = vpop.f32.mrf.mxu0
    %v6440 = vadd.f32 %v6111, %v6439
    %v6441 = vpop.f32.mrf.mxu0
    %v6442 = vadd.f32 %v6113, %v6441
    %6443 = vdwg.mxu0
    %6444 = vmatpush.bf16.msra.mxu0 %v5015
    %6445 = vmatpush.bf16.msra.mxu0 %v5013
    %6446 = vmatpush.bf16.msra.mxu0 %v5011
    %6447 = vmatpush.bf16.msra.mxu0 %v5009
    %6448 = vmatpush.bf16.msra.mxu0 %v5007
    %6449 = vmatpush.bf16.msra.mxu0 %v5005
    %6450 = vmatpush.bf16.msra.mxu0 %v5003
    %6451 = vmatpush.bf16.msra.mxu0 %v5001
    %6452 = vmatmul.bf16.gmra.mxu0 %v4488
    %v6453 = vpop.f32.mrf.mxu0
    %v6454 = vadd.f32 %v2487, %v6453
    %v6455 = vpop.f32.mrf.mxu0
    %v6456 = vadd.f32 %v2489, %v6455
    %6457 = vmatmul.bf16.gmra.mxu0 %v4492
    %v6458 = vpop.f32.mrf.mxu0
    %v6459 = vadd.f32 %v2492, %v6458
    %v6460 = vpop.f32.mrf.mxu0
    %v6461 = vadd.f32 %v2494, %v6460
    %6462 = vmatmul.bf16.gmra.mxu0 %v4496
    %v6463 = vpop.f32.mrf.mxu0
    %v6464 = vadd.f32 %v2497, %v6463
    %v6465 = vpop.f32.mrf.mxu0
    %v6466 = vadd.f32 %v2499, %v6465
    %6467 = vmatmul.bf16.gmra.mxu0 %v4500
    %v6468 = vpop.f32.mrf.mxu0
    %v6469 = vadd.f32 %v2502, %v6468
    %v6470 = vpop.f32.mrf.mxu0
    %v6471 = vadd.f32 %v2504, %v6470
    %6472 = vmatmul.bf16.gmra.mxu0 %v4504
    %v6473 = vpop.f32.mrf.mxu0
    %v6474 = vadd.f32 %v2507, %v6473
    %v6475 = vpop.f32.mrf.mxu0
    %v6476 = vadd.f32 %v2509, %v6475
    %6477 = vmatmul.bf16.gmra.mxu0 %v4508
    %v6478 = vpop.f32.mrf.mxu0
    %v6479 = vadd.f32 %v2512, %v6478
    %v6480 = vpop.f32.mrf.mxu0
    %v6481 = vadd.f32 %v2514, %v6480
    %6482 = vmatmul.bf16.gmra.mxu0 %v4512
    %v6483 = vpop.f32.mrf.mxu0
    %v6484 = vadd.f32 %v2517, %v6483
    %v6485 = vpop.f32.mrf.mxu0
    %v6486 = vadd.f32 %v2519, %v6485
    %6487 = vmatmul.bf16.gmra.mxu0 %v4516
    %v6488 = vpop.f32.mrf.mxu0
    %v6489 = vadd.f32 %v2522, %v6488
    %v6490 = vpop.f32.mrf.mxu0
    %v6491 = vadd.f32 %v2524, %v6490
    %6492 = vmatmul.bf16.gmra.mxu0 %v4520
    %v6493 = vpop.f32.mrf.mxu0
    %v6494 = vadd.f32 %v2527, %v6493
    %v6495 = vpop.f32.mrf.mxu0
    %v6496 = vadd.f32 %v2529, %v6495
    %6497 = vmatmul.bf16.gmra.mxu0 %v4524
    %v6498 = vpop.f32.mrf.mxu0
    %v6499 = vadd.f32 %v2532, %v6498
    %v6500 = vpop.f32.mrf.mxu0
    %v6501 = vadd.f32 %v2534, %v6500
    %6502 = vmatmul.bf16.gmra.mxu0 %v4528
    %v6503 = vpop.f32.mrf.mxu0
    %v6504 = vadd.f32 %v2537, %v6503
    %v6505 = vpop.f32.mrf.mxu0
    %v6506 = vadd.f32 %v2539, %v6505
    %6507 = vmatmul.bf16.gmra.mxu0 %v4532
    %v6508 = vpop.f32.mrf.mxu0
    %v6509 = vadd.f32 %v2542, %v6508
    %v6510 = vpop.f32.mrf.mxu0
    %v6511 = vadd.f32 %v2544, %v6510
    %6512 = vmatmul.bf16.gmra.mxu0 %v4536
    %v6513 = vpop.f32.mrf.mxu0
    %v6514 = vadd.f32 %v2547, %v6513
    %v6515 = vpop.f32.mrf.mxu0
    %v6516 = vadd.f32 %v2549, %v6515
    %6517 = vmatmul.bf16.gmra.mxu0 %v4540
    %v6518 = vpop.f32.mrf.mxu0
    %v6519 = vadd.f32 %v2552, %v6518
    %v6520 = vpop.f32.mrf.mxu0
    %v6521 = vadd.f32 %v2554, %v6520
    %6522 = vmatmul.bf16.gmra.mxu0 %v4544
    %v6523 = vpop.f32.mrf.mxu0
    %v6524 = vadd.f32 %v2557, %v6523
    %v6525 = vpop.f32.mrf.mxu0
    %v6526 = vadd.f32 %v2559, %v6525
    %6527 = vmatmul.bf16.gmra.mxu0 %v4548
    %v6528 = vpop.f32.mrf.mxu0
    %v6529 = vadd.f32 %v2562, %v6528
    %v6530 = vpop.f32.mrf.mxu0
    %v6531 = vadd.f32 %v2564, %v6530
    %6532 = vmatmul.bf16.gmra.mxu0 %v4552
    %v6533 = vpop.f32.mrf.mxu0
    %v6534 = vadd.f32 %v2567, %v6533
    %v6535 = vpop.f32.mrf.mxu0
    %v6536 = vadd.f32 %v2569, %v6535
    %6537 = vmatmul.bf16.gmra.mxu0 %v4556
    %v6538 = vpop.f32.mrf.mxu0
    %v6539 = vadd.f32 %v2572, %v6538
    %v6540 = vpop.f32.mrf.mxu0
    %v6541 = vadd.f32 %v2574, %v6540
    %6542 = vmatmul.bf16.gmra.mxu0 %v4560
    %v6543 = vpop.f32.mrf.mxu0
    %v6544 = vadd.f32 %v2577, %v6543
    %v6545 = vpop.f32.mrf.mxu0
    %v6546 = vadd.f32 %v2579, %v6545
    %6547 = vmatmul.bf16.gmra.mxu0 %v4564
    %v6548 = vpop.f32.mrf.mxu0
    %v6549 = vadd.f32 %v2582, %v6548
    %v6550 = vpop.f32.mrf.mxu0
    %v6551 = vadd.f32 %v2584, %v6550
    %6552 = vmatmul.bf16.gmra.mxu0 %v4568
    %v6553 = vpop.f32.mrf.mxu0
    %v6554 = vadd.f32 %v2587, %v6553
    %v6555 = vpop.f32.mrf.mxu0
    %v6556 = vadd.f32 %v2589, %v6555
    %6557 = vmatmul.bf16.gmra.mxu0 %v4572
    %v6558 = vpop.f32.mrf.mxu0
    %v6559 = vadd.f32 %v2592, %v6558
    %v6560 = vpop.f32.mrf.mxu0
    %v6561 = vadd.f32 %v2594, %v6560
    %6562 = vmatmul.bf16.gmra.mxu0 %v4576
    %v6563 = vpop.f32.mrf.mxu0
    %v6564 = vadd.f32 %v2597, %v6563
    %v6565 = vpop.f32.mrf.mxu0
    %v6566 = vadd.f32 %v2599, %v6565
    %6567 = vmatmul.bf16.gmra.mxu0 %v4580
    %v6568 = vpop.f32.mrf.mxu0
    %v6569 = vadd.f32 %v2602, %v6568
    %v6570 = vpop.f32.mrf.mxu0
    %v6571 = vadd.f32 %v2604, %v6570
    %6572 = vmatmul.bf16.gmra.mxu0 %v4584
    %v6573 = vpop.f32.mrf.mxu0
    %v6574 = vadd.f32 %v2607, %v6573
    %v6575 = vpop.f32.mrf.mxu0
    %v6576 = vadd.f32 %v2609, %v6575
    %6577 = vmatmul.bf16.gmra.mxu0 %v4588
    %v6578 = vpop.f32.mrf.mxu0
    %v6579 = vadd.f32 %v2612, %v6578
    %v6580 = vpop.f32.mrf.mxu0
    %v6581 = vadd.f32 %v2614, %v6580
    %6582 = vmatmul.bf16.gmra.mxu0 %v4592
    %v6583 = vpop.f32.mrf.mxu0
    %v6584 = vadd.f32 %v2617, %v6583
    %v6585 = vpop.f32.mrf.mxu0
    %v6586 = vadd.f32 %v2619, %v6585
    %6587 = vmatmul.bf16.gmra.mxu0 %v4596
    %v6588 = vpop.f32.mrf.mxu0
    %v6589 = vadd.f32 %v2622, %v6588
    %v6590 = vpop.f32.mrf.mxu0
    %v6591 = vadd.f32 %v2624, %v6590
    %6592 = vmatmul.bf16.gmra.mxu0 %v4600
    %v6593 = vpop.f32.mrf.mxu0
    %v6594 = vadd.f32 %v2627, %v6593
    %v6595 = vpop.f32.mrf.mxu0
    %v6596 = vadd.f32 %v2629, %v6595
    %6597 = vmatmul.bf16.gmra.mxu0 %v4604
    %v6598 = vpop.f32.mrf.mxu0
    %v6599 = vadd.f32 %v2632, %v6598
    %v6600 = vpop.f32.mrf.mxu0
    %v6601 = vadd.f32 %v2634, %v6600
    %6602 = vmatmul.bf16.gmra.mxu0 %v4608
    %v6603 = vpop.f32.mrf.mxu0
    %v6604 = vadd.f32 %v2637, %v6603
    %v6605 = vpop.f32.mrf.mxu0
    %v6606 = vadd.f32 %v2639, %v6605
    %6607 = vmatmul.bf16.gmra.mxu0 %v4612
    %v6608 = vpop.f32.mrf.mxu0
    %v6609 = vadd.f32 %v2642, %v6608
    %v6610 = vpop.f32.mrf.mxu0
    %v6611 = vadd.f32 %v2644, %v6610
    %6612 = vmatmul.bf16.gmra.mxu0 %v4616
    %v6613 = vpop.f32.mrf.mxu0
    %v6614 = vadd.f32 %v2647, %v6613
    %v6615 = vpop.f32.mrf.mxu0
    %v6616 = vadd.f32 %v2649, %v6615
    %6617 = vmatmul.bf16.gmra.mxu0 %v4620
    %v6618 = vpop.f32.mrf.mxu0
    %v6619 = vadd.f32 %v2652, %v6618
    %v6620 = vpop.f32.mrf.mxu0
    %v6621 = vadd.f32 %v2654, %v6620
    %6622 = vmatmul.bf16.gmra.mxu0 %v4624
    %v6623 = vpop.f32.mrf.mxu0
    %v6624 = vadd.f32 %v2657, %v6623
    %v6625 = vpop.f32.mrf.mxu0
    %v6626 = vadd.f32 %v2659, %v6625
    %6627 = vmatmul.bf16.gmra.mxu0 %v4628
    %v6628 = vpop.f32.mrf.mxu0
    %v6629 = vadd.f32 %v2662, %v6628
    %v6630 = vpop.f32.mrf.mxu0
    %v6631 = vadd.f32 %v2664, %v6630
    %6632 = vmatmul.bf16.gmra.mxu0 %v4632
    %v6633 = vpop.f32.mrf.mxu0
    %v6634 = vadd.f32 %v2667, %v6633
    %v6635 = vpop.f32.mrf.mxu0
    %v6636 = vadd.f32 %v2669, %v6635
    %6637 = vmatmul.bf16.gmra.mxu0 %v4636
    %v6638 = vpop.f32.mrf.mxu0
    %v6639 = vadd.f32 %v2672, %v6638
    %v6640 = vpop.f32.mrf.mxu0
    %v6641 = vadd.f32 %v2674, %v6640
    %6642 = vmatmul.bf16.gmra.mxu0 %v4640
    %v6643 = vpop.f32.mrf.mxu0
    %v6644 = vadd.f32 %v2677, %v6643
    %v6645 = vpop.f32.mrf.mxu0
    %v6646 = vadd.f32 %v2679, %v6645
    %6647 = vmatmul.bf16.gmra.mxu0 %v4644
    %v6648 = vpop.f32.mrf.mxu0
    %v6649 = vadd.f32 %v2682, %v6648
    %v6650 = vpop.f32.mrf.mxu0
    %v6651 = vadd.f32 %v2684, %v6650
    %6652 = vmatmul.bf16.gmra.mxu0 %v4648
    %v6653 = vpop.f32.mrf.mxu0
    %v6654 = vadd.f32 %v2687, %v6653
    %v6655 = vpop.f32.mrf.mxu0
    %v6656 = vadd.f32 %v2689, %v6655
    %6657 = vmatmul.bf16.gmra.mxu0 %v4652
    %v6658 = vpop.f32.mrf.mxu0
    %v6659 = vadd.f32 %v2692, %v6658
    %v6660 = vpop.f32.mrf.mxu0
    %v6661 = vadd.f32 %v2694, %v6660
    %6662 = vmatmul.bf16.gmra.mxu0 %v4656
    %v6663 = vpop.f32.mrf.mxu0
    %v6664 = vadd.f32 %v2697, %v6663
    %v6665 = vpop.f32.mrf.mxu0
    %v6666 = vadd.f32 %v2699, %v6665
    %6667 = vmatmul.bf16.gmra.mxu0 %v4660
    %v6668 = vpop.f32.mrf.mxu0
    %v6669 = vadd.f32 %v2702, %v6668
    %v6670 = vpop.f32.mrf.mxu0
    %v6671 = vadd.f32 %v2704, %v6670
    %6672 = vmatmul.bf16.gmra.mxu0 %v4664
    %v6673 = vpop.f32.mrf.mxu0
    %v6674 = vadd.f32 %v2707, %v6673
    %v6675 = vpop.f32.mrf.mxu0
    %v6676 = vadd.f32 %v2709, %v6675
    %6677 = vmatmul.bf16.gmra.mxu0 %v4668
    %v6678 = vpop.f32.mrf.mxu0
    %v6679 = vadd.f32 %v2712, %v6678
    %v6680 = vpop.f32.mrf.mxu0
    %v6681 = vadd.f32 %v2714, %v6680
    %6682 = vmatmul.bf16.gmra.mxu0 %v4672
    %v6683 = vpop.f32.mrf.mxu0
    %v6684 = vadd.f32 %v2717, %v6683
    %v6685 = vpop.f32.mrf.mxu0
    %v6686 = vadd.f32 %v2719, %v6685
    %6687 = vmatmul.bf16.gmra.mxu0 %v4676
    %v6688 = vpop.f32.mrf.mxu0
    %v6689 = vadd.f32 %v2722, %v6688
    %v6690 = vpop.f32.mrf.mxu0
    %v6691 = vadd.f32 %v2724, %v6690
    %6692 = vmatmul.bf16.gmra.mxu0 %v4680
    %v6693 = vpop.f32.mrf.mxu0
    %v6694 = vadd.f32 %v2727, %v6693
    %v6695 = vpop.f32.mrf.mxu0
    %v6696 = vadd.f32 %v2729, %v6695
    %6697 = vmatmul.bf16.gmra.mxu0 %v4684
    %v6698 = vpop.f32.mrf.mxu0
    %v6699 = vadd.f32 %v2732, %v6698
    %v6700 = vpop.f32.mrf.mxu0
    %v6701 = vadd.f32 %v2734, %v6700
    %6702 = vmatmul.bf16.gmra.mxu0 %v4688
    %v6703 = vpop.f32.mrf.mxu0
    %v6704 = vadd.f32 %v2737, %v6703
    %v6705 = vpop.f32.mrf.mxu0
    %v6706 = vadd.f32 %v2739, %v6705
    %6707 = vmatmul.bf16.gmra.mxu0 %v4692
    %v6708 = vpop.f32.mrf.mxu0
    %v6709 = vadd.f32 %v2742, %v6708
    %v6710 = vpop.f32.mrf.mxu0
    %v6711 = vadd.f32 %v2744, %v6710
    %6712 = vmatmul.bf16.gmra.mxu0 %v4696
    %v6713 = vpop.f32.mrf.mxu0
    %v6714 = vadd.f32 %v2747, %v6713
    %v6715 = vpop.f32.mrf.mxu0
    %v6716 = vadd.f32 %v2749, %v6715
    %6717 = vmatmul.bf16.gmra.mxu0 %v4700
    %v6718 = vpop.f32.mrf.mxu0
    %v6719 = vadd.f32 %v2752, %v6718
    %v6720 = vpop.f32.mrf.mxu0
    %v6721 = vadd.f32 %v2754, %v6720
    %6722 = vmatmul.bf16.gmra.mxu0 %v4704
    %v6723 = vpop.f32.mrf.mxu0
    %v6724 = vadd.f32 %v2757, %v6723
    %v6725 = vpop.f32.mrf.mxu0
    %v6726 = vadd.f32 %v2759, %v6725
    %6727 = vmatmul.bf16.gmra.mxu0 %v4708
    %v6728 = vpop.f32.mrf.mxu0
    %v6729 = vadd.f32 %v2762, %v6728
    %v6730 = vpop.f32.mrf.mxu0
    %v6731 = vadd.f32 %v2764, %v6730
    %6732 = vmatmul.bf16.gmra.mxu0 %v4712
    %v6733 = vpop.f32.mrf.mxu0
    %v6734 = vadd.f32 %v2767, %v6733
    %v6735 = vpop.f32.mrf.mxu0
    %v6736 = vadd.f32 %v2769, %v6735
    %6737 = vmatmul.bf16.gmra.mxu0 %v4716
    %v6738 = vpop.f32.mrf.mxu0
    %v6739 = vadd.f32 %v2772, %v6738
    %v6740 = vpop.f32.mrf.mxu0
    %v6741 = vadd.f32 %v2774, %v6740
    %6742 = vmatmul.bf16.gmra.mxu0 %v4720
    %v6743 = vpop.f32.mrf.mxu0
    %v6744 = vadd.f32 %v2777, %v6743
    %v6745 = vpop.f32.mrf.mxu0
    %v6746 = vadd.f32 %v2779, %v6745
    %6747 = vmatmul.bf16.gmra.mxu0 %v4724
    %v6748 = vpop.f32.mrf.mxu0
    %v6749 = vadd.f32 %v2782, %v6748
    %v6750 = vpop.f32.mrf.mxu0
    %v6751 = vadd.f32 %v2784, %v6750
    %6752 = vmatmul.bf16.gmra.mxu0 %v4728
    %v6753 = vpop.f32.mrf.mxu0
    %v6754 = vadd.f32 %v2787, %v6753
    %v6755 = vpop.f32.mrf.mxu0
    %v6756 = vadd.f32 %v2789, %v6755
    %6757 = vmatmul.bf16.gmra.mxu0 %v4732
    %v6758 = vpop.f32.mrf.mxu0
    %v6759 = vadd.f32 %v2792, %v6758
    %v6760 = vpop.f32.mrf.mxu0
    %v6761 = vadd.f32 %v2794, %v6760
    %6762 = vmatmul.bf16.gmra.mxu0 %v4736
    %v6763 = vpop.f32.mrf.mxu0
    %v6764 = vadd.f32 %v2797, %v6763
    %v6765 = vpop.f32.mrf.mxu0
    %v6766 = vadd.f32 %v2799, %v6765
    %6767 = vmatmul.bf16.gmra.mxu0 %v4740
    %v6768 = vpop.f32.mrf.mxu0
    %v6769 = vadd.f32 %v2802, %v6768
    %v6770 = vpop.f32.mrf.mxu0
    %v6771 = vadd.f32 %v2804, %v6770
    %6772 = vdwg.mxu0
    %6773 = vmatpush.bf16.msra.mxu0 %v5031
    %6774 = vmatpush.bf16.msra.mxu0 %v5029
    %6775 = vmatpush.bf16.msra.mxu0 %v5027
    %6776 = vmatpush.bf16.msra.mxu0 %v5025
    %6777 = vmatpush.bf16.msra.mxu0 %v5023
    %6778 = vmatpush.bf16.msra.mxu0 %v5021
    %6779 = vmatpush.bf16.msra.mxu0 %v5019
    %6780 = vmatpush.bf16.msra.mxu0 %v5017
    %6781 = vmatmul.bf16.gmra.mxu0 %v4489
    %v6782 = vpop.f32.mrf.mxu0
    %v6783 = vadd.f32 %v6454, %v6782
    %v6784 = vpop.f32.mrf.mxu0
    %v6785 = vadd.f32 %v6456, %v6784
    %6786 = vmatmul.bf16.gmra.mxu0 %v4493
    %v6787 = vpop.f32.mrf.mxu0
    %v6788 = vadd.f32 %v6459, %v6787
    %v6789 = vpop.f32.mrf.mxu0
    %v6790 = vadd.f32 %v6461, %v6789
    %6791 = vmatmul.bf16.gmra.mxu0 %v4497
    %v6792 = vpop.f32.mrf.mxu0
    %v6793 = vadd.f32 %v6464, %v6792
    %v6794 = vpop.f32.mrf.mxu0
    %v6795 = vadd.f32 %v6466, %v6794
    %6796 = vmatmul.bf16.gmra.mxu0 %v4501
    %v6797 = vpop.f32.mrf.mxu0
    %v6798 = vadd.f32 %v6469, %v6797
    %v6799 = vpop.f32.mrf.mxu0
    %v6800 = vadd.f32 %v6471, %v6799
    %6801 = vmatmul.bf16.gmra.mxu0 %v4505
    %v6802 = vpop.f32.mrf.mxu0
    %v6803 = vadd.f32 %v6474, %v6802
    %v6804 = vpop.f32.mrf.mxu0
    %v6805 = vadd.f32 %v6476, %v6804
    %6806 = vmatmul.bf16.gmra.mxu0 %v4509
    %v6807 = vpop.f32.mrf.mxu0
    %v6808 = vadd.f32 %v6479, %v6807
    %v6809 = vpop.f32.mrf.mxu0
    %v6810 = vadd.f32 %v6481, %v6809
    %6811 = vmatmul.bf16.gmra.mxu0 %v4513
    %v6812 = vpop.f32.mrf.mxu0
    %v6813 = vadd.f32 %v6484, %v6812
    %v6814 = vpop.f32.mrf.mxu0
    %v6815 = vadd.f32 %v6486, %v6814
    %6816 = vmatmul.bf16.gmra.mxu0 %v4517
    %v6817 = vpop.f32.mrf.mxu0
    %v6818 = vadd.f32 %v6489, %v6817
    %v6819 = vpop.f32.mrf.mxu0
    %v6820 = vadd.f32 %v6491, %v6819
    %6821 = vmatmul.bf16.gmra.mxu0 %v4521
    %v6822 = vpop.f32.mrf.mxu0
    %v6823 = vadd.f32 %v6494, %v6822
    %v6824 = vpop.f32.mrf.mxu0
    %v6825 = vadd.f32 %v6496, %v6824
    %6826 = vmatmul.bf16.gmra.mxu0 %v4525
    %v6827 = vpop.f32.mrf.mxu0
    %v6828 = vadd.f32 %v6499, %v6827
    %v6829 = vpop.f32.mrf.mxu0
    %v6830 = vadd.f32 %v6501, %v6829
    %6831 = vmatmul.bf16.gmra.mxu0 %v4529
    %v6832 = vpop.f32.mrf.mxu0
    %v6833 = vadd.f32 %v6504, %v6832
    %v6834 = vpop.f32.mrf.mxu0
    %v6835 = vadd.f32 %v6506, %v6834
    %6836 = vmatmul.bf16.gmra.mxu0 %v4533
    %v6837 = vpop.f32.mrf.mxu0
    %v6838 = vadd.f32 %v6509, %v6837
    %v6839 = vpop.f32.mrf.mxu0
    %v6840 = vadd.f32 %v6511, %v6839
    %6841 = vmatmul.bf16.gmra.mxu0 %v4537
    %v6842 = vpop.f32.mrf.mxu0
    %v6843 = vadd.f32 %v6514, %v6842
    %v6844 = vpop.f32.mrf.mxu0
    %v6845 = vadd.f32 %v6516, %v6844
    %6846 = vmatmul.bf16.gmra.mxu0 %v4541
    %v6847 = vpop.f32.mrf.mxu0
    %v6848 = vadd.f32 %v6519, %v6847
    %v6849 = vpop.f32.mrf.mxu0
    %v6850 = vadd.f32 %v6521, %v6849
    %6851 = vmatmul.bf16.gmra.mxu0 %v4545
    %v6852 = vpop.f32.mrf.mxu0
    %v6853 = vadd.f32 %v6524, %v6852
    %v6854 = vpop.f32.mrf.mxu0
    %v6855 = vadd.f32 %v6526, %v6854
    %6856 = vmatmul.bf16.gmra.mxu0 %v4549
    %v6857 = vpop.f32.mrf.mxu0
    %v6858 = vadd.f32 %v6529, %v6857
    %v6859 = vpop.f32.mrf.mxu0
    %v6860 = vadd.f32 %v6531, %v6859
    %6861 = vmatmul.bf16.gmra.mxu0 %v4553
    %v6862 = vpop.f32.mrf.mxu0
    %v6863 = vadd.f32 %v6534, %v6862
    %v6864 = vpop.f32.mrf.mxu0
    %v6865 = vadd.f32 %v6536, %v6864
    %6866 = vmatmul.bf16.gmra.mxu0 %v4557
    %v6867 = vpop.f32.mrf.mxu0
    %v6868 = vadd.f32 %v6539, %v6867
    %v6869 = vpop.f32.mrf.mxu0
    %v6870 = vadd.f32 %v6541, %v6869
    %6871 = vmatmul.bf16.gmra.mxu0 %v4561
    %v6872 = vpop.f32.mrf.mxu0
    %v6873 = vadd.f32 %v6544, %v6872
    %v6874 = vpop.f32.mrf.mxu0
    %v6875 = vadd.f32 %v6546, %v6874
    %6876 = vmatmul.bf16.gmra.mxu0 %v4565
    %v6877 = vpop.f32.mrf.mxu0
    %v6878 = vadd.f32 %v6549, %v6877
    %v6879 = vpop.f32.mrf.mxu0
    %v6880 = vadd.f32 %v6551, %v6879
    %6881 = vmatmul.bf16.gmra.mxu0 %v4569
    %v6882 = vpop.f32.mrf.mxu0
    %v6883 = vadd.f32 %v6554, %v6882
    %v6884 = vpop.f32.mrf.mxu0
    %v6885 = vadd.f32 %v6556, %v6884
    %6886 = vmatmul.bf16.gmra.mxu0 %v4573
    %v6887 = vpop.f32.mrf.mxu0
    %v6888 = vadd.f32 %v6559, %v6887
    %v6889 = vpop.f32.mrf.mxu0
    %v6890 = vadd.f32 %v6561, %v6889
    %6891 = vmatmul.bf16.gmra.mxu0 %v4577
    %v6892 = vpop.f32.mrf.mxu0
    %v6893 = vadd.f32 %v6564, %v6892
    %v6894 = vpop.f32.mrf.mxu0
    %v6895 = vadd.f32 %v6566, %v6894
    %6896 = vmatmul.bf16.gmra.mxu0 %v4581
    %v6897 = vpop.f32.mrf.mxu0
    %v6898 = vadd.f32 %v6569, %v6897
    %v6899 = vpop.f32.mrf.mxu0
    %v6900 = vadd.f32 %v6571, %v6899
    %6901 = vmatmul.bf16.gmra.mxu0 %v4585
    %v6902 = vpop.f32.mrf.mxu0
    %v6903 = vadd.f32 %v6574, %v6902
    %v6904 = vpop.f32.mrf.mxu0
    %v6905 = vadd.f32 %v6576, %v6904
    %6906 = vmatmul.bf16.gmra.mxu0 %v4589
    %v6907 = vpop.f32.mrf.mxu0
    %v6908 = vadd.f32 %v6579, %v6907
    %v6909 = vpop.f32.mrf.mxu0
    %v6910 = vadd.f32 %v6581, %v6909
    %6911 = vmatmul.bf16.gmra.mxu0 %v4593
    %v6912 = vpop.f32.mrf.mxu0
    %v6913 = vadd.f32 %v6584, %v6912
    %v6914 = vpop.f32.mrf.mxu0
    %v6915 = vadd.f32 %v6586, %v6914
    %6916 = vmatmul.bf16.gmra.mxu0 %v4597
    %v6917 = vpop.f32.mrf.mxu0
    %v6918 = vadd.f32 %v6589, %v6917
    %v6919 = vpop.f32.mrf.mxu0
    %v6920 = vadd.f32 %v6591, %v6919
    %6921 = vmatmul.bf16.gmra.mxu0 %v4601
    %v6922 = vpop.f32.mrf.mxu0
    %v6923 = vadd.f32 %v6594, %v6922
    %v6924 = vpop.f32.mrf.mxu0
    %v6925 = vadd.f32 %v6596, %v6924
    %6926 = vmatmul.bf16.gmra.mxu0 %v4605
    %v6927 = vpop.f32.mrf.mxu0
    %v6928 = vadd.f32 %v6599, %v6927
    %v6929 = vpop.f32.mrf.mxu0
    %v6930 = vadd.f32 %v6601, %v6929
    %6931 = vmatmul.bf16.gmra.mxu0 %v4609
    %v6932 = vpop.f32.mrf.mxu0
    %v6933 = vadd.f32 %v6604, %v6932
    %v6934 = vpop.f32.mrf.mxu0
    %v6935 = vadd.f32 %v6606, %v6934
    %6936 = vmatmul.bf16.gmra.mxu0 %v4613
    %v6937 = vpop.f32.mrf.mxu0
    %v6938 = vadd.f32 %v6609, %v6937
    %v6939 = vpop.f32.mrf.mxu0
    %v6940 = vadd.f32 %v6611, %v6939
    %6941 = vmatmul.bf16.gmra.mxu0 %v4617
    %v6942 = vpop.f32.mrf.mxu0
    %v6943 = vadd.f32 %v6614, %v6942
    %v6944 = vpop.f32.mrf.mxu0
    %v6945 = vadd.f32 %v6616, %v6944
    %6946 = vmatmul.bf16.gmra.mxu0 %v4621
    %v6947 = vpop.f32.mrf.mxu0
    %v6948 = vadd.f32 %v6619, %v6947
    %v6949 = vpop.f32.mrf.mxu0
    %v6950 = vadd.f32 %v6621, %v6949
    %6951 = vmatmul.bf16.gmra.mxu0 %v4625
    %v6952 = vpop.f32.mrf.mxu0
    %v6953 = vadd.f32 %v6624, %v6952
    %v6954 = vpop.f32.mrf.mxu0
    %v6955 = vadd.f32 %v6626, %v6954
    %6956 = vmatmul.bf16.gmra.mxu0 %v4629
    %v6957 = vpop.f32.mrf.mxu0
    %v6958 = vadd.f32 %v6629, %v6957
    %v6959 = vpop.f32.mrf.mxu0
    %v6960 = vadd.f32 %v6631, %v6959
    %6961 = vmatmul.bf16.gmra.mxu0 %v4633
    %v6962 = vpop.f32.mrf.mxu0
    %v6963 = vadd.f32 %v6634, %v6962
    %v6964 = vpop.f32.mrf.mxu0
    %v6965 = vadd.f32 %v6636, %v6964
    %6966 = vmatmul.bf16.gmra.mxu0 %v4637
    %v6967 = vpop.f32.mrf.mxu0
    %v6968 = vadd.f32 %v6639, %v6967
    %v6969 = vpop.f32.mrf.mxu0
    %v6970 = vadd.f32 %v6641, %v6969
    %6971 = vmatmul.bf16.gmra.mxu0 %v4641
    %v6972 = vpop.f32.mrf.mxu0
    %v6973 = vadd.f32 %v6644, %v6972
    %v6974 = vpop.f32.mrf.mxu0
    %v6975 = vadd.f32 %v6646, %v6974
    %6976 = vmatmul.bf16.gmra.mxu0 %v4645
    %v6977 = vpop.f32.mrf.mxu0
    %v6978 = vadd.f32 %v6649, %v6977
    %v6979 = vpop.f32.mrf.mxu0
    %v6980 = vadd.f32 %v6651, %v6979
    %6981 = vmatmul.bf16.gmra.mxu0 %v4649
    %v6982 = vpop.f32.mrf.mxu0
    %v6983 = vadd.f32 %v6654, %v6982
    %v6984 = vpop.f32.mrf.mxu0
    %v6985 = vadd.f32 %v6656, %v6984
    %6986 = vmatmul.bf16.gmra.mxu0 %v4653
    %v6987 = vpop.f32.mrf.mxu0
    %v6988 = vadd.f32 %v6659, %v6987
    %v6989 = vpop.f32.mrf.mxu0
    %v6990 = vadd.f32 %v6661, %v6989
    %6991 = vmatmul.bf16.gmra.mxu0 %v4657
    %v6992 = vpop.f32.mrf.mxu0
    %v6993 = vadd.f32 %v6664, %v6992
    %v6994 = vpop.f32.mrf.mxu0
    %v6995 = vadd.f32 %v6666, %v6994
    %6996 = vmatmul.bf16.gmra.mxu0 %v4661
    %v6997 = vpop.f32.mrf.mxu0
    %v6998 = vadd.f32 %v6669, %v6997
    %v6999 = vpop.f32.mrf.mxu0
    %v7000 = vadd.f32 %v6671, %v6999
    %7001 = vmatmul.bf16.gmra.mxu0 %v4665
    %v7002 = vpop.f32.mrf.mxu0
    %v7003 = vadd.f32 %v6674, %v7002
    %v7004 = vpop.f32.mrf.mxu0
    %v7005 = vadd.f32 %v6676, %v7004
    %7006 = vmatmul.bf16.gmra.mxu0 %v4669
    %v7007 = vpop.f32.mrf.mxu0
    %v7008 = vadd.f32 %v6679, %v7007
    %v7009 = vpop.f32.mrf.mxu0
    %v7010 = vadd.f32 %v6681, %v7009
    %7011 = vmatmul.bf16.gmra.mxu0 %v4673
    %v7012 = vpop.f32.mrf.mxu0
    %v7013 = vadd.f32 %v6684, %v7012
    %v7014 = vpop.f32.mrf.mxu0
    %v7015 = vadd.f32 %v6686, %v7014
    %7016 = vmatmul.bf16.gmra.mxu0 %v4677
    %v7017 = vpop.f32.mrf.mxu0
    %v7018 = vadd.f32 %v6689, %v7017
    %v7019 = vpop.f32.mrf.mxu0
    %v7020 = vadd.f32 %v6691, %v7019
    %7021 = vmatmul.bf16.gmra.mxu0 %v4681
    %v7022 = vpop.f32.mrf.mxu0
    %v7023 = vadd.f32 %v6694, %v7022
    %v7024 = vpop.f32.mrf.mxu0
    %v7025 = vadd.f32 %v6696, %v7024
    %7026 = vmatmul.bf16.gmra.mxu0 %v4685
    %v7027 = vpop.f32.mrf.mxu0
    %v7028 = vadd.f32 %v6699, %v7027
    %v7029 = vpop.f32.mrf.mxu0
    %v7030 = vadd.f32 %v6701, %v7029
    %7031 = vmatmul.bf16.gmra.mxu0 %v4689
    %v7032 = vpop.f32.mrf.mxu0
    %v7033 = vadd.f32 %v6704, %v7032
    %v7034 = vpop.f32.mrf.mxu0
    %v7035 = vadd.f32 %v6706, %v7034
    %7036 = vmatmul.bf16.gmra.mxu0 %v4693
    %v7037 = vpop.f32.mrf.mxu0
    %v7038 = vadd.f32 %v6709, %v7037
    %v7039 = vpop.f32.mrf.mxu0
    %v7040 = vadd.f32 %v6711, %v7039
    %7041 = vmatmul.bf16.gmra.mxu0 %v4697
    %v7042 = vpop.f32.mrf.mxu0
    %v7043 = vadd.f32 %v6714, %v7042
    %v7044 = vpop.f32.mrf.mxu0
    %v7045 = vadd.f32 %v6716, %v7044
    %7046 = vmatmul.bf16.gmra.mxu0 %v4701
    %v7047 = vpop.f32.mrf.mxu0
    %v7048 = vadd.f32 %v6719, %v7047
    %v7049 = vpop.f32.mrf.mxu0
    %v7050 = vadd.f32 %v6721, %v7049
    %7051 = vmatmul.bf16.gmra.mxu0 %v4705
    %v7052 = vpop.f32.mrf.mxu0
    %v7053 = vadd.f32 %v6724, %v7052
    %v7054 = vpop.f32.mrf.mxu0
    %v7055 = vadd.f32 %v6726, %v7054
    %7056 = vmatmul.bf16.gmra.mxu0 %v4709
    %v7057 = vpop.f32.mrf.mxu0
    %v7058 = vadd.f32 %v6729, %v7057
    %v7059 = vpop.f32.mrf.mxu0
    %v7060 = vadd.f32 %v6731, %v7059
    %7061 = vmatmul.bf16.gmra.mxu0 %v4713
    %v7062 = vpop.f32.mrf.mxu0
    %v7063 = vadd.f32 %v6734, %v7062
    %v7064 = vpop.f32.mrf.mxu0
    %v7065 = vadd.f32 %v6736, %v7064
    %7066 = vmatmul.bf16.gmra.mxu0 %v4717
    %v7067 = vpop.f32.mrf.mxu0
    %v7068 = vadd.f32 %v6739, %v7067
    %v7069 = vpop.f32.mrf.mxu0
    %v7070 = vadd.f32 %v6741, %v7069
    %7071 = vmatmul.bf16.gmra.mxu0 %v4721
    %v7072 = vpop.f32.mrf.mxu0
    %v7073 = vadd.f32 %v6744, %v7072
    %v7074 = vpop.f32.mrf.mxu0
    %v7075 = vadd.f32 %v6746, %v7074
    %7076 = vmatmul.bf16.gmra.mxu0 %v4725
    %v7077 = vpop.f32.mrf.mxu0
    %v7078 = vadd.f32 %v6749, %v7077
    %v7079 = vpop.f32.mrf.mxu0
    %v7080 = vadd.f32 %v6751, %v7079
    %7081 = vmatmul.bf16.gmra.mxu0 %v4729
    %v7082 = vpop.f32.mrf.mxu0
    %v7083 = vadd.f32 %v6754, %v7082
    %v7084 = vpop.f32.mrf.mxu0
    %v7085 = vadd.f32 %v6756, %v7084
    %7086 = vmatmul.bf16.gmra.mxu0 %v4733
    %v7087 = vpop.f32.mrf.mxu0
    %v7088 = vadd.f32 %v6759, %v7087
    %v7089 = vpop.f32.mrf.mxu0
    %v7090 = vadd.f32 %v6761, %v7089
    %7091 = vmatmul.bf16.gmra.mxu0 %v4737
    %v7092 = vpop.f32.mrf.mxu0
    %v7093 = vadd.f32 %v6764, %v7092
    %v7094 = vpop.f32.mrf.mxu0
    %v7095 = vadd.f32 %v6766, %v7094
    %7096 = vmatmul.bf16.gmra.mxu0 %v4741
    %v7097 = vpop.f32.mrf.mxu0
    %v7098 = vadd.f32 %v6769, %v7097
    %v7099 = vpop.f32.mrf.mxu0
    %v7100 = vadd.f32 %v6771, %v7099
    %7101 = vdwg.mxu0
    %7102 = vmatpush.bf16.msra.mxu0 %v5047
    %7103 = vmatpush.bf16.msra.mxu0 %v5045
    %7104 = vmatpush.bf16.msra.mxu0 %v5043
    %7105 = vmatpush.bf16.msra.mxu0 %v5041
    %7106 = vmatpush.bf16.msra.mxu0 %v5039
    %7107 = vmatpush.bf16.msra.mxu0 %v5037
    %7108 = vmatpush.bf16.msra.mxu0 %v5035
    %7109 = vmatpush.bf16.msra.mxu0 %v5033
    %7110 = vmatmul.bf16.gmra.mxu0 %v4490
    %v7111 = vpop.f32.mrf.mxu0
    %v7112 = vadd.f32 %v6783, %v7111
    %v7113 = vpop.f32.mrf.mxu0
    %v7114 = vadd.f32 %v6785, %v7113
    %7115 = vmatmul.bf16.gmra.mxu0 %v4494
    %v7116 = vpop.f32.mrf.mxu0
    %v7117 = vadd.f32 %v6788, %v7116
    %v7118 = vpop.f32.mrf.mxu0
    %v7119 = vadd.f32 %v6790, %v7118
    %7120 = vmatmul.bf16.gmra.mxu0 %v4498
    %v7121 = vpop.f32.mrf.mxu0
    %v7122 = vadd.f32 %v6793, %v7121
    %v7123 = vpop.f32.mrf.mxu0
    %v7124 = vadd.f32 %v6795, %v7123
    %7125 = vmatmul.bf16.gmra.mxu0 %v4502
    %v7126 = vpop.f32.mrf.mxu0
    %v7127 = vadd.f32 %v6798, %v7126
    %v7128 = vpop.f32.mrf.mxu0
    %v7129 = vadd.f32 %v6800, %v7128
    %7130 = vmatmul.bf16.gmra.mxu0 %v4506
    %v7131 = vpop.f32.mrf.mxu0
    %v7132 = vadd.f32 %v6803, %v7131
    %v7133 = vpop.f32.mrf.mxu0
    %v7134 = vadd.f32 %v6805, %v7133
    %7135 = vmatmul.bf16.gmra.mxu0 %v4510
    %v7136 = vpop.f32.mrf.mxu0
    %v7137 = vadd.f32 %v6808, %v7136
    %v7138 = vpop.f32.mrf.mxu0
    %v7139 = vadd.f32 %v6810, %v7138
    %7140 = vmatmul.bf16.gmra.mxu0 %v4514
    %v7141 = vpop.f32.mrf.mxu0
    %v7142 = vadd.f32 %v6813, %v7141
    %v7143 = vpop.f32.mrf.mxu0
    %v7144 = vadd.f32 %v6815, %v7143
    %7145 = vmatmul.bf16.gmra.mxu0 %v4518
    %v7146 = vpop.f32.mrf.mxu0
    %v7147 = vadd.f32 %v6818, %v7146
    %v7148 = vpop.f32.mrf.mxu0
    %v7149 = vadd.f32 %v6820, %v7148
    %7150 = vmatmul.bf16.gmra.mxu0 %v4522
    %v7151 = vpop.f32.mrf.mxu0
    %v7152 = vadd.f32 %v6823, %v7151
    %v7153 = vpop.f32.mrf.mxu0
    %v7154 = vadd.f32 %v6825, %v7153
    %7155 = vmatmul.bf16.gmra.mxu0 %v4526
    %v7156 = vpop.f32.mrf.mxu0
    %v7157 = vadd.f32 %v6828, %v7156
    %v7158 = vpop.f32.mrf.mxu0
    %v7159 = vadd.f32 %v6830, %v7158
    %7160 = vmatmul.bf16.gmra.mxu0 %v4530
    %v7161 = vpop.f32.mrf.mxu0
    %v7162 = vadd.f32 %v6833, %v7161
    %v7163 = vpop.f32.mrf.mxu0
    %v7164 = vadd.f32 %v6835, %v7163
    %7165 = vmatmul.bf16.gmra.mxu0 %v4534
    %v7166 = vpop.f32.mrf.mxu0
    %v7167 = vadd.f32 %v6838, %v7166
    %v7168 = vpop.f32.mrf.mxu0
    %v7169 = vadd.f32 %v6840, %v7168
    %7170 = vmatmul.bf16.gmra.mxu0 %v4538
    %v7171 = vpop.f32.mrf.mxu0
    %v7172 = vadd.f32 %v6843, %v7171
    %v7173 = vpop.f32.mrf.mxu0
    %v7174 = vadd.f32 %v6845, %v7173
    %7175 = vmatmul.bf16.gmra.mxu0 %v4542
    %v7176 = vpop.f32.mrf.mxu0
    %v7177 = vadd.f32 %v6848, %v7176
    %v7178 = vpop.f32.mrf.mxu0
    %v7179 = vadd.f32 %v6850, %v7178
    %7180 = vmatmul.bf16.gmra.mxu0 %v4546
    %v7181 = vpop.f32.mrf.mxu0
    %v7182 = vadd.f32 %v6853, %v7181
    %v7183 = vpop.f32.mrf.mxu0
    %v7184 = vadd.f32 %v6855, %v7183
    %7185 = vmatmul.bf16.gmra.mxu0 %v4550
    %v7186 = vpop.f32.mrf.mxu0
    %v7187 = vadd.f32 %v6858, %v7186
    %v7188 = vpop.f32.mrf.mxu0
    %v7189 = vadd.f32 %v6860, %v7188
    %7190 = vmatmul.bf16.gmra.mxu0 %v4554
    %v7191 = vpop.f32.mrf.mxu0
    %v7192 = vadd.f32 %v6863, %v7191
    %v7193 = vpop.f32.mrf.mxu0
    %v7194 = vadd.f32 %v6865, %v7193
    %7195 = vmatmul.bf16.gmra.mxu0 %v4558
    %v7196 = vpop.f32.mrf.mxu0
    %v7197 = vadd.f32 %v6868, %v7196
    %v7198 = vpop.f32.mrf.mxu0
    %v7199 = vadd.f32 %v6870, %v7198
    %7200 = vmatmul.bf16.gmra.mxu0 %v4562
    %v7201 = vpop.f32.mrf.mxu0
    %v7202 = vadd.f32 %v6873, %v7201
    %v7203 = vpop.f32.mrf.mxu0
    %v7204 = vadd.f32 %v6875, %v7203
    %7205 = vmatmul.bf16.gmra.mxu0 %v4566
    %v7206 = vpop.f32.mrf.mxu0
    %v7207 = vadd.f32 %v6878, %v7206
    %v7208 = vpop.f32.mrf.mxu0
    %v7209 = vadd.f32 %v6880, %v7208
    %7210 = vmatmul.bf16.gmra.mxu0 %v4570
    %v7211 = vpop.f32.mrf.mxu0
    %v7212 = vadd.f32 %v6883, %v7211
    %v7213 = vpop.f32.mrf.mxu0
    %v7214 = vadd.f32 %v6885, %v7213
    %7215 = vmatmul.bf16.gmra.mxu0 %v4574
    %v7216 = vpop.f32.mrf.mxu0
    %v7217 = vadd.f32 %v6888, %v7216
    %v7218 = vpop.f32.mrf.mxu0
    %v7219 = vadd.f32 %v6890, %v7218
    %7220 = vmatmul.bf16.gmra.mxu0 %v4578
    %v7221 = vpop.f32.mrf.mxu0
    %v7222 = vadd.f32 %v6893, %v7221
    %v7223 = vpop.f32.mrf.mxu0
    %v7224 = vadd.f32 %v6895, %v7223
    %7225 = vmatmul.bf16.gmra.mxu0 %v4582
    %v7226 = vpop.f32.mrf.mxu0
    %v7227 = vadd.f32 %v6898, %v7226
    %v7228 = vpop.f32.mrf.mxu0
    %v7229 = vadd.f32 %v6900, %v7228
    %7230 = vmatmul.bf16.gmra.mxu0 %v4586
    %v7231 = vpop.f32.mrf.mxu0
    %v7232 = vadd.f32 %v6903, %v7231
    %v7233 = vpop.f32.mrf.mxu0
    %v7234 = vadd.f32 %v6905, %v7233
    %7235 = vmatmul.bf16.gmra.mxu0 %v4590
    %v7236 = vpop.f32.mrf.mxu0
    %v7237 = vadd.f32 %v6908, %v7236
    %v7238 = vpop.f32.mrf.mxu0
    %v7239 = vadd.f32 %v6910, %v7238
    %7240 = vmatmul.bf16.gmra.mxu0 %v4594
    %v7241 = vpop.f32.mrf.mxu0
    %v7242 = vadd.f32 %v6913, %v7241
    %v7243 = vpop.f32.mrf.mxu0
    %v7244 = vadd.f32 %v6915, %v7243
    %7245 = vmatmul.bf16.gmra.mxu0 %v4598
    %v7246 = vpop.f32.mrf.mxu0
    %v7247 = vadd.f32 %v6918, %v7246
    %v7248 = vpop.f32.mrf.mxu0
    %v7249 = vadd.f32 %v6920, %v7248
    %7250 = vmatmul.bf16.gmra.mxu0 %v4602
    %v7251 = vpop.f32.mrf.mxu0
    %v7252 = vadd.f32 %v6923, %v7251
    %v7253 = vpop.f32.mrf.mxu0
    %v7254 = vadd.f32 %v6925, %v7253
    %7255 = vmatmul.bf16.gmra.mxu0 %v4606
    %v7256 = vpop.f32.mrf.mxu0
    %v7257 = vadd.f32 %v6928, %v7256
    %v7258 = vpop.f32.mrf.mxu0
    %v7259 = vadd.f32 %v6930, %v7258
    %7260 = vmatmul.bf16.gmra.mxu0 %v4610
    %v7261 = vpop.f32.mrf.mxu0
    %v7262 = vadd.f32 %v6933, %v7261
    %v7263 = vpop.f32.mrf.mxu0
    %v7264 = vadd.f32 %v6935, %v7263
    %7265 = vmatmul.bf16.gmra.mxu0 %v4614
    %v7266 = vpop.f32.mrf.mxu0
    %v7267 = vadd.f32 %v6938, %v7266
    %v7268 = vpop.f32.mrf.mxu0
    %v7269 = vadd.f32 %v6940, %v7268
    %7270 = vmatmul.bf16.gmra.mxu0 %v4618
    %v7271 = vpop.f32.mrf.mxu0
    %v7272 = vadd.f32 %v6943, %v7271
    %v7273 = vpop.f32.mrf.mxu0
    %v7274 = vadd.f32 %v6945, %v7273
    %7275 = vmatmul.bf16.gmra.mxu0 %v4622
    %v7276 = vpop.f32.mrf.mxu0
    %v7277 = vadd.f32 %v6948, %v7276
    %v7278 = vpop.f32.mrf.mxu0
    %v7279 = vadd.f32 %v6950, %v7278
    %7280 = vmatmul.bf16.gmra.mxu0 %v4626
    %v7281 = vpop.f32.mrf.mxu0
    %v7282 = vadd.f32 %v6953, %v7281
    %v7283 = vpop.f32.mrf.mxu0
    %v7284 = vadd.f32 %v6955, %v7283
    %7285 = vmatmul.bf16.gmra.mxu0 %v4630
    %v7286 = vpop.f32.mrf.mxu0
    %v7287 = vadd.f32 %v6958, %v7286
    %v7288 = vpop.f32.mrf.mxu0
    %v7289 = vadd.f32 %v6960, %v7288
    %7290 = vmatmul.bf16.gmra.mxu0 %v4634
    %v7291 = vpop.f32.mrf.mxu0
    %v7292 = vadd.f32 %v6963, %v7291
    %v7293 = vpop.f32.mrf.mxu0
    %v7294 = vadd.f32 %v6965, %v7293
    %7295 = vmatmul.bf16.gmra.mxu0 %v4638
    %v7296 = vpop.f32.mrf.mxu0
    %v7297 = vadd.f32 %v6968, %v7296
    %v7298 = vpop.f32.mrf.mxu0
    %v7299 = vadd.f32 %v6970, %v7298
    %7300 = vmatmul.bf16.gmra.mxu0 %v4642
    %v7301 = vpop.f32.mrf.mxu0
    %v7302 = vadd.f32 %v6973, %v7301
    %v7303 = vpop.f32.mrf.mxu0
    %v7304 = vadd.f32 %v6975, %v7303
    %7305 = vmatmul.bf16.gmra.mxu0 %v4646
    %v7306 = vpop.f32.mrf.mxu0
    %v7307 = vadd.f32 %v6978, %v7306
    %v7308 = vpop.f32.mrf.mxu0
    %v7309 = vadd.f32 %v6980, %v7308
    %7310 = vmatmul.bf16.gmra.mxu0 %v4650
    %v7311 = vpop.f32.mrf.mxu0
    %v7312 = vadd.f32 %v6983, %v7311
    %v7313 = vpop.f32.mrf.mxu0
    %v7314 = vadd.f32 %v6985, %v7313
    %7315 = vmatmul.bf16.gmra.mxu0 %v4654
    %v7316 = vpop.f32.mrf.mxu0
    %v7317 = vadd.f32 %v6988, %v7316
    %v7318 = vpop.f32.mrf.mxu0
    %v7319 = vadd.f32 %v6990, %v7318
    %7320 = vmatmul.bf16.gmra.mxu0 %v4658
    %v7321 = vpop.f32.mrf.mxu0
    %v7322 = vadd.f32 %v6993, %v7321
    %v7323 = vpop.f32.mrf.mxu0
    %v7324 = vadd.f32 %v6995, %v7323
    %7325 = vmatmul.bf16.gmra.mxu0 %v4662
    %v7326 = vpop.f32.mrf.mxu0
    %v7327 = vadd.f32 %v6998, %v7326
    %v7328 = vpop.f32.mrf.mxu0
    %v7329 = vadd.f32 %v7000, %v7328
    %7330 = vmatmul.bf16.gmra.mxu0 %v4666
    %v7331 = vpop.f32.mrf.mxu0
    %v7332 = vadd.f32 %v7003, %v7331
    %v7333 = vpop.f32.mrf.mxu0
    %v7334 = vadd.f32 %v7005, %v7333
    %7335 = vmatmul.bf16.gmra.mxu0 %v4670
    %v7336 = vpop.f32.mrf.mxu0
    %v7337 = vadd.f32 %v7008, %v7336
    %v7338 = vpop.f32.mrf.mxu0
    %v7339 = vadd.f32 %v7010, %v7338
    %7340 = vmatmul.bf16.gmra.mxu0 %v4674
    %v7341 = vpop.f32.mrf.mxu0
    %v7342 = vadd.f32 %v7013, %v7341
    %v7343 = vpop.f32.mrf.mxu0
    %v7344 = vadd.f32 %v7015, %v7343
    %7345 = vmatmul.bf16.gmra.mxu0 %v4678
    %v7346 = vpop.f32.mrf.mxu0
    %v7347 = vadd.f32 %v7018, %v7346
    %v7348 = vpop.f32.mrf.mxu0
    %v7349 = vadd.f32 %v7020, %v7348
    %7350 = vmatmul.bf16.gmra.mxu0 %v4682
    %v7351 = vpop.f32.mrf.mxu0
    %v7352 = vadd.f32 %v7023, %v7351
    %v7353 = vpop.f32.mrf.mxu0
    %v7354 = vadd.f32 %v7025, %v7353
    %7355 = vmatmul.bf16.gmra.mxu0 %v4686
    %v7356 = vpop.f32.mrf.mxu0
    %v7357 = vadd.f32 %v7028, %v7356
    %v7358 = vpop.f32.mrf.mxu0
    %v7359 = vadd.f32 %v7030, %v7358
    %7360 = vmatmul.bf16.gmra.mxu0 %v4690
    %v7361 = vpop.f32.mrf.mxu0
    %v7362 = vadd.f32 %v7033, %v7361
    %v7363 = vpop.f32.mrf.mxu0
    %v7364 = vadd.f32 %v7035, %v7363
    %7365 = vmatmul.bf16.gmra.mxu0 %v4694
    %v7366 = vpop.f32.mrf.mxu0
    %v7367 = vadd.f32 %v7038, %v7366
    %v7368 = vpop.f32.mrf.mxu0
    %v7369 = vadd.f32 %v7040, %v7368
    %7370 = vmatmul.bf16.gmra.mxu0 %v4698
    %v7371 = vpop.f32.mrf.mxu0
    %v7372 = vadd.f32 %v7043, %v7371
    %v7373 = vpop.f32.mrf.mxu0
    %v7374 = vadd.f32 %v7045, %v7373
    %7375 = vmatmul.bf16.gmra.mxu0 %v4702
    %v7376 = vpop.f32.mrf.mxu0
    %v7377 = vadd.f32 %v7048, %v7376
    %v7378 = vpop.f32.mrf.mxu0
    %v7379 = vadd.f32 %v7050, %v7378
    %7380 = vmatmul.bf16.gmra.mxu0 %v4706
    %v7381 = vpop.f32.mrf.mxu0
    %v7382 = vadd.f32 %v7053, %v7381
    %v7383 = vpop.f32.mrf.mxu0
    %v7384 = vadd.f32 %v7055, %v7383
    %7385 = vmatmul.bf16.gmra.mxu0 %v4710
    %v7386 = vpop.f32.mrf.mxu0
    %v7387 = vadd.f32 %v7058, %v7386
    %v7388 = vpop.f32.mrf.mxu0
    %v7389 = vadd.f32 %v7060, %v7388
    %7390 = vmatmul.bf16.gmra.mxu0 %v4714
    %v7391 = vpop.f32.mrf.mxu0
    %v7392 = vadd.f32 %v7063, %v7391
    %v7393 = vpop.f32.mrf.mxu0
    %v7394 = vadd.f32 %v7065, %v7393
    %7395 = vmatmul.bf16.gmra.mxu0 %v4718
    %v7396 = vpop.f32.mrf.mxu0
    %v7397 = vadd.f32 %v7068, %v7396
    %v7398 = vpop.f32.mrf.mxu0
    %v7399 = vadd.f32 %v7070, %v7398
    %7400 = vmatmul.bf16.gmra.mxu0 %v4722
    %v7401 = vpop.f32.mrf.mxu0
    %v7402 = vadd.f32 %v7073, %v7401
    %v7403 = vpop.f32.mrf.mxu0
    %v7404 = vadd.f32 %v7075, %v7403
    %7405 = vmatmul.bf16.gmra.mxu0 %v4726
    %v7406 = vpop.f32.mrf.mxu0
    %v7407 = vadd.f32 %v7078, %v7406
    %v7408 = vpop.f32.mrf.mxu0
    %v7409 = vadd.f32 %v7080, %v7408
    %7410 = vmatmul.bf16.gmra.mxu0 %v4730
    %v7411 = vpop.f32.mrf.mxu0
    %v7412 = vadd.f32 %v7083, %v7411
    %v7413 = vpop.f32.mrf.mxu0
    %v7414 = vadd.f32 %v7085, %v7413
    %7415 = vmatmul.bf16.gmra.mxu0 %v4734
    %v7416 = vpop.f32.mrf.mxu0
    %v7417 = vadd.f32 %v7088, %v7416
    %v7418 = vpop.f32.mrf.mxu0
    %v7419 = vadd.f32 %v7090, %v7418
    %7420 = vmatmul.bf16.gmra.mxu0 %v4738
    %v7421 = vpop.f32.mrf.mxu0
    %v7422 = vadd.f32 %v7093, %v7421
    %v7423 = vpop.f32.mrf.mxu0
    %v7424 = vadd.f32 %v7095, %v7423
    %7425 = vmatmul.bf16.gmra.mxu0 %v4742
    %v7426 = vpop.f32.mrf.mxu0
    %v7427 = vadd.f32 %v7098, %v7426
    %v7428 = vpop.f32.mrf.mxu0
    %v7429 = vadd.f32 %v7100, %v7428
    %7430 = vdwg.mxu0
    %7431 = vmatpush.bf16.msra.mxu0 %v5063
    %7432 = vmatpush.bf16.msra.mxu0 %v5061
    %7433 = vmatpush.bf16.msra.mxu0 %v5059
    %7434 = vmatpush.bf16.msra.mxu0 %v5057
    %7435 = vmatpush.bf16.msra.mxu0 %v5055
    %7436 = vmatpush.bf16.msra.mxu0 %v5053
    %7437 = vmatpush.bf16.msra.mxu0 %v5051
    %7438 = vmatpush.bf16.msra.mxu0 %v5049
    %7439 = vmatmul.bf16.gmra.mxu0 %v4491
    %v7440 = vpop.f32.mrf.mxu0
    %v7441 = vadd.f32 %v7112, %v7440
    %v7442 = vpop.f32.mrf.mxu0
    %v7443 = vadd.f32 %v7114, %v7442
    %7444 = vmatmul.bf16.gmra.mxu0 %v4495
    %v7445 = vpop.f32.mrf.mxu0
    %v7446 = vadd.f32 %v7117, %v7445
    %v7447 = vpop.f32.mrf.mxu0
    %v7448 = vadd.f32 %v7119, %v7447
    %7449 = vmatmul.bf16.gmra.mxu0 %v4499
    %v7450 = vpop.f32.mrf.mxu0
    %v7451 = vadd.f32 %v7122, %v7450
    %v7452 = vpop.f32.mrf.mxu0
    %v7453 = vadd.f32 %v7124, %v7452
    %7454 = vmatmul.bf16.gmra.mxu0 %v4503
    %v7455 = vpop.f32.mrf.mxu0
    %v7456 = vadd.f32 %v7127, %v7455
    %v7457 = vpop.f32.mrf.mxu0
    %v7458 = vadd.f32 %v7129, %v7457
    %7459 = vmatmul.bf16.gmra.mxu0 %v4507
    %v7460 = vpop.f32.mrf.mxu0
    %v7461 = vadd.f32 %v7132, %v7460
    %v7462 = vpop.f32.mrf.mxu0
    %v7463 = vadd.f32 %v7134, %v7462
    %7464 = vmatmul.bf16.gmra.mxu0 %v4511
    %v7465 = vpop.f32.mrf.mxu0
    %v7466 = vadd.f32 %v7137, %v7465
    %v7467 = vpop.f32.mrf.mxu0
    %v7468 = vadd.f32 %v7139, %v7467
    %7469 = vmatmul.bf16.gmra.mxu0 %v4515
    %v7470 = vpop.f32.mrf.mxu0
    %v7471 = vadd.f32 %v7142, %v7470
    %v7472 = vpop.f32.mrf.mxu0
    %v7473 = vadd.f32 %v7144, %v7472
    %7474 = vmatmul.bf16.gmra.mxu0 %v4519
    %v7475 = vpop.f32.mrf.mxu0
    %v7476 = vadd.f32 %v7147, %v7475
    %v7477 = vpop.f32.mrf.mxu0
    %v7478 = vadd.f32 %v7149, %v7477
    %7479 = vmatmul.bf16.gmra.mxu0 %v4523
    %v7480 = vpop.f32.mrf.mxu0
    %v7481 = vadd.f32 %v7152, %v7480
    %v7482 = vpop.f32.mrf.mxu0
    %v7483 = vadd.f32 %v7154, %v7482
    %7484 = vmatmul.bf16.gmra.mxu0 %v4527
    %v7485 = vpop.f32.mrf.mxu0
    %v7486 = vadd.f32 %v7157, %v7485
    %v7487 = vpop.f32.mrf.mxu0
    %v7488 = vadd.f32 %v7159, %v7487
    %7489 = vmatmul.bf16.gmra.mxu0 %v4531
    %v7490 = vpop.f32.mrf.mxu0
    %v7491 = vadd.f32 %v7162, %v7490
    %v7492 = vpop.f32.mrf.mxu0
    %v7493 = vadd.f32 %v7164, %v7492
    %7494 = vmatmul.bf16.gmra.mxu0 %v4535
    %v7495 = vpop.f32.mrf.mxu0
    %v7496 = vadd.f32 %v7167, %v7495
    %v7497 = vpop.f32.mrf.mxu0
    %v7498 = vadd.f32 %v7169, %v7497
    %7499 = vmatmul.bf16.gmra.mxu0 %v4539
    %v7500 = vpop.f32.mrf.mxu0
    %v7501 = vadd.f32 %v7172, %v7500
    %v7502 = vpop.f32.mrf.mxu0
    %v7503 = vadd.f32 %v7174, %v7502
    %7504 = vmatmul.bf16.gmra.mxu0 %v4543
    %v7505 = vpop.f32.mrf.mxu0
    %v7506 = vadd.f32 %v7177, %v7505
    %v7507 = vpop.f32.mrf.mxu0
    %v7508 = vadd.f32 %v7179, %v7507
    %7509 = vmatmul.bf16.gmra.mxu0 %v4547
    %v7510 = vpop.f32.mrf.mxu0
    %v7511 = vadd.f32 %v7182, %v7510
    %v7512 = vpop.f32.mrf.mxu0
    %v7513 = vadd.f32 %v7184, %v7512
    %7514 = vmatmul.bf16.gmra.mxu0 %v4551
    %v7515 = vpop.f32.mrf.mxu0
    %v7516 = vadd.f32 %v7187, %v7515
    %v7517 = vpop.f32.mrf.mxu0
    %v7518 = vadd.f32 %v7189, %v7517
    %7519 = vmatmul.bf16.gmra.mxu0 %v4555
    %v7520 = vpop.f32.mrf.mxu0
    %v7521 = vadd.f32 %v7192, %v7520
    %v7522 = vpop.f32.mrf.mxu0
    %v7523 = vadd.f32 %v7194, %v7522
    %7524 = vmatmul.bf16.gmra.mxu0 %v4559
    %v7525 = vpop.f32.mrf.mxu0
    %v7526 = vadd.f32 %v7197, %v7525
    %v7527 = vpop.f32.mrf.mxu0
    %v7528 = vadd.f32 %v7199, %v7527
    %7529 = vmatmul.bf16.gmra.mxu0 %v4563
    %v7530 = vpop.f32.mrf.mxu0
    %v7531 = vadd.f32 %v7202, %v7530
    %v7532 = vpop.f32.mrf.mxu0
    %v7533 = vadd.f32 %v7204, %v7532
    %7534 = vmatmul.bf16.gmra.mxu0 %v4567
    %v7535 = vpop.f32.mrf.mxu0
    %v7536 = vadd.f32 %v7207, %v7535
    %v7537 = vpop.f32.mrf.mxu0
    %v7538 = vadd.f32 %v7209, %v7537
    %7539 = vmatmul.bf16.gmra.mxu0 %v4571
    %v7540 = vpop.f32.mrf.mxu0
    %v7541 = vadd.f32 %v7212, %v7540
    %v7542 = vpop.f32.mrf.mxu0
    %v7543 = vadd.f32 %v7214, %v7542
    %7544 = vmatmul.bf16.gmra.mxu0 %v4575
    %v7545 = vpop.f32.mrf.mxu0
    %v7546 = vadd.f32 %v7217, %v7545
    %v7547 = vpop.f32.mrf.mxu0
    %v7548 = vadd.f32 %v7219, %v7547
    %7549 = vmatmul.bf16.gmra.mxu0 %v4579
    %v7550 = vpop.f32.mrf.mxu0
    %v7551 = vadd.f32 %v7222, %v7550
    %v7552 = vpop.f32.mrf.mxu0
    %v7553 = vadd.f32 %v7224, %v7552
    %7554 = vmatmul.bf16.gmra.mxu0 %v4583
    %v7555 = vpop.f32.mrf.mxu0
    %v7556 = vadd.f32 %v7227, %v7555
    %v7557 = vpop.f32.mrf.mxu0
    %v7558 = vadd.f32 %v7229, %v7557
    %7559 = vmatmul.bf16.gmra.mxu0 %v4587
    %v7560 = vpop.f32.mrf.mxu0
    %v7561 = vadd.f32 %v7232, %v7560
    %v7562 = vpop.f32.mrf.mxu0
    %v7563 = vadd.f32 %v7234, %v7562
    %7564 = vmatmul.bf16.gmra.mxu0 %v4591
    %v7565 = vpop.f32.mrf.mxu0
    %v7566 = vadd.f32 %v7237, %v7565
    %v7567 = vpop.f32.mrf.mxu0
    %v7568 = vadd.f32 %v7239, %v7567
    %7569 = vmatmul.bf16.gmra.mxu0 %v4595
    %v7570 = vpop.f32.mrf.mxu0
    %v7571 = vadd.f32 %v7242, %v7570
    %v7572 = vpop.f32.mrf.mxu0
    %v7573 = vadd.f32 %v7244, %v7572
    %7574 = vmatmul.bf16.gmra.mxu0 %v4599
    %v7575 = vpop.f32.mrf.mxu0
    %v7576 = vadd.f32 %v7247, %v7575
    %v7577 = vpop.f32.mrf.mxu0
    %v7578 = vadd.f32 %v7249, %v7577
    %7579 = vmatmul.bf16.gmra.mxu0 %v4603
    %v7580 = vpop.f32.mrf.mxu0
    %v7581 = vadd.f32 %v7252, %v7580
    %v7582 = vpop.f32.mrf.mxu0
    %v7583 = vadd.f32 %v7254, %v7582
    %7584 = vmatmul.bf16.gmra.mxu0 %v4607
    %v7585 = vpop.f32.mrf.mxu0
    %v7586 = vadd.f32 %v7257, %v7585
    %v7587 = vpop.f32.mrf.mxu0
    %v7588 = vadd.f32 %v7259, %v7587
    %7589 = vmatmul.bf16.gmra.mxu0 %v4611
    %v7590 = vpop.f32.mrf.mxu0
    %v7591 = vadd.f32 %v7262, %v7590
    %v7592 = vpop.f32.mrf.mxu0
    %v7593 = vadd.f32 %v7264, %v7592
    %7594 = vmatmul.bf16.gmra.mxu0 %v4615
    %v7595 = vpop.f32.mrf.mxu0
    %v7596 = vadd.f32 %v7267, %v7595
    %v7597 = vpop.f32.mrf.mxu0
    %v7598 = vadd.f32 %v7269, %v7597
    %7599 = vmatmul.bf16.gmra.mxu0 %v4619
    %v7600 = vpop.f32.mrf.mxu0
    %v7601 = vadd.f32 %v7272, %v7600
    %v7602 = vpop.f32.mrf.mxu0
    %v7603 = vadd.f32 %v7274, %v7602
    %7604 = vmatmul.bf16.gmra.mxu0 %v4623
    %v7605 = vpop.f32.mrf.mxu0
    %v7606 = vadd.f32 %v7277, %v7605
    %v7607 = vpop.f32.mrf.mxu0
    %v7608 = vadd.f32 %v7279, %v7607
    %7609 = vmatmul.bf16.gmra.mxu0 %v4627
    %v7610 = vpop.f32.mrf.mxu0
    %v7611 = vadd.f32 %v7282, %v7610
    %v7612 = vpop.f32.mrf.mxu0
    %v7613 = vadd.f32 %v7284, %v7612
    %7614 = vmatmul.bf16.gmra.mxu0 %v4631
    %v7615 = vpop.f32.mrf.mxu0
    %v7616 = vadd.f32 %v7287, %v7615
    %v7617 = vpop.f32.mrf.mxu0
    %v7618 = vadd.f32 %v7289, %v7617
    %7619 = vmatmul.bf16.gmra.mxu0 %v4635
    %v7620 = vpop.f32.mrf.mxu0
    %v7621 = vadd.f32 %v7292, %v7620
    %v7622 = vpop.f32.mrf.mxu0
    %v7623 = vadd.f32 %v7294, %v7622
    %7624 = vmatmul.bf16.gmra.mxu0 %v4639
    %v7625 = vpop.f32.mrf.mxu0
    %v7626 = vadd.f32 %v7297, %v7625
    %v7627 = vpop.f32.mrf.mxu0
    %v7628 = vadd.f32 %v7299, %v7627
    %7629 = vmatmul.bf16.gmra.mxu0 %v4643
    %v7630 = vpop.f32.mrf.mxu0
    %v7631 = vadd.f32 %v7302, %v7630
    %v7632 = vpop.f32.mrf.mxu0
    %v7633 = vadd.f32 %v7304, %v7632
    %7634 = vmatmul.bf16.gmra.mxu0 %v4647
    %v7635 = vpop.f32.mrf.mxu0
    %v7636 = vadd.f32 %v7307, %v7635
    %v7637 = vpop.f32.mrf.mxu0
    %v7638 = vadd.f32 %v7309, %v7637
    %7639 = vmatmul.bf16.gmra.mxu0 %v4651
    %v7640 = vpop.f32.mrf.mxu0
    %v7641 = vadd.f32 %v7312, %v7640
    %v7642 = vpop.f32.mrf.mxu0
    %v7643 = vadd.f32 %v7314, %v7642
    %7644 = vmatmul.bf16.gmra.mxu0 %v4655
    %v7645 = vpop.f32.mrf.mxu0
    %v7646 = vadd.f32 %v7317, %v7645
    %v7647 = vpop.f32.mrf.mxu0
    %v7648 = vadd.f32 %v7319, %v7647
    %7649 = vmatmul.bf16.gmra.mxu0 %v4659
    %v7650 = vpop.f32.mrf.mxu0
    %v7651 = vadd.f32 %v7322, %v7650
    %v7652 = vpop.f32.mrf.mxu0
    %v7653 = vadd.f32 %v7324, %v7652
    %7654 = vmatmul.bf16.gmra.mxu0 %v4663
    %v7655 = vpop.f32.mrf.mxu0
    %v7656 = vadd.f32 %v7327, %v7655
    %v7657 = vpop.f32.mrf.mxu0
    %v7658 = vadd.f32 %v7329, %v7657
    %7659 = vmatmul.bf16.gmra.mxu0 %v4667
    %v7660 = vpop.f32.mrf.mxu0
    %v7661 = vadd.f32 %v7332, %v7660
    %v7662 = vpop.f32.mrf.mxu0
    %v7663 = vadd.f32 %v7334, %v7662
    %7664 = vmatmul.bf16.gmra.mxu0 %v4671
    %v7665 = vpop.f32.mrf.mxu0
    %v7666 = vadd.f32 %v7337, %v7665
    %v7667 = vpop.f32.mrf.mxu0
    %v7668 = vadd.f32 %v7339, %v7667
    %7669 = vmatmul.bf16.gmra.mxu0 %v4675
    %v7670 = vpop.f32.mrf.mxu0
    %v7671 = vadd.f32 %v7342, %v7670
    %v7672 = vpop.f32.mrf.mxu0
    %v7673 = vadd.f32 %v7344, %v7672
    %7674 = vmatmul.bf16.gmra.mxu0 %v4679
    %v7675 = vpop.f32.mrf.mxu0
    %v7676 = vadd.f32 %v7347, %v7675
    %v7677 = vpop.f32.mrf.mxu0
    %v7678 = vadd.f32 %v7349, %v7677
    %7679 = vmatmul.bf16.gmra.mxu0 %v4683
    %v7680 = vpop.f32.mrf.mxu0
    %v7681 = vadd.f32 %v7352, %v7680
    %v7682 = vpop.f32.mrf.mxu0
    %v7683 = vadd.f32 %v7354, %v7682
    %7684 = vmatmul.bf16.gmra.mxu0 %v4687
    %v7685 = vpop.f32.mrf.mxu0
    %v7686 = vadd.f32 %v7357, %v7685
    %v7687 = vpop.f32.mrf.mxu0
    %v7688 = vadd.f32 %v7359, %v7687
    %7689 = vmatmul.bf16.gmra.mxu0 %v4691
    %v7690 = vpop.f32.mrf.mxu0
    %v7691 = vadd.f32 %v7362, %v7690
    %v7692 = vpop.f32.mrf.mxu0
    %v7693 = vadd.f32 %v7364, %v7692
    %7694 = vmatmul.bf16.gmra.mxu0 %v4695
    %v7695 = vpop.f32.mrf.mxu0
    %v7696 = vadd.f32 %v7367, %v7695
    %v7697 = vpop.f32.mrf.mxu0
    %v7698 = vadd.f32 %v7369, %v7697
    %7699 = vmatmul.bf16.gmra.mxu0 %v4699
    %v7700 = vpop.f32.mrf.mxu0
    %v7701 = vadd.f32 %v7372, %v7700
    %v7702 = vpop.f32.mrf.mxu0
    %v7703 = vadd.f32 %v7374, %v7702
    %7704 = vmatmul.bf16.gmra.mxu0 %v4703
    %v7705 = vpop.f32.mrf.mxu0
    %v7706 = vadd.f32 %v7377, %v7705
    %v7707 = vpop.f32.mrf.mxu0
    %v7708 = vadd.f32 %v7379, %v7707
    %7709 = vmatmul.bf16.gmra.mxu0 %v4707
    %v7710 = vpop.f32.mrf.mxu0
    %v7711 = vadd.f32 %v7382, %v7710
    %v7712 = vpop.f32.mrf.mxu0
    %v7713 = vadd.f32 %v7384, %v7712
    %7714 = vmatmul.bf16.gmra.mxu0 %v4711
    %v7715 = vpop.f32.mrf.mxu0
    %v7716 = vadd.f32 %v7387, %v7715
    %v7717 = vpop.f32.mrf.mxu0
    %v7718 = vadd.f32 %v7389, %v7717
    %7719 = vmatmul.bf16.gmra.mxu0 %v4715
    %v7720 = vpop.f32.mrf.mxu0
    %v7721 = vadd.f32 %v7392, %v7720
    %v7722 = vpop.f32.mrf.mxu0
    %v7723 = vadd.f32 %v7394, %v7722
    %7724 = vmatmul.bf16.gmra.mxu0 %v4719
    %v7725 = vpop.f32.mrf.mxu0
    %v7726 = vadd.f32 %v7397, %v7725
    %v7727 = vpop.f32.mrf.mxu0
    %v7728 = vadd.f32 %v7399, %v7727
    %7729 = vmatmul.bf16.gmra.mxu0 %v4723
    %v7730 = vpop.f32.mrf.mxu0
    %v7731 = vadd.f32 %v7402, %v7730
    %v7732 = vpop.f32.mrf.mxu0
    %v7733 = vadd.f32 %v7404, %v7732
    %7734 = vmatmul.bf16.gmra.mxu0 %v4727
    %v7735 = vpop.f32.mrf.mxu0
    %v7736 = vadd.f32 %v7407, %v7735
    %v7737 = vpop.f32.mrf.mxu0
    %v7738 = vadd.f32 %v7409, %v7737
    %7739 = vmatmul.bf16.gmra.mxu0 %v4731
    %v7740 = vpop.f32.mrf.mxu0
    %v7741 = vadd.f32 %v7412, %v7740
    %v7742 = vpop.f32.mrf.mxu0
    %v7743 = vadd.f32 %v7414, %v7742
    %7744 = vmatmul.bf16.gmra.mxu0 %v4735
    %v7745 = vpop.f32.mrf.mxu0
    %v7746 = vadd.f32 %v7417, %v7745
    %v7747 = vpop.f32.mrf.mxu0
    %v7748 = vadd.f32 %v7419, %v7747
    %7749 = vmatmul.bf16.gmra.mxu0 %v4739
    %v7750 = vpop.f32.mrf.mxu0
    %v7751 = vadd.f32 %v7422, %v7750
    %v7752 = vpop.f32.mrf.mxu0
    %v7753 = vadd.f32 %v7424, %v7752
    %7754 = vmatmul.bf16.gmra.mxu0 %v4743
    %v7755 = vpop.f32.mrf.mxu0
    %v7756 = vadd.f32 %v7427, %v7755
    %v7757 = vpop.f32.mrf.mxu0
    %v7758 = vadd.f32 %v7429, %v7757
    %7759 = vdwg.mxu0
    %v7760 = vmul.f32 %v6125, 0.01
    %v7761 = vmul.f32 %v7441, 0.01
    %v7762 = vmul.f32 %v6127, 0.01
    %v7763 = vmul.f32 %v7443, 0.01
    %v7764 = vmul.f32 %v6130, 0.01
    %v7765 = vmul.f32 %v7446, 0.01
    %v7766 = vmul.f32 %v6132, 0.01
    %v7767 = vmul.f32 %v7448, 0.01
    %v7768 = vmul.f32 %v6135, 0.01
    %v7769 = vmul.f32 %v7451, 0.01
    %v7770 = vmul.f32 %v6137, 0.01
    %v7771 = vmul.f32 %v7453, 0.01
    %v7772 = vmul.f32 %v6140, 0.01
    %v7773 = vmul.f32 %v7456, 0.01
    %v7774 = vmul.f32 %v6142, 0.01
    %v7775 = vmul.f32 %v7458, 0.01
    %v7776 = vmul.f32 %v6145, 0.01
    %v7777 = vmul.f32 %v7461, 0.01
    %v7778 = vmul.f32 %v6147, 0.01
    %v7779 = vmul.f32 %v7463, 0.01
    %v7780 = vmul.f32 %v6150, 0.01
    %v7781 = vmul.f32 %v7466, 0.01
    %v7782 = vmul.f32 %v6152, 0.01
    %v7783 = vmul.f32 %v7468, 0.01
    %v7784 = vmul.f32 %v6155, 0.01
    %v7785 = vmul.f32 %v7471, 0.01
    %v7786 = vmul.f32 %v6157, 0.01
    %v7787 = vmul.f32 %v7473, 0.01
    %v7788 = vmul.f32 %v6160, 0.01
    %v7789 = vmul.f32 %v7476, 0.01
    %v7790 = vmul.f32 %v6162, 0.01
    %v7791 = vmul.f32 %v7478, 0.01
    %v7792 = vmul.f32 %v6165, 0.01
    %v7793 = vmul.f32 %v7481, 0.01
    %v7794 = vmul.f32 %v6167, 0.01
    %v7795 = vmul.f32 %v7483, 0.01
    %v7796 = vmul.f32 %v6170, 0.01
    %v7797 = vmul.f32 %v7486, 0.01
    %v7798 = vmul.f32 %v6172, 0.01
    %v7799 = vmul.f32 %v7488, 0.01
    %v7800 = vmul.f32 %v6175, 0.01
    %v7801 = vmul.f32 %v7491, 0.01
    %v7802 = vmul.f32 %v6177, 0.01
    %v7803 = vmul.f32 %v7493, 0.01
    %v7804 = vmul.f32 %v6180, 0.01
    %v7805 = vmul.f32 %v7496, 0.01
    %v7806 = vmul.f32 %v6182, 0.01
    %v7807 = vmul.f32 %v7498, 0.01
    %v7808 = vmul.f32 %v6185, 0.01
    %v7809 = vmul.f32 %v7501, 0.01
    %v7810 = vmul.f32 %v6187, 0.01
    %v7811 = vmul.f32 %v7503, 0.01
    %v7812 = vmul.f32 %v6190, 0.01
    %v7813 = vmul.f32 %v7506, 0.01
    %v7814 = vmul.f32 %v6192, 0.01
    %v7815 = vmul.f32 %v7508, 0.01
    %v7816 = vmul.f32 %v6195, 0.01
    %v7817 = vmul.f32 %v7511, 0.01
    %v7818 = vmul.f32 %v6197, 0.01
    %v7819 = vmul.f32 %v7513, 0.01
    %v7820 = vmul.f32 %v6200, 0.01
    %v7821 = vmul.f32 %v7516, 0.01
    %v7822 = vmul.f32 %v6202, 0.01
    %v7823 = vmul.f32 %v7518, 0.01
    %v7824 = vmul.f32 %v6205, 0.01
    %v7825 = vmul.f32 %v7521, 0.01
    %v7826 = vmul.f32 %v6207, 0.01
    %v7827 = vmul.f32 %v7523, 0.01
    %v7828 = vmul.f32 %v6210, 0.01
    %v7829 = vmul.f32 %v7526, 0.01
    %v7830 = vmul.f32 %v6212, 0.01
    %v7831 = vmul.f32 %v7528, 0.01
    %v7832 = vmul.f32 %v6215, 0.01
    %v7833 = vmul.f32 %v7531, 0.01
    %v7834 = vmul.f32 %v6217, 0.01
    %v7835 = vmul.f32 %v7533, 0.01
    %v7836 = vmul.f32 %v6220, 0.01
    %v7837 = vmul.f32 %v7536, 0.01
    %v7838 = vmul.f32 %v6222, 0.01
    %v7839 = vmul.f32 %v7538, 0.01
    %v7840 = vmul.f32 %v6225, 0.01
    %v7841 = vmul.f32 %v7541, 0.01
    %v7842 = vmul.f32 %v6227, 0.01
    %v7843 = vmul.f32 %v7543, 0.01
    %v7844 = vmul.f32 %v6230, 0.01
    %v7845 = vmul.f32 %v7546, 0.01
    %v7846 = vmul.f32 %v6232, 0.01
    %v7847 = vmul.f32 %v7548, 0.01
    %v7848 = vmul.f32 %v6235, 0.01
    %v7849 = vmul.f32 %v7551, 0.01
    %v7850 = vmul.f32 %v6237, 0.01
    %v7851 = vmul.f32 %v7553, 0.01
    %v7852 = vmul.f32 %v6240, 0.01
    %v7853 = vmul.f32 %v7556, 0.01
    %v7854 = vmul.f32 %v6242, 0.01
    %v7855 = vmul.f32 %v7558, 0.01
    %v7856 = vmul.f32 %v6245, 0.01
    %v7857 = vmul.f32 %v7561, 0.01
    %v7858 = vmul.f32 %v6247, 0.01
    %v7859 = vmul.f32 %v7563, 0.01
    %v7860 = vmul.f32 %v6250, 0.01
    %v7861 = vmul.f32 %v7566, 0.01
    %v7862 = vmul.f32 %v6252, 0.01
    %v7863 = vmul.f32 %v7568, 0.01
    %v7864 = vmul.f32 %v6255, 0.01
    %v7865 = vmul.f32 %v7571, 0.01
    %v7866 = vmul.f32 %v6257, 0.01
    %v7867 = vmul.f32 %v7573, 0.01
    %v7868 = vmul.f32 %v6260, 0.01
    %v7869 = vmul.f32 %v7576, 0.01
    %v7870 = vmul.f32 %v6262, 0.01
    %v7871 = vmul.f32 %v7578, 0.01
    %v7872 = vmul.f32 %v6265, 0.01
    %v7873 = vmul.f32 %v7581, 0.01
    %v7874 = vmul.f32 %v6267, 0.01
    %v7875 = vmul.f32 %v7583, 0.01
    %v7876 = vmul.f32 %v6270, 0.01
    %v7877 = vmul.f32 %v7586, 0.01
    %v7878 = vmul.f32 %v6272, 0.01
    %v7879 = vmul.f32 %v7588, 0.01
    %v7880 = vmul.f32 %v6275, 0.01
    %v7881 = vmul.f32 %v7591, 0.01
    %v7882 = vmul.f32 %v6277, 0.01
    %v7883 = vmul.f32 %v7593, 0.01
    %v7884 = vmul.f32 %v6280, 0.01
    %v7885 = vmul.f32 %v7596, 0.01
    %v7886 = vmul.f32 %v6282, 0.01
    %v7887 = vmul.f32 %v7598, 0.01
    %v7888 = vmul.f32 %v6285, 0.01
    %v7889 = vmul.f32 %v7601, 0.01
    %v7890 = vmul.f32 %v6287, 0.01
    %v7891 = vmul.f32 %v7603, 0.01
    %v7892 = vmul.f32 %v6290, 0.01
    %v7893 = vmul.f32 %v7606, 0.01
    %v7894 = vmul.f32 %v6292, 0.01
    %v7895 = vmul.f32 %v7608, 0.01
    %v7896 = vmul.f32 %v6295, 0.01
    %v7897 = vmul.f32 %v7611, 0.01
    %v7898 = vmul.f32 %v6297, 0.01
    %v7899 = vmul.f32 %v7613, 0.01
    %v7900 = vmul.f32 %v6300, 0.01
    %v7901 = vmul.f32 %v7616, 0.01
    %v7902 = vmul.f32 %v6302, 0.01
    %v7903 = vmul.f32 %v7618, 0.01
    %v7904 = vmul.f32 %v6305, 0.01
    %v7905 = vmul.f32 %v7621, 0.01
    %v7906 = vmul.f32 %v6307, 0.01
    %v7907 = vmul.f32 %v7623, 0.01
    %v7908 = vmul.f32 %v6310, 0.01
    %v7909 = vmul.f32 %v7626, 0.01
    %v7910 = vmul.f32 %v6312, 0.01
    %v7911 = vmul.f32 %v7628, 0.01
    %v7912 = vmul.f32 %v6315, 0.01
    %v7913 = vmul.f32 %v7631, 0.01
    %v7914 = vmul.f32 %v6317, 0.01
    %v7915 = vmul.f32 %v7633, 0.01
    %v7916 = vmul.f32 %v6320, 0.01
    %v7917 = vmul.f32 %v7636, 0.01
    %v7918 = vmul.f32 %v6322, 0.01
    %v7919 = vmul.f32 %v7638, 0.01
    %v7920 = vmul.f32 %v6325, 0.01
    %v7921 = vmul.f32 %v7641, 0.01
    %v7922 = vmul.f32 %v6327, 0.01
    %v7923 = vmul.f32 %v7643, 0.01
    %v7924 = vmul.f32 %v6330, 0.01
    %v7925 = vmul.f32 %v7646, 0.01
    %v7926 = vmul.f32 %v6332, 0.01
    %v7927 = vmul.f32 %v7648, 0.01
    %v7928 = vmul.f32 %v6335, 0.01
    %v7929 = vmul.f32 %v7651, 0.01
    %v7930 = vmul.f32 %v6337, 0.01
    %v7931 = vmul.f32 %v7653, 0.01
    %v7932 = vmul.f32 %v6340, 0.01
    %v7933 = vmul.f32 %v7656, 0.01
    %v7934 = vmul.f32 %v6342, 0.01
    %v7935 = vmul.f32 %v7658, 0.01
    %v7936 = vmul.f32 %v6345, 0.01
    %v7937 = vmul.f32 %v7661, 0.01
    %v7938 = vmul.f32 %v6347, 0.01
    %v7939 = vmul.f32 %v7663, 0.01
    %v7940 = vmul.f32 %v6350, 0.01
    %v7941 = vmul.f32 %v7666, 0.01
    %v7942 = vmul.f32 %v6352, 0.01
    %v7943 = vmul.f32 %v7668, 0.01
    %v7944 = vmul.f32 %v6355, 0.01
    %v7945 = vmul.f32 %v7671, 0.01
    %v7946 = vmul.f32 %v6357, 0.01
    %v7947 = vmul.f32 %v7673, 0.01
    %v7948 = vmul.f32 %v6360, 0.01
    %v7949 = vmul.f32 %v7676, 0.01
    %v7950 = vmul.f32 %v6362, 0.01
    %v7951 = vmul.f32 %v7678, 0.01
    %v7952 = vmul.f32 %v6365, 0.01
    %v7953 = vmul.f32 %v7681, 0.01
    %v7954 = vmul.f32 %v6367, 0.01
    %v7955 = vmul.f32 %v7683, 0.01
    %v7956 = vmul.f32 %v6370, 0.01
    %v7957 = vmul.f32 %v7686, 0.01
    %v7958 = vmul.f32 %v6372, 0.01
    %v7959 = vmul.f32 %v7688, 0.01
    %v7960 = vmul.f32 %v6375, 0.01
    %v7961 = vmul.f32 %v7691, 0.01
    %v7962 = vmul.f32 %v6377, 0.01
    %v7963 = vmul.f32 %v7693, 0.01
    %v7964 = vmul.f32 %v6380, 0.01
    %v7965 = vmul.f32 %v7696, 0.01
    %v7966 = vmul.f32 %v6382, 0.01
    %v7967 = vmul.f32 %v7698, 0.01
    %v7968 = vmul.f32 %v6385, 0.01
    %v7969 = vmul.f32 %v7701, 0.01
    %v7970 = vmul.f32 %v6387, 0.01
    %v7971 = vmul.f32 %v7703, 0.01
    %v7972 = vmul.f32 %v6390, 0.01
    %v7973 = vmul.f32 %v7706, 0.01
    %v7974 = vmul.f32 %v6392, 0.01
    %v7975 = vmul.f32 %v7708, 0.01
    %v7976 = vmul.f32 %v6395, 0.01
    %v7977 = vmul.f32 %v7711, 0.01
    %v7978 = vmul.f32 %v6397, 0.01
    %v7979 = vmul.f32 %v7713, 0.01
    %v7980 = vmul.f32 %v6400, 0.01
    %v7981 = vmul.f32 %v7716, 0.01
    %v7982 = vmul.f32 %v6402, 0.01
    %v7983 = vmul.f32 %v7718, 0.01
    %v7984 = vmul.f32 %v6405, 0.01
    %v7985 = vmul.f32 %v7721, 0.01
    %v7986 = vmul.f32 %v6407, 0.01
    %v7987 = vmul.f32 %v7723, 0.01
    %v7988 = vmul.f32 %v6410, 0.01
    %v7989 = vmul.f32 %v7726, 0.01
    %v7990 = vmul.f32 %v6412, 0.01
    %v7991 = vmul.f32 %v7728, 0.01
    %v7992 = vmul.f32 %v6415, 0.01
    %v7993 = vmul.f32 %v7731, 0.01
    %v7994 = vmul.f32 %v6417, 0.01
    %v7995 = vmul.f32 %v7733, 0.01
    %v7996 = vmul.f32 %v6420, 0.01
    %v7997 = vmul.f32 %v7736, 0.01
    %v7998 = vmul.f32 %v6422, 0.01
    %v7999 = vmul.f32 %v7738, 0.01
    %v8000 = vmul.f32 %v6425, 0.01
    %v8001 = vmul.f32 %v7741, 0.01
    %v8002 = vmul.f32 %v6427, 0.01
    %v8003 = vmul.f32 %v7743, 0.01
    %v8004 = vmul.f32 %v6430, 0.01
    %v8005 = vmul.f32 %v7746, 0.01
    %v8006 = vmul.f32 %v6432, 0.01
    %v8007 = vmul.f32 %v7748, 0.01
    %v8008 = vmul.f32 %v6435, 0.01
    %v8009 = vmul.f32 %v7751, 0.01
    %v8010 = vmul.f32 %v6437, 0.01
    %v8011 = vmul.f32 %v7753, 0.01
    %v8012 = vmul.f32 %v6440, 0.01
    %v8013 = vmul.f32 %v7756, 0.01
    %v8014 = vmul.f32 %v6442, 0.01
    %v8015 = vmul.f32 %v7758, 0.01
    %v8016 = vmax.f32 %v6125, %v7760
    %v8017 = vmax.f32 %v7441, %v7761
    %v8018 = vmax.f32 %v6127, %v7762
    %v8019 = vmax.f32 %v7443, %v7763
    %v8020 = vmax.f32 %v6130, %v7764
    %v8021 = vmax.f32 %v7446, %v7765
    %v8022 = vmax.f32 %v6132, %v7766
    %v8023 = vmax.f32 %v7448, %v7767
    %v8024 = vmax.f32 %v6135, %v7768
    %v8025 = vmax.f32 %v7451, %v7769
    %v8026 = vmax.f32 %v6137, %v7770
    %v8027 = vmax.f32 %v7453, %v7771
    %v8028 = vmax.f32 %v6140, %v7772
    %v8029 = vmax.f32 %v7456, %v7773
    %v8030 = vmax.f32 %v6142, %v7774
    %v8031 = vmax.f32 %v7458, %v7775
    %v8032 = vmax.f32 %v6145, %v7776
    %v8033 = vmax.f32 %v7461, %v7777
    %v8034 = vmax.f32 %v6147, %v7778
    %v8035 = vmax.f32 %v7463, %v7779
    %v8036 = vmax.f32 %v6150, %v7780
    %v8037 = vmax.f32 %v7466, %v7781
    %v8038 = vmax.f32 %v6152, %v7782
    %v8039 = vmax.f32 %v7468, %v7783
    %v8040 = vmax.f32 %v6155, %v7784
    %v8041 = vmax.f32 %v7471, %v7785
    %v8042 = vmax.f32 %v6157, %v7786
    %v8043 = vmax.f32 %v7473, %v7787
    %v8044 = vmax.f32 %v6160, %v7788
    %v8045 = vmax.f32 %v7476, %v7789
    %v8046 = vmax.f32 %v6162, %v7790
    %v8047 = vmax.f32 %v7478, %v7791
    %v8048 = vmax.f32 %v6165, %v7792
    %v8049 = vmax.f32 %v7481, %v7793
    %v8050 = vmax.f32 %v6167, %v7794
    %v8051 = vmax.f32 %v7483, %v7795
    %v8052 = vmax.f32 %v6170, %v7796
    %v8053 = vmax.f32 %v7486, %v7797
    %v8054 = vmax.f32 %v6172, %v7798
    %v8055 = vmax.f32 %v7488, %v7799
    %v8056 = vmax.f32 %v6175, %v7800
    %v8057 = vmax.f32 %v7491, %v7801
    %v8058 = vmax.f32 %v6177, %v7802
    %v8059 = vmax.f32 %v7493, %v7803
    %v8060 = vmax.f32 %v6180, %v7804
    %v8061 = vmax.f32 %v7496, %v7805
    %v8062 = vmax.f32 %v6182, %v7806
    %v8063 = vmax.f32 %v7498, %v7807
    %v8064 = vmax.f32 %v6185, %v7808
    %v8065 = vmax.f32 %v7501, %v7809
    %v8066 = vmax.f32 %v6187, %v7810
    %v8067 = vmax.f32 %v7503, %v7811
    %v8068 = vmax.f32 %v6190, %v7812
    %v8069 = vmax.f32 %v7506, %v7813
    %v8070 = vmax.f32 %v6192, %v7814
    %v8071 = vmax.f32 %v7508, %v7815
    %v8072 = vmax.f32 %v6195, %v7816
    %v8073 = vmax.f32 %v7511, %v7817
    %v8074 = vmax.f32 %v6197, %v7818
    %v8075 = vmax.f32 %v7513, %v7819
    %v8076 = vmax.f32 %v6200, %v7820
    %v8077 = vmax.f32 %v7516, %v7821
    %v8078 = vmax.f32 %v6202, %v7822
    %v8079 = vmax.f32 %v7518, %v7823
    %v8080 = vmax.f32 %v6205, %v7824
    %v8081 = vmax.f32 %v7521, %v7825
    %v8082 = vmax.f32 %v6207, %v7826
    %v8083 = vmax.f32 %v7523, %v7827
    %v8084 = vmax.f32 %v6210, %v7828
    %v8085 = vmax.f32 %v7526, %v7829
    %v8086 = vmax.f32 %v6212, %v7830
    %v8087 = vmax.f32 %v7528, %v7831
    %v8088 = vmax.f32 %v6215, %v7832
    %v8089 = vmax.f32 %v7531, %v7833
    %v8090 = vmax.f32 %v6217, %v7834
    %v8091 = vmax.f32 %v7533, %v7835
    %v8092 = vmax.f32 %v6220, %v7836
    %v8093 = vmax.f32 %v7536, %v7837
    %v8094 = vmax.f32 %v6222, %v7838
    %v8095 = vmax.f32 %v7538, %v7839
    %v8096 = vmax.f32 %v6225, %v7840
    %v8097 = vmax.f32 %v7541, %v7841
    %v8098 = vmax.f32 %v6227, %v7842
    %v8099 = vmax.f32 %v7543, %v7843
    %v8100 = vmax.f32 %v6230, %v7844
    %v8101 = vmax.f32 %v7546, %v7845
    %v8102 = vmax.f32 %v6232, %v7846
    %v8103 = vmax.f32 %v7548, %v7847
    %v8104 = vmax.f32 %v6235, %v7848
    %v8105 = vmax.f32 %v7551, %v7849
    %v8106 = vmax.f32 %v6237, %v7850
    %v8107 = vmax.f32 %v7553, %v7851
    %v8108 = vmax.f32 %v6240, %v7852
    %v8109 = vmax.f32 %v7556, %v7853
    %v8110 = vmax.f32 %v6242, %v7854
    %v8111 = vmax.f32 %v7558, %v7855
    %v8112 = vmax.f32 %v6245, %v7856
    %v8113 = vmax.f32 %v7561, %v7857
    %v8114 = vmax.f32 %v6247, %v7858
    %v8115 = vmax.f32 %v7563, %v7859
    %v8116 = vmax.f32 %v6250, %v7860
    %v8117 = vmax.f32 %v7566, %v7861
    %v8118 = vmax.f32 %v6252, %v7862
    %v8119 = vmax.f32 %v7568, %v7863
    %v8120 = vmax.f32 %v6255, %v7864
    %v8121 = vmax.f32 %v7571, %v7865
    %v8122 = vmax.f32 %v6257, %v7866
    %v8123 = vmax.f32 %v7573, %v7867
    %v8124 = vmax.f32 %v6260, %v7868
    %v8125 = vmax.f32 %v7576, %v7869
    %v8126 = vmax.f32 %v6262, %v7870
    %v8127 = vmax.f32 %v7578, %v7871
    %v8128 = vmax.f32 %v6265, %v7872
    %v8129 = vmax.f32 %v7581, %v7873
    %v8130 = vmax.f32 %v6267, %v7874
    %v8131 = vmax.f32 %v7583, %v7875
    %v8132 = vmax.f32 %v6270, %v7876
    %v8133 = vmax.f32 %v7586, %v7877
    %v8134 = vmax.f32 %v6272, %v7878
    %v8135 = vmax.f32 %v7588, %v7879
    %v8136 = vmax.f32 %v6275, %v7880
    %v8137 = vmax.f32 %v7591, %v7881
    %v8138 = vmax.f32 %v6277, %v7882
    %v8139 = vmax.f32 %v7593, %v7883
    %v8140 = vmax.f32 %v6280, %v7884
    %v8141 = vmax.f32 %v7596, %v7885
    %v8142 = vmax.f32 %v6282, %v7886
    %v8143 = vmax.f32 %v7598, %v7887
    %v8144 = vmax.f32 %v6285, %v7888
    %v8145 = vmax.f32 %v7601, %v7889
    %v8146 = vmax.f32 %v6287, %v7890
    %v8147 = vmax.f32 %v7603, %v7891
    %v8148 = vmax.f32 %v6290, %v7892
    %v8149 = vmax.f32 %v7606, %v7893
    %v8150 = vmax.f32 %v6292, %v7894
    %v8151 = vmax.f32 %v7608, %v7895
    %v8152 = vmax.f32 %v6295, %v7896
    %v8153 = vmax.f32 %v7611, %v7897
    %v8154 = vmax.f32 %v6297, %v7898
    %v8155 = vmax.f32 %v7613, %v7899
    %v8156 = vmax.f32 %v6300, %v7900
    %v8157 = vmax.f32 %v7616, %v7901
    %v8158 = vmax.f32 %v6302, %v7902
    %v8159 = vmax.f32 %v7618, %v7903
    %v8160 = vmax.f32 %v6305, %v7904
    %v8161 = vmax.f32 %v7621, %v7905
    %v8162 = vmax.f32 %v6307, %v7906
    %v8163 = vmax.f32 %v7623, %v7907
    %v8164 = vmax.f32 %v6310, %v7908
    %v8165 = vmax.f32 %v7626, %v7909
    %v8166 = vmax.f32 %v6312, %v7910
    %v8167 = vmax.f32 %v7628, %v7911
    %v8168 = vmax.f32 %v6315, %v7912
    %v8169 = vmax.f32 %v7631, %v7913
    %v8170 = vmax.f32 %v6317, %v7914
    %v8171 = vmax.f32 %v7633, %v7915
    %v8172 = vmax.f32 %v6320, %v7916
    %v8173 = vmax.f32 %v7636, %v7917
    %v8174 = vmax.f32 %v6322, %v7918
    %v8175 = vmax.f32 %v7638, %v7919
    %v8176 = vmax.f32 %v6325, %v7920
    %v8177 = vmax.f32 %v7641, %v7921
    %v8178 = vmax.f32 %v6327, %v7922
    %v8179 = vmax.f32 %v7643, %v7923
    %v8180 = vmax.f32 %v6330, %v7924
    %v8181 = vmax.f32 %v7646, %v7925
    %v8182 = vmax.f32 %v6332, %v7926
    %v8183 = vmax.f32 %v7648, %v7927
    %v8184 = vmax.f32 %v6335, %v7928
    %v8185 = vmax.f32 %v7651, %v7929
    %v8186 = vmax.f32 %v6337, %v7930
    %v8187 = vmax.f32 %v7653, %v7931
    %v8188 = vmax.f32 %v6340, %v7932
    %v8189 = vmax.f32 %v7656, %v7933
    %v8190 = vmax.f32 %v6342, %v7934
    %v8191 = vmax.f32 %v7658, %v7935
    %v8192 = vmax.f32 %v6345, %v7936
    %v8193 = vmax.f32 %v7661, %v7937
    %v8194 = vmax.f32 %v6347, %v7938
    %v8195 = vmax.f32 %v7663, %v7939
    %v8196 = vmax.f32 %v6350, %v7940
    %v8197 = vmax.f32 %v7666, %v7941
    %v8198 = vmax.f32 %v6352, %v7942
    %v8199 = vmax.f32 %v7668, %v7943
    %v8200 = vmax.f32 %v6355, %v7944
    %v8201 = vmax.f32 %v7671, %v7945
    %v8202 = vmax.f32 %v6357, %v7946
    %v8203 = vmax.f32 %v7673, %v7947
    %v8204 = vmax.f32 %v6360, %v7948
    %v8205 = vmax.f32 %v7676, %v7949
    %v8206 = vmax.f32 %v6362, %v7950
    %v8207 = vmax.f32 %v7678, %v7951
    %v8208 = vmax.f32 %v6365, %v7952
    %v8209 = vmax.f32 %v7681, %v7953
    %v8210 = vmax.f32 %v6367, %v7954
    %v8211 = vmax.f32 %v7683, %v7955
    %v8212 = vmax.f32 %v6370, %v7956
    %v8213 = vmax.f32 %v7686, %v7957
    %v8214 = vmax.f32 %v6372, %v7958
    %v8215 = vmax.f32 %v7688, %v7959
    %v8216 = vmax.f32 %v6375, %v7960
    %v8217 = vmax.f32 %v7691, %v7961
    %v8218 = vmax.f32 %v6377, %v7962
    %v8219 = vmax.f32 %v7693, %v7963
    %v8220 = vmax.f32 %v6380, %v7964
    %v8221 = vmax.f32 %v7696, %v7965
    %v8222 = vmax.f32 %v6382, %v7966
    %v8223 = vmax.f32 %v7698, %v7967
    %v8224 = vmax.f32 %v6385, %v7968
    %v8225 = vmax.f32 %v7701, %v7969
    %v8226 = vmax.f32 %v6387, %v7970
    %v8227 = vmax.f32 %v7703, %v7971
    %v8228 = vmax.f32 %v6390, %v7972
    %v8229 = vmax.f32 %v7706, %v7973
    %v8230 = vmax.f32 %v6392, %v7974
    %v8231 = vmax.f32 %v7708, %v7975
    %v8232 = vmax.f32 %v6395, %v7976
    %v8233 = vmax.f32 %v7711, %v7977
    %v8234 = vmax.f32 %v6397, %v7978
    %v8235 = vmax.f32 %v7713, %v7979
    %v8236 = vmax.f32 %v6400, %v7980
    %v8237 = vmax.f32 %v7716, %v7981
    %v8238 = vmax.f32 %v6402, %v7982
    %v8239 = vmax.f32 %v7718, %v7983
    %v8240 = vmax.f32 %v6405, %v7984
    %v8241 = vmax.f32 %v7721, %v7985
    %v8242 = vmax.f32 %v6407, %v7986
    %v8243 = vmax.f32 %v7723, %v7987
    %v8244 = vmax.f32 %v6410, %v7988
    %v8245 = vmax.f32 %v7726, %v7989
    %v8246 = vmax.f32 %v6412, %v7990
    %v8247 = vmax.f32 %v7728, %v7991
    %v8248 = vmax.f32 %v6415, %v7992
    %v8249 = vmax.f32 %v7731, %v7993
    %v8250 = vmax.f32 %v6417, %v7994
    %v8251 = vmax.f32 %v7733, %v7995
    %v8252 = vmax.f32 %v6420, %v7996
    %v8253 = vmax.f32 %v7736, %v7997
    %v8254 = vmax.f32 %v6422, %v7998
    %v8255 = vmax.f32 %v7738, %v7999
    %v8256 = vmax.f32 %v6425, %v8000
    %v8257 = vmax.f32 %v7741, %v8001
    %v8258 = vmax.f32 %v6427, %v8002
    %v8259 = vmax.f32 %v7743, %v8003
    %v8260 = vmax.f32 %v6430, %v8004
    %v8261 = vmax.f32 %v7746, %v8005
    %v8262 = vmax.f32 %v6432, %v8006
    %v8263 = vmax.f32 %v7748, %v8007
    %v8264 = vmax.f32 %v6435, %v8008
    %v8265 = vmax.f32 %v7751, %v8009
    %v8266 = vmax.f32 %v6437, %v8010
    %v8267 = vmax.f32 %v7753, %v8011
    %v8268 = vmax.f32 %v6440, %v8012
    %v8269 = vmax.f32 %v7756, %v8013
    %v8270 = vmax.f32 %v6442, %v8014
    %v8271 = vmax.f32 %v7758, %v8015
    %v8272 = vpack.c.bf16 %v8018, %v8016
    %v8273 = vpack.c.bf16 %v8019, %v8017
    %v8274 = vpack.c.bf16 %v8022, %v8020
    %v8275 = vpack.c.bf16 %v8023, %v8021
    %v8276 = vpack.c.bf16 %v8026, %v8024
    %v8277 = vpack.c.bf16 %v8027, %v8025
    %v8278 = vpack.c.bf16 %v8030, %v8028
    %v8279 = vpack.c.bf16 %v8031, %v8029
    %v8280 = vpack.c.bf16 %v8034, %v8032
    %v8281 = vpack.c.bf16 %v8035, %v8033
    %v8282 = vpack.c.bf16 %v8038, %v8036
    %v8283 = vpack.c.bf16 %v8039, %v8037
    %v8284 = vpack.c.bf16 %v8042, %v8040
    %v8285 = vpack.c.bf16 %v8043, %v8041
    %v8286 = vpack.c.bf16 %v8046, %v8044
    %v8287 = vpack.c.bf16 %v8047, %v8045
    %v8288 = vpack.c.bf16 %v8050, %v8048
    %v8289 = vpack.c.bf16 %v8051, %v8049
    %v8290 = vpack.c.bf16 %v8054, %v8052
    %v8291 = vpack.c.bf16 %v8055, %v8053
    %v8292 = vpack.c.bf16 %v8058, %v8056
    %v8293 = vpack.c.bf16 %v8059, %v8057
    %v8294 = vpack.c.bf16 %v8062, %v8060
    %v8295 = vpack.c.bf16 %v8063, %v8061
    %v8296 = vpack.c.bf16 %v8066, %v8064
    %v8297 = vpack.c.bf16 %v8067, %v8065
    %v8298 = vpack.c.bf16 %v8070, %v8068
    %v8299 = vpack.c.bf16 %v8071, %v8069
    %v8300 = vpack.c.bf16 %v8074, %v8072
    %v8301 = vpack.c.bf16 %v8075, %v8073
    %v8302 = vpack.c.bf16 %v8078, %v8076
    %v8303 = vpack.c.bf16 %v8079, %v8077
    %v8304 = vpack.c.bf16 %v8082, %v8080
    %v8305 = vpack.c.bf16 %v8083, %v8081
    %v8306 = vpack.c.bf16 %v8086, %v8084
    %v8307 = vpack.c.bf16 %v8087, %v8085
    %v8308 = vpack.c.bf16 %v8090, %v8088
    %v8309 = vpack.c.bf16 %v8091, %v8089
    %v8310 = vpack.c.bf16 %v8094, %v8092
    %v8311 = vpack.c.bf16 %v8095, %v8093
    %v8312 = vpack.c.bf16 %v8098, %v8096
    %v8313 = vpack.c.bf16 %v8099, %v8097
    %v8314 = vpack.c.bf16 %v8102, %v8100
    %v8315 = vpack.c.bf16 %v8103, %v8101
    %v8316 = vpack.c.bf16 %v8106, %v8104
    %v8317 = vpack.c.bf16 %v8107, %v8105
    %v8318 = vpack.c.bf16 %v8110, %v8108
    %v8319 = vpack.c.bf16 %v8111, %v8109
    %v8320 = vpack.c.bf16 %v8114, %v8112
    %v8321 = vpack.c.bf16 %v8115, %v8113
    %v8322 = vpack.c.bf16 %v8118, %v8116
    %v8323 = vpack.c.bf16 %v8119, %v8117
    %v8324 = vpack.c.bf16 %v8122, %v8120
    %v8325 = vpack.c.bf16 %v8123, %v8121
    %v8326 = vpack.c.bf16 %v8126, %v8124
    %v8327 = vpack.c.bf16 %v8127, %v8125
    %v8328 = vpack.c.bf16 %v8130, %v8128
    %v8329 = vpack.c.bf16 %v8131, %v8129
    %v8330 = vpack.c.bf16 %v8134, %v8132
    %v8331 = vpack.c.bf16 %v8135, %v8133
    %v8332 = vpack.c.bf16 %v8138, %v8136
    %v8333 = vpack.c.bf16 %v8139, %v8137
    %v8334 = vpack.c.bf16 %v8142, %v8140
    %v8335 = vpack.c.bf16 %v8143, %v8141
    %v8336 = vpack.c.bf16 %v8146, %v8144
    %v8337 = vpack.c.bf16 %v8147, %v8145
    %v8338 = vpack.c.bf16 %v8150, %v8148
    %v8339 = vpack.c.bf16 %v8151, %v8149
    %v8340 = vpack.c.bf16 %v8154, %v8152
    %v8341 = vpack.c.bf16 %v8155, %v8153
    %v8342 = vpack.c.bf16 %v8158, %v8156
    %v8343 = vpack.c.bf16 %v8159, %v8157
    %v8344 = vpack.c.bf16 %v8162, %v8160
    %v8345 = vpack.c.bf16 %v8163, %v8161
    %v8346 = vpack.c.bf16 %v8166, %v8164
    %v8347 = vpack.c.bf16 %v8167, %v8165
    %v8348 = vpack.c.bf16 %v8170, %v8168
    %v8349 = vpack.c.bf16 %v8171, %v8169
    %v8350 = vpack.c.bf16 %v8174, %v8172
    %v8351 = vpack.c.bf16 %v8175, %v8173
    %v8352 = vpack.c.bf16 %v8178, %v8176
    %v8353 = vpack.c.bf16 %v8179, %v8177
    %v8354 = vpack.c.bf16 %v8182, %v8180
    %v8355 = vpack.c.bf16 %v8183, %v8181
    %v8356 = vpack.c.bf16 %v8186, %v8184
    %v8357 = vpack.c.bf16 %v8187, %v8185
    %v8358 = vpack.c.bf16 %v8190, %v8188
    %v8359 = vpack.c.bf16 %v8191, %v8189
    %v8360 = vpack.c.bf16 %v8194, %v8192
    %v8361 = vpack.c.bf16 %v8195, %v8193
    %v8362 = vpack.c.bf16 %v8198, %v8196
    %v8363 = vpack.c.bf16 %v8199, %v8197
    %v8364 = vpack.c.bf16 %v8202, %v8200
    %v8365 = vpack.c.bf16 %v8203, %v8201
    %v8366 = vpack.c.bf16 %v8206, %v8204
    %v8367 = vpack.c.bf16 %v8207, %v8205
    %v8368 = vpack.c.bf16 %v8210, %v8208
    %v8369 = vpack.c.bf16 %v8211, %v8209
    %v8370 = vpack.c.bf16 %v8214, %v8212
    %v8371 = vpack.c.bf16 %v8215, %v8213
    %v8372 = vpack.c.bf16 %v8218, %v8216
    %v8373 = vpack.c.bf16 %v8219, %v8217
    %v8374 = vpack.c.bf16 %v8222, %v8220
    %v8375 = vpack.c.bf16 %v8223, %v8221
    %v8376 = vpack.c.bf16 %v8226, %v8224
    %v8377 = vpack.c.bf16 %v8227, %v8225
    %v8378 = vpack.c.bf16 %v8230, %v8228
    %v8379 = vpack.c.bf16 %v8231, %v8229
    %v8380 = vpack.c.bf16 %v8234, %v8232
    %v8381 = vpack.c.bf16 %v8235, %v8233
    %v8382 = vpack.c.bf16 %v8238, %v8236
    %v8383 = vpack.c.bf16 %v8239, %v8237
    %v8384 = vpack.c.bf16 %v8242, %v8240
    %v8385 = vpack.c.bf16 %v8243, %v8241
    %v8386 = vpack.c.bf16 %v8246, %v8244
    %v8387 = vpack.c.bf16 %v8247, %v8245
    %v8388 = vpack.c.bf16 %v8250, %v8248
    %v8389 = vpack.c.bf16 %v8251, %v8249
    %v8390 = vpack.c.bf16 %v8254, %v8252
    %v8391 = vpack.c.bf16 %v8255, %v8253
    %v8392 = vpack.c.bf16 %v8258, %v8256
    %v8393 = vpack.c.bf16 %v8259, %v8257
    %v8394 = vpack.c.bf16 %v8262, %v8260
    %v8395 = vpack.c.bf16 %v8263, %v8261
    %v8396 = vpack.c.bf16 %v8266, %v8264
    %v8397 = vpack.c.bf16 %v8267, %v8265
    %v8398 = vpack.c.bf16 %v8270, %v8268
    %v8399 = vpack.c.bf16 %v8271, %v8269
    %v8400 = vld [vmem:[#allocation2] sm:$0xf]
    %v8401 = vld [vmem:[#allocation2 + $0x4] sm:$0xf]
    %v8402 = vld [vmem:[#allocation2 + $0x8] sm:$0xf]
    %v8403 = vld [vmem:[#allocation2 + $0xc] sm:$0xf]
    %v8404 = vld [vmem:[#allocation2 + $0x10] sm:$0xf]
    %v8405 = vld [vmem:[#allocation2 + $0x14] sm:$0xf]
    %v8406 = vld [vmem:[#allocation2 + $0x18] sm:$0xf]
    %v8407 = vld [vmem:[#allocation2 + $0x1c] sm:$0xf]
    %v8408 = vld [vmem:[#allocation2 + $0x20] sm:$0xf]
    %v8409 = vld [vmem:[#allocation2 + $0x24] sm:$0xf]
    %v8410 = vld [vmem:[#allocation2 + $0x28] sm:$0xf]
    %v8411 = vld [vmem:[#allocation2 + $0x2c] sm:$0xf]
    %v8412 = vld [vmem:[#allocation2 + $0x30] sm:$0xf]
    %v8413 = vld [vmem:[#allocation2 + $0x34] sm:$0xf]
    %v8414 = vld [vmem:[#allocation2 + $0x38] sm:$0xf]
    %v8415 = vld [vmem:[#allocation2 + $0x3c] sm:$0xf]
    %v8416 = vld [vmem:[#allocation2 + $0x40] sm:$0xf]
    %v8417 = vld [vmem:[#allocation2 + $0x44] sm:$0xf]
    %v8418 = vld [vmem:[#allocation2 + $0x48] sm:$0xf]
    %v8419 = vld [vmem:[#allocation2 + $0x4c] sm:$0xf]
    %v8420 = vld [vmem:[#allocation2 + $0x50] sm:$0xf]
    %v8421 = vld [vmem:[#allocation2 + $0x54] sm:$0xf]
    %v8422 = vld [vmem:[#allocation2 + $0x58] sm:$0xf]
    %v8423 = vld [vmem:[#allocation2 + $0x5c] sm:$0xf]
    %v8424 = vld [vmem:[#allocation2 + $0x60] sm:$0xf]
    %v8425 = vld [vmem:[#allocation2 + $0x64] sm:$0xf]
    %v8426 = vld [vmem:[#allocation2 + $0x68] sm:$0xf]
    %v8427 = vld [vmem:[#allocation2 + $0x6c] sm:$0xf]
    %v8428 = vld [vmem:[#allocation2 + $0x70] sm:$0xf]
    %v8429 = vld [vmem:[#allocation2 + $0x74] sm:$0xf]
    %v8430 = vld [vmem:[#allocation2 + $0x78] sm:$0xf]
    %v8431 = vld [vmem:[#allocation2 + $0x7c] sm:$0xf]
    %v8464 = vunpack.c.l.b16 %v8400
    %v8465 = vunpack.c.l.b16 %v8401
    %v8466 = vunpack.c.l.b16 %v8402
    %v8467 = vunpack.c.l.b16 %v8403
    %v8468 = vunpack.c.l.b16 %v8404
    %v8469 = vunpack.c.l.b16 %v8405
    %v8470 = vunpack.c.l.b16 %v8406
    %v8471 = vunpack.c.l.b16 %v8407
    %v8472 = vunpack.c.l.b16 %v8408
    %v8473 = vunpack.c.l.b16 %v8409
    %v8474 = vunpack.c.l.b16 %v8410
    %v8475 = vunpack.c.l.b16 %v8411
    %v8476 = vunpack.c.l.b16 %v8412
    %v8477 = vunpack.c.l.b16 %v8413
    %v8478 = vunpack.c.l.b16 %v8414
    %v8479 = vunpack.c.l.b16 %v8415
    %v8480 = vunpack.c.l.b16 %v8416
    %v8481 = vunpack.c.l.b16 %v8417
    %v8482 = vunpack.c.l.b16 %v8418
    %v8483 = vunpack.c.l.b16 %v8419
    %v8484 = vunpack.c.l.b16 %v8420
    %v8485 = vunpack.c.l.b16 %v8421
    %v8486 = vunpack.c.l.b16 %v8422
    %v8487 = vunpack.c.l.b16 %v8423
    %v8488 = vunpack.c.l.b16 %v8424
    %v8489 = vunpack.c.l.b16 %v8425
    %v8490 = vunpack.c.l.b16 %v8426
    %v8491 = vunpack.c.l.b16 %v8427
    %v8492 = vunpack.c.l.b16 %v8428
    %v8493 = vunpack.c.l.b16 %v8429
    %v8494 = vunpack.c.l.b16 %v8430
    %v8495 = vunpack.c.l.b16 %v8431
    %v8496 = vpack.c.b16 %v8465, %v8464
    %v8497 = vpack.c.b16 %v8467, %v8466
    %v8498 = vpack.c.b16 %v8469, %v8468
    %v8499 = vpack.c.b16 %v8471, %v8470
    %v8500 = vpack.c.b16 %v8473, %v8472
    %v8501 = vpack.c.b16 %v8475, %v8474
    %v8502 = vpack.c.b16 %v8477, %v8476
    %v8503 = vpack.c.b16 %v8479, %v8478
    %v8504 = vpack.c.b16 %v8481, %v8480
    %v8505 = vpack.c.b16 %v8483, %v8482
    %v8506 = vpack.c.b16 %v8485, %v8484
    %v8507 = vpack.c.b16 %v8487, %v8486
    %v8508 = vpack.c.b16 %v8489, %v8488
    %v8509 = vpack.c.b16 %v8491, %v8490
    %v8510 = vpack.c.b16 %v8493, %v8492
    %v8511 = vpack.c.b16 %v8495, %v8494
    %8528 = vmatpush.bf16.msra.mxu0 %v8503
    %8529 = vmatpush.bf16.msra.mxu0 %v8502
    %8530 = vmatpush.bf16.msra.mxu0 %v8501
    %8531 = vmatpush.bf16.msra.mxu0 %v8500
    %8532 = vmatpush.bf16.msra.mxu0 %v8499
    %8533 = vmatpush.bf16.msra.mxu0 %v8498
    %8534 = vmatpush.bf16.msra.mxu0 %v8497
    %8535 = vmatpush.bf16.msra.mxu0 %v8496
    %8536 = vmatmul.bf16.gmra.mxu0 %v8272
    %v8537 = vpop.f32.mrf.mxu0
    %v8538 = vadd.f32 %v2816, %v8537
    %v8539 = vpop.f32.mrf.mxu0
    %v8540 = vadd.f32 %v2818, %v8539
    %8541 = vmatmul.bf16.gmra.mxu0 %v8274
    %v8542 = vpop.f32.mrf.mxu0
    %v8543 = vadd.f32 %v2821, %v8542
    %v8544 = vpop.f32.mrf.mxu0
    %v8545 = vadd.f32 %v2823, %v8544
    %8546 = vmatmul.bf16.gmra.mxu0 %v8276
    %v8547 = vpop.f32.mrf.mxu0
    %v8548 = vadd.f32 %v2826, %v8547
    %v8549 = vpop.f32.mrf.mxu0
    %v8550 = vadd.f32 %v2828, %v8549
    %8551 = vmatmul.bf16.gmra.mxu0 %v8278
    %v8552 = vpop.f32.mrf.mxu0
    %v8553 = vadd.f32 %v2831, %v8552
    %v8554 = vpop.f32.mrf.mxu0
    %v8555 = vadd.f32 %v2833, %v8554
    %8556 = vmatmul.bf16.gmra.mxu0 %v8280
    %v8557 = vpop.f32.mrf.mxu0
    %v8558 = vadd.f32 %v2836, %v8557
    %v8559 = vpop.f32.mrf.mxu0
    %v8560 = vadd.f32 %v2838, %v8559
    %8561 = vmatmul.bf16.gmra.mxu0 %v8282
    %v8562 = vpop.f32.mrf.mxu0
    %v8563 = vadd.f32 %v2841, %v8562
    %v8564 = vpop.f32.mrf.mxu0
    %v8565 = vadd.f32 %v2843, %v8564
    %8566 = vmatmul.bf16.gmra.mxu0 %v8284
    %v8567 = vpop.f32.mrf.mxu0
    %v8568 = vadd.f32 %v2846, %v8567
    %v8569 = vpop.f32.mrf.mxu0
    %v8570 = vadd.f32 %v2848, %v8569
    %8571 = vmatmul.bf16.gmra.mxu0 %v8286
    %v8572 = vpop.f32.mrf.mxu0
    %v8573 = vadd.f32 %v2851, %v8572
    %v8574 = vpop.f32.mrf.mxu0
    %v8575 = vadd.f32 %v2853, %v8574
    %8576 = vmatmul.bf16.gmra.mxu0 %v8288
    %v8577 = vpop.f32.mrf.mxu0
    %v8578 = vadd.f32 %v2856, %v8577
    %v8579 = vpop.f32.mrf.mxu0
    %v8580 = vadd.f32 %v2858, %v8579
    %8581 = vmatmul.bf16.gmra.mxu0 %v8290
    %v8582 = vpop.f32.mrf.mxu0
    %v8583 = vadd.f32 %v2861, %v8582
    %v8584 = vpop.f32.mrf.mxu0
    %v8585 = vadd.f32 %v2863, %v8584
    %8586 = vmatmul.bf16.gmra.mxu0 %v8292
    %v8587 = vpop.f32.mrf.mxu0
    %v8588 = vadd.f32 %v2866, %v8587
    %v8589 = vpop.f32.mrf.mxu0
    %v8590 = vadd.f32 %v2868, %v8589
    %8591 = vmatmul.bf16.gmra.mxu0 %v8294
    %v8592 = vpop.f32.mrf.mxu0
    %v8593 = vadd.f32 %v2871, %v8592
    %v8594 = vpop.f32.mrf.mxu0
    %v8595 = vadd.f32 %v2873, %v8594
    %8596 = vmatmul.bf16.gmra.mxu0 %v8296
    %v8597 = vpop.f32.mrf.mxu0
    %v8598 = vadd.f32 %v2876, %v8597
    %v8599 = vpop.f32.mrf.mxu0
    %v8600 = vadd.f32 %v2878, %v8599
    %8601 = vmatmul.bf16.gmra.mxu0 %v8298
    %v8602 = vpop.f32.mrf.mxu0
    %v8603 = vadd.f32 %v2881, %v8602
    %v8604 = vpop.f32.mrf.mxu0
    %v8605 = vadd.f32 %v2883, %v8604
    %8606 = vmatmul.bf16.gmra.mxu0 %v8300
    %v8607 = vpop.f32.mrf.mxu0
    %v8608 = vadd.f32 %v2886, %v8607
    %v8609 = vpop.f32.mrf.mxu0
    %v8610 = vadd.f32 %v2888, %v8609
    %8611 = vmatmul.bf16.gmra.mxu0 %v8302
    %v8612 = vpop.f32.mrf.mxu0
    %v8613 = vadd.f32 %v2891, %v8612
    %v8614 = vpop.f32.mrf.mxu0
    %v8615 = vadd.f32 %v2893, %v8614
    %8616 = vmatmul.bf16.gmra.mxu0 %v8304
    %v8617 = vpop.f32.mrf.mxu0
    %v8618 = vadd.f32 %v2896, %v8617
    %v8619 = vpop.f32.mrf.mxu0
    %v8620 = vadd.f32 %v2898, %v8619
    %8621 = vmatmul.bf16.gmra.mxu0 %v8306
    %v8622 = vpop.f32.mrf.mxu0
    %v8623 = vadd.f32 %v2901, %v8622
    %v8624 = vpop.f32.mrf.mxu0
    %v8625 = vadd.f32 %v2903, %v8624
    %8626 = vmatmul.bf16.gmra.mxu0 %v8308
    %v8627 = vpop.f32.mrf.mxu0
    %v8628 = vadd.f32 %v2906, %v8627
    %v8629 = vpop.f32.mrf.mxu0
    %v8630 = vadd.f32 %v2908, %v8629
    %8631 = vmatmul.bf16.gmra.mxu0 %v8310
    %v8632 = vpop.f32.mrf.mxu0
    %v8633 = vadd.f32 %v2911, %v8632
    %v8634 = vpop.f32.mrf.mxu0
    %v8635 = vadd.f32 %v2913, %v8634
    %8636 = vmatmul.bf16.gmra.mxu0 %v8312
    %v8637 = vpop.f32.mrf.mxu0
    %v8638 = vadd.f32 %v2916, %v8637
    %v8639 = vpop.f32.mrf.mxu0
    %v8640 = vadd.f32 %v2918, %v8639
    %8641 = vmatmul.bf16.gmra.mxu0 %v8314
    %v8642 = vpop.f32.mrf.mxu0
    %v8643 = vadd.f32 %v2921, %v8642
    %v8644 = vpop.f32.mrf.mxu0
    %v8645 = vadd.f32 %v2923, %v8644
    %8646 = vmatmul.bf16.gmra.mxu0 %v8316
    %v8647 = vpop.f32.mrf.mxu0
    %v8648 = vadd.f32 %v2926, %v8647
    %v8649 = vpop.f32.mrf.mxu0
    %v8650 = vadd.f32 %v2928, %v8649
    %8651 = vmatmul.bf16.gmra.mxu0 %v8318
    %v8652 = vpop.f32.mrf.mxu0
    %v8653 = vadd.f32 %v2931, %v8652
    %v8654 = vpop.f32.mrf.mxu0
    %v8655 = vadd.f32 %v2933, %v8654
    %8656 = vmatmul.bf16.gmra.mxu0 %v8320
    %v8657 = vpop.f32.mrf.mxu0
    %v8658 = vadd.f32 %v2936, %v8657
    %v8659 = vpop.f32.mrf.mxu0
    %v8660 = vadd.f32 %v2938, %v8659
    %8661 = vmatmul.bf16.gmra.mxu0 %v8322
    %v8662 = vpop.f32.mrf.mxu0
    %v8663 = vadd.f32 %v2941, %v8662
    %v8664 = vpop.f32.mrf.mxu0
    %v8665 = vadd.f32 %v2943, %v8664
    %8666 = vmatmul.bf16.gmra.mxu0 %v8324
    %v8667 = vpop.f32.mrf.mxu0
    %v8668 = vadd.f32 %v2946, %v8667
    %v8669 = vpop.f32.mrf.mxu0
    %v8670 = vadd.f32 %v2948, %v8669
    %8671 = vmatmul.bf16.gmra.mxu0 %v8326
    %v8672 = vpop.f32.mrf.mxu0
    %v8673 = vadd.f32 %v2951, %v8672
    %v8674 = vpop.f32.mrf.mxu0
    %v8675 = vadd.f32 %v2953, %v8674
    %8676 = vmatmul.bf16.gmra.mxu0 %v8328
    %v8677 = vpop.f32.mrf.mxu0
    %v8678 = vadd.f32 %v2956, %v8677
    %v8679 = vpop.f32.mrf.mxu0
    %v8680 = vadd.f32 %v2958, %v8679
    %8681 = vmatmul.bf16.gmra.mxu0 %v8330
    %v8682 = vpop.f32.mrf.mxu0
    %v8683 = vadd.f32 %v2961, %v8682
    %v8684 = vpop.f32.mrf.mxu0
    %v8685 = vadd.f32 %v2963, %v8684
    %8686 = vmatmul.bf16.gmra.mxu0 %v8332
    %v8687 = vpop.f32.mrf.mxu0
    %v8688 = vadd.f32 %v2966, %v8687
    %v8689 = vpop.f32.mrf.mxu0
    %v8690 = vadd.f32 %v2968, %v8689
    %8691 = vmatmul.bf16.gmra.mxu0 %v8334
    %v8692 = vpop.f32.mrf.mxu0
    %v8693 = vadd.f32 %v2971, %v8692
    %v8694 = vpop.f32.mrf.mxu0
    %v8695 = vadd.f32 %v2973, %v8694
    %8696 = vmatmul.bf16.gmra.mxu0 %v8336
    %v8697 = vpop.f32.mrf.mxu0
    %v8698 = vadd.f32 %v2976, %v8697
    %v8699 = vpop.f32.mrf.mxu0
    %v8700 = vadd.f32 %v2978, %v8699
    %8701 = vmatmul.bf16.gmra.mxu0 %v8338
    %v8702 = vpop.f32.mrf.mxu0
    %v8703 = vadd.f32 %v2981, %v8702
    %v8704 = vpop.f32.mrf.mxu0
    %v8705 = vadd.f32 %v2983, %v8704
    %8706 = vmatmul.bf16.gmra.mxu0 %v8340
    %v8707 = vpop.f32.mrf.mxu0
    %v8708 = vadd.f32 %v2986, %v8707
    %v8709 = vpop.f32.mrf.mxu0
    %v8710 = vadd.f32 %v2988, %v8709
    %8711 = vmatmul.bf16.gmra.mxu0 %v8342
    %v8712 = vpop.f32.mrf.mxu0
    %v8713 = vadd.f32 %v2991, %v8712
    %v8714 = vpop.f32.mrf.mxu0
    %v8715 = vadd.f32 %v2993, %v8714
    %8716 = vmatmul.bf16.gmra.mxu0 %v8344
    %v8717 = vpop.f32.mrf.mxu0
    %v8718 = vadd.f32 %v2996, %v8717
    %v8719 = vpop.f32.mrf.mxu0
    %v8720 = vadd.f32 %v2998, %v8719
    %8721 = vmatmul.bf16.gmra.mxu0 %v8346
    %v8722 = vpop.f32.mrf.mxu0
    %v8723 = vadd.f32 %v3001, %v8722
    %v8724 = vpop.f32.mrf.mxu0
    %v8725 = vadd.f32 %v3003, %v8724
    %8726 = vmatmul.bf16.gmra.mxu0 %v8348
    %v8727 = vpop.f32.mrf.mxu0
    %v8728 = vadd.f32 %v3006, %v8727
    %v8729 = vpop.f32.mrf.mxu0
    %v8730 = vadd.f32 %v3008, %v8729
    %8731 = vmatmul.bf16.gmra.mxu0 %v8350
    %v8732 = vpop.f32.mrf.mxu0
    %v8733 = vadd.f32 %v3011, %v8732
    %v8734 = vpop.f32.mrf.mxu0
    %v8735 = vadd.f32 %v3013, %v8734
    %8736 = vmatmul.bf16.gmra.mxu0 %v8352
    %v8737 = vpop.f32.mrf.mxu0
    %v8738 = vadd.f32 %v3016, %v8737
    %v8739 = vpop.f32.mrf.mxu0
    %v8740 = vadd.f32 %v3018, %v8739
    %8741 = vmatmul.bf16.gmra.mxu0 %v8354
    %v8742 = vpop.f32.mrf.mxu0
    %v8743 = vadd.f32 %v3021, %v8742
    %v8744 = vpop.f32.mrf.mxu0
    %v8745 = vadd.f32 %v3023, %v8744
    %8746 = vmatmul.bf16.gmra.mxu0 %v8356
    %v8747 = vpop.f32.mrf.mxu0
    %v8748 = vadd.f32 %v3026, %v8747
    %v8749 = vpop.f32.mrf.mxu0
    %v8750 = vadd.f32 %v3028, %v8749
    %8751 = vmatmul.bf16.gmra.mxu0 %v8358
    %v8752 = vpop.f32.mrf.mxu0
    %v8753 = vadd.f32 %v3031, %v8752
    %v8754 = vpop.f32.mrf.mxu0
    %v8755 = vadd.f32 %v3033, %v8754
    %8756 = vmatmul.bf16.gmra.mxu0 %v8360
    %v8757 = vpop.f32.mrf.mxu0
    %v8758 = vadd.f32 %v3036, %v8757
    %v8759 = vpop.f32.mrf.mxu0
    %v8760 = vadd.f32 %v3038, %v8759
    %8761 = vmatmul.bf16.gmra.mxu0 %v8362
    %v8762 = vpop.f32.mrf.mxu0
    %v8763 = vadd.f32 %v3041, %v8762
    %v8764 = vpop.f32.mrf.mxu0
    %v8765 = vadd.f32 %v3043, %v8764
    %8766 = vmatmul.bf16.gmra.mxu0 %v8364
    %v8767 = vpop.f32.mrf.mxu0
    %v8768 = vadd.f32 %v3046, %v8767
    %v8769 = vpop.f32.mrf.mxu0
    %v8770 = vadd.f32 %v3048, %v8769
    %8771 = vmatmul.bf16.gmra.mxu0 %v8366
    %v8772 = vpop.f32.mrf.mxu0
    %v8773 = vadd.f32 %v3051, %v8772
    %v8774 = vpop.f32.mrf.mxu0
    %v8775 = vadd.f32 %v3053, %v8774
    %8776 = vmatmul.bf16.gmra.mxu0 %v8368
    %v8777 = vpop.f32.mrf.mxu0
    %v8778 = vadd.f32 %v3056, %v8777
    %v8779 = vpop.f32.mrf.mxu0
    %v8780 = vadd.f32 %v3058, %v8779
    %8781 = vmatmul.bf16.gmra.mxu0 %v8370
    %v8782 = vpop.f32.mrf.mxu0
    %v8783 = vadd.f32 %v3061, %v8782
    %v8784 = vpop.f32.mrf.mxu0
    %v8785 = vadd.f32 %v3063, %v8784
    %8786 = vmatmul.bf16.gmra.mxu0 %v8372
    %v8787 = vpop.f32.mrf.mxu0
    %v8788 = vadd.f32 %v3066, %v8787
    %v8789 = vpop.f32.mrf.mxu0
    %v8790 = vadd.f32 %v3068, %v8789
    %8791 = vmatmul.bf16.gmra.mxu0 %v8374
    %v8792 = vpop.f32.mrf.mxu0
    %v8793 = vadd.f32 %v3071, %v8792
    %v8794 = vpop.f32.mrf.mxu0
    %v8795 = vadd.f32 %v3073, %v8794
    %8796 = vmatmul.bf16.gmra.mxu0 %v8376
    %v8797 = vpop.f32.mrf.mxu0
    %v8798 = vadd.f32 %v3076, %v8797
    %v8799 = vpop.f32.mrf.mxu0
    %v8800 = vadd.f32 %v3078, %v8799
    %8801 = vmatmul.bf16.gmra.mxu0 %v8378
    %v8802 = vpop.f32.mrf.mxu0
    %v8803 = vadd.f32 %v3081, %v8802
    %v8804 = vpop.f32.mrf.mxu0
    %v8805 = vadd.f32 %v3083, %v8804
    %8806 = vmatmul.bf16.gmra.mxu0 %v8380
    %v8807 = vpop.f32.mrf.mxu0
    %v8808 = vadd.f32 %v3086, %v8807
    %v8809 = vpop.f32.mrf.mxu0
    %v8810 = vadd.f32 %v3088, %v8809
    %8811 = vmatmul.bf16.gmra.mxu0 %v8382
    %v8812 = vpop.f32.mrf.mxu0
    %v8813 = vadd.f32 %v3091, %v8812
    %v8814 = vpop.f32.mrf.mxu0
    %v8815 = vadd.f32 %v3093, %v8814
    %8816 = vmatmul.bf16.gmra.mxu0 %v8384
    %v8817 = vpop.f32.mrf.mxu0
    %v8818 = vadd.f32 %v3096, %v8817
    %v8819 = vpop.f32.mrf.mxu0
    %v8820 = vadd.f32 %v3098, %v8819
    %8821 = vmatmul.bf16.gmra.mxu0 %v8386
    %v8822 = vpop.f32.mrf.mxu0
    %v8823 = vadd.f32 %v3101, %v8822
    %v8824 = vpop.f32.mrf.mxu0
    %v8825 = vadd.f32 %v3103, %v8824
    %8826 = vmatmul.bf16.gmra.mxu0 %v8388
    %v8827 = vpop.f32.mrf.mxu0
    %v8828 = vadd.f32 %v3106, %v8827
    %v8829 = vpop.f32.mrf.mxu0
    %v8830 = vadd.f32 %v3108, %v8829
    %8831 = vmatmul.bf16.gmra.mxu0 %v8390
    %v8832 = vpop.f32.mrf.mxu0
    %v8833 = vadd.f32 %v3111, %v8832
    %v8834 = vpop.f32.mrf.mxu0
    %v8835 = vadd.f32 %v3113, %v8834
    %8836 = vmatmul.bf16.gmra.mxu0 %v8392
    %v8837 = vpop.f32.mrf.mxu0
    %v8838 = vadd.f32 %v3116, %v8837
    %v8839 = vpop.f32.mrf.mxu0
    %v8840 = vadd.f32 %v3118, %v8839
    %8841 = vmatmul.bf16.gmra.mxu0 %v8394
    %v8842 = vpop.f32.mrf.mxu0
    %v8843 = vadd.f32 %v3121, %v8842
    %v8844 = vpop.f32.mrf.mxu0
    %v8845 = vadd.f32 %v3123, %v8844
    %8846 = vmatmul.bf16.gmra.mxu0 %v8396
    %v8847 = vpop.f32.mrf.mxu0
    %v8848 = vadd.f32 %v3126, %v8847
    %v8849 = vpop.f32.mrf.mxu0
    %v8850 = vadd.f32 %v3128, %v8849
    %8851 = vmatmul.bf16.gmra.mxu0 %v8398
    %v8852 = vpop.f32.mrf.mxu0
    %v8853 = vadd.f32 %v3131, %v8852
    %v8854 = vpop.f32.mrf.mxu0
    %v8855 = vadd.f32 %v3133, %v8854
    %8856 = vdwg.mxu0
    %8857 = vmatpush.bf16.msra.mxu0 %v8511
    %8858 = vmatpush.bf16.msra.mxu0 %v8510
    %8859 = vmatpush.bf16.msra.mxu0 %v8509
    %8860 = vmatpush.bf16.msra.mxu0 %v8508
    %8861 = vmatpush.bf16.msra.mxu0 %v8507
    %8862 = vmatpush.bf16.msra.mxu0 %v8506
    %8863 = vmatpush.bf16.msra.mxu0 %v8505
    %8864 = vmatpush.bf16.msra.mxu0 %v8504
    %8865 = vmatmul.bf16.gmra.mxu0 %v8273
    %v8866 = vpop.f32.mrf.mxu0
    %v8867 = vadd.f32 %v8538, %v8866
    %v8868 = vpop.f32.mrf.mxu0
    %v8869 = vadd.f32 %v8540, %v8868
    %8870 = vmatmul.bf16.gmra.mxu0 %v8275
    %v8871 = vpop.f32.mrf.mxu0
    %v8872 = vadd.f32 %v8543, %v8871
    %v8873 = vpop.f32.mrf.mxu0
    %v8874 = vadd.f32 %v8545, %v8873
    %8875 = vmatmul.bf16.gmra.mxu0 %v8277
    %v8876 = vpop.f32.mrf.mxu0
    %v8877 = vadd.f32 %v8548, %v8876
    %v8878 = vpop.f32.mrf.mxu0
    %v8879 = vadd.f32 %v8550, %v8878
    %8880 = vmatmul.bf16.gmra.mxu0 %v8279
    %v8881 = vpop.f32.mrf.mxu0
    %v8882 = vadd.f32 %v8553, %v8881
    %v8883 = vpop.f32.mrf.mxu0
    %v8884 = vadd.f32 %v8555, %v8883
    %8885 = vmatmul.bf16.gmra.mxu0 %v8281
    %v8886 = vpop.f32.mrf.mxu0
    %v8887 = vadd.f32 %v8558, %v8886
    %v8888 = vpop.f32.mrf.mxu0
    %v8889 = vadd.f32 %v8560, %v8888
    %8890 = vmatmul.bf16.gmra.mxu0 %v8283
    %v8891 = vpop.f32.mrf.mxu0
    %v8892 = vadd.f32 %v8563, %v8891
    %v8893 = vpop.f32.mrf.mxu0
    %v8894 = vadd.f32 %v8565, %v8893
    %8895 = vmatmul.bf16.gmra.mxu0 %v8285
    %v8896 = vpop.f32.mrf.mxu0
    %v8897 = vadd.f32 %v8568, %v8896
    %v8898 = vpop.f32.mrf.mxu0
    %v8899 = vadd.f32 %v8570, %v8898
    %8900 = vmatmul.bf16.gmra.mxu0 %v8287
    %v8901 = vpop.f32.mrf.mxu0
    %v8902 = vadd.f32 %v8573, %v8901
    %v8903 = vpop.f32.mrf.mxu0
    %v8904 = vadd.f32 %v8575, %v8903
    %8905 = vmatmul.bf16.gmra.mxu0 %v8289
    %v8906 = vpop.f32.mrf.mxu0
    %v8907 = vadd.f32 %v8578, %v8906
    %v8908 = vpop.f32.mrf.mxu0
    %v8909 = vadd.f32 %v8580, %v8908
    %8910 = vmatmul.bf16.gmra.mxu0 %v8291
    %v8911 = vpop.f32.mrf.mxu0
    %v8912 = vadd.f32 %v8583, %v8911
    %v8913 = vpop.f32.mrf.mxu0
    %v8914 = vadd.f32 %v8585, %v8913
    %8915 = vmatmul.bf16.gmra.mxu0 %v8293
    %v8916 = vpop.f32.mrf.mxu0
    %v8917 = vadd.f32 %v8588, %v8916
    %v8918 = vpop.f32.mrf.mxu0
    %v8919 = vadd.f32 %v8590, %v8918
    %8920 = vmatmul.bf16.gmra.mxu0 %v8295
    %v8921 = vpop.f32.mrf.mxu0
    %v8922 = vadd.f32 %v8593, %v8921
    %v8923 = vpop.f32.mrf.mxu0
    %v8924 = vadd.f32 %v8595, %v8923
    %8925 = vmatmul.bf16.gmra.mxu0 %v8297
    %v8926 = vpop.f32.mrf.mxu0
    %v8927 = vadd.f32 %v8598, %v8926
    %v8928 = vpop.f32.mrf.mxu0
    %v8929 = vadd.f32 %v8600, %v8928
    %8930 = vmatmul.bf16.gmra.mxu0 %v8299
    %v8931 = vpop.f32.mrf.mxu0
    %v8932 = vadd.f32 %v8603, %v8931
    %v8933 = vpop.f32.mrf.mxu0
    %v8934 = vadd.f32 %v8605, %v8933
    %8935 = vmatmul.bf16.gmra.mxu0 %v8301
    %v8936 = vpop.f32.mrf.mxu0
    %v8937 = vadd.f32 %v8608, %v8936
    %v8938 = vpop.f32.mrf.mxu0
    %v8939 = vadd.f32 %v8610, %v8938
    %8940 = vmatmul.bf16.gmra.mxu0 %v8303
    %v8941 = vpop.f32.mrf.mxu0
    %v8942 = vadd.f32 %v8613, %v8941
    %v8943 = vpop.f32.mrf.mxu0
    %v8944 = vadd.f32 %v8615, %v8943
    %8945 = vmatmul.bf16.gmra.mxu0 %v8305
    %v8946 = vpop.f32.mrf.mxu0
    %v8947 = vadd.f32 %v8618, %v8946
    %v8948 = vpop.f32.mrf.mxu0
    %v8949 = vadd.f32 %v8620, %v8948
    %8950 = vmatmul.bf16.gmra.mxu0 %v8307
    %v8951 = vpop.f32.mrf.mxu0
    %v8952 = vadd.f32 %v8623, %v8951
    %v8953 = vpop.f32.mrf.mxu0
    %v8954 = vadd.f32 %v8625, %v8953
    %8955 = vmatmul.bf16.gmra.mxu0 %v8309
    %v8956 = vpop.f32.mrf.mxu0
    %v8957 = vadd.f32 %v8628, %v8956
    %v8958 = vpop.f32.mrf.mxu0
    %v8959 = vadd.f32 %v8630, %v8958
    %8960 = vmatmul.bf16.gmra.mxu0 %v8311
    %v8961 = vpop.f32.mrf.mxu0
    %v8962 = vadd.f32 %v8633, %v8961
    %v8963 = vpop.f32.mrf.mxu0
    %v8964 = vadd.f32 %v8635, %v8963
    %8965 = vmatmul.bf16.gmra.mxu0 %v8313
    %v8966 = vpop.f32.mrf.mxu0
    %v8967 = vadd.f32 %v8638, %v8966
    %v8968 = vpop.f32.mrf.mxu0
    %v8969 = vadd.f32 %v8640, %v8968
    %8970 = vmatmul.bf16.gmra.mxu0 %v8315
    %v8971 = vpop.f32.mrf.mxu0
    %v8972 = vadd.f32 %v8643, %v8971
    %v8973 = vpop.f32.mrf.mxu0
    %v8974 = vadd.f32 %v8645, %v8973
    %8975 = vmatmul.bf16.gmra.mxu0 %v8317
    %v8976 = vpop.f32.mrf.mxu0
    %v8977 = vadd.f32 %v8648, %v8976
    %v8978 = vpop.f32.mrf.mxu0
    %v8979 = vadd.f32 %v8650, %v8978
    %8980 = vmatmul.bf16.gmra.mxu0 %v8319
    %v8981 = vpop.f32.mrf.mxu0
    %v8982 = vadd.f32 %v8653, %v8981
    %v8983 = vpop.f32.mrf.mxu0
    %v8984 = vadd.f32 %v8655, %v8983
    %8985 = vmatmul.bf16.gmra.mxu0 %v8321
    %v8986 = vpop.f32.mrf.mxu0
    %v8987 = vadd.f32 %v8658, %v8986
    %v8988 = vpop.f32.mrf.mxu0
    %v8989 = vadd.f32 %v8660, %v8988
    %8990 = vmatmul.bf16.gmra.mxu0 %v8323
    %v8991 = vpop.f32.mrf.mxu0
    %v8992 = vadd.f32 %v8663, %v8991
    %v8993 = vpop.f32.mrf.mxu0
    %v8994 = vadd.f32 %v8665, %v8993
    %8995 = vmatmul.bf16.gmra.mxu0 %v8325
    %v8996 = vpop.f32.mrf.mxu0
    %v8997 = vadd.f32 %v8668, %v8996
    %v8998 = vpop.f32.mrf.mxu0
    %v8999 = vadd.f32 %v8670, %v8998
    %9000 = vmatmul.bf16.gmra.mxu0 %v8327
    %v9001 = vpop.f32.mrf.mxu0
    %v9002 = vadd.f32 %v8673, %v9001
    %v9003 = vpop.f32.mrf.mxu0
    %v9004 = vadd.f32 %v8675, %v9003
    %9005 = vmatmul.bf16.gmra.mxu0 %v8329
    %v9006 = vpop.f32.mrf.mxu0
    %v9007 = vadd.f32 %v8678, %v9006
    %v9008 = vpop.f32.mrf.mxu0
    %v9009 = vadd.f32 %v8680, %v9008
    %9010 = vmatmul.bf16.gmra.mxu0 %v8331
    %v9011 = vpop.f32.mrf.mxu0
    %v9012 = vadd.f32 %v8683, %v9011
    %v9013 = vpop.f32.mrf.mxu0
    %v9014 = vadd.f32 %v8685, %v9013
    %9015 = vmatmul.bf16.gmra.mxu0 %v8333
    %v9016 = vpop.f32.mrf.mxu0
    %v9017 = vadd.f32 %v8688, %v9016
    %v9018 = vpop.f32.mrf.mxu0
    %v9019 = vadd.f32 %v8690, %v9018
    %9020 = vmatmul.bf16.gmra.mxu0 %v8335
    %v9021 = vpop.f32.mrf.mxu0
    %v9022 = vadd.f32 %v8693, %v9021
    %v9023 = vpop.f32.mrf.mxu0
    %v9024 = vadd.f32 %v8695, %v9023
    %9025 = vmatmul.bf16.gmra.mxu0 %v8337
    %v9026 = vpop.f32.mrf.mxu0
    %v9027 = vadd.f32 %v8698, %v9026
    %v9028 = vpop.f32.mrf.mxu0
    %v9029 = vadd.f32 %v8700, %v9028
    %9030 = vmatmul.bf16.gmra.mxu0 %v8339
    %v9031 = vpop.f32.mrf.mxu0
    %v9032 = vadd.f32 %v8703, %v9031
    %v9033 = vpop.f32.mrf.mxu0
    %v9034 = vadd.f32 %v8705, %v9033
    %9035 = vmatmul.bf16.gmra.mxu0 %v8341
    %v9036 = vpop.f32.mrf.mxu0
    %v9037 = vadd.f32 %v8708, %v9036
    %v9038 = vpop.f32.mrf.mxu0
    %v9039 = vadd.f32 %v8710, %v9038
    %9040 = vmatmul.bf16.gmra.mxu0 %v8343
    %v9041 = vpop.f32.mrf.mxu0
    %v9042 = vadd.f32 %v8713, %v9041
    %v9043 = vpop.f32.mrf.mxu0
    %v9044 = vadd.f32 %v8715, %v9043
    %9045 = vmatmul.bf16.gmra.mxu0 %v8345
    %v9046 = vpop.f32.mrf.mxu0
    %v9047 = vadd.f32 %v8718, %v9046
    %v9048 = vpop.f32.mrf.mxu0
    %v9049 = vadd.f32 %v8720, %v9048
    %9050 = vmatmul.bf16.gmra.mxu0 %v8347
    %v9051 = vpop.f32.mrf.mxu0
    %v9052 = vadd.f32 %v8723, %v9051
    %v9053 = vpop.f32.mrf.mxu0
    %v9054 = vadd.f32 %v8725, %v9053
    %9055 = vmatmul.bf16.gmra.mxu0 %v8349
    %v9056 = vpop.f32.mrf.mxu0
    %v9057 = vadd.f32 %v8728, %v9056
    %v9058 = vpop.f32.mrf.mxu0
    %v9059 = vadd.f32 %v8730, %v9058
    %9060 = vmatmul.bf16.gmra.mxu0 %v8351
    %v9061 = vpop.f32.mrf.mxu0
    %v9062 = vadd.f32 %v8733, %v9061
    %v9063 = vpop.f32.mrf.mxu0
    %v9064 = vadd.f32 %v8735, %v9063
    %9065 = vmatmul.bf16.gmra.mxu0 %v8353
    %v9066 = vpop.f32.mrf.mxu0
    %v9067 = vadd.f32 %v8738, %v9066
    %v9068 = vpop.f32.mrf.mxu0
    %v9069 = vadd.f32 %v8740, %v9068
    %9070 = vmatmul.bf16.gmra.mxu0 %v8355
    %v9071 = vpop.f32.mrf.mxu0
    %v9072 = vadd.f32 %v8743, %v9071
    %v9073 = vpop.f32.mrf.mxu0
    %v9074 = vadd.f32 %v8745, %v9073
    %9075 = vmatmul.bf16.gmra.mxu0 %v8357
    %v9076 = vpop.f32.mrf.mxu0
    %v9077 = vadd.f32 %v8748, %v9076
    %v9078 = vpop.f32.mrf.mxu0
    %v9079 = vadd.f32 %v8750, %v9078
    %9080 = vmatmul.bf16.gmra.mxu0 %v8359
    %v9081 = vpop.f32.mrf.mxu0
    %v9082 = vadd.f32 %v8753, %v9081
    %v9083 = vpop.f32.mrf.mxu0
    %v9084 = vadd.f32 %v8755, %v9083
    %9085 = vmatmul.bf16.gmra.mxu0 %v8361
    %v9086 = vpop.f32.mrf.mxu0
    %v9087 = vadd.f32 %v8758, %v9086
    %v9088 = vpop.f32.mrf.mxu0
    %v9089 = vadd.f32 %v8760, %v9088
    %9090 = vmatmul.bf16.gmra.mxu0 %v8363
    %v9091 = vpop.f32.mrf.mxu0
    %v9092 = vadd.f32 %v8763, %v9091
    %v9093 = vpop.f32.mrf.mxu0
    %v9094 = vadd.f32 %v8765, %v9093
    %9095 = vmatmul.bf16.gmra.mxu0 %v8365
    %v9096 = vpop.f32.mrf.mxu0
    %v9097 = vadd.f32 %v8768, %v9096
    %v9098 = vpop.f32.mrf.mxu0
    %v9099 = vadd.f32 %v8770, %v9098
    %9100 = vmatmul.bf16.gmra.mxu0 %v8367
    %v9101 = vpop.f32.mrf.mxu0
    %v9102 = vadd.f32 %v8773, %v9101
    %v9103 = vpop.f32.mrf.mxu0
    %v9104 = vadd.f32 %v8775, %v9103
    %9105 = vmatmul.bf16.gmra.mxu0 %v8369
    %v9106 = vpop.f32.mrf.mxu0
    %v9107 = vadd.f32 %v8778, %v9106
    %v9108 = vpop.f32.mrf.mxu0
    %v9109 = vadd.f32 %v8780, %v9108
    %9110 = vmatmul.bf16.gmra.mxu0 %v8371
    %v9111 = vpop.f32.mrf.mxu0
    %v9112 = vadd.f32 %v8783, %v9111
    %v9113 = vpop.f32.mrf.mxu0
    %v9114 = vadd.f32 %v8785, %v9113
    %9115 = vmatmul.bf16.gmra.mxu0 %v8373
    %v9116 = vpop.f32.mrf.mxu0
    %v9117 = vadd.f32 %v8788, %v9116
    %v9118 = vpop.f32.mrf.mxu0
    %v9119 = vadd.f32 %v8790, %v9118
    %9120 = vmatmul.bf16.gmra.mxu0 %v8375
    %v9121 = vpop.f32.mrf.mxu0
    %v9122 = vadd.f32 %v8793, %v9121
    %v9123 = vpop.f32.mrf.mxu0
    %v9124 = vadd.f32 %v8795, %v9123
    %9125 = vmatmul.bf16.gmra.mxu0 %v8377
    %v9126 = vpop.f32.mrf.mxu0
    %v9127 = vadd.f32 %v8798, %v9126
    %v9128 = vpop.f32.mrf.mxu0
    %v9129 = vadd.f32 %v8800, %v9128
    %9130 = vmatmul.bf16.gmra.mxu0 %v8379
    %v9131 = vpop.f32.mrf.mxu0
    %v9132 = vadd.f32 %v8803, %v9131
    %v9133 = vpop.f32.mrf.mxu0
    %v9134 = vadd.f32 %v8805, %v9133
    %9135 = vmatmul.bf16.gmra.mxu0 %v8381
    %v9136 = vpop.f32.mrf.mxu0
    %v9137 = vadd.f32 %v8808, %v9136
    %v9138 = vpop.f32.mrf.mxu0
    %v9139 = vadd.f32 %v8810, %v9138
    %9140 = vmatmul.bf16.gmra.mxu0 %v8383
    %v9141 = vpop.f32.mrf.mxu0
    %v9142 = vadd.f32 %v8813, %v9141
    %v9143 = vpop.f32.mrf.mxu0
    %v9144 = vadd.f32 %v8815, %v9143
    %9145 = vmatmul.bf16.gmra.mxu0 %v8385
    %v9146 = vpop.f32.mrf.mxu0
    %v9147 = vadd.f32 %v8818, %v9146
    %v9148 = vpop.f32.mrf.mxu0
    %v9149 = vadd.f32 %v8820, %v9148
    %9150 = vmatmul.bf16.gmra.mxu0 %v8387
    %v9151 = vpop.f32.mrf.mxu0
    %v9152 = vadd.f32 %v8823, %v9151
    %v9153 = vpop.f32.mrf.mxu0
    %v9154 = vadd.f32 %v8825, %v9153
    %9155 = vmatmul.bf16.gmra.mxu0 %v8389
    %v9156 = vpop.f32.mrf.mxu0
    %v9157 = vadd.f32 %v8828, %v9156
    %v9158 = vpop.f32.mrf.mxu0
    %v9159 = vadd.f32 %v8830, %v9158
    %9160 = vmatmul.bf16.gmra.mxu0 %v8391
    %v9161 = vpop.f32.mrf.mxu0
    %v9162 = vadd.f32 %v8833, %v9161
    %v9163 = vpop.f32.mrf.mxu0
    %v9164 = vadd.f32 %v8835, %v9163
    %9165 = vmatmul.bf16.gmra.mxu0 %v8393
    %v9166 = vpop.f32.mrf.mxu0
    %v9167 = vadd.f32 %v8838, %v9166
    %v9168 = vpop.f32.mrf.mxu0
    %v9169 = vadd.f32 %v8840, %v9168
    %9170 = vmatmul.bf16.gmra.mxu0 %v8395
    %v9171 = vpop.f32.mrf.mxu0
    %v9172 = vadd.f32 %v8843, %v9171
    %v9173 = vpop.f32.mrf.mxu0
    %v9174 = vadd.f32 %v8845, %v9173
    %9175 = vmatmul.bf16.gmra.mxu0 %v8397
    %v9176 = vpop.f32.mrf.mxu0
    %v9177 = vadd.f32 %v8848, %v9176
    %v9178 = vpop.f32.mrf.mxu0
    %v9179 = vadd.f32 %v8850, %v9178
    %9180 = vmatmul.bf16.gmra.mxu0 %v8399
    %v9181 = vpop.f32.mrf.mxu0
    %v9182 = vadd.f32 %v8853, %v9181
    %v9183 = vpop.f32.mrf.mxu0
    %v9184 = vadd.f32 %v8855, %v9183
    %9185 = vdwg.mxu0
    %v9186 = vmul.f32 %v8867, 0.01
    %v9187 = vmul.f32 %v8869, 0.01
    %v9188 = vmul.f32 %v8872, 0.01
    %v9189 = vmul.f32 %v8874, 0.01
    %v9190 = vmul.f32 %v8877, 0.01
    %v9191 = vmul.f32 %v8879, 0.01
    %v9192 = vmul.f32 %v8882, 0.01
    %v9193 = vmul.f32 %v8884, 0.01
    %v9194 = vmul.f32 %v8887, 0.01
    %v9195 = vmul.f32 %v8889, 0.01
    %v9196 = vmul.f32 %v8892, 0.01
    %v9197 = vmul.f32 %v8894, 0.01
    %v9198 = vmul.f32 %v8897, 0.01
    %v9199 = vmul.f32 %v8899, 0.01
    %v9200 = vmul.f32 %v8902, 0.01
    %v9201 = vmul.f32 %v8904, 0.01
    %v9202 = vmul.f32 %v8907, 0.01
    %v9203 = vmul.f32 %v8909, 0.01
    %v9204 = vmul.f32 %v8912, 0.01
    %v9205 = vmul.f32 %v8914, 0.01
    %v9206 = vmul.f32 %v8917, 0.01
    %v9207 = vmul.f32 %v8919, 0.01
    %v9208 = vmul.f32 %v8922, 0.01
    %v9209 = vmul.f32 %v8924, 0.01
    %v9210 = vmul.f32 %v8927, 0.01
    %v9211 = vmul.f32 %v8929, 0.01
    %v9212 = vmul.f32 %v8932, 0.01
    %v9213 = vmul.f32 %v8934, 0.01
    %v9214 = vmul.f32 %v8937, 0.01
    %v9215 = vmul.f32 %v8939, 0.01
    %v9216 = vmul.f32 %v8942, 0.01
    %v9217 = vmul.f32 %v8944, 0.01
    %v9218 = vmul.f32 %v8947, 0.01
    %v9219 = vmul.f32 %v8949, 0.01
    %v9220 = vmul.f32 %v8952, 0.01
    %v9221 = vmul.f32 %v8954, 0.01
    %v9222 = vmul.f32 %v8957, 0.01
    %v9223 = vmul.f32 %v8959, 0.01
    %v9224 = vmul.f32 %v8962, 0.01
    %v9225 = vmul.f32 %v8964, 0.01
    %v9226 = vmul.f32 %v8967, 0.01
    %v9227 = vmul.f32 %v8969, 0.01
    %v9228 = vmul.f32 %v8972, 0.01
    %v9229 = vmul.f32 %v8974, 0.01
    %v9230 = vmul.f32 %v8977, 0.01
    %v9231 = vmul.f32 %v8979, 0.01
    %v9232 = vmul.f32 %v8982, 0.01
    %v9233 = vmul.f32 %v8984, 0.01
    %v9234 = vmul.f32 %v8987, 0.01
    %v9235 = vmul.f32 %v8989, 0.01
    %v9236 = vmul.f32 %v8992, 0.01
    %v9237 = vmul.f32 %v8994, 0.01
    %v9238 = vmul.f32 %v8997, 0.01
    %v9239 = vmul.f32 %v8999, 0.01
    %v9240 = vmul.f32 %v9002, 0.01
    %v9241 = vmul.f32 %v9004, 0.01
    %v9242 = vmul.f32 %v9007, 0.01
    %v9243 = vmul.f32 %v9009, 0.01
    %v9244 = vmul.f32 %v9012, 0.01
    %v9245 = vmul.f32 %v9014, 0.01
    %v9246 = vmul.f32 %v9017, 0.01
    %v9247 = vmul.f32 %v9019, 0.01
    %v9248 = vmul.f32 %v9022, 0.01
    %v9249 = vmul.f32 %v9024, 0.01
    %v9250 = vmul.f32 %v9027, 0.01
    %v9251 = vmul.f32 %v9029, 0.01
    %v9252 = vmul.f32 %v9032, 0.01
    %v9253 = vmul.f32 %v9034, 0.01
    %v9254 = vmul.f32 %v9037, 0.01
    %v9255 = vmul.f32 %v9039, 0.01
    %v9256 = vmul.f32 %v9042, 0.01
    %v9257 = vmul.f32 %v9044, 0.01
    %v9258 = vmul.f32 %v9047, 0.01
    %v9259 = vmul.f32 %v9049, 0.01
    %v9260 = vmul.f32 %v9052, 0.01
    %v9261 = vmul.f32 %v9054, 0.01
    %v9262 = vmul.f32 %v9057, 0.01
    %v9263 = vmul.f32 %v9059, 0.01
    %v9264 = vmul.f32 %v9062, 0.01
    %v9265 = vmul.f32 %v9064, 0.01
    %v9266 = vmul.f32 %v9067, 0.01
    %v9267 = vmul.f32 %v9069, 0.01
    %v9268 = vmul.f32 %v9072, 0.01
    %v9269 = vmul.f32 %v9074, 0.01
    %v9270 = vmul.f32 %v9077, 0.01
    %v9271 = vmul.f32 %v9079, 0.01
    %v9272 = vmul.f32 %v9082, 0.01
    %v9273 = vmul.f32 %v9084, 0.01
    %v9274 = vmul.f32 %v9087, 0.01
    %v9275 = vmul.f32 %v9089, 0.01
    %v9276 = vmul.f32 %v9092, 0.01
    %v9277 = vmul.f32 %v9094, 0.01
    %v9278 = vmul.f32 %v9097, 0.01
    %v9279 = vmul.f32 %v9099, 0.01
    %v9280 = vmul.f32 %v9102, 0.01
    %v9281 = vmul.f32 %v9104, 0.01
    %v9282 = vmul.f32 %v9107, 0.01
    %v9283 = vmul.f32 %v9109, 0.01
    %v9284 = vmul.f32 %v9112, 0.01
    %v9285 = vmul.f32 %v9114, 0.01
    %v9286 = vmul.f32 %v9117, 0.01
    %v9287 = vmul.f32 %v9119, 0.01
    %v9288 = vmul.f32 %v9122, 0.01
    %v9289 = vmul.f32 %v9124, 0.01
    %v9290 = vmul.f32 %v9127, 0.01
    %v9291 = vmul.f32 %v9129, 0.01
    %v9292 = vmul.f32 %v9132, 0.01
    %v9293 = vmul.f32 %v9134, 0.01
    %v9294 = vmul.f32 %v9137, 0.01
    %v9295 = vmul.f32 %v9139, 0.01
    %v9296 = vmul.f32 %v9142, 0.01
    %v9297 = vmul.f32 %v9144, 0.01
    %v9298 = vmul.f32 %v9147, 0.01
    %v9299 = vmul.f32 %v9149, 0.01
    %v9300 = vmul.f32 %v9152, 0.01
    %v9301 = vmul.f32 %v9154, 0.01
    %v9302 = vmul.f32 %v9157, 0.01
    %v9303 = vmul.f32 %v9159, 0.01
    %v9304 = vmul.f32 %v9162, 0.01
    %v9305 = vmul.f32 %v9164, 0.01
    %v9306 = vmul.f32 %v9167, 0.01
    %v9307 = vmul.f32 %v9169, 0.01
    %v9308 = vmul.f32 %v9172, 0.01
    %v9309 = vmul.f32 %v9174, 0.01
    %v9310 = vmul.f32 %v9177, 0.01
    %v9311 = vmul.f32 %v9179, 0.01
    %v9312 = vmul.f32 %v9182, 0.01
    %v9313 = vmul.f32 %v9184, 0.01
    %v9314 = vmax.f32 %v8867, %v9186
    %v9315 = vmax.f32 %v8869, %v9187
    %v9316 = vmax.f32 %v8872, %v9188
    %v9317 = vmax.f32 %v8874, %v9189
    %v9318 = vmax.f32 %v8877, %v9190
    %v9319 = vmax.f32 %v8879, %v9191
    %v9320 = vmax.f32 %v8882, %v9192
    %v9321 = vmax.f32 %v8884, %v9193
    %v9322 = vmax.f32 %v8887, %v9194
    %v9323 = vmax.f32 %v8889, %v9195
    %v9324 = vmax.f32 %v8892, %v9196
    %v9325 = vmax.f32 %v8894, %v9197
    %v9326 = vmax.f32 %v8897, %v9198
    %v9327 = vmax.f32 %v8899, %v9199
    %v9328 = vmax.f32 %v8902, %v9200
    %v9329 = vmax.f32 %v8904, %v9201
    %v9330 = vmax.f32 %v8907, %v9202
    %v9331 = vmax.f32 %v8909, %v9203
    %v9332 = vmax.f32 %v8912, %v9204
    %v9333 = vmax.f32 %v8914, %v9205
    %v9334 = vmax.f32 %v8917, %v9206
    %v9335 = vmax.f32 %v8919, %v9207
    %v9336 = vmax.f32 %v8922, %v9208
    %v9337 = vmax.f32 %v8924, %v9209
    %v9338 = vmax.f32 %v8927, %v9210
    %v9339 = vmax.f32 %v8929, %v9211
    %v9340 = vmax.f32 %v8932, %v9212
    %v9341 = vmax.f32 %v8934, %v9213
    %v9342 = vmax.f32 %v8937, %v9214
    %v9343 = vmax.f32 %v8939, %v9215
    %v9344 = vmax.f32 %v8942, %v9216
    %v9345 = vmax.f32 %v8944, %v9217
    %v9346 = vmax.f32 %v8947, %v9218
    %v9347 = vmax.f32 %v8949, %v9219
    %v9348 = vmax.f32 %v8952, %v9220
    %v9349 = vmax.f32 %v8954, %v9221
    %v9350 = vmax.f32 %v8957, %v9222
    %v9351 = vmax.f32 %v8959, %v9223
    %v9352 = vmax.f32 %v8962, %v9224
    %v9353 = vmax.f32 %v8964, %v9225
    %v9354 = vmax.f32 %v8967, %v9226
    %v9355 = vmax.f32 %v8969, %v9227
    %v9356 = vmax.f32 %v8972, %v9228
    %v9357 = vmax.f32 %v8974, %v9229
    %v9358 = vmax.f32 %v8977, %v9230
    %v9359 = vmax.f32 %v8979, %v9231
    %v9360 = vmax.f32 %v8982, %v9232
    %v9361 = vmax.f32 %v8984, %v9233
    %v9362 = vmax.f32 %v8987, %v9234
    %v9363 = vmax.f32 %v8989, %v9235
    %v9364 = vmax.f32 %v8992, %v9236
    %v9365 = vmax.f32 %v8994, %v9237
    %v9366 = vmax.f32 %v8997, %v9238
    %v9367 = vmax.f32 %v8999, %v9239
    %v9368 = vmax.f32 %v9002, %v9240
    %v9369 = vmax.f32 %v9004, %v9241
    %v9370 = vmax.f32 %v9007, %v9242
    %v9371 = vmax.f32 %v9009, %v9243
    %v9372 = vmax.f32 %v9012, %v9244
    %v9373 = vmax.f32 %v9014, %v9245
    %v9374 = vmax.f32 %v9017, %v9246
    %v9375 = vmax.f32 %v9019, %v9247
    %v9376 = vmax.f32 %v9022, %v9248
    %v9377 = vmax.f32 %v9024, %v9249
    %v9378 = vmax.f32 %v9027, %v9250
    %v9379 = vmax.f32 %v9029, %v9251
    %v9380 = vmax.f32 %v9032, %v9252
    %v9381 = vmax.f32 %v9034, %v9253
    %v9382 = vmax.f32 %v9037, %v9254
    %v9383 = vmax.f32 %v9039, %v9255
    %v9384 = vmax.f32 %v9042, %v9256
    %v9385 = vmax.f32 %v9044, %v9257
    %v9386 = vmax.f32 %v9047, %v9258
    %v9387 = vmax.f32 %v9049, %v9259
    %v9388 = vmax.f32 %v9052, %v9260
    %v9389 = vmax.f32 %v9054, %v9261
    %v9390 = vmax.f32 %v9057, %v9262
    %v9391 = vmax.f32 %v9059, %v9263
    %v9392 = vmax.f32 %v9062, %v9264
    %v9393 = vmax.f32 %v9064, %v9265
    %v9394 = vmax.f32 %v9067, %v9266
    %v9395 = vmax.f32 %v9069, %v9267
    %v9396 = vmax.f32 %v9072, %v9268
    %v9397 = vmax.f32 %v9074, %v9269
    %v9398 = vmax.f32 %v9077, %v9270
    %v9399 = vmax.f32 %v9079, %v9271
    %v9400 = vmax.f32 %v9082, %v9272
    %v9401 = vmax.f32 %v9084, %v9273
    %v9402 = vmax.f32 %v9087, %v9274
    %v9403 = vmax.f32 %v9089, %v9275
    %v9404 = vmax.f32 %v9092, %v9276
    %v9405 = vmax.f32 %v9094, %v9277
    %v9406 = vmax.f32 %v9097, %v9278
    %v9407 = vmax.f32 %v9099, %v9279
    %v9408 = vmax.f32 %v9102, %v9280
    %v9409 = vmax.f32 %v9104, %v9281
    %v9410 = vmax.f32 %v9107, %v9282
    %v9411 = vmax.f32 %v9109, %v9283
    %v9412 = vmax.f32 %v9112, %v9284
    %v9413 = vmax.f32 %v9114, %v9285
    %v9414 = vmax.f32 %v9117, %v9286
    %v9415 = vmax.f32 %v9119, %v9287
    %v9416 = vmax.f32 %v9122, %v9288
    %v9417 = vmax.f32 %v9124, %v9289
    %v9418 = vmax.f32 %v9127, %v9290
    %v9419 = vmax.f32 %v9129, %v9291
    %v9420 = vmax.f32 %v9132, %v9292
    %v9421 = vmax.f32 %v9134, %v9293
    %v9422 = vmax.f32 %v9137, %v9294
    %v9423 = vmax.f32 %v9139, %v9295
    %v9424 = vmax.f32 %v9142, %v9296
    %v9425 = vmax.f32 %v9144, %v9297
    %v9426 = vmax.f32 %v9147, %v9298
    %v9427 = vmax.f32 %v9149, %v9299
    %v9428 = vmax.f32 %v9152, %v9300
    %v9429 = vmax.f32 %v9154, %v9301
    %v9430 = vmax.f32 %v9157, %v9302
    %v9431 = vmax.f32 %v9159, %v9303
    %v9432 = vmax.f32 %v9162, %v9304
    %v9433 = vmax.f32 %v9164, %v9305
    %v9434 = vmax.f32 %v9167, %v9306
    %v9435 = vmax.f32 %v9169, %v9307
    %v9436 = vmax.f32 %v9172, %v9308
    %v9437 = vmax.f32 %v9174, %v9309
    %v9438 = vmax.f32 %v9177, %v9310
    %v9439 = vmax.f32 %v9179, %v9311
    %v9440 = vmax.f32 %v9182, %v9312
    %v9441 = vmax.f32 %v9184, %v9313
    %v9442 = vpack.c.bf16 %v9315, %v9314
    %v9443 = vpack.c.bf16 %v9317, %v9316
    %v9444 = vpack.c.bf16 %v9319, %v9318
    %v9445 = vpack.c.bf16 %v9321, %v9320
    %v9446 = vpack.c.bf16 %v9323, %v9322
    %v9447 = vpack.c.bf16 %v9325, %v9324
    %v9448 = vpack.c.bf16 %v9327, %v9326
    %v9449 = vpack.c.bf16 %v9329, %v9328
    %v9450 = vpack.c.bf16 %v9331, %v9330
    %v9451 = vpack.c.bf16 %v9333, %v9332
    %v9452 = vpack.c.bf16 %v9335, %v9334
    %v9453 = vpack.c.bf16 %v9337, %v9336
    %v9454 = vpack.c.bf16 %v9339, %v9338
    %v9455 = vpack.c.bf16 %v9341, %v9340
    %v9456 = vpack.c.bf16 %v9343, %v9342
    %v9457 = vpack.c.bf16 %v9345, %v9344
    %v9458 = vpack.c.bf16 %v9347, %v9346
    %v9459 = vpack.c.bf16 %v9349, %v9348
    %v9460 = vpack.c.bf16 %v9351, %v9350
    %v9461 = vpack.c.bf16 %v9353, %v9352
    %v9462 = vpack.c.bf16 %v9355, %v9354
    %v9463 = vpack.c.bf16 %v9357, %v9356
    %v9464 = vpack.c.bf16 %v9359, %v9358
    %v9465 = vpack.c.bf16 %v9361, %v9360
    %v9466 = vpack.c.bf16 %v9363, %v9362
    %v9467 = vpack.c.bf16 %v9365, %v9364
    %v9468 = vpack.c.bf16 %v9367, %v9366
    %v9469 = vpack.c.bf16 %v9369, %v9368
    %v9470 = vpack.c.bf16 %v9371, %v9370
    %v9471 = vpack.c.bf16 %v9373, %v9372
    %v9472 = vpack.c.bf16 %v9375, %v9374
    %v9473 = vpack.c.bf16 %v9377, %v9376
    %v9474 = vpack.c.bf16 %v9379, %v9378
    %v9475 = vpack.c.bf16 %v9381, %v9380
    %v9476 = vpack.c.bf16 %v9383, %v9382
    %v9477 = vpack.c.bf16 %v9385, %v9384
    %v9478 = vpack.c.bf16 %v9387, %v9386
    %v9479 = vpack.c.bf16 %v9389, %v9388
    %v9480 = vpack.c.bf16 %v9391, %v9390
    %v9481 = vpack.c.bf16 %v9393, %v9392
    %v9482 = vpack.c.bf16 %v9395, %v9394
    %v9483 = vpack.c.bf16 %v9397, %v9396
    %v9484 = vpack.c.bf16 %v9399, %v9398
    %v9485 = vpack.c.bf16 %v9401, %v9400
    %v9486 = vpack.c.bf16 %v9403, %v9402
    %v9487 = vpack.c.bf16 %v9405, %v9404
    %v9488 = vpack.c.bf16 %v9407, %v9406
    %v9489 = vpack.c.bf16 %v9409, %v9408
    %v9490 = vpack.c.bf16 %v9411, %v9410
    %v9491 = vpack.c.bf16 %v9413, %v9412
    %v9492 = vpack.c.bf16 %v9415, %v9414
    %v9493 = vpack.c.bf16 %v9417, %v9416
    %v9494 = vpack.c.bf16 %v9419, %v9418
    %v9495 = vpack.c.bf16 %v9421, %v9420
    %v9496 = vpack.c.bf16 %v9423, %v9422
    %v9497 = vpack.c.bf16 %v9425, %v9424
    %v9498 = vpack.c.bf16 %v9427, %v9426
    %v9499 = vpack.c.bf16 %v9429, %v9428
    %v9500 = vpack.c.bf16 %v9431, %v9430
    %v9501 = vpack.c.bf16 %v9433, %v9432
    %v9502 = vpack.c.bf16 %v9435, %v9434
    %v9503 = vpack.c.bf16 %v9437, %v9436
    %v9504 = vpack.c.bf16 %v9439, %v9438
    %v9505 = vpack.c.bf16 %v9441, %v9440
    %v9506 = vld [vmem:[%s4] sm:$0xf]
    %v9507 = vld [vmem:[%s4 + $0x4] sm:$0xf]
    %v9508 = vld [vmem:[%s4 + $0x8] sm:$0xf]
    %v9509 = vld [vmem:[%s4 + $0xc] sm:$0xf]
    %v9510 = vld [vmem:[%s4 + $0x10] sm:$0xf]
    %v9511 = vld [vmem:[%s4 + $0x14] sm:$0xf]
    %v9512 = vld [vmem:[%s4 + $0x18] sm:$0xf]
    %v9513 = vld [vmem:[%s4 + $0x1c] sm:$0xf]
    %v9514 = vld [vmem:[%s4 + $0x20] sm:$0xf]
    %v9515 = vld [vmem:[%s4 + $0x24] sm:$0xf]
    %v9516 = vld [vmem:[%s4 + $0x28] sm:$0xf]
    %v9517 = vld [vmem:[%s4 + $0x2c] sm:$0xf]
    %v9518 = vld [vmem:[%s4 + $0x30] sm:$0xf]
    %v9519 = vld [vmem:[%s4 + $0x34] sm:$0xf]
    %v9520 = vld [vmem:[%s4 + $0x38] sm:$0xf]
    %v9521 = vld [vmem:[%s4 + $0x3c] sm:$0xf]
    %v9538 = vunpack.c.l.b16 %v9506
    %v9539 = vunpack.c.l.b16 %v9507
    %v9540 = vunpack.c.l.b16 %v9508
    %v9541 = vunpack.c.l.b16 %v9509
    %v9542 = vunpack.c.l.b16 %v9510
    %v9543 = vunpack.c.l.b16 %v9511
    %v9544 = vunpack.c.l.b16 %v9512
    %v9545 = vunpack.c.l.b16 %v9513
    %v9546 = vunpack.c.l.b16 %v9514
    %v9547 = vunpack.c.l.b16 %v9515
    %v9548 = vunpack.c.l.b16 %v9516
    %v9549 = vunpack.c.l.b16 %v9517
    %v9550 = vunpack.c.l.b16 %v9518
    %v9551 = vunpack.c.l.b16 %v9519
    %v9552 = vunpack.c.l.b16 %v9520
    %v9553 = vunpack.c.l.b16 %v9521
    %v9554 = vpack.c.b16 %v9539, %v9538
    %v9555 = vpack.c.b16 %v9541, %v9540
    %v9556 = vpack.c.b16 %v9543, %v9542
    %v9557 = vpack.c.b16 %v9545, %v9544
    %v9558 = vpack.c.b16 %v9547, %v9546
    %v9559 = vpack.c.b16 %v9549, %v9548
    %v9560 = vpack.c.b16 %v9551, %v9550
    %v9561 = vpack.c.b16 %v9553, %v9552
    %9570 = vmatpush.bf16.msra.mxu0 %v9561
    %9571 = vmatpush.bf16.msra.mxu0 %v9560
    %9572 = vmatpush.bf16.msra.mxu0 %v9559
    %9573 = vmatpush.bf16.msra.mxu0 %v9558
    %9574 = vmatpush.bf16.msra.mxu0 %v9557
    %9575 = vmatpush.bf16.msra.mxu0 %v9556
    %9576 = vmatpush.bf16.msra.mxu0 %v9555
    %9577 = vmatpush.bf16.msra.mxu0 %v9554
    %9578 = vmatmul.bf16.gmra.mxu0 %v9442
    %v9579 = vpop.f32.mrf.mxu0
    %v9580 = vadd.f32 %v3145, %v9579
    %v9581 = vpop.f32.mrf.mxu0
    %v9582 = vadd.f32 %v3147, %v9581
    %9583 = vmatmul.bf16.gmra.mxu0 %v9443
    %v9584 = vpop.f32.mrf.mxu0
    %v9585 = vadd.f32 %v3150, %v9584
    %v9586 = vpop.f32.mrf.mxu0
    %v9587 = vadd.f32 %v3152, %v9586
    %9588 = vmatmul.bf16.gmra.mxu0 %v9444
    %v9589 = vpop.f32.mrf.mxu0
    %v9590 = vadd.f32 %v3155, %v9589
    %v9591 = vpop.f32.mrf.mxu0
    %v9592 = vadd.f32 %v3157, %v9591
    %9593 = vmatmul.bf16.gmra.mxu0 %v9445
    %v9594 = vpop.f32.mrf.mxu0
    %v9595 = vadd.f32 %v3160, %v9594
    %v9596 = vpop.f32.mrf.mxu0
    %v9597 = vadd.f32 %v3162, %v9596
    %9598 = vmatmul.bf16.gmra.mxu0 %v9446
    %v9599 = vpop.f32.mrf.mxu0
    %v9600 = vadd.f32 %v3165, %v9599
    %v9601 = vpop.f32.mrf.mxu0
    %v9602 = vadd.f32 %v3167, %v9601
    %9603 = vmatmul.bf16.gmra.mxu0 %v9447
    %v9604 = vpop.f32.mrf.mxu0
    %v9605 = vadd.f32 %v3170, %v9604
    %v9606 = vpop.f32.mrf.mxu0
    %v9607 = vadd.f32 %v3172, %v9606
    %9608 = vmatmul.bf16.gmra.mxu0 %v9448
    %v9609 = vpop.f32.mrf.mxu0
    %v9610 = vadd.f32 %v3175, %v9609
    %v9611 = vpop.f32.mrf.mxu0
    %v9612 = vadd.f32 %v3177, %v9611
    %9613 = vmatmul.bf16.gmra.mxu0 %v9449
    %v9614 = vpop.f32.mrf.mxu0
    %v9615 = vadd.f32 %v3180, %v9614
    %v9616 = vpop.f32.mrf.mxu0
    %v9617 = vadd.f32 %v3182, %v9616
    %9618 = vmatmul.bf16.gmra.mxu0 %v9450
    %v9619 = vpop.f32.mrf.mxu0
    %v9620 = vadd.f32 %v3185, %v9619
    %v9621 = vpop.f32.mrf.mxu0
    %v9622 = vadd.f32 %v3187, %v9621
    %9623 = vmatmul.bf16.gmra.mxu0 %v9451
    %v9624 = vpop.f32.mrf.mxu0
    %v9625 = vadd.f32 %v3190, %v9624
    %v9626 = vpop.f32.mrf.mxu0
    %v9627 = vadd.f32 %v3192, %v9626
    %9628 = vmatmul.bf16.gmra.mxu0 %v9452
    %v9629 = vpop.f32.mrf.mxu0
    %v9630 = vadd.f32 %v3195, %v9629
    %v9631 = vpop.f32.mrf.mxu0
    %v9632 = vadd.f32 %v3197, %v9631
    %9633 = vmatmul.bf16.gmra.mxu0 %v9453
    %v9634 = vpop.f32.mrf.mxu0
    %v9635 = vadd.f32 %v3200, %v9634
    %v9636 = vpop.f32.mrf.mxu0
    %v9637 = vadd.f32 %v3202, %v9636
    %9638 = vmatmul.bf16.gmra.mxu0 %v9454
    %v9639 = vpop.f32.mrf.mxu0
    %v9640 = vadd.f32 %v3205, %v9639
    %v9641 = vpop.f32.mrf.mxu0
    %v9642 = vadd.f32 %v3207, %v9641
    %9643 = vmatmul.bf16.gmra.mxu0 %v9455
    %v9644 = vpop.f32.mrf.mxu0
    %v9645 = vadd.f32 %v3210, %v9644
    %v9646 = vpop.f32.mrf.mxu0
    %v9647 = vadd.f32 %v3212, %v9646
    %9648 = vmatmul.bf16.gmra.mxu0 %v9456
    %v9649 = vpop.f32.mrf.mxu0
    %v9650 = vadd.f32 %v3215, %v9649
    %v9651 = vpop.f32.mrf.mxu0
    %v9652 = vadd.f32 %v3217, %v9651
    %9653 = vmatmul.bf16.gmra.mxu0 %v9457
    %v9654 = vpop.f32.mrf.mxu0
    %v9655 = vadd.f32 %v3220, %v9654
    %v9656 = vpop.f32.mrf.mxu0
    %v9657 = vadd.f32 %v3222, %v9656
    %9658 = vmatmul.bf16.gmra.mxu0 %v9458
    %v9659 = vpop.f32.mrf.mxu0
    %v9660 = vadd.f32 %v3225, %v9659
    %v9661 = vpop.f32.mrf.mxu0
    %v9662 = vadd.f32 %v3227, %v9661
    %9663 = vmatmul.bf16.gmra.mxu0 %v9459
    %v9664 = vpop.f32.mrf.mxu0
    %v9665 = vadd.f32 %v3230, %v9664
    %v9666 = vpop.f32.mrf.mxu0
    %v9667 = vadd.f32 %v3232, %v9666
    %9668 = vmatmul.bf16.gmra.mxu0 %v9460
    %v9669 = vpop.f32.mrf.mxu0
    %v9670 = vadd.f32 %v3235, %v9669
    %v9671 = vpop.f32.mrf.mxu0
    %v9672 = vadd.f32 %v3237, %v9671
    %9673 = vmatmul.bf16.gmra.mxu0 %v9461
    %v9674 = vpop.f32.mrf.mxu0
    %v9675 = vadd.f32 %v3240, %v9674
    %v9676 = vpop.f32.mrf.mxu0
    %v9677 = vadd.f32 %v3242, %v9676
    %9678 = vmatmul.bf16.gmra.mxu0 %v9462
    %v9679 = vpop.f32.mrf.mxu0
    %v9680 = vadd.f32 %v3245, %v9679
    %v9681 = vpop.f32.mrf.mxu0
    %v9682 = vadd.f32 %v3247, %v9681
    %9683 = vmatmul.bf16.gmra.mxu0 %v9463
    %v9684 = vpop.f32.mrf.mxu0
    %v9685 = vadd.f32 %v3250, %v9684
    %v9686 = vpop.f32.mrf.mxu0
    %v9687 = vadd.f32 %v3252, %v9686
    %9688 = vmatmul.bf16.gmra.mxu0 %v9464
    %v9689 = vpop.f32.mrf.mxu0
    %v9690 = vadd.f32 %v3255, %v9689
    %v9691 = vpop.f32.mrf.mxu0
    %v9692 = vadd.f32 %v3257, %v9691
    %9693 = vmatmul.bf16.gmra.mxu0 %v9465
    %v9694 = vpop.f32.mrf.mxu0
    %v9695 = vadd.f32 %v3260, %v9694
    %v9696 = vpop.f32.mrf.mxu0
    %v9697 = vadd.f32 %v3262, %v9696
    %9698 = vmatmul.bf16.gmra.mxu0 %v9466
    %v9699 = vpop.f32.mrf.mxu0
    %v9700 = vadd.f32 %v3265, %v9699
    %v9701 = vpop.f32.mrf.mxu0
    %v9702 = vadd.f32 %v3267, %v9701
    %9703 = vmatmul.bf16.gmra.mxu0 %v9467
    %v9704 = vpop.f32.mrf.mxu0
    %v9705 = vadd.f32 %v3270, %v9704
    %v9706 = vpop.f32.mrf.mxu0
    %v9707 = vadd.f32 %v3272, %v9706
    %9708 = vmatmul.bf16.gmra.mxu0 %v9468
    %v9709 = vpop.f32.mrf.mxu0
    %v9710 = vadd.f32 %v3275, %v9709
    %v9711 = vpop.f32.mrf.mxu0
    %v9712 = vadd.f32 %v3277, %v9711
    %9713 = vmatmul.bf16.gmra.mxu0 %v9469
    %v9714 = vpop.f32.mrf.mxu0
    %v9715 = vadd.f32 %v3280, %v9714
    %v9716 = vpop.f32.mrf.mxu0
    %v9717 = vadd.f32 %v3282, %v9716
    %9718 = vmatmul.bf16.gmra.mxu0 %v9470
    %v9719 = vpop.f32.mrf.mxu0
    %v9720 = vadd.f32 %v3285, %v9719
    %v9721 = vpop.f32.mrf.mxu0
    %v9722 = vadd.f32 %v3287, %v9721
    %9723 = vmatmul.bf16.gmra.mxu0 %v9471
    %v9724 = vpop.f32.mrf.mxu0
    %v9725 = vadd.f32 %v3290, %v9724
    %v9726 = vpop.f32.mrf.mxu0
    %v9727 = vadd.f32 %v3292, %v9726
    %9728 = vmatmul.bf16.gmra.mxu0 %v9472
    %v9729 = vpop.f32.mrf.mxu0
    %v9730 = vadd.f32 %v3295, %v9729
    %v9731 = vpop.f32.mrf.mxu0
    %v9732 = vadd.f32 %v3297, %v9731
    %9733 = vmatmul.bf16.gmra.mxu0 %v9473
    %v9734 = vpop.f32.mrf.mxu0
    %v9735 = vadd.f32 %v3300, %v9734
    %v9736 = vpop.f32.mrf.mxu0
    %v9737 = vadd.f32 %v3302, %v9736
    %9738 = vmatmul.bf16.gmra.mxu0 %v9474
    %v9739 = vpop.f32.mrf.mxu0
    %v9740 = vadd.f32 %v3305, %v9739
    %v9741 = vpop.f32.mrf.mxu0
    %v9742 = vadd.f32 %v3307, %v9741
    %9743 = vmatmul.bf16.gmra.mxu0 %v9475
    %v9744 = vpop.f32.mrf.mxu0
    %v9745 = vadd.f32 %v3310, %v9744
    %v9746 = vpop.f32.mrf.mxu0
    %v9747 = vadd.f32 %v3312, %v9746
    %9748 = vmatmul.bf16.gmra.mxu0 %v9476
    %v9749 = vpop.f32.mrf.mxu0
    %v9750 = vadd.f32 %v3315, %v9749
    %v9751 = vpop.f32.mrf.mxu0
    %v9752 = vadd.f32 %v3317, %v9751
    %9753 = vmatmul.bf16.gmra.mxu0 %v9477
    %v9754 = vpop.f32.mrf.mxu0
    %v9755 = vadd.f32 %v3320, %v9754
    %v9756 = vpop.f32.mrf.mxu0
    %v9757 = vadd.f32 %v3322, %v9756
    %9758 = vmatmul.bf16.gmra.mxu0 %v9478
    %v9759 = vpop.f32.mrf.mxu0
    %v9760 = vadd.f32 %v3325, %v9759
    %v9761 = vpop.f32.mrf.mxu0
    %v9762 = vadd.f32 %v3327, %v9761
    %9763 = vmatmul.bf16.gmra.mxu0 %v9479
    %v9764 = vpop.f32.mrf.mxu0
    %v9765 = vadd.f32 %v3330, %v9764
    %v9766 = vpop.f32.mrf.mxu0
    %v9767 = vadd.f32 %v3332, %v9766
    %9768 = vmatmul.bf16.gmra.mxu0 %v9480
    %v9769 = vpop.f32.mrf.mxu0
    %v9770 = vadd.f32 %v3335, %v9769
    %v9771 = vpop.f32.mrf.mxu0
    %v9772 = vadd.f32 %v3337, %v9771
    %9773 = vmatmul.bf16.gmra.mxu0 %v9481
    %v9774 = vpop.f32.mrf.mxu0
    %v9775 = vadd.f32 %v3340, %v9774
    %v9776 = vpop.f32.mrf.mxu0
    %v9777 = vadd.f32 %v3342, %v9776
    %9778 = vmatmul.bf16.gmra.mxu0 %v9482
    %v9779 = vpop.f32.mrf.mxu0
    %v9780 = vadd.f32 %v3345, %v9779
    %v9781 = vpop.f32.mrf.mxu0
    %v9782 = vadd.f32 %v3347, %v9781
    %9783 = vmatmul.bf16.gmra.mxu0 %v9483
    %v9784 = vpop.f32.mrf.mxu0
    %v9785 = vadd.f32 %v3350, %v9784
    %v9786 = vpop.f32.mrf.mxu0
    %v9787 = vadd.f32 %v3352, %v9786
    %9788 = vmatmul.bf16.gmra.mxu0 %v9484
    %v9789 = vpop.f32.mrf.mxu0
    %v9790 = vadd.f32 %v3355, %v9789
    %v9791 = vpop.f32.mrf.mxu0
    %v9792 = vadd.f32 %v3357, %v9791
    %9793 = vmatmul.bf16.gmra.mxu0 %v9485
    %v9794 = vpop.f32.mrf.mxu0
    %v9795 = vadd.f32 %v3360, %v9794
    %v9796 = vpop.f32.mrf.mxu0
    %v9797 = vadd.f32 %v3362, %v9796
    %9798 = vmatmul.bf16.gmra.mxu0 %v9486
    %v9799 = vpop.f32.mrf.mxu0
    %v9800 = vadd.f32 %v3365, %v9799
    %v9801 = vpop.f32.mrf.mxu0
    %v9802 = vadd.f32 %v3367, %v9801
    %9803 = vmatmul.bf16.gmra.mxu0 %v9487
    %v9804 = vpop.f32.mrf.mxu0
    %v9805 = vadd.f32 %v3370, %v9804
    %v9806 = vpop.f32.mrf.mxu0
    %v9807 = vadd.f32 %v3372, %v9806
    %9808 = vmatmul.bf16.gmra.mxu0 %v9488
    %v9809 = vpop.f32.mrf.mxu0
    %v9810 = vadd.f32 %v3375, %v9809
    %v9811 = vpop.f32.mrf.mxu0
    %v9812 = vadd.f32 %v3377, %v9811
    %9813 = vmatmul.bf16.gmra.mxu0 %v9489
    %v9814 = vpop.f32.mrf.mxu0
    %v9815 = vadd.f32 %v3380, %v9814
    %v9816 = vpop.f32.mrf.mxu0
    %v9817 = vadd.f32 %v3382, %v9816
    %9818 = vmatmul.bf16.gmra.mxu0 %v9490
    %v9819 = vpop.f32.mrf.mxu0
    %v9820 = vadd.f32 %v3385, %v9819
    %v9821 = vpop.f32.mrf.mxu0
    %v9822 = vadd.f32 %v3387, %v9821
    %9823 = vmatmul.bf16.gmra.mxu0 %v9491
    %v9824 = vpop.f32.mrf.mxu0
    %v9825 = vadd.f32 %v3390, %v9824
    %v9826 = vpop.f32.mrf.mxu0
    %v9827 = vadd.f32 %v3392, %v9826
    %9828 = vmatmul.bf16.gmra.mxu0 %v9492
    %v9829 = vpop.f32.mrf.mxu0
    %v9830 = vadd.f32 %v3395, %v9829
    %v9831 = vpop.f32.mrf.mxu0
    %v9832 = vadd.f32 %v3397, %v9831
    %9833 = vmatmul.bf16.gmra.mxu0 %v9493
    %v9834 = vpop.f32.mrf.mxu0
    %v9835 = vadd.f32 %v3400, %v9834
    %v9836 = vpop.f32.mrf.mxu0
    %v9837 = vadd.f32 %v3402, %v9836
    %9838 = vmatmul.bf16.gmra.mxu0 %v9494
    %v9839 = vpop.f32.mrf.mxu0
    %v9840 = vadd.f32 %v3405, %v9839
    %v9841 = vpop.f32.mrf.mxu0
    %v9842 = vadd.f32 %v3407, %v9841
    %9843 = vmatmul.bf16.gmra.mxu0 %v9495
    %v9844 = vpop.f32.mrf.mxu0
    %v9845 = vadd.f32 %v3410, %v9844
    %v9846 = vpop.f32.mrf.mxu0
    %v9847 = vadd.f32 %v3412, %v9846
    %9848 = vmatmul.bf16.gmra.mxu0 %v9496
    %v9849 = vpop.f32.mrf.mxu0
    %v9850 = vadd.f32 %v3415, %v9849
    %v9851 = vpop.f32.mrf.mxu0
    %v9852 = vadd.f32 %v3417, %v9851
    %9853 = vmatmul.bf16.gmra.mxu0 %v9497
    %v9854 = vpop.f32.mrf.mxu0
    %v9855 = vadd.f32 %v3420, %v9854
    %v9856 = vpop.f32.mrf.mxu0
    %v9857 = vadd.f32 %v3422, %v9856
    %9858 = vmatmul.bf16.gmra.mxu0 %v9498
    %v9859 = vpop.f32.mrf.mxu0
    %v9860 = vadd.f32 %v3425, %v9859
    %v9861 = vpop.f32.mrf.mxu0
    %v9862 = vadd.f32 %v3427, %v9861
    %9863 = vmatmul.bf16.gmra.mxu0 %v9499
    %v9864 = vpop.f32.mrf.mxu0
    %v9865 = vadd.f32 %v3430, %v9864
    %v9866 = vpop.f32.mrf.mxu0
    %v9867 = vadd.f32 %v3432, %v9866
    %9868 = vmatmul.bf16.gmra.mxu0 %v9500
    %v9869 = vpop.f32.mrf.mxu0
    %v9870 = vadd.f32 %v3435, %v9869
    %v9871 = vpop.f32.mrf.mxu0
    %v9872 = vadd.f32 %v3437, %v9871
    %9873 = vmatmul.bf16.gmra.mxu0 %v9501
    %v9874 = vpop.f32.mrf.mxu0
    %v9875 = vadd.f32 %v3440, %v9874
    %v9876 = vpop.f32.mrf.mxu0
    %v9877 = vadd.f32 %v3442, %v9876
    %9878 = vmatmul.bf16.gmra.mxu0 %v9502
    %v9879 = vpop.f32.mrf.mxu0
    %v9880 = vadd.f32 %v3445, %v9879
    %v9881 = vpop.f32.mrf.mxu0
    %v9882 = vadd.f32 %v3447, %v9881
    %9883 = vmatmul.bf16.gmra.mxu0 %v9503
    %v9884 = vpop.f32.mrf.mxu0
    %v9885 = vadd.f32 %v3450, %v9884
    %v9886 = vpop.f32.mrf.mxu0
    %v9887 = vadd.f32 %v3452, %v9886
    %9888 = vmatmul.bf16.gmra.mxu0 %v9504
    %v9889 = vpop.f32.mrf.mxu0
    %v9890 = vadd.f32 %v3455, %v9889
    %v9891 = vpop.f32.mrf.mxu0
    %v9892 = vadd.f32 %v3457, %v9891
    %9893 = vmatmul.bf16.gmra.mxu0 %v9505
    %v9894 = vpop.f32.mrf.mxu0
    %v9895 = vadd.f32 %v3460, %v9894
    %v9896 = vpop.f32.mrf.mxu0
    %v9897 = vadd.f32 %v3462, %v9896
    %9898 = vdwg.mxu0
    %v9899 = vmul.f32 %v9580, 0.01
    %v9900 = vmul.f32 %v9582, 0.01
    %v9901 = vmul.f32 %v9585, 0.01
    %v9902 = vmul.f32 %v9587, 0.01
    %v9903 = vmul.f32 %v9590, 0.01
    %v9904 = vmul.f32 %v9592, 0.01
    %v9905 = vmul.f32 %v9595, 0.01
    %v9906 = vmul.f32 %v9597, 0.01
    %v9907 = vmul.f32 %v9600, 0.01
    %v9908 = vmul.f32 %v9602, 0.01
    %v9909 = vmul.f32 %v9605, 0.01
    %v9910 = vmul.f32 %v9607, 0.01
    %v9911 = vmul.f32 %v9610, 0.01
    %v9912 = vmul.f32 %v9612, 0.01
    %v9913 = vmul.f32 %v9615, 0.01
    %v9914 = vmul.f32 %v9617, 0.01
    %v9915 = vmul.f32 %v9620, 0.01
    %v9916 = vmul.f32 %v9622, 0.01
    %v9917 = vmul.f32 %v9625, 0.01
    %v9918 = vmul.f32 %v9627, 0.01
    %v9919 = vmul.f32 %v9630, 0.01
    %v9920 = vmul.f32 %v9632, 0.01
    %v9921 = vmul.f32 %v9635, 0.01
    %v9922 = vmul.f32 %v9637, 0.01
    %v9923 = vmul.f32 %v9640, 0.01
    %v9924 = vmul.f32 %v9642, 0.01
    %v9925 = vmul.f32 %v9645, 0.01
    %v9926 = vmul.f32 %v9647, 0.01
    %v9927 = vmul.f32 %v9650, 0.01
    %v9928 = vmul.f32 %v9652, 0.01
    %v9929 = vmul.f32 %v9655, 0.01
    %v9930 = vmul.f32 %v9657, 0.01
    %v9931 = vmul.f32 %v9660, 0.01
    %v9932 = vmul.f32 %v9662, 0.01
    %v9933 = vmul.f32 %v9665, 0.01
    %v9934 = vmul.f32 %v9667, 0.01
    %v9935 = vmul.f32 %v9670, 0.01
    %v9936 = vmul.f32 %v9672, 0.01
    %v9937 = vmul.f32 %v9675, 0.01
    %v9938 = vmul.f32 %v9677, 0.01
    %v9939 = vmul.f32 %v9680, 0.01
    %v9940 = vmul.f32 %v9682, 0.01
    %v9941 = vmul.f32 %v9685, 0.01
    %v9942 = vmul.f32 %v9687, 0.01
    %v9943 = vmul.f32 %v9690, 0.01
    %v9944 = vmul.f32 %v9692, 0.01
    %v9945 = vmul.f32 %v9695, 0.01
    %v9946 = vmul.f32 %v9697, 0.01
    %v9947 = vmul.f32 %v9700, 0.01
    %v9948 = vmul.f32 %v9702, 0.01
    %v9949 = vmul.f32 %v9705, 0.01
    %v9950 = vmul.f32 %v9707, 0.01
    %v9951 = vmul.f32 %v9710, 0.01
    %v9952 = vmul.f32 %v9712, 0.01
    %v9953 = vmul.f32 %v9715, 0.01
    %v9954 = vmul.f32 %v9717, 0.01
    %v9955 = vmul.f32 %v9720, 0.01
    %v9956 = vmul.f32 %v9722, 0.01
    %v9957 = vmul.f32 %v9725, 0.01
    %v9958 = vmul.f32 %v9727, 0.01
    %v9959 = vmul.f32 %v9730, 0.01
    %v9960 = vmul.f32 %v9732, 0.01
    %v9961 = vmul.f32 %v9735, 0.01
    %v9962 = vmul.f32 %v9737, 0.01
    %v9963 = vmul.f32 %v9740, 0.01
    %v9964 = vmul.f32 %v9742, 0.01
    %v9965 = vmul.f32 %v9745, 0.01
    %v9966 = vmul.f32 %v9747, 0.01
    %v9967 = vmul.f32 %v9750, 0.01
    %v9968 = vmul.f32 %v9752, 0.01
    %v9969 = vmul.f32 %v9755, 0.01
    %v9970 = vmul.f32 %v9757, 0.01
    %v9971 = vmul.f32 %v9760, 0.01
    %v9972 = vmul.f32 %v9762, 0.01
    %v9973 = vmul.f32 %v9765, 0.01
    %v9974 = vmul.f32 %v9767, 0.01
    %v9975 = vmul.f32 %v9770, 0.01
    %v9976 = vmul.f32 %v9772, 0.01
    %v9977 = vmul.f32 %v9775, 0.01
    %v9978 = vmul.f32 %v9777, 0.01
    %v9979 = vmul.f32 %v9780, 0.01
    %v9980 = vmul.f32 %v9782, 0.01
    %v9981 = vmul.f32 %v9785, 0.01
    %v9982 = vmul.f32 %v9787, 0.01
    %v9983 = vmul.f32 %v9790, 0.01
    %v9984 = vmul.f32 %v9792, 0.01
    %v9985 = vmul.f32 %v9795, 0.01
    %v9986 = vmul.f32 %v9797, 0.01
    %v9987 = vmul.f32 %v9800, 0.01
    %v9988 = vmul.f32 %v9802, 0.01
    %v9989 = vmul.f32 %v9805, 0.01
    %v9990 = vmul.f32 %v9807, 0.01
    %v9991 = vmul.f32 %v9810, 0.01
    %v9992 = vmul.f32 %v9812, 0.01
    %v9993 = vmul.f32 %v9815, 0.01
    %v9994 = vmul.f32 %v9817, 0.01
    %v9995 = vmul.f32 %v9820, 0.01
    %v9996 = vmul.f32 %v9822, 0.01
    %v9997 = vmul.f32 %v9825, 0.01
    %v9998 = vmul.f32 %v9827, 0.01
    %v9999 = vmul.f32 %v9830, 0.01
    %v10000 = vmul.f32 %v9832, 0.01
    %v10001 = vmul.f32 %v9835, 0.01
    %v10002 = vmul.f32 %v9837, 0.01
    %v10003 = vmul.f32 %v9840, 0.01
    %v10004 = vmul.f32 %v9842, 0.01
    %v10005 = vmul.f32 %v9845, 0.01
    %v10006 = vmul.f32 %v9847, 0.01
    %v10007 = vmul.f32 %v9850, 0.01
    %v10008 = vmul.f32 %v9852, 0.01
    %v10009 = vmul.f32 %v9855, 0.01
    %v10010 = vmul.f32 %v9857, 0.01
    %v10011 = vmul.f32 %v9860, 0.01
    %v10012 = vmul.f32 %v9862, 0.01
    %v10013 = vmul.f32 %v9865, 0.01
    %v10014 = vmul.f32 %v9867, 0.01
    %v10015 = vmul.f32 %v9870, 0.01
    %v10016 = vmul.f32 %v9872, 0.01
    %v10017 = vmul.f32 %v9875, 0.01
    %v10018 = vmul.f32 %v9877, 0.01
    %v10019 = vmul.f32 %v9880, 0.01
    %v10020 = vmul.f32 %v9882, 0.01
    %v10021 = vmul.f32 %v9885, 0.01
    %v10022 = vmul.f32 %v9887, 0.01
    %v10023 = vmul.f32 %v9890, 0.01
    %v10024 = vmul.f32 %v9892, 0.01
    %v10025 = vmul.f32 %v9895, 0.01
    %v10026 = vmul.f32 %v9897, 0.01
    %v10027 = vmax.f32 %v9580, %v9899
    %v10028 = vmax.f32 %v9582, %v9900
    %v10029 = vmax.f32 %v9585, %v9901
    %v10030 = vmax.f32 %v9587, %v9902
    %v10031 = vmax.f32 %v9590, %v9903
    %v10032 = vmax.f32 %v9592, %v9904
    %v10033 = vmax.f32 %v9595, %v9905
    %v10034 = vmax.f32 %v9597, %v9906
    %v10035 = vmax.f32 %v9600, %v9907
    %v10036 = vmax.f32 %v9602, %v9908
    %v10037 = vmax.f32 %v9605, %v9909
    %v10038 = vmax.f32 %v9607, %v9910
    %v10039 = vmax.f32 %v9610, %v9911
    %v10040 = vmax.f32 %v9612, %v9912
    %v10041 = vmax.f32 %v9615, %v9913
    %v10042 = vmax.f32 %v9617, %v9914
    %v10043 = vmax.f32 %v9620, %v9915
    %v10044 = vmax.f32 %v9622, %v9916
    %v10045 = vmax.f32 %v9625, %v9917
    %v10046 = vmax.f32 %v9627, %v9918
    %v10047 = vmax.f32 %v9630, %v9919
    %v10048 = vmax.f32 %v9632, %v9920
    %v10049 = vmax.f32 %v9635, %v9921
    %v10050 = vmax.f32 %v9637, %v9922
    %v10051 = vmax.f32 %v9640, %v9923
    %v10052 = vmax.f32 %v9642, %v9924
    %v10053 = vmax.f32 %v9645, %v9925
    %v10054 = vmax.f32 %v9647, %v9926
    %v10055 = vmax.f32 %v9650, %v9927
    %v10056 = vmax.f32 %v9652, %v9928
    %v10057 = vmax.f32 %v9655, %v9929
    %v10058 = vmax.f32 %v9657, %v9930
    %v10059 = vmax.f32 %v9660, %v9931
    %v10060 = vmax.f32 %v9662, %v9932
    %v10061 = vmax.f32 %v9665, %v9933
    %v10062 = vmax.f32 %v9667, %v9934
    %v10063 = vmax.f32 %v9670, %v9935
    %v10064 = vmax.f32 %v9672, %v9936
    %v10065 = vmax.f32 %v9675, %v9937
    %v10066 = vmax.f32 %v9677, %v9938
    %v10067 = vmax.f32 %v9680, %v9939
    %v10068 = vmax.f32 %v9682, %v9940
    %v10069 = vmax.f32 %v9685, %v9941
    %v10070 = vmax.f32 %v9687, %v9942
    %v10071 = vmax.f32 %v9690, %v9943
    %v10072 = vmax.f32 %v9692, %v9944
    %v10073 = vmax.f32 %v9695, %v9945
    %v10074 = vmax.f32 %v9697, %v9946
    %v10075 = vmax.f32 %v9700, %v9947
    %v10076 = vmax.f32 %v9702, %v9948
    %v10077 = vmax.f32 %v9705, %v9949
    %v10078 = vmax.f32 %v9707, %v9950
    %v10079 = vmax.f32 %v9710, %v9951
    %v10080 = vmax.f32 %v9712, %v9952
    %v10081 = vmax.f32 %v9715, %v9953
    %v10082 = vmax.f32 %v9717, %v9954
    %v10083 = vmax.f32 %v9720, %v9955
    %v10084 = vmax.f32 %v9722, %v9956
    %v10085 = vmax.f32 %v9725, %v9957
    %v10086 = vmax.f32 %v9727, %v9958
    %v10087 = vmax.f32 %v9730, %v9959
    %v10088 = vmax.f32 %v9732, %v9960
    %v10089 = vmax.f32 %v9735, %v9961
    %v10090 = vmax.f32 %v9737, %v9962
    %v10091 = vmax.f32 %v9740, %v9963
    %v10092 = vmax.f32 %v9742, %v9964
    %v10093 = vmax.f32 %v9745, %v9965
    %v10094 = vmax.f32 %v9747, %v9966
    %v10095 = vmax.f32 %v9750, %v9967
    %v10096 = vmax.f32 %v9752, %v9968
    %v10097 = vmax.f32 %v9755, %v9969
    %v10098 = vmax.f32 %v9757, %v9970
    %v10099 = vmax.f32 %v9760, %v9971
    %v10100 = vmax.f32 %v9762, %v9972
    %v10101 = vmax.f32 %v9765, %v9973
    %v10102 = vmax.f32 %v9767, %v9974
    %v10103 = vmax.f32 %v9770, %v9975
    %v10104 = vmax.f32 %v9772, %v9976
    %v10105 = vmax.f32 %v9775, %v9977
    %v10106 = vmax.f32 %v9777, %v9978
    %v10107 = vmax.f32 %v9780, %v9979
    %v10108 = vmax.f32 %v9782, %v9980
    %v10109 = vmax.f32 %v9785, %v9981
    %v10110 = vmax.f32 %v9787, %v9982
    %v10111 = vmax.f32 %v9790, %v9983
    %v10112 = vmax.f32 %v9792, %v9984
    %v10113 = vmax.f32 %v9795, %v9985
    %v10114 = vmax.f32 %v9797, %v9986
    %v10115 = vmax.f32 %v9800, %v9987
    %v10116 = vmax.f32 %v9802, %v9988
    %v10117 = vmax.f32 %v9805, %v9989
    %v10118 = vmax.f32 %v9807, %v9990
    %v10119 = vmax.f32 %v9810, %v9991
    %v10120 = vmax.f32 %v9812, %v9992
    %v10121 = vmax.f32 %v9815, %v9993
    %v10122 = vmax.f32 %v9817, %v9994
    %v10123 = vmax.f32 %v9820, %v9995
    %v10124 = vmax.f32 %v9822, %v9996
    %v10125 = vmax.f32 %v9825, %v9997
    %v10126 = vmax.f32 %v9827, %v9998
    %v10127 = vmax.f32 %v9830, %v9999
    %v10128 = vmax.f32 %v9832, %v10000
    %v10129 = vmax.f32 %v9835, %v10001
    %v10130 = vmax.f32 %v9837, %v10002
    %v10131 = vmax.f32 %v9840, %v10003
    %v10132 = vmax.f32 %v9842, %v10004
    %v10133 = vmax.f32 %v9845, %v10005
    %v10134 = vmax.f32 %v9847, %v10006
    %v10135 = vmax.f32 %v9850, %v10007
    %v10136 = vmax.f32 %v9852, %v10008
    %v10137 = vmax.f32 %v9855, %v10009
    %v10138 = vmax.f32 %v9857, %v10010
    %v10139 = vmax.f32 %v9860, %v10011
    %v10140 = vmax.f32 %v9862, %v10012
    %v10141 = vmax.f32 %v9865, %v10013
    %v10142 = vmax.f32 %v9867, %v10014
    %v10143 = vmax.f32 %v9870, %v10015
    %v10144 = vmax.f32 %v9872, %v10016
    %v10145 = vmax.f32 %v9875, %v10017
    %v10146 = vmax.f32 %v9877, %v10018
    %v10147 = vmax.f32 %v9880, %v10019
    %v10148 = vmax.f32 %v9882, %v10020
    %v10149 = vmax.f32 %v9885, %v10021
    %v10150 = vmax.f32 %v9887, %v10022
    %v10151 = vmax.f32 %v9890, %v10023
    %v10152 = vmax.f32 %v9892, %v10024
    %v10153 = vmax.f32 %v9895, %v10025
    %v10154 = vmax.f32 %v9897, %v10026
    %v10155 = vpack.c.bf16 %v10028, %v10027
    %v10156 = vpack.c.bf16 %v10030, %v10029
    %v10157 = vpack.c.bf16 %v10032, %v10031
    %v10158 = vpack.c.bf16 %v10034, %v10033
    %v10159 = vpack.c.bf16 %v10036, %v10035
    %v10160 = vpack.c.bf16 %v10038, %v10037
    %v10161 = vpack.c.bf16 %v10040, %v10039
    %v10162 = vpack.c.bf16 %v10042, %v10041
    %v10163 = vpack.c.bf16 %v10044, %v10043
    %v10164 = vpack.c.bf16 %v10046, %v10045
    %v10165 = vpack.c.bf16 %v10048, %v10047
    %v10166 = vpack.c.bf16 %v10050, %v10049
    %v10167 = vpack.c.bf16 %v10052, %v10051
    %v10168 = vpack.c.bf16 %v10054, %v10053
    %v10169 = vpack.c.bf16 %v10056, %v10055
    %v10170 = vpack.c.bf16 %v10058, %v10057
    %v10171 = vpack.c.bf16 %v10060, %v10059
    %v10172 = vpack.c.bf16 %v10062, %v10061
    %v10173 = vpack.c.bf16 %v10064, %v10063
    %v10174 = vpack.c.bf16 %v10066, %v10065
    %v10175 = vpack.c.bf16 %v10068, %v10067
    %v10176 = vpack.c.bf16 %v10070, %v10069
    %v10177 = vpack.c.bf16 %v10072, %v10071
    %v10178 = vpack.c.bf16 %v10074, %v10073
    %v10179 = vpack.c.bf16 %v10076, %v10075
    %v10180 = vpack.c.bf16 %v10078, %v10077
    %v10181 = vpack.c.bf16 %v10080, %v10079
    %v10182 = vpack.c.bf16 %v10082, %v10081
    %v10183 = vpack.c.bf16 %v10084, %v10083
    %v10184 = vpack.c.bf16 %v10086, %v10085
    %v10185 = vpack.c.bf16 %v10088, %v10087
    %v10186 = vpack.c.bf16 %v10090, %v10089
    %v10187 = vpack.c.bf16 %v10092, %v10091
    %v10188 = vpack.c.bf16 %v10094, %v10093
    %v10189 = vpack.c.bf16 %v10096, %v10095
    %v10190 = vpack.c.bf16 %v10098, %v10097
    %v10191 = vpack.c.bf16 %v10100, %v10099
    %v10192 = vpack.c.bf16 %v10102, %v10101
    %v10193 = vpack.c.bf16 %v10104, %v10103
    %v10194 = vpack.c.bf16 %v10106, %v10105
    %v10195 = vpack.c.bf16 %v10108, %v10107
    %v10196 = vpack.c.bf16 %v10110, %v10109
    %v10197 = vpack.c.bf16 %v10112, %v10111
    %v10198 = vpack.c.bf16 %v10114, %v10113
    %v10199 = vpack.c.bf16 %v10116, %v10115
    %v10200 = vpack.c.bf16 %v10118, %v10117
    %v10201 = vpack.c.bf16 %v10120, %v10119
    %v10202 = vpack.c.bf16 %v10122, %v10121
    %v10203 = vpack.c.bf16 %v10124, %v10123
    %v10204 = vpack.c.bf16 %v10126, %v10125
    %v10205 = vpack.c.bf16 %v10128, %v10127
    %v10206 = vpack.c.bf16 %v10130, %v10129
    %v10207 = vpack.c.bf16 %v10132, %v10131
    %v10208 = vpack.c.bf16 %v10134, %v10133
    %v10209 = vpack.c.bf16 %v10136, %v10135
    %v10210 = vpack.c.bf16 %v10138, %v10137
    %v10211 = vpack.c.bf16 %v10140, %v10139
    %v10212 = vpack.c.bf16 %v10142, %v10141
    %v10213 = vpack.c.bf16 %v10144, %v10143
    %v10214 = vpack.c.bf16 %v10146, %v10145
    %v10215 = vpack.c.bf16 %v10148, %v10147
    %v10216 = vpack.c.bf16 %v10150, %v10149
    %v10217 = vpack.c.bf16 %v10152, %v10151
    %v10218 = vpack.c.bf16 %v10154, %v10153
    %v10219 = vld [vmem:[%s5] sm:$0xf]
    %v10220 = vld [vmem:[%s5 + $0x4] sm:$0xf]
    %v10221 = vld [vmem:[%s5 + $0x8] sm:$0xf]
    %v10222 = vld [vmem:[%s5 + $0xc] sm:$0xf]
    %v10223 = vld [vmem:[%s5 + $0x10] sm:$0xf]
    %v10224 = vld [vmem:[%s5 + $0x14] sm:$0xf]
    %v10225 = vld [vmem:[%s5 + $0x18] sm:$0xf]
    %v10226 = vld [vmem:[%s5 + $0x1c] sm:$0xf]
    %v10235 = vunpack.c.l.b16 %v10219
    %v10236 = vunpack.c.l.b16 %v10220
    %v10237 = vunpack.c.l.b16 %v10221
    %v10238 = vunpack.c.l.b16 %v10222
    %v10239 = vunpack.c.l.b16 %v10223
    %v10240 = vunpack.c.l.b16 %v10224
    %v10241 = vunpack.c.l.b16 %v10225
    %v10242 = vunpack.c.l.b16 %v10226
    %v10243 = vpack.c.b16 %v10236, %v10235
    %v10244 = vpack.c.b16 %v10238, %v10237
    %v10245 = vpack.c.b16 %v10240, %v10239
    %v10246 = vpack.c.b16 %v10242, %v10241
    %10379 = vrot.lane.b32.xlu0 %v3145, 64
    %v10380 = vpop.permute.xlu0 %10379
    %10381 = vrot.lane.b32.xlu0 %v3147, 64
    %v10382 = vpop.permute.xlu0 %10381
    %10383 = vrot.lane.b32.xlu0 %v3150, 64
    %v10384 = vpop.permute.xlu0 %10383
    %10385 = vrot.lane.b32.xlu0 %v3152, 64
    %v10386 = vpop.permute.xlu0 %10385
    %10387 = vrot.lane.b32.xlu0 %v3155, 64
    %v10388 = vpop.permute.xlu0 %10387
    %10389 = vrot.lane.b32.xlu0 %v3157, 64
    %v10390 = vpop.permute.xlu0 %10389
    %10391 = vrot.lane.b32.xlu0 %v3160, 64
    %v10392 = vpop.permute.xlu0 %10391
    %10393 = vrot.lane.b32.xlu0 %v3162, 64
    %v10394 = vpop.permute.xlu0 %10393
    %10395 = vrot.lane.b32.xlu0 %v3165, 64
    %v10396 = vpop.permute.xlu0 %10395
    %10397 = vrot.lane.b32.xlu0 %v3167, 64
    %v10398 = vpop.permute.xlu0 %10397
    %10399 = vrot.lane.b32.xlu0 %v3170, 64
    %v10400 = vpop.permute.xlu0 %10399
    %10401 = vrot.lane.b32.xlu0 %v3172, 64
    %v10402 = vpop.permute.xlu0 %10401
    %10403 = vrot.lane.b32.xlu0 %v3175, 64
    %v10404 = vpop.permute.xlu0 %10403
    %10405 = vrot.lane.b32.xlu0 %v3177, 64
    %v10406 = vpop.permute.xlu0 %10405
    %10407 = vrot.lane.b32.xlu0 %v3180, 64
    %v10408 = vpop.permute.xlu0 %10407
    %10409 = vrot.lane.b32.xlu0 %v3182, 64
    %v10410 = vpop.permute.xlu0 %10409
    %10411 = vrot.lane.b32.xlu0 %v3185, 64
    %v10412 = vpop.permute.xlu0 %10411
    %10413 = vrot.lane.b32.xlu0 %v3187, 64
    %v10414 = vpop.permute.xlu0 %10413
    %10415 = vrot.lane.b32.xlu0 %v3190, 64
    %v10416 = vpop.permute.xlu0 %10415
    %10417 = vrot.lane.b32.xlu0 %v3192, 64
    %v10418 = vpop.permute.xlu0 %10417
    %10419 = vrot.lane.b32.xlu0 %v3195, 64
    %v10420 = vpop.permute.xlu0 %10419
    %10421 = vrot.lane.b32.xlu0 %v3197, 64
    %v10422 = vpop.permute.xlu0 %10421
    %10423 = vrot.lane.b32.xlu0 %v3200, 64
    %v10424 = vpop.permute.xlu0 %10423
    %10425 = vrot.lane.b32.xlu0 %v3202, 64
    %v10426 = vpop.permute.xlu0 %10425
    %10427 = vrot.lane.b32.xlu0 %v3205, 64
    %v10428 = vpop.permute.xlu0 %10427
    %10429 = vrot.lane.b32.xlu0 %v3207, 64
    %v10430 = vpop.permute.xlu0 %10429
    %10431 = vrot.lane.b32.xlu0 %v3210, 64
    %v10432 = vpop.permute.xlu0 %10431
    %10433 = vrot.lane.b32.xlu0 %v3212, 64
    %v10434 = vpop.permute.xlu0 %10433
    %10435 = vrot.lane.b32.xlu0 %v3215, 64
    %v10436 = vpop.permute.xlu0 %10435
    %10437 = vrot.lane.b32.xlu0 %v3217, 64
    %v10438 = vpop.permute.xlu0 %10437
    %10439 = vrot.lane.b32.xlu0 %v3220, 64
    %v10440 = vpop.permute.xlu0 %10439
    %10441 = vrot.lane.b32.xlu0 %v3222, 64
    %v10442 = vpop.permute.xlu0 %10441
    %10443 = vrot.lane.b32.xlu0 %v3225, 64
    %v10444 = vpop.permute.xlu0 %10443
    %10445 = vrot.lane.b32.xlu0 %v3227, 64
    %v10446 = vpop.permute.xlu0 %10445
    %10447 = vrot.lane.b32.xlu0 %v3230, 64
    %v10448 = vpop.permute.xlu0 %10447
    %10449 = vrot.lane.b32.xlu0 %v3232, 64
    %v10450 = vpop.permute.xlu0 %10449
    %10451 = vrot.lane.b32.xlu0 %v3235, 64
    %v10452 = vpop.permute.xlu0 %10451
    %10453 = vrot.lane.b32.xlu0 %v3237, 64
    %v10454 = vpop.permute.xlu0 %10453
    %10455 = vrot.lane.b32.xlu0 %v3240, 64
    %v10456 = vpop.permute.xlu0 %10455
    %10457 = vrot.lane.b32.xlu0 %v3242, 64
    %v10458 = vpop.permute.xlu0 %10457
    %10459 = vrot.lane.b32.xlu0 %v3245, 64
    %v10460 = vpop.permute.xlu0 %10459
    %10461 = vrot.lane.b32.xlu0 %v3247, 64
    %v10462 = vpop.permute.xlu0 %10461
    %10463 = vrot.lane.b32.xlu0 %v3250, 64
    %v10464 = vpop.permute.xlu0 %10463
    %10465 = vrot.lane.b32.xlu0 %v3252, 64
    %v10466 = vpop.permute.xlu0 %10465
    %10467 = vrot.lane.b32.xlu0 %v3255, 64
    %v10468 = vpop.permute.xlu0 %10467
    %10469 = vrot.lane.b32.xlu0 %v3257, 64
    %v10470 = vpop.permute.xlu0 %10469
    %10471 = vrot.lane.b32.xlu0 %v3260, 64
    %v10472 = vpop.permute.xlu0 %10471
    %10473 = vrot.lane.b32.xlu0 %v3262, 64
    %v10474 = vpop.permute.xlu0 %10473
    %10475 = vrot.lane.b32.xlu0 %v3265, 64
    %v10476 = vpop.permute.xlu0 %10475
    %10477 = vrot.lane.b32.xlu0 %v3267, 64
    %v10478 = vpop.permute.xlu0 %10477
    %10479 = vrot.lane.b32.xlu0 %v3270, 64
    %v10480 = vpop.permute.xlu0 %10479
    %10481 = vrot.lane.b32.xlu0 %v3272, 64
    %v10482 = vpop.permute.xlu0 %10481
    %10483 = vrot.lane.b32.xlu0 %v3275, 64
    %v10484 = vpop.permute.xlu0 %10483
    %10485 = vrot.lane.b32.xlu0 %v3277, 64
    %v10486 = vpop.permute.xlu0 %10485
    %10487 = vrot.lane.b32.xlu0 %v3280, 64
    %v10488 = vpop.permute.xlu0 %10487
    %10489 = vrot.lane.b32.xlu0 %v3282, 64
    %v10490 = vpop.permute.xlu0 %10489
    %10491 = vrot.lane.b32.xlu0 %v3285, 64
    %v10492 = vpop.permute.xlu0 %10491
    %10493 = vrot.lane.b32.xlu0 %v3287, 64
    %v10494 = vpop.permute.xlu0 %10493
    %10495 = vrot.lane.b32.xlu0 %v3290, 64
    %v10496 = vpop.permute.xlu0 %10495
    %10497 = vrot.lane.b32.xlu0 %v3292, 64
    %v10498 = vpop.permute.xlu0 %10497
    %10499 = vrot.lane.b32.xlu0 %v3295, 64
    %v10500 = vpop.permute.xlu0 %10499
    %10501 = vrot.lane.b32.xlu0 %v3297, 64
    %v10502 = vpop.permute.xlu0 %10501
    %10503 = vrot.lane.b32.xlu0 %v3300, 64
    %v10504 = vpop.permute.xlu0 %10503
    %10505 = vrot.lane.b32.xlu0 %v3302, 64
    %v10506 = vpop.permute.xlu0 %10505
    %10507 = vrot.lane.b32.xlu0 %v3305, 64
    %v10508 = vpop.permute.xlu0 %10507
    %10509 = vrot.lane.b32.xlu0 %v3307, 64
    %v10510 = vpop.permute.xlu0 %10509
    %10511 = vrot.lane.b32.xlu0 %v3310, 64
    %v10512 = vpop.permute.xlu0 %10511
    %10513 = vrot.lane.b32.xlu0 %v3312, 64
    %v10514 = vpop.permute.xlu0 %10513
    %10515 = vrot.lane.b32.xlu0 %v3315, 64
    %v10516 = vpop.permute.xlu0 %10515
    %10517 = vrot.lane.b32.xlu0 %v3317, 64
    %v10518 = vpop.permute.xlu0 %10517
    %10519 = vrot.lane.b32.xlu0 %v3320, 64
    %v10520 = vpop.permute.xlu0 %10519
    %10521 = vrot.lane.b32.xlu0 %v3322, 64
    %v10522 = vpop.permute.xlu0 %10521
    %10523 = vrot.lane.b32.xlu0 %v3325, 64
    %v10524 = vpop.permute.xlu0 %10523
    %10525 = vrot.lane.b32.xlu0 %v3327, 64
    %v10526 = vpop.permute.xlu0 %10525
    %10527 = vrot.lane.b32.xlu0 %v3330, 64
    %v10528 = vpop.permute.xlu0 %10527
    %10529 = vrot.lane.b32.xlu0 %v3332, 64
    %v10530 = vpop.permute.xlu0 %10529
    %10531 = vrot.lane.b32.xlu0 %v3335, 64
    %v10532 = vpop.permute.xlu0 %10531
    %10533 = vrot.lane.b32.xlu0 %v3337, 64
    %v10534 = vpop.permute.xlu0 %10533
    %10535 = vrot.lane.b32.xlu0 %v3340, 64
    %v10536 = vpop.permute.xlu0 %10535
    %10537 = vrot.lane.b32.xlu0 %v3342, 64
    %v10538 = vpop.permute.xlu0 %10537
    %10539 = vrot.lane.b32.xlu0 %v3345, 64
    %v10540 = vpop.permute.xlu0 %10539
    %10541 = vrot.lane.b32.xlu0 %v3347, 64
    %v10542 = vpop.permute.xlu0 %10541
    %10543 = vrot.lane.b32.xlu0 %v3350, 64
    %v10544 = vpop.permute.xlu0 %10543
    %10545 = vrot.lane.b32.xlu0 %v3352, 64
    %v10546 = vpop.permute.xlu0 %10545
    %10547 = vrot.lane.b32.xlu0 %v3355, 64
    %v10548 = vpop.permute.xlu0 %10547
    %10549 = vrot.lane.b32.xlu0 %v3357, 64
    %v10550 = vpop.permute.xlu0 %10549
    %10551 = vrot.lane.b32.xlu0 %v3360, 64
    %v10552 = vpop.permute.xlu0 %10551
    %10553 = vrot.lane.b32.xlu0 %v3362, 64
    %v10554 = vpop.permute.xlu0 %10553
    %10555 = vrot.lane.b32.xlu0 %v3365, 64
    %v10556 = vpop.permute.xlu0 %10555
    %10557 = vrot.lane.b32.xlu0 %v3367, 64
    %v10558 = vpop.permute.xlu0 %10557
    %10559 = vrot.lane.b32.xlu0 %v3370, 64
    %v10560 = vpop.permute.xlu0 %10559
    %10561 = vrot.lane.b32.xlu0 %v3372, 64
    %v10562 = vpop.permute.xlu0 %10561
    %10563 = vrot.lane.b32.xlu0 %v3375, 64
    %v10564 = vpop.permute.xlu0 %10563
    %10565 = vrot.lane.b32.xlu0 %v3377, 64
    %v10566 = vpop.permute.xlu0 %10565
    %10567 = vrot.lane.b32.xlu0 %v3380, 64
    %v10568 = vpop.permute.xlu0 %10567
    %10569 = vrot.lane.b32.xlu0 %v3382, 64
    %v10570 = vpop.permute.xlu0 %10569
    %10571 = vrot.lane.b32.xlu0 %v3385, 64
    %v10572 = vpop.permute.xlu0 %10571
    %10573 = vrot.lane.b32.xlu0 %v3387, 64
    %v10574 = vpop.permute.xlu0 %10573
    %10575 = vrot.lane.b32.xlu0 %v3390, 64
    %v10576 = vpop.permute.xlu0 %10575
    %10577 = vrot.lane.b32.xlu0 %v3392, 64
    %v10578 = vpop.permute.xlu0 %10577
    %10579 = vrot.lane.b32.xlu0 %v3395, 64
    %v10580 = vpop.permute.xlu0 %10579
    %10581 = vrot.lane.b32.xlu0 %v3397, 64
    %v10582 = vpop.permute.xlu0 %10581
    %10583 = vrot.lane.b32.xlu0 %v3400, 64
    %v10584 = vpop.permute.xlu0 %10583
    %10585 = vrot.lane.b32.xlu0 %v3402, 64
    %v10586 = vpop.permute.xlu0 %10585
    %10587 = vrot.lane.b32.xlu0 %v3405, 64
    %v10588 = vpop.permute.xlu0 %10587
    %10589 = vrot.lane.b32.xlu0 %v3407, 64
    %v10590 = vpop.permute.xlu0 %10589
    %10591 = vrot.lane.b32.xlu0 %v3410, 64
    %v10592 = vpop.permute.xlu0 %10591
    %10593 = vrot.lane.b32.xlu0 %v3412, 64
    %v10594 = vpop.permute.xlu0 %10593
    %10595 = vrot.lane.b32.xlu0 %v3415, 64
    %v10596 = vpop.permute.xlu0 %10595
    %10597 = vrot.lane.b32.xlu0 %v3417, 64
    %v10598 = vpop.permute.xlu0 %10597
    %10599 = vrot.lane.b32.xlu0 %v3420, 64
    %v10600 = vpop.permute.xlu0 %10599
    %10601 = vrot.lane.b32.xlu0 %v3422, 64
    %v10602 = vpop.permute.xlu0 %10601
    %10603 = vrot.lane.b32.xlu0 %v3425, 64
    %v10604 = vpop.permute.xlu0 %10603
    %10605 = vrot.lane.b32.xlu0 %v3427, 64
    %v10606 = vpop.permute.xlu0 %10605
    %10607 = vrot.lane.b32.xlu0 %v3430, 64
    %v10608 = vpop.permute.xlu0 %10607
    %10609 = vrot.lane.b32.xlu0 %v3432, 64
    %v10610 = vpop.permute.xlu0 %10609
    %10611 = vrot.lane.b32.xlu0 %v3435, 64
    %v10612 = vpop.permute.xlu0 %10611
    %10613 = vrot.lane.b32.xlu0 %v3437, 64
    %v10614 = vpop.permute.xlu0 %10613
    %10615 = vrot.lane.b32.xlu0 %v3440, 64
    %v10616 = vpop.permute.xlu0 %10615
    %10617 = vrot.lane.b32.xlu0 %v3442, 64
    %v10618 = vpop.permute.xlu0 %10617
    %10619 = vrot.lane.b32.xlu0 %v3445, 64
    %v10620 = vpop.permute.xlu0 %10619
    %10621 = vrot.lane.b32.xlu0 %v3447, 64
    %v10622 = vpop.permute.xlu0 %10621
    %10623 = vrot.lane.b32.xlu0 %v3450, 64
    %v10624 = vpop.permute.xlu0 %10623
    %10625 = vrot.lane.b32.xlu0 %v3452, 64
    %v10626 = vpop.permute.xlu0 %10625
    %10627 = vrot.lane.b32.xlu0 %v3455, 64
    %v10628 = vpop.permute.xlu0 %10627
    %10629 = vrot.lane.b32.xlu0 %v3457, 64
    %v10630 = vpop.permute.xlu0 %10629
    %10631 = vrot.lane.b32.xlu0 %v3460, 64
    %v10632 = vpop.permute.xlu0 %10631
    %10633 = vrot.lane.b32.xlu0 %v3462, 64
    %v10634 = vpop.permute.xlu0 %10633
    %vm10763 = vcmask 523264
    %v10765 = vsel %vm10763, %v10155, 0
    %v10768 = vsel %vm10763, %v10156, 0
    %v10771 = vsel %vm10763, %v10157, 0
    %v10774 = vsel %vm10763, %v10158, 0
    %v10777 = vsel %vm10763, %v10159, 0
    %v10780 = vsel %vm10763, %v10160, 0
    %v10783 = vsel %vm10763, %v10161, 0
    %v10786 = vsel %vm10763, %v10162, 0
    %v10789 = vsel %vm10763, %v10163, 0
    %v10792 = vsel %vm10763, %v10164, 0
    %v10795 = vsel %vm10763, %v10165, 0
    %v10798 = vsel %vm10763, %v10166, 0
    %v10801 = vsel %vm10763, %v10167, 0
    %v10804 = vsel %vm10763, %v10168, 0
    %v10807 = vsel %vm10763, %v10169, 0
    %v10810 = vsel %vm10763, %v10170, 0
    %v10813 = vsel %vm10763, %v10171, 0
    %v10816 = vsel %vm10763, %v10172, 0
    %v10819 = vsel %vm10763, %v10173, 0
    %v10822 = vsel %vm10763, %v10174, 0
    %v10825 = vsel %vm10763, %v10175, 0
    %v10828 = vsel %vm10763, %v10176, 0
    %v10831 = vsel %vm10763, %v10177, 0
    %v10834 = vsel %vm10763, %v10178, 0
    %v10837 = vsel %vm10763, %v10179, 0
    %v10840 = vsel %vm10763, %v10180, 0
    %v10843 = vsel %vm10763, %v10181, 0
    %v10846 = vsel %vm10763, %v10182, 0
    %v10849 = vsel %vm10763, %v10183, 0
    %v10852 = vsel %vm10763, %v10184, 0
    %v10855 = vsel %vm10763, %v10185, 0
    %v10858 = vsel %vm10763, %v10186, 0
    %v10861 = vsel %vm10763, %v10187, 0
    %v10864 = vsel %vm10763, %v10188, 0
    %v10867 = vsel %vm10763, %v10189, 0
    %v10870 = vsel %vm10763, %v10190, 0
    %v10873 = vsel %vm10763, %v10191, 0
    %v10876 = vsel %vm10763, %v10192, 0
    %v10879 = vsel %vm10763, %v10193, 0
    %v10882 = vsel %vm10763, %v10194, 0
    %v10885 = vsel %vm10763, %v10195, 0
    %v10888 = vsel %vm10763, %v10196, 0
    %v10891 = vsel %vm10763, %v10197, 0
    %v10894 = vsel %vm10763, %v10198, 0
    %v10897 = vsel %vm10763, %v10199, 0
    %v10900 = vsel %vm10763, %v10200, 0
    %v10903 = vsel %vm10763, %v10201, 0
    %v10906 = vsel %vm10763, %v10202, 0
    %v10909 = vsel %vm10763, %v10203, 0
    %v10912 = vsel %vm10763, %v10204, 0
    %v10915 = vsel %vm10763, %v10205, 0
    %v10918 = vsel %vm10763, %v10206, 0
    %v10921 = vsel %vm10763, %v10207, 0
    %v10924 = vsel %vm10763, %v10208, 0
    %v10927 = vsel %vm10763, %v10209, 0
    %v10930 = vsel %vm10763, %v10210, 0
    %v10933 = vsel %vm10763, %v10211, 0
    %v10936 = vsel %vm10763, %v10212, 0
    %v10939 = vsel %vm10763, %v10213, 0
    %v10942 = vsel %vm10763, %v10214, 0
    %v10945 = vsel %vm10763, %v10215, 0
    %v10948 = vsel %vm10763, %v10216, 0
    %v10951 = vsel %vm10763, %v10217, 0
    %v10954 = vsel %vm10763, %v10218, 0
    %10956 = vmatpush.bf16.msra.mxu0 0
    %10957 = vmatpush.bf16.msra.mxu0 0
    %10958 = vmatpush.bf16.msra.mxu0 0
    %10959 = vmatpush.bf16.msra.mxu0 0
    %10960 = vmatpush.bf16.msra.mxu0 %v10246
    %10961 = vmatpush.bf16.msra.mxu0 %v10245
    %10962 = vmatpush.bf16.msra.mxu0 %v10244
    %10963 = vmatpush.bf16.msra.mxu0 %v10243
    %10964 = vmatmul.bf16.gmra.mxu0 %v10765
    %v10965 = vpop.f32.mrf.mxu0
    %v10966 = vadd.f32 %v10380, %v10965
    %v10967 = vpop.f32.mrf.mxu0
    %v10968 = vadd.f32 %v10382, %v10967
    %10969 = vmatmul.bf16.gmra.mxu0 %v10768
    %v10970 = vpop.f32.mrf.mxu0
    %v10971 = vadd.f32 %v10384, %v10970
    %v10972 = vpop.f32.mrf.mxu0
    %v10973 = vadd.f32 %v10386, %v10972
    %10974 = vmatmul.bf16.gmra.mxu0 %v10771
    %v10975 = vpop.f32.mrf.mxu0
    %v10976 = vadd.f32 %v10388, %v10975
    %v10977 = vpop.f32.mrf.mxu0
    %v10978 = vadd.f32 %v10390, %v10977
    %10979 = vmatmul.bf16.gmra.mxu0 %v10774
    %v10980 = vpop.f32.mrf.mxu0
    %v10981 = vadd.f32 %v10392, %v10980
    %v10982 = vpop.f32.mrf.mxu0
    %v10983 = vadd.f32 %v10394, %v10982
    %10984 = vmatmul.bf16.gmra.mxu0 %v10777
    %v10985 = vpop.f32.mrf.mxu0
    %v10986 = vadd.f32 %v10396, %v10985
    %v10987 = vpop.f32.mrf.mxu0
    %v10988 = vadd.f32 %v10398, %v10987
    %10989 = vmatmul.bf16.gmra.mxu0 %v10780
    %v10990 = vpop.f32.mrf.mxu0
    %v10991 = vadd.f32 %v10400, %v10990
    %v10992 = vpop.f32.mrf.mxu0
    %v10993 = vadd.f32 %v10402, %v10992
    %10994 = vmatmul.bf16.gmra.mxu0 %v10783
    %v10995 = vpop.f32.mrf.mxu0
    %v10996 = vadd.f32 %v10404, %v10995
    %v10997 = vpop.f32.mrf.mxu0
    %v10998 = vadd.f32 %v10406, %v10997
    %10999 = vmatmul.bf16.gmra.mxu0 %v10786
    %v11000 = vpop.f32.mrf.mxu0
    %v11001 = vadd.f32 %v10408, %v11000
    %v11002 = vpop.f32.mrf.mxu0
    %v11003 = vadd.f32 %v10410, %v11002
    %11004 = vmatmul.bf16.gmra.mxu0 %v10789
    %v11005 = vpop.f32.mrf.mxu0
    %v11006 = vadd.f32 %v10412, %v11005
    %v11007 = vpop.f32.mrf.mxu0
    %v11008 = vadd.f32 %v10414, %v11007
    %11009 = vmatmul.bf16.gmra.mxu0 %v10792
    %v11010 = vpop.f32.mrf.mxu0
    %v11011 = vadd.f32 %v10416, %v11010
    %v11012 = vpop.f32.mrf.mxu0
    %v11013 = vadd.f32 %v10418, %v11012
    %11014 = vmatmul.bf16.gmra.mxu0 %v10795
    %v11015 = vpop.f32.mrf.mxu0
    %v11016 = vadd.f32 %v10420, %v11015
    %v11017 = vpop.f32.mrf.mxu0
    %v11018 = vadd.f32 %v10422, %v11017
    %11019 = vmatmul.bf16.gmra.mxu0 %v10798
    %v11020 = vpop.f32.mrf.mxu0
    %v11021 = vadd.f32 %v10424, %v11020
    %v11022 = vpop.f32.mrf.mxu0
    %v11023 = vadd.f32 %v10426, %v11022
    %11024 = vmatmul.bf16.gmra.mxu0 %v10801
    %v11025 = vpop.f32.mrf.mxu0
    %v11026 = vadd.f32 %v10428, %v11025
    %v11027 = vpop.f32.mrf.mxu0
    %v11028 = vadd.f32 %v10430, %v11027
    %11029 = vmatmul.bf16.gmra.mxu0 %v10804
    %v11030 = vpop.f32.mrf.mxu0
    %v11031 = vadd.f32 %v10432, %v11030
    %v11032 = vpop.f32.mrf.mxu0
    %v11033 = vadd.f32 %v10434, %v11032
    %11034 = vmatmul.bf16.gmra.mxu0 %v10807
    %v11035 = vpop.f32.mrf.mxu0
    %v11036 = vadd.f32 %v10436, %v11035
    %v11037 = vpop.f32.mrf.mxu0
    %v11038 = vadd.f32 %v10438, %v11037
    %11039 = vmatmul.bf16.gmra.mxu0 %v10810
    %v11040 = vpop.f32.mrf.mxu0
    %v11041 = vadd.f32 %v10440, %v11040
    %v11042 = vpop.f32.mrf.mxu0
    %v11043 = vadd.f32 %v10442, %v11042
    %11044 = vmatmul.bf16.gmra.mxu0 %v10813
    %v11045 = vpop.f32.mrf.mxu0
    %v11046 = vadd.f32 %v10444, %v11045
    %v11047 = vpop.f32.mrf.mxu0
    %v11048 = vadd.f32 %v10446, %v11047
    %11049 = vmatmul.bf16.gmra.mxu0 %v10816
    %v11050 = vpop.f32.mrf.mxu0
    %v11051 = vadd.f32 %v10448, %v11050
    %v11052 = vpop.f32.mrf.mxu0
    %v11053 = vadd.f32 %v10450, %v11052
    %11054 = vmatmul.bf16.gmra.mxu0 %v10819
    %v11055 = vpop.f32.mrf.mxu0
    %v11056 = vadd.f32 %v10452, %v11055
    %v11057 = vpop.f32.mrf.mxu0
    %v11058 = vadd.f32 %v10454, %v11057
    %11059 = vmatmul.bf16.gmra.mxu0 %v10822
    %v11060 = vpop.f32.mrf.mxu0
    %v11061 = vadd.f32 %v10456, %v11060
    %v11062 = vpop.f32.mrf.mxu0
    %v11063 = vadd.f32 %v10458, %v11062
    %11064 = vmatmul.bf16.gmra.mxu0 %v10825
    %v11065 = vpop.f32.mrf.mxu0
    %v11066 = vadd.f32 %v10460, %v11065
    %v11067 = vpop.f32.mrf.mxu0
    %v11068 = vadd.f32 %v10462, %v11067
    %11069 = vmatmul.bf16.gmra.mxu0 %v10828
    %v11070 = vpop.f32.mrf.mxu0
    %v11071 = vadd.f32 %v10464, %v11070
    %v11072 = vpop.f32.mrf.mxu0
    %v11073 = vadd.f32 %v10466, %v11072
    %11074 = vmatmul.bf16.gmra.mxu0 %v10831
    %v11075 = vpop.f32.mrf.mxu0
    %v11076 = vadd.f32 %v10468, %v11075
    %v11077 = vpop.f32.mrf.mxu0
    %v11078 = vadd.f32 %v10470, %v11077
    %11079 = vmatmul.bf16.gmra.mxu0 %v10834
    %v11080 = vpop.f32.mrf.mxu0
    %v11081 = vadd.f32 %v10472, %v11080
    %v11082 = vpop.f32.mrf.mxu0
    %v11083 = vadd.f32 %v10474, %v11082
    %11084 = vmatmul.bf16.gmra.mxu0 %v10837
    %v11085 = vpop.f32.mrf.mxu0
    %v11086 = vadd.f32 %v10476, %v11085
    %v11087 = vpop.f32.mrf.mxu0
    %v11088 = vadd.f32 %v10478, %v11087
    %11089 = vmatmul.bf16.gmra.mxu0 %v10840
    %v11090 = vpop.f32.mrf.mxu0
    %v11091 = vadd.f32 %v10480, %v11090
    %v11092 = vpop.f32.mrf.mxu0
    %v11093 = vadd.f32 %v10482, %v11092
    %11094 = vmatmul.bf16.gmra.mxu0 %v10843
    %v11095 = vpop.f32.mrf.mxu0
    %v11096 = vadd.f32 %v10484, %v11095
    %v11097 = vpop.f32.mrf.mxu0
    %v11098 = vadd.f32 %v10486, %v11097
    %11099 = vmatmul.bf16.gmra.mxu0 %v10846
    %v11100 = vpop.f32.mrf.mxu0
    %v11101 = vadd.f32 %v10488, %v11100
    %v11102 = vpop.f32.mrf.mxu0
    %v11103 = vadd.f32 %v10490, %v11102
    %11104 = vmatmul.bf16.gmra.mxu0 %v10849
    %v11105 = vpop.f32.mrf.mxu0
    %v11106 = vadd.f32 %v10492, %v11105
    %v11107 = vpop.f32.mrf.mxu0
    %v11108 = vadd.f32 %v10494, %v11107
    %11109 = vmatmul.bf16.gmra.mxu0 %v10852
    %v11110 = vpop.f32.mrf.mxu0
    %v11111 = vadd.f32 %v10496, %v11110
    %v11112 = vpop.f32.mrf.mxu0
    %v11113 = vadd.f32 %v10498, %v11112
    %11114 = vmatmul.bf16.gmra.mxu0 %v10855
    %v11115 = vpop.f32.mrf.mxu0
    %v11116 = vadd.f32 %v10500, %v11115
    %v11117 = vpop.f32.mrf.mxu0
    %v11118 = vadd.f32 %v10502, %v11117
    %11119 = vmatmul.bf16.gmra.mxu0 %v10858
    %v11120 = vpop.f32.mrf.mxu0
    %v11121 = vadd.f32 %v10504, %v11120
    %v11122 = vpop.f32.mrf.mxu0
    %v11123 = vadd.f32 %v10506, %v11122
    %11124 = vmatmul.bf16.gmra.mxu0 %v10861
    %v11125 = vpop.f32.mrf.mxu0
    %v11126 = vadd.f32 %v10508, %v11125
    %v11127 = vpop.f32.mrf.mxu0
    %v11128 = vadd.f32 %v10510, %v11127
    %11129 = vmatmul.bf16.gmra.mxu0 %v10864
    %v11130 = vpop.f32.mrf.mxu0
    %v11131 = vadd.f32 %v10512, %v11130
    %v11132 = vpop.f32.mrf.mxu0
    %v11133 = vadd.f32 %v10514, %v11132
    %11134 = vmatmul.bf16.gmra.mxu0 %v10867
    %v11135 = vpop.f32.mrf.mxu0
    %v11136 = vadd.f32 %v10516, %v11135
    %v11137 = vpop.f32.mrf.mxu0
    %v11138 = vadd.f32 %v10518, %v11137
    %11139 = vmatmul.bf16.gmra.mxu0 %v10870
    %v11140 = vpop.f32.mrf.mxu0
    %v11141 = vadd.f32 %v10520, %v11140
    %v11142 = vpop.f32.mrf.mxu0
    %v11143 = vadd.f32 %v10522, %v11142
    %11144 = vmatmul.bf16.gmra.mxu0 %v10873
    %v11145 = vpop.f32.mrf.mxu0
    %v11146 = vadd.f32 %v10524, %v11145
    %v11147 = vpop.f32.mrf.mxu0
    %v11148 = vadd.f32 %v10526, %v11147
    %11149 = vmatmul.bf16.gmra.mxu0 %v10876
    %v11150 = vpop.f32.mrf.mxu0
    %v11151 = vadd.f32 %v10528, %v11150
    %v11152 = vpop.f32.mrf.mxu0
    %v11153 = vadd.f32 %v10530, %v11152
    %11154 = vmatmul.bf16.gmra.mxu0 %v10879
    %v11155 = vpop.f32.mrf.mxu0
    %v11156 = vadd.f32 %v10532, %v11155
    %v11157 = vpop.f32.mrf.mxu0
    %v11158 = vadd.f32 %v10534, %v11157
    %11159 = vmatmul.bf16.gmra.mxu0 %v10882
    %v11160 = vpop.f32.mrf.mxu0
    %v11161 = vadd.f32 %v10536, %v11160
    %v11162 = vpop.f32.mrf.mxu0
    %v11163 = vadd.f32 %v10538, %v11162
    %11164 = vmatmul.bf16.gmra.mxu0 %v10885
    %v11165 = vpop.f32.mrf.mxu0
    %v11166 = vadd.f32 %v10540, %v11165
    %v11167 = vpop.f32.mrf.mxu0
    %v11168 = vadd.f32 %v10542, %v11167
    %11169 = vmatmul.bf16.gmra.mxu0 %v10888
    %v11170 = vpop.f32.mrf.mxu0
    %v11171 = vadd.f32 %v10544, %v11170
    %v11172 = vpop.f32.mrf.mxu0
    %v11173 = vadd.f32 %v10546, %v11172
    %11174 = vmatmul.bf16.gmra.mxu0 %v10891
    %v11175 = vpop.f32.mrf.mxu0
    %v11176 = vadd.f32 %v10548, %v11175
    %v11177 = vpop.f32.mrf.mxu0
    %v11178 = vadd.f32 %v10550, %v11177
    %11179 = vmatmul.bf16.gmra.mxu0 %v10894
    %v11180 = vpop.f32.mrf.mxu0
    %v11181 = vadd.f32 %v10552, %v11180
    %v11182 = vpop.f32.mrf.mxu0
    %v11183 = vadd.f32 %v10554, %v11182
    %11184 = vmatmul.bf16.gmra.mxu0 %v10897
    %v11185 = vpop.f32.mrf.mxu0
    %v11186 = vadd.f32 %v10556, %v11185
    %v11187 = vpop.f32.mrf.mxu0
    %v11188 = vadd.f32 %v10558, %v11187
    %11189 = vmatmul.bf16.gmra.mxu0 %v10900
    %v11190 = vpop.f32.mrf.mxu0
    %v11191 = vadd.f32 %v10560, %v11190
    %v11192 = vpop.f32.mrf.mxu0
    %v11193 = vadd.f32 %v10562, %v11192
    %11194 = vmatmul.bf16.gmra.mxu0 %v10903
    %v11195 = vpop.f32.mrf.mxu0
    %v11196 = vadd.f32 %v10564, %v11195
    %v11197 = vpop.f32.mrf.mxu0
    %v11198 = vadd.f32 %v10566, %v11197
    %11199 = vmatmul.bf16.gmra.mxu0 %v10906
    %v11200 = vpop.f32.mrf.mxu0
    %v11201 = vadd.f32 %v10568, %v11200
    %v11202 = vpop.f32.mrf.mxu0
    %v11203 = vadd.f32 %v10570, %v11202
    %11204 = vmatmul.bf16.gmra.mxu0 %v10909
    %v11205 = vpop.f32.mrf.mxu0
    %v11206 = vadd.f32 %v10572, %v11205
    %v11207 = vpop.f32.mrf.mxu0
    %v11208 = vadd.f32 %v10574, %v11207
    %11209 = vmatmul.bf16.gmra.mxu0 %v10912
    %v11210 = vpop.f32.mrf.mxu0
    %v11211 = vadd.f32 %v10576, %v11210
    %v11212 = vpop.f32.mrf.mxu0
    %v11213 = vadd.f32 %v10578, %v11212
    %11214 = vmatmul.bf16.gmra.mxu0 %v10915
    %v11215 = vpop.f32.mrf.mxu0
    %v11216 = vadd.f32 %v10580, %v11215
    %v11217 = vpop.f32.mrf.mxu0
    %v11218 = vadd.f32 %v10582, %v11217
    %11219 = vmatmul.bf16.gmra.mxu0 %v10918
    %v11220 = vpop.f32.mrf.mxu0
    %v11221 = vadd.f32 %v10584, %v11220
    %v11222 = vpop.f32.mrf.mxu0
    %v11223 = vadd.f32 %v10586, %v11222
    %11224 = vmatmul.bf16.gmra.mxu0 %v10921
    %v11225 = vpop.f32.mrf.mxu0
    %v11226 = vadd.f32 %v10588, %v11225
    %v11227 = vpop.f32.mrf.mxu0
    %v11228 = vadd.f32 %v10590, %v11227
    %11229 = vmatmul.bf16.gmra.mxu0 %v10924
    %v11230 = vpop.f32.mrf.mxu0
    %v11231 = vadd.f32 %v10592, %v11230
    %v11232 = vpop.f32.mrf.mxu0
    %v11233 = vadd.f32 %v10594, %v11232
    %11234 = vmatmul.bf16.gmra.mxu0 %v10927
    %v11235 = vpop.f32.mrf.mxu0
    %v11236 = vadd.f32 %v10596, %v11235
    %v11237 = vpop.f32.mrf.mxu0
    %v11238 = vadd.f32 %v10598, %v11237
    %11239 = vmatmul.bf16.gmra.mxu0 %v10930
    %v11240 = vpop.f32.mrf.mxu0
    %v11241 = vadd.f32 %v10600, %v11240
    %v11242 = vpop.f32.mrf.mxu0
    %v11243 = vadd.f32 %v10602, %v11242
    %11244 = vmatmul.bf16.gmra.mxu0 %v10933
    %v11245 = vpop.f32.mrf.mxu0
    %v11246 = vadd.f32 %v10604, %v11245
    %v11247 = vpop.f32.mrf.mxu0
    %v11248 = vadd.f32 %v10606, %v11247
    %11249 = vmatmul.bf16.gmra.mxu0 %v10936
    %v11250 = vpop.f32.mrf.mxu0
    %v11251 = vadd.f32 %v10608, %v11250
    %v11252 = vpop.f32.mrf.mxu0
    %v11253 = vadd.f32 %v10610, %v11252
    %11254 = vmatmul.bf16.gmra.mxu0 %v10939
    %v11255 = vpop.f32.mrf.mxu0
    %v11256 = vadd.f32 %v10612, %v11255
    %v11257 = vpop.f32.mrf.mxu0
    %v11258 = vadd.f32 %v10614, %v11257
    %11259 = vmatmul.bf16.gmra.mxu0 %v10942
    %v11260 = vpop.f32.mrf.mxu0
    %v11261 = vadd.f32 %v10616, %v11260
    %v11262 = vpop.f32.mrf.mxu0
    %v11263 = vadd.f32 %v10618, %v11262
    %11264 = vmatmul.bf16.gmra.mxu0 %v10945
    %v11265 = vpop.f32.mrf.mxu0
    %v11266 = vadd.f32 %v10620, %v11265
    %v11267 = vpop.f32.mrf.mxu0
    %v11268 = vadd.f32 %v10622, %v11267
    %11269 = vmatmul.bf16.gmra.mxu0 %v10948
    %v11270 = vpop.f32.mrf.mxu0
    %v11271 = vadd.f32 %v10624, %v11270
    %v11272 = vpop.f32.mrf.mxu0
    %v11273 = vadd.f32 %v10626, %v11272
    %11274 = vmatmul.bf16.gmra.mxu0 %v10951
    %v11275 = vpop.f32.mrf.mxu0
    %v11276 = vadd.f32 %v10628, %v11275
    %v11277 = vpop.f32.mrf.mxu0
    %v11278 = vadd.f32 %v10630, %v11277
    %11279 = vmatmul.bf16.gmra.mxu0 %v10954
    %v11280 = vpop.f32.mrf.mxu0
    %v11281 = vadd.f32 %v10632, %v11280
    %v11282 = vpop.f32.mrf.mxu0
    %v11283 = vadd.f32 %v10634, %v11282
    %11284 = vdwg.mxu0
    %v11285 = vmul.f32 %v10966, 0.01
    %v11286 = vmul.f32 %v10968, 0.01
    %v11287 = vmul.f32 %v10971, 0.01
    %v11288 = vmul.f32 %v10973, 0.01
    %v11289 = vmul.f32 %v10976, 0.01
    %v11290 = vmul.f32 %v10978, 0.01
    %v11291 = vmul.f32 %v10981, 0.01
    %v11292 = vmul.f32 %v10983, 0.01
    %v11293 = vmul.f32 %v10986, 0.01
    %v11294 = vmul.f32 %v10988, 0.01
    %v11295 = vmul.f32 %v10991, 0.01
    %v11296 = vmul.f32 %v10993, 0.01
    %v11297 = vmul.f32 %v10996, 0.01
    %v11298 = vmul.f32 %v10998, 0.01
    %v11299 = vmul.f32 %v11001, 0.01
    %v11300 = vmul.f32 %v11003, 0.01
    %v11301 = vmul.f32 %v11006, 0.01
    %v11302 = vmul.f32 %v11008, 0.01
    %v11303 = vmul.f32 %v11011, 0.01
    %v11304 = vmul.f32 %v11013, 0.01
    %v11305 = vmul.f32 %v11016, 0.01
    %v11306 = vmul.f32 %v11018, 0.01
    %v11307 = vmul.f32 %v11021, 0.01
    %v11308 = vmul.f32 %v11023, 0.01
    %v11309 = vmul.f32 %v11026, 0.01
    %v11310 = vmul.f32 %v11028, 0.01
    %v11311 = vmul.f32 %v11031, 0.01
    %v11312 = vmul.f32 %v11033, 0.01
    %v11313 = vmul.f32 %v11036, 0.01
    %v11314 = vmul.f32 %v11038, 0.01
    %v11315 = vmul.f32 %v11041, 0.01
    %v11316 = vmul.f32 %v11043, 0.01
    %v11317 = vmul.f32 %v11046, 0.01
    %v11318 = vmul.f32 %v11048, 0.01
    %v11319 = vmul.f32 %v11051, 0.01
    %v11320 = vmul.f32 %v11053, 0.01
    %v11321 = vmul.f32 %v11056, 0.01
    %v11322 = vmul.f32 %v11058, 0.01
    %v11323 = vmul.f32 %v11061, 0.01
    %v11324 = vmul.f32 %v11063, 0.01
    %v11325 = vmul.f32 %v11066, 0.01
    %v11326 = vmul.f32 %v11068, 0.01
    %v11327 = vmul.f32 %v11071, 0.01
    %v11328 = vmul.f32 %v11073, 0.01
    %v11329 = vmul.f32 %v11076, 0.01
    %v11330 = vmul.f32 %v11078, 0.01
    %v11331 = vmul.f32 %v11081, 0.01
    %v11332 = vmul.f32 %v11083, 0.01
    %v11333 = vmul.f32 %v11086, 0.01
    %v11334 = vmul.f32 %v11088, 0.01
    %v11335 = vmul.f32 %v11091, 0.01
    %v11336 = vmul.f32 %v11093, 0.01
    %v11337 = vmul.f32 %v11096, 0.01
    %v11338 = vmul.f32 %v11098, 0.01
    %v11339 = vmul.f32 %v11101, 0.01
    %v11340 = vmul.f32 %v11103, 0.01
    %v11341 = vmul.f32 %v11106, 0.01
    %v11342 = vmul.f32 %v11108, 0.01
    %v11343 = vmul.f32 %v11111, 0.01
    %v11344 = vmul.f32 %v11113, 0.01
    %v11345 = vmul.f32 %v11116, 0.01
    %v11346 = vmul.f32 %v11118, 0.01
    %v11347 = vmul.f32 %v11121, 0.01
    %v11348 = vmul.f32 %v11123, 0.01
    %v11349 = vmul.f32 %v11126, 0.01
    %v11350 = vmul.f32 %v11128, 0.01
    %v11351 = vmul.f32 %v11131, 0.01
    %v11352 = vmul.f32 %v11133, 0.01
    %v11353 = vmul.f32 %v11136, 0.01
    %v11354 = vmul.f32 %v11138, 0.01
    %v11355 = vmul.f32 %v11141, 0.01
    %v11356 = vmul.f32 %v11143, 0.01
    %v11357 = vmul.f32 %v11146, 0.01
    %v11358 = vmul.f32 %v11148, 0.01
    %v11359 = vmul.f32 %v11151, 0.01
    %v11360 = vmul.f32 %v11153, 0.01
    %v11361 = vmul.f32 %v11156, 0.01
    %v11362 = vmul.f32 %v11158, 0.01
    %v11363 = vmul.f32 %v11161, 0.01
    %v11364 = vmul.f32 %v11163, 0.01
    %v11365 = vmul.f32 %v11166, 0.01
    %v11366 = vmul.f32 %v11168, 0.01
    %v11367 = vmul.f32 %v11171, 0.01
    %v11368 = vmul.f32 %v11173, 0.01
    %v11369 = vmul.f32 %v11176, 0.01
    %v11370 = vmul.f32 %v11178, 0.01
    %v11371 = vmul.f32 %v11181, 0.01
    %v11372 = vmul.f32 %v11183, 0.01
    %v11373 = vmul.f32 %v11186, 0.01
    %v11374 = vmul.f32 %v11188, 0.01
    %v11375 = vmul.f32 %v11191, 0.01
    %v11376 = vmul.f32 %v11193, 0.01
    %v11377 = vmul.f32 %v11196, 0.01
    %v11378 = vmul.f32 %v11198, 0.01
    %v11379 = vmul.f32 %v11201, 0.01
    %v11380 = vmul.f32 %v11203, 0.01
    %v11381 = vmul.f32 %v11206, 0.01
    %v11382 = vmul.f32 %v11208, 0.01
    %v11383 = vmul.f32 %v11211, 0.01
    %v11384 = vmul.f32 %v11213, 0.01
    %v11385 = vmul.f32 %v11216, 0.01
    %v11386 = vmul.f32 %v11218, 0.01
    %v11387 = vmul.f32 %v11221, 0.01
    %v11388 = vmul.f32 %v11223, 0.01
    %v11389 = vmul.f32 %v11226, 0.01
    %v11390 = vmul.f32 %v11228, 0.01
    %v11391 = vmul.f32 %v11231, 0.01
    %v11392 = vmul.f32 %v11233, 0.01
    %v11393 = vmul.f32 %v11236, 0.01
    %v11394 = vmul.f32 %v11238, 0.01
    %v11395 = vmul.f32 %v11241, 0.01
    %v11396 = vmul.f32 %v11243, 0.01
    %v11397 = vmul.f32 %v11246, 0.01
    %v11398 = vmul.f32 %v11248, 0.01
    %v11399 = vmul.f32 %v11251, 0.01
    %v11400 = vmul.f32 %v11253, 0.01
    %v11401 = vmul.f32 %v11256, 0.01
    %v11402 = vmul.f32 %v11258, 0.01
    %v11403 = vmul.f32 %v11261, 0.01
    %v11404 = vmul.f32 %v11263, 0.01
    %v11405 = vmul.f32 %v11266, 0.01
    %v11406 = vmul.f32 %v11268, 0.01
    %v11407 = vmul.f32 %v11271, 0.01
    %v11408 = vmul.f32 %v11273, 0.01
    %v11409 = vmul.f32 %v11276, 0.01
    %v11410 = vmul.f32 %v11278, 0.01
    %v11411 = vmul.f32 %v11281, 0.01
    %v11412 = vmul.f32 %v11283, 0.01
    %v11413 = vmax.f32 %v10966, %v11285
    %v11414 = vmax.f32 %v10968, %v11286
    %v11415 = vmax.f32 %v10971, %v11287
    %v11416 = vmax.f32 %v10973, %v11288
    %v11417 = vmax.f32 %v10976, %v11289
    %v11418 = vmax.f32 %v10978, %v11290
    %v11419 = vmax.f32 %v10981, %v11291
    %v11420 = vmax.f32 %v10983, %v11292
    %v11421 = vmax.f32 %v10986, %v11293
    %v11422 = vmax.f32 %v10988, %v11294
    %v11423 = vmax.f32 %v10991, %v11295
    %v11424 = vmax.f32 %v10993, %v11296
    %v11425 = vmax.f32 %v10996, %v11297
    %v11426 = vmax.f32 %v10998, %v11298
    %v11427 = vmax.f32 %v11001, %v11299
    %v11428 = vmax.f32 %v11003, %v11300
    %v11429 = vmax.f32 %v11006, %v11301
    %v11430 = vmax.f32 %v11008, %v11302
    %v11431 = vmax.f32 %v11011, %v11303
    %v11432 = vmax.f32 %v11013, %v11304
    %v11433 = vmax.f32 %v11016, %v11305
    %v11434 = vmax.f32 %v11018, %v11306
    %v11435 = vmax.f32 %v11021, %v11307
    %v11436 = vmax.f32 %v11023, %v11308
    %v11437 = vmax.f32 %v11026, %v11309
    %v11438 = vmax.f32 %v11028, %v11310
    %v11439 = vmax.f32 %v11031, %v11311
    %v11440 = vmax.f32 %v11033, %v11312
    %v11441 = vmax.f32 %v11036, %v11313
    %v11442 = vmax.f32 %v11038, %v11314
    %v11443 = vmax.f32 %v11041, %v11315
    %v11444 = vmax.f32 %v11043, %v11316
    %v11445 = vmax.f32 %v11046, %v11317
    %v11446 = vmax.f32 %v11048, %v11318
    %v11447 = vmax.f32 %v11051, %v11319
    %v11448 = vmax.f32 %v11053, %v11320
    %v11449 = vmax.f32 %v11056, %v11321
    %v11450 = vmax.f32 %v11058, %v11322
    %v11451 = vmax.f32 %v11061, %v11323
    %v11452 = vmax.f32 %v11063, %v11324
    %v11453 = vmax.f32 %v11066, %v11325
    %v11454 = vmax.f32 %v11068, %v11326
    %v11455 = vmax.f32 %v11071, %v11327
    %v11456 = vmax.f32 %v11073, %v11328
    %v11457 = vmax.f32 %v11076, %v11329
    %v11458 = vmax.f32 %v11078, %v11330
    %v11459 = vmax.f32 %v11081, %v11331
    %v11460 = vmax.f32 %v11083, %v11332
    %v11461 = vmax.f32 %v11086, %v11333
    %v11462 = vmax.f32 %v11088, %v11334
    %v11463 = vmax.f32 %v11091, %v11335
    %v11464 = vmax.f32 %v11093, %v11336
    %v11465 = vmax.f32 %v11096, %v11337
    %v11466 = vmax.f32 %v11098, %v11338
    %v11467 = vmax.f32 %v11101, %v11339
    %v11468 = vmax.f32 %v11103, %v11340
    %v11469 = vmax.f32 %v11106, %v11341
    %v11470 = vmax.f32 %v11108, %v11342
    %v11471 = vmax.f32 %v11111, %v11343
    %v11472 = vmax.f32 %v11113, %v11344
    %v11473 = vmax.f32 %v11116, %v11345
    %v11474 = vmax.f32 %v11118, %v11346
    %v11475 = vmax.f32 %v11121, %v11347
    %v11476 = vmax.f32 %v11123, %v11348
    %v11477 = vmax.f32 %v11126, %v11349
    %v11478 = vmax.f32 %v11128, %v11350
    %v11479 = vmax.f32 %v11131, %v11351
    %v11480 = vmax.f32 %v11133, %v11352
    %v11481 = vmax.f32 %v11136, %v11353
    %v11482 = vmax.f32 %v11138, %v11354
    %v11483 = vmax.f32 %v11141, %v11355
    %v11484 = vmax.f32 %v11143, %v11356
    %v11485 = vmax.f32 %v11146, %v11357
    %v11486 = vmax.f32 %v11148, %v11358
    %v11487 = vmax.f32 %v11151, %v11359
    %v11488 = vmax.f32 %v11153, %v11360
    %v11489 = vmax.f32 %v11156, %v11361
    %v11490 = vmax.f32 %v11158, %v11362
    %v11491 = vmax.f32 %v11161, %v11363
    %v11492 = vmax.f32 %v11163, %v11364
    %v11493 = vmax.f32 %v11166, %v11365
    %v11494 = vmax.f32 %v11168, %v11366
    %v11495 = vmax.f32 %v11171, %v11367
    %v11496 = vmax.f32 %v11173, %v11368
    %v11497 = vmax.f32 %v11176, %v11369
    %v11498 = vmax.f32 %v11178, %v11370
    %v11499 = vmax.f32 %v11181, %v11371
    %v11500 = vmax.f32 %v11183, %v11372
    %v11501 = vmax.f32 %v11186, %v11373
    %v11502 = vmax.f32 %v11188, %v11374
    %v11503 = vmax.f32 %v11191, %v11375
    %v11504 = vmax.f32 %v11193, %v11376
    %v11505 = vmax.f32 %v11196, %v11377
    %v11506 = vmax.f32 %v11198, %v11378
    %v11507 = vmax.f32 %v11201, %v11379
    %v11508 = vmax.f32 %v11203, %v11380
    %v11509 = vmax.f32 %v11206, %v11381
    %v11510 = vmax.f32 %v11208, %v11382
    %v11511 = vmax.f32 %v11211, %v11383
    %v11512 = vmax.f32 %v11213, %v11384
    %v11513 = vmax.f32 %v11216, %v11385
    %v11514 = vmax.f32 %v11218, %v11386
    %v11515 = vmax.f32 %v11221, %v11387
    %v11516 = vmax.f32 %v11223, %v11388
    %v11517 = vmax.f32 %v11226, %v11389
    %v11518 = vmax.f32 %v11228, %v11390
    %v11519 = vmax.f32 %v11231, %v11391
    %v11520 = vmax.f32 %v11233, %v11392
    %v11521 = vmax.f32 %v11236, %v11393
    %v11522 = vmax.f32 %v11238, %v11394
    %v11523 = vmax.f32 %v11241, %v11395
    %v11524 = vmax.f32 %v11243, %v11396
    %v11525 = vmax.f32 %v11246, %v11397
    %v11526 = vmax.f32 %v11248, %v11398
    %v11527 = vmax.f32 %v11251, %v11399
    %v11528 = vmax.f32 %v11253, %v11400
    %v11529 = vmax.f32 %v11256, %v11401
    %v11530 = vmax.f32 %v11258, %v11402
    %v11531 = vmax.f32 %v11261, %v11403
    %v11532 = vmax.f32 %v11263, %v11404
    %v11533 = vmax.f32 %v11266, %v11405
    %v11534 = vmax.f32 %v11268, %v11406
    %v11535 = vmax.f32 %v11271, %v11407
    %v11536 = vmax.f32 %v11273, %v11408
    %v11537 = vmax.f32 %v11276, %v11409
    %v11538 = vmax.f32 %v11278, %v11410
    %v11539 = vmax.f32 %v11281, %v11411
    %v11540 = vmax.f32 %v11283, %v11412
    %v11541 = vpack.c.bf16 %v11414, %v11413
    %v11542 = vpack.c.bf16 %v11416, %v11415
    %v11543 = vpack.c.bf16 %v11418, %v11417
    %v11544 = vpack.c.bf16 %v11420, %v11419
    %v11545 = vpack.c.bf16 %v11422, %v11421
    %v11546 = vpack.c.bf16 %v11424, %v11423
    %v11547 = vpack.c.bf16 %v11426, %v11425
    %v11548 = vpack.c.bf16 %v11428, %v11427
    %v11549 = vpack.c.bf16 %v11430, %v11429
    %v11550 = vpack.c.bf16 %v11432, %v11431
    %v11551 = vpack.c.bf16 %v11434, %v11433
    %v11552 = vpack.c.bf16 %v11436, %v11435
    %v11553 = vpack.c.bf16 %v11438, %v11437
    %v11554 = vpack.c.bf16 %v11440, %v11439
    %v11555 = vpack.c.bf16 %v11442, %v11441
    %v11556 = vpack.c.bf16 %v11444, %v11443
    %v11557 = vpack.c.bf16 %v11446, %v11445
    %v11558 = vpack.c.bf16 %v11448, %v11447
    %v11559 = vpack.c.bf16 %v11450, %v11449
    %v11560 = vpack.c.bf16 %v11452, %v11451
    %v11561 = vpack.c.bf16 %v11454, %v11453
    %v11562 = vpack.c.bf16 %v11456, %v11455
    %v11563 = vpack.c.bf16 %v11458, %v11457
    %v11564 = vpack.c.bf16 %v11460, %v11459
    %v11565 = vpack.c.bf16 %v11462, %v11461
    %v11566 = vpack.c.bf16 %v11464, %v11463
    %v11567 = vpack.c.bf16 %v11466, %v11465
    %v11568 = vpack.c.bf16 %v11468, %v11467
    %v11569 = vpack.c.bf16 %v11470, %v11469
    %v11570 = vpack.c.bf16 %v11472, %v11471
    %v11571 = vpack.c.bf16 %v11474, %v11473
    %v11572 = vpack.c.bf16 %v11476, %v11475
    %v11573 = vpack.c.bf16 %v11478, %v11477
    %v11574 = vpack.c.bf16 %v11480, %v11479
    %v11575 = vpack.c.bf16 %v11482, %v11481
    %v11576 = vpack.c.bf16 %v11484, %v11483
    %v11577 = vpack.c.bf16 %v11486, %v11485
    %v11578 = vpack.c.bf16 %v11488, %v11487
    %v11579 = vpack.c.bf16 %v11490, %v11489
    %v11580 = vpack.c.bf16 %v11492, %v11491
    %v11581 = vpack.c.bf16 %v11494, %v11493
    %v11582 = vpack.c.bf16 %v11496, %v11495
    %v11583 = vpack.c.bf16 %v11498, %v11497
    %v11584 = vpack.c.bf16 %v11500, %v11499
    %v11585 = vpack.c.bf16 %v11502, %v11501
    %v11586 = vpack.c.bf16 %v11504, %v11503
    %v11587 = vpack.c.bf16 %v11506, %v11505
    %v11588 = vpack.c.bf16 %v11508, %v11507
    %v11589 = vpack.c.bf16 %v11510, %v11509
    %v11590 = vpack.c.bf16 %v11512, %v11511
    %v11591 = vpack.c.bf16 %v11514, %v11513
    %v11592 = vpack.c.bf16 %v11516, %v11515
    %v11593 = vpack.c.bf16 %v11518, %v11517
    %v11594 = vpack.c.bf16 %v11520, %v11519
    %v11595 = vpack.c.bf16 %v11522, %v11521
    %v11596 = vpack.c.bf16 %v11524, %v11523
    %v11597 = vpack.c.bf16 %v11526, %v11525
    %v11598 = vpack.c.bf16 %v11528, %v11527
    %v11599 = vpack.c.bf16 %v11530, %v11529
    %v11600 = vpack.c.bf16 %v11532, %v11531
    %v11601 = vpack.c.bf16 %v11534, %v11533
    %v11602 = vpack.c.bf16 %v11536, %v11535
    %v11603 = vpack.c.bf16 %v11538, %v11537
    %v11604 = vpack.c.bf16 %v11540, %v11539
    %v11605 = vld [vmem:[%s6] sm:$0xf]
    %v11606 = vld [vmem:[%s6 + $0x4] sm:$0xf]
    %v11607 = vld [vmem:[%s6 + $0x8] sm:$0xf]
    %v11608 = vld [vmem:[%s6 + $0xc] sm:$0xf]
    %v11609 = vld [vmem:[%s7] sm:$0x1]
    %v11611 = vperm.slane %v11609, 0
    %v11617 = vunpack.c.l.b16 %v11605
    %v11618 = vunpack.c.l.b16 %v11606
    %v11619 = vunpack.c.l.b16 %v11607
    %v11620 = vunpack.c.l.b16 %v11608
    %v11621 = vpack.c.b16 %v11618, %v11617
    %v11622 = vpack.c.b16 %v11620, %v11619
    %vm11625 = vcmask 261120
    %v11627 = vsel %vm11625, %v11541, 0
    %v11630 = vsel %vm11625, %v11542, 0
    %v11633 = vsel %vm11625, %v11543, 0
    %v11636 = vsel %vm11625, %v11544, 0
    %v11639 = vsel %vm11625, %v11545, 0
    %v11642 = vsel %vm11625, %v11546, 0
    %v11645 = vsel %vm11625, %v11547, 0
    %v11648 = vsel %vm11625, %v11548, 0
    %v11651 = vsel %vm11625, %v11549, 0
    %v11654 = vsel %vm11625, %v11550, 0
    %v11657 = vsel %vm11625, %v11551, 0
    %v11660 = vsel %vm11625, %v11552, 0
    %v11663 = vsel %vm11625, %v11553, 0
    %v11666 = vsel %vm11625, %v11554, 0
    %v11669 = vsel %vm11625, %v11555, 0
    %v11672 = vsel %vm11625, %v11556, 0
    %v11675 = vsel %vm11625, %v11557, 0
    %v11678 = vsel %vm11625, %v11558, 0
    %v11681 = vsel %vm11625, %v11559, 0
    %v11684 = vsel %vm11625, %v11560, 0
    %v11687 = vsel %vm11625, %v11561, 0
    %v11690 = vsel %vm11625, %v11562, 0
    %v11693 = vsel %vm11625, %v11563, 0
    %v11696 = vsel %vm11625, %v11564, 0
    %v11699 = vsel %vm11625, %v11565, 0
    %v11702 = vsel %vm11625, %v11566, 0
    %v11705 = vsel %vm11625, %v11567, 0
    %v11708 = vsel %vm11625, %v11568, 0
    %v11711 = vsel %vm11625, %v11569, 0
    %v11714 = vsel %vm11625, %v11570, 0
    %v11717 = vsel %vm11625, %v11571, 0
    %v11720 = vsel %vm11625, %v11572, 0
    %v11723 = vsel %vm11625, %v11573, 0
    %v11726 = vsel %vm11625, %v11574, 0
    %v11729 = vsel %vm11625, %v11575, 0
    %v11732 = vsel %vm11625, %v11576, 0
    %v11735 = vsel %vm11625, %v11577, 0
    %v11738 = vsel %vm11625, %v11578, 0
    %v11741 = vsel %vm11625, %v11579, 0
    %v11744 = vsel %vm11625, %v11580, 0
    %v11747 = vsel %vm11625, %v11581, 0
    %v11750 = vsel %vm11625, %v11582, 0
    %v11753 = vsel %vm11625, %v11583, 0
    %v11756 = vsel %vm11625, %v11584, 0
    %v11759 = vsel %vm11625, %v11585, 0
    %v11762 = vsel %vm11625, %v11586, 0
    %v11765 = vsel %vm11625, %v11587, 0
    %v11768 = vsel %vm11625, %v11588, 0
    %v11771 = vsel %vm11625, %v11589, 0
    %v11774 = vsel %vm11625, %v11590, 0
    %v11777 = vsel %vm11625, %v11591, 0
    %v11780 = vsel %vm11625, %v11592, 0
    %v11783 = vsel %vm11625, %v11593, 0
    %v11786 = vsel %vm11625, %v11594, 0
    %v11789 = vsel %vm11625, %v11595, 0
    %v11792 = vsel %vm11625, %v11596, 0
    %v11795 = vsel %vm11625, %v11597, 0
    %v11798 = vsel %vm11625, %v11598, 0
    %v11801 = vsel %vm11625, %v11599, 0
    %v11804 = vsel %vm11625, %v11600, 0
    %v11807 = vsel %vm11625, %v11601, 0
    %v11810 = vsel %vm11625, %v11602, 0
    %v11813 = vsel %vm11625, %v11603, 0
    %v11816 = vsel %vm11625, %v11604, 0
    %11818 = vmatpush.bf16.msra.mxu0 0
    %11819 = vmatpush.bf16.msra.mxu0 0
    %11820 = vmatpush.bf16.msra.mxu0 0
    %11821 = vmatpush.bf16.msra.mxu0 0
    %11822 = vmatpush.bf16.msra.mxu0 0
    %11823 = vmatpush.bf16.msra.mxu0 0
    %11824 = vmatpush.bf16.msra.mxu0 %v11622
    %11825 = vmatpush.bf16.msra.mxu0 %v11621
    %11826 = vmatmul.bf16.gmra.mxu0 %v11627
    %v11827 = vpop.f32.mrf.mxu0
    %v11828 = vadd.f32 %v11611, %v11827
    %v11829 = vpop.f32.mrf.mxu0
    %v11830 = vadd.f32 %v11611, %v11829
    %11831 = vmatmul.bf16.gmra.mxu0 %v11630
    %v11832 = vpop.f32.mrf.mxu0
    %v11833 = vadd.f32 %v11611, %v11832
    %v11834 = vpop.f32.mrf.mxu0
    %v11835 = vadd.f32 %v11611, %v11834
    %11836 = vmatmul.bf16.gmra.mxu0 %v11633
    %v11837 = vpop.f32.mrf.mxu0
    %v11838 = vadd.f32 %v11611, %v11837
    %v11839 = vpop.f32.mrf.mxu0
    %v11840 = vadd.f32 %v11611, %v11839
    %11841 = vmatmul.bf16.gmra.mxu0 %v11636
    %v11842 = vpop.f32.mrf.mxu0
    %v11843 = vadd.f32 %v11611, %v11842
    %v11844 = vpop.f32.mrf.mxu0
    %v11845 = vadd.f32 %v11611, %v11844
    %11846 = vmatmul.bf16.gmra.mxu0 %v11639
    %v11847 = vpop.f32.mrf.mxu0
    %v11848 = vadd.f32 %v11611, %v11847
    %v11849 = vpop.f32.mrf.mxu0
    %v11850 = vadd.f32 %v11611, %v11849
    %11851 = vmatmul.bf16.gmra.mxu0 %v11642
    %v11852 = vpop.f32.mrf.mxu0
    %v11853 = vadd.f32 %v11611, %v11852
    %v11854 = vpop.f32.mrf.mxu0
    %v11855 = vadd.f32 %v11611, %v11854
    %11856 = vmatmul.bf16.gmra.mxu0 %v11645
    %v11857 = vpop.f32.mrf.mxu0
    %v11858 = vadd.f32 %v11611, %v11857
    %v11859 = vpop.f32.mrf.mxu0
    %v11860 = vadd.f32 %v11611, %v11859
    %11861 = vmatmul.bf16.gmra.mxu0 %v11648
    %v11862 = vpop.f32.mrf.mxu0
    %v11863 = vadd.f32 %v11611, %v11862
    %v11864 = vpop.f32.mrf.mxu0
    %v11865 = vadd.f32 %v11611, %v11864
    %11866 = vmatmul.bf16.gmra.mxu0 %v11651
    %v11867 = vpop.f32.mrf.mxu0
    %v11868 = vadd.f32 %v11611, %v11867
    %v11869 = vpop.f32.mrf.mxu0
    %v11870 = vadd.f32 %v11611, %v11869
    %11871 = vmatmul.bf16.gmra.mxu0 %v11654
    %v11872 = vpop.f32.mrf.mxu0
    %v11873 = vadd.f32 %v11611, %v11872
    %v11874 = vpop.f32.mrf.mxu0
    %v11875 = vadd.f32 %v11611, %v11874
    %11876 = vmatmul.bf16.gmra.mxu0 %v11657
    %v11877 = vpop.f32.mrf.mxu0
    %v11878 = vadd.f32 %v11611, %v11877
    %v11879 = vpop.f32.mrf.mxu0
    %v11880 = vadd.f32 %v11611, %v11879
    %11881 = vmatmul.bf16.gmra.mxu0 %v11660
    %v11882 = vpop.f32.mrf.mxu0
    %v11883 = vadd.f32 %v11611, %v11882
    %v11884 = vpop.f32.mrf.mxu0
    %v11885 = vadd.f32 %v11611, %v11884
    %11886 = vmatmul.bf16.gmra.mxu0 %v11663
    %v11887 = vpop.f32.mrf.mxu0
    %v11888 = vadd.f32 %v11611, %v11887
    %v11889 = vpop.f32.mrf.mxu0
    %v11890 = vadd.f32 %v11611, %v11889
    %11891 = vmatmul.bf16.gmra.mxu0 %v11666
    %v11892 = vpop.f32.mrf.mxu0
    %v11893 = vadd.f32 %v11611, %v11892
    %v11894 = vpop.f32.mrf.mxu0
    %v11895 = vadd.f32 %v11611, %v11894
    %11896 = vmatmul.bf16.gmra.mxu0 %v11669
    %v11897 = vpop.f32.mrf.mxu0
    %v11898 = vadd.f32 %v11611, %v11897
    %v11899 = vpop.f32.mrf.mxu0
    %v11900 = vadd.f32 %v11611, %v11899
    %11901 = vmatmul.bf16.gmra.mxu0 %v11672
    %v11902 = vpop.f32.mrf.mxu0
    %v11903 = vadd.f32 %v11611, %v11902
    %v11904 = vpop.f32.mrf.mxu0
    %v11905 = vadd.f32 %v11611, %v11904
    %11906 = vmatmul.bf16.gmra.mxu0 %v11675
    %v11907 = vpop.f32.mrf.mxu0
    %v11908 = vadd.f32 %v11611, %v11907
    %v11909 = vpop.f32.mrf.mxu0
    %v11910 = vadd.f32 %v11611, %v11909
    %11911 = vmatmul.bf16.gmra.mxu0 %v11678
    %v11912 = vpop.f32.mrf.mxu0
    %v11913 = vadd.f32 %v11611, %v11912
    %v11914 = vpop.f32.mrf.mxu0
    %v11915 = vadd.f32 %v11611, %v11914
    %11916 = vmatmul.bf16.gmra.mxu0 %v11681
    %v11917 = vpop.f32.mrf.mxu0
    %v11918 = vadd.f32 %v11611, %v11917
    %v11919 = vpop.f32.mrf.mxu0
    %v11920 = vadd.f32 %v11611, %v11919
    %11921 = vmatmul.bf16.gmra.mxu0 %v11684
    %v11922 = vpop.f32.mrf.mxu0
    %v11923 = vadd.f32 %v11611, %v11922
    %v11924 = vpop.f32.mrf.mxu0
    %v11925 = vadd.f32 %v11611, %v11924
    %11926 = vmatmul.bf16.gmra.mxu0 %v11687
    %v11927 = vpop.f32.mrf.mxu0
    %v11928 = vadd.f32 %v11611, %v11927
    %v11929 = vpop.f32.mrf.mxu0
    %v11930 = vadd.f32 %v11611, %v11929
    %11931 = vmatmul.bf16.gmra.mxu0 %v11690
    %v11932 = vpop.f32.mrf.mxu0
    %v11933 = vadd.f32 %v11611, %v11932
    %v11934 = vpop.f32.mrf.mxu0
    %v11935 = vadd.f32 %v11611, %v11934
    %11936 = vmatmul.bf16.gmra.mxu0 %v11693
    %v11937 = vpop.f32.mrf.mxu0
    %v11938 = vadd.f32 %v11611, %v11937
    %v11939 = vpop.f32.mrf.mxu0
    %v11940 = vadd.f32 %v11611, %v11939
    %11941 = vmatmul.bf16.gmra.mxu0 %v11696
    %v11942 = vpop.f32.mrf.mxu0
    %v11943 = vadd.f32 %v11611, %v11942
    %v11944 = vpop.f32.mrf.mxu0
    %v11945 = vadd.f32 %v11611, %v11944
    %11946 = vmatmul.bf16.gmra.mxu0 %v11699
    %v11947 = vpop.f32.mrf.mxu0
    %v11948 = vadd.f32 %v11611, %v11947
    %v11949 = vpop.f32.mrf.mxu0
    %v11950 = vadd.f32 %v11611, %v11949
    %11951 = vmatmul.bf16.gmra.mxu0 %v11702
    %v11952 = vpop.f32.mrf.mxu0
    %v11953 = vadd.f32 %v11611, %v11952
    %v11954 = vpop.f32.mrf.mxu0
    %v11955 = vadd.f32 %v11611, %v11954
    %11956 = vmatmul.bf16.gmra.mxu0 %v11705
    %v11957 = vpop.f32.mrf.mxu0
    %v11958 = vadd.f32 %v11611, %v11957
    %v11959 = vpop.f32.mrf.mxu0
    %v11960 = vadd.f32 %v11611, %v11959
    %11961 = vmatmul.bf16.gmra.mxu0 %v11708
    %v11962 = vpop.f32.mrf.mxu0
    %v11963 = vadd.f32 %v11611, %v11962
    %v11964 = vpop.f32.mrf.mxu0
    %v11965 = vadd.f32 %v11611, %v11964
    %11966 = vmatmul.bf16.gmra.mxu0 %v11711
    %v11967 = vpop.f32.mrf.mxu0
    %v11968 = vadd.f32 %v11611, %v11967
    %v11969 = vpop.f32.mrf.mxu0
    %v11970 = vadd.f32 %v11611, %v11969
    %11971 = vmatmul.bf16.gmra.mxu0 %v11714
    %v11972 = vpop.f32.mrf.mxu0
    %v11973 = vadd.f32 %v11611, %v11972
    %v11974 = vpop.f32.mrf.mxu0
    %v11975 = vadd.f32 %v11611, %v11974
    %11976 = vmatmul.bf16.gmra.mxu0 %v11717
    %v11977 = vpop.f32.mrf.mxu0
    %v11978 = vadd.f32 %v11611, %v11977
    %v11979 = vpop.f32.mrf.mxu0
    %v11980 = vadd.f32 %v11611, %v11979
    %11981 = vmatmul.bf16.gmra.mxu0 %v11720
    %v11982 = vpop.f32.mrf.mxu0
    %v11983 = vadd.f32 %v11611, %v11982
    %v11984 = vpop.f32.mrf.mxu0
    %v11985 = vadd.f32 %v11611, %v11984
    %11986 = vmatmul.bf16.gmra.mxu0 %v11723
    %v11987 = vpop.f32.mrf.mxu0
    %v11988 = vadd.f32 %v11611, %v11987
    %v11989 = vpop.f32.mrf.mxu0
    %v11990 = vadd.f32 %v11611, %v11989
    %11991 = vmatmul.bf16.gmra.mxu0 %v11726
    %v11992 = vpop.f32.mrf.mxu0
    %v11993 = vadd.f32 %v11611, %v11992
    %v11994 = vpop.f32.mrf.mxu0
    %v11995 = vadd.f32 %v11611, %v11994
    %11996 = vmatmul.bf16.gmra.mxu0 %v11729
    %v11997 = vpop.f32.mrf.mxu0
    %v11998 = vadd.f32 %v11611, %v11997
    %v11999 = vpop.f32.mrf.mxu0
    %v12000 = vadd.f32 %v11611, %v11999
    %12001 = vmatmul.bf16.gmra.mxu0 %v11732
    %v12002 = vpop.f32.mrf.mxu0
    %v12003 = vadd.f32 %v11611, %v12002
    %v12004 = vpop.f32.mrf.mxu0
    %v12005 = vadd.f32 %v11611, %v12004
    %12006 = vmatmul.bf16.gmra.mxu0 %v11735
    %v12007 = vpop.f32.mrf.mxu0
    %v12008 = vadd.f32 %v11611, %v12007
    %v12009 = vpop.f32.mrf.mxu0
    %v12010 = vadd.f32 %v11611, %v12009
    %12011 = vmatmul.bf16.gmra.mxu0 %v11738
    %v12012 = vpop.f32.mrf.mxu0
    %v12013 = vadd.f32 %v11611, %v12012
    %v12014 = vpop.f32.mrf.mxu0
    %v12015 = vadd.f32 %v11611, %v12014
    %12016 = vmatmul.bf16.gmra.mxu0 %v11741
    %v12017 = vpop.f32.mrf.mxu0
    %v12018 = vadd.f32 %v11611, %v12017
    %v12019 = vpop.f32.mrf.mxu0
    %v12020 = vadd.f32 %v11611, %v12019
    %12021 = vmatmul.bf16.gmra.mxu0 %v11744
    %v12022 = vpop.f32.mrf.mxu0
    %v12023 = vadd.f32 %v11611, %v12022
    %v12024 = vpop.f32.mrf.mxu0
    %v12025 = vadd.f32 %v11611, %v12024
    %12026 = vmatmul.bf16.gmra.mxu0 %v11747
    %v12027 = vpop.f32.mrf.mxu0
    %v12028 = vadd.f32 %v11611, %v12027
    %v12029 = vpop.f32.mrf.mxu0
    %v12030 = vadd.f32 %v11611, %v12029
    %12031 = vmatmul.bf16.gmra.mxu0 %v11750
    %v12032 = vpop.f32.mrf.mxu0
    %v12033 = vadd.f32 %v11611, %v12032
    %v12034 = vpop.f32.mrf.mxu0
    %v12035 = vadd.f32 %v11611, %v12034
    %12036 = vmatmul.bf16.gmra.mxu0 %v11753
    %v12037 = vpop.f32.mrf.mxu0
    %v12038 = vadd.f32 %v11611, %v12037
    %v12039 = vpop.f32.mrf.mxu0
    %v12040 = vadd.f32 %v11611, %v12039
    %12041 = vmatmul.bf16.gmra.mxu0 %v11756
    %v12042 = vpop.f32.mrf.mxu0
    %v12043 = vadd.f32 %v11611, %v12042
    %v12044 = vpop.f32.mrf.mxu0
    %v12045 = vadd.f32 %v11611, %v12044
    %12046 = vmatmul.bf16.gmra.mxu0 %v11759
    %v12047 = vpop.f32.mrf.mxu0
    %v12048 = vadd.f32 %v11611, %v12047
    %v12049 = vpop.f32.mrf.mxu0
    %v12050 = vadd.f32 %v11611, %v12049
    %12051 = vmatmul.bf16.gmra.mxu0 %v11762
    %v12052 = vpop.f32.mrf.mxu0
    %v12053 = vadd.f32 %v11611, %v12052
    %v12054 = vpop.f32.mrf.mxu0
    %v12055 = vadd.f32 %v11611, %v12054
    %12056 = vmatmul.bf16.gmra.mxu0 %v11765
    %v12057 = vpop.f32.mrf.mxu0
    %v12058 = vadd.f32 %v11611, %v12057
    %v12059 = vpop.f32.mrf.mxu0
    %v12060 = vadd.f32 %v11611, %v12059
    %12061 = vmatmul.bf16.gmra.mxu0 %v11768
    %v12062 = vpop.f32.mrf.mxu0
    %v12063 = vadd.f32 %v11611, %v12062
    %v12064 = vpop.f32.mrf.mxu0
    %v12065 = vadd.f32 %v11611, %v12064
    %12066 = vmatmul.bf16.gmra.mxu0 %v11771
    %v12067 = vpop.f32.mrf.mxu0
    %v12068 = vadd.f32 %v11611, %v12067
    %v12069 = vpop.f32.mrf.mxu0
    %v12070 = vadd.f32 %v11611, %v12069
    %12071 = vmatmul.bf16.gmra.mxu0 %v11774
    %v12072 = vpop.f32.mrf.mxu0
    %v12073 = vadd.f32 %v11611, %v12072
    %v12074 = vpop.f32.mrf.mxu0
    %v12075 = vadd.f32 %v11611, %v12074
    %12076 = vmatmul.bf16.gmra.mxu0 %v11777
    %v12077 = vpop.f32.mrf.mxu0
    %v12078 = vadd.f32 %v11611, %v12077
    %v12079 = vpop.f32.mrf.mxu0
    %v12080 = vadd.f32 %v11611, %v12079
    %12081 = vmatmul.bf16.gmra.mxu0 %v11780
    %v12082 = vpop.f32.mrf.mxu0
    %v12083 = vadd.f32 %v11611, %v12082
    %v12084 = vpop.f32.mrf.mxu0
    %v12085 = vadd.f32 %v11611, %v12084
    %12086 = vmatmul.bf16.gmra.mxu0 %v11783
    %v12087 = vpop.f32.mrf.mxu0
    %v12088 = vadd.f32 %v11611, %v12087
    %v12089 = vpop.f32.mrf.mxu0
    %v12090 = vadd.f32 %v11611, %v12089
    %12091 = vmatmul.bf16.gmra.mxu0 %v11786
    %v12092 = vpop.f32.mrf.mxu0
    %v12093 = vadd.f32 %v11611, %v12092
    %v12094 = vpop.f32.mrf.mxu0
    %v12095 = vadd.f32 %v11611, %v12094
    %12096 = vmatmul.bf16.gmra.mxu0 %v11789
    %v12097 = vpop.f32.mrf.mxu0
    %v12098 = vadd.f32 %v11611, %v12097
    %v12099 = vpop.f32.mrf.mxu0
    %v12100 = vadd.f32 %v11611, %v12099
    %12101 = vmatmul.bf16.gmra.mxu0 %v11792
    %v12102 = vpop.f32.mrf.mxu0
    %v12103 = vadd.f32 %v11611, %v12102
    %v12104 = vpop.f32.mrf.mxu0
    %v12105 = vadd.f32 %v11611, %v12104
    %12106 = vmatmul.bf16.gmra.mxu0 %v11795
    %v12107 = vpop.f32.mrf.mxu0
    %v12108 = vadd.f32 %v11611, %v12107
    %v12109 = vpop.f32.mrf.mxu0
    %v12110 = vadd.f32 %v11611, %v12109
    %12111 = vmatmul.bf16.gmra.mxu0 %v11798
    %v12112 = vpop.f32.mrf.mxu0
    %v12113 = vadd.f32 %v11611, %v12112
    %v12114 = vpop.f32.mrf.mxu0
    %v12115 = vadd.f32 %v11611, %v12114
    %12116 = vmatmul.bf16.gmra.mxu0 %v11801
    %v12117 = vpop.f32.mrf.mxu0
    %v12118 = vadd.f32 %v11611, %v12117
    %v12119 = vpop.f32.mrf.mxu0
    %v12120 = vadd.f32 %v11611, %v12119
    %12121 = vmatmul.bf16.gmra.mxu0 %v11804
    %v12122 = vpop.f32.mrf.mxu0
    %v12123 = vadd.f32 %v11611, %v12122
    %v12124 = vpop.f32.mrf.mxu0
    %v12125 = vadd.f32 %v11611, %v12124
    %12126 = vmatmul.bf16.gmra.mxu0 %v11807
    %v12127 = vpop.f32.mrf.mxu0
    %v12128 = vadd.f32 %v11611, %v12127
    %v12129 = vpop.f32.mrf.mxu0
    %v12130 = vadd.f32 %v11611, %v12129
    %12131 = vmatmul.bf16.gmra.mxu0 %v11810
    %v12132 = vpop.f32.mrf.mxu0
    %v12133 = vadd.f32 %v11611, %v12132
    %v12134 = vpop.f32.mrf.mxu0
    %v12135 = vadd.f32 %v11611, %v12134
    %12136 = vmatmul.bf16.gmra.mxu0 %v11813
    %v12137 = vpop.f32.mrf.mxu0
    %v12138 = vadd.f32 %v11611, %v12137
    %v12139 = vpop.f32.mrf.mxu0
    %v12140 = vadd.f32 %v11611, %v12139
    %12141 = vmatmul.bf16.gmra.mxu0 %v11816
    %v12142 = vpop.f32.mrf.mxu0
    %v12143 = vadd.f32 %v11611, %v12142
    %v12144 = vpop.f32.mrf.mxu0
    %v12145 = vadd.f32 %v11611, %v12144
    %12146 = vdwg.mxu0
    %vm12147 = vcmask 31744
    %12148 = vst.msk [vmem:[%s8] sm:$0xff] %vm12147, %v11828
    %12149 = vst.msk [vmem:[%s8 + $0x8] sm:$0xff] %vm12147, %v11830
    %12150 = vst.msk [vmem:[%s8 + $0x10] sm:$0xff] %vm12147, %v11833
    %12151 = vst.msk [vmem:[%s8 + $0x18] sm:$0xff] %vm12147, %v11835
    %12152 = vst.msk [vmem:[%s8 + $0x20] sm:$0xff] %vm12147, %v11838
    %12153 = vst.msk [vmem:[%s8 + $0x28] sm:$0xff] %vm12147, %v11840
    %12154 = vst.msk [vmem:[%s8 + $0x30] sm:$0xff] %vm12147, %v11843
    %12155 = vst.msk [vmem:[%s8 + $0x38] sm:$0xff] %vm12147, %v11845
    %12156 = vst.msk [vmem:[%s8 + $0x40] sm:$0xff] %vm12147, %v11848
    %12157 = vst.msk [vmem:[%s8 + $0x48] sm:$0xff] %vm12147, %v11850
    %12158 = vst.msk [vmem:[%s8 + $0x50] sm:$0xff] %vm12147, %v11853
    %12159 = vst.msk [vmem:[%s8 + $0x58] sm:$0xff] %vm12147, %v11855
    %12160 = vst.msk [vmem:[%s8 + $0x60] sm:$0xff] %vm12147, %v11858
    %12161 = vst.msk [vmem:[%s8 + $0x68] sm:$0xff] %vm12147, %v11860
    %12162 = vst.msk [vmem:[%s8 + $0x70] sm:$0xff] %vm12147, %v11863
    %12163 = vst.msk [vmem:[%s8 + $0x78] sm:$0xff] %vm12147, %v11865
    %12164 = vst.msk [vmem:[%s8 + $0x80] sm:$0xff] %vm12147, %v11868
    %12165 = vst.msk [vmem:[%s8 + $0x88] sm:$0xff] %vm12147, %v11870
    %12166 = vst.msk [vmem:[%s8 + $0x90] sm:$0xff] %vm12147, %v11873
    %12167 = vst.msk [vmem:[%s8 + $0x98] sm:$0xff] %vm12147, %v11875
    %12168 = vst.msk [vmem:[%s8 + $0xa0] sm:$0xff] %vm12147, %v11878
    %12169 = vst.msk [vmem:[%s8 + $0xa8] sm:$0xff] %vm12147, %v11880
    %12170 = vst.msk [vmem:[%s8 + $0xb0] sm:$0xff] %vm12147, %v11883
    %12171 = vst.msk [vmem:[%s8 + $0xb8] sm:$0xff] %vm12147, %v11885
    %12172 = vst.msk [vmem:[%s8 + $0xc0] sm:$0xff] %vm12147, %v11888
    %12173 = vst.msk [vmem:[%s8 + $0xc8] sm:$0xff] %vm12147, %v11890
    %12174 = vst.msk [vmem:[%s8 + $0xd0] sm:$0xff] %vm12147, %v11893
    %12175 = vst.msk [vmem:[%s8 + $0xd8] sm:$0xff] %vm12147, %v11895
    %12176 = vst.msk [vmem:[%s8 + $0xe0] sm:$0xff] %vm12147, %v11898
    %12177 = vst.msk [vmem:[%s8 + $0xe8] sm:$0xff] %vm12147, %v11900
    %12178 = vst.msk [vmem:[%s8 + $0xf0] sm:$0xff] %vm12147, %v11903
    %12179 = vst.msk [vmem:[%s8 + $0xf8] sm:$0xff] %vm12147, %v11905
    %12180 = vst.msk [vmem:[%s8 + $0x100] sm:$0xff] %vm12147, %v11908
    %12181 = vst.msk [vmem:[%s8 + $0x108] sm:$0xff] %vm12147, %v11910
    %12182 = vst.msk [vmem:[%s8 + $0x110] sm:$0xff] %vm12147, %v11913
    %12183 = vst.msk [vmem:[%s8 + $0x118] sm:$0xff] %vm12147, %v11915
    %12184 = vst.msk [vmem:[%s8 + $0x120] sm:$0xff] %vm12147, %v11918
    %12185 = vst.msk [vmem:[%s8 + $0x128] sm:$0xff] %vm12147, %v11920
    %12186 = vst.msk [vmem:[%s8 + $0x130] sm:$0xff] %vm12147, %v11923
    %12187 = vst.msk [vmem:[%s8 + $0x138] sm:$0xff] %vm12147, %v11925
    %12188 = vst.msk [vmem:[%s8 + $0x140] sm:$0xff] %vm12147, %v11928
    %12189 = vst.msk [vmem:[%s8 + $0x148] sm:$0xff] %vm12147, %v11930
    %12190 = vst.msk [vmem:[%s8 + $0x150] sm:$0xff] %vm12147, %v11933
    %12191 = vst.msk [vmem:[%s8 + $0x158] sm:$0xff] %vm12147, %v11935
    %12192 = vst.msk [vmem:[%s8 + $0x160] sm:$0xff] %vm12147, %v11938
    %12193 = vst.msk [vmem:[%s8 + $0x168] sm:$0xff] %vm12147, %v11940
    %12194 = vst.msk [vmem:[%s8 + $0x170] sm:$0xff] %vm12147, %v11943
    %12195 = vst.msk [vmem:[%s8 + $0x178] sm:$0xff] %vm12147, %v11945
    %12196 = vst.msk [vmem:[%s8 + $0x180] sm:$0xff] %vm12147, %v11948
    %12197 = vst.msk [vmem:[%s8 + $0x188] sm:$0xff] %vm12147, %v11950
    %12198 = vst.msk [vmem:[%s8 + $0x190] sm:$0xff] %vm12147, %v11953
    %12199 = vst.msk [vmem:[%s8 + $0x198] sm:$0xff] %vm12147, %v11955
    %12200 = vst.msk [vmem:[%s8 + $0x1a0] sm:$0xff] %vm12147, %v11958
    %12201 = vst.msk [vmem:[%s8 + $0x1a8] sm:$0xff] %vm12147, %v11960
    %12202 = vst.msk [vmem:[%s8 + $0x1b0] sm:$0xff] %vm12147, %v11963
    %12203 = vst.msk [vmem:[%s8 + $0x1b8] sm:$0xff] %vm12147, %v11965
    %12204 = vst.msk [vmem:[%s8 + $0x1c0] sm:$0xff] %vm12147, %v11968
    %12205 = vst.msk [vmem:[%s8 + $0x1c8] sm:$0xff] %vm12147, %v11970
    %12206 = vst.msk [vmem:[%s8 + $0x1d0] sm:$0xff] %vm12147, %v11973
    %12207 = vst.msk [vmem:[%s8 + $0x1d8] sm:$0xff] %vm12147, %v11975
    %12208 = vst.msk [vmem:[%s8 + $0x1e0] sm:$0xff] %vm12147, %v11978
    %12209 = vst.msk [vmem:[%s8 + $0x1e8] sm:$0xff] %vm12147, %v11980
    %12210 = vst.msk [vmem:[%s8 + $0x1f0] sm:$0xff] %vm12147, %v11983
    %12211 = vst.msk [vmem:[%s8 + $0x1f8] sm:$0xff] %vm12147, %v11985
    %12212 = vst.msk [vmem:[%s8 + $0x200] sm:$0xff] %vm12147, %v11988
    %12213 = vst.msk [vmem:[%s8 + $0x208] sm:$0xff] %vm12147, %v11990
    %12214 = vst.msk [vmem:[%s8 + $0x210] sm:$0xff] %vm12147, %v11993
    %12215 = vst.msk [vmem:[%s8 + $0x218] sm:$0xff] %vm12147, %v11995
    %12216 = vst.msk [vmem:[%s8 + $0x220] sm:$0xff] %vm12147, %v11998
    %12217 = vst.msk [vmem:[%s8 + $0x228] sm:$0xff] %vm12147, %v12000
    %12218 = vst.msk [vmem:[%s8 + $0x230] sm:$0xff] %vm12147, %v12003
    %12219 = vst.msk [vmem:[%s8 + $0x238] sm:$0xff] %vm12147, %v12005
    %12220 = vst.msk [vmem:[%s8 + $0x240] sm:$0xff] %vm12147, %v12008
    %12221 = vst.msk [vmem:[%s8 + $0x248] sm:$0xff] %vm12147, %v12010
    %12222 = vst.msk [vmem:[%s8 + $0x250] sm:$0xff] %vm12147, %v12013
    %12223 = vst.msk [vmem:[%s8 + $0x258] sm:$0xff] %vm12147, %v12015
    %12224 = vst.msk [vmem:[%s8 + $0x260] sm:$0xff] %vm12147, %v12018
    %12225 = vst.msk [vmem:[%s8 + $0x268] sm:$0xff] %vm12147, %v12020
    %12226 = vst.msk [vmem:[%s8 + $0x270] sm:$0xff] %vm12147, %v12023
    %12227 = vst.msk [vmem:[%s8 + $0x278] sm:$0xff] %vm12147, %v12025
    %12228 = vst.msk [vmem:[%s8 + $0x280] sm:$0xff] %vm12147, %v12028
    %12229 = vst.msk [vmem:[%s8 + $0x288] sm:$0xff] %vm12147, %v12030
    %12230 = vst.msk [vmem:[%s8 + $0x290] sm:$0xff] %vm12147, %v12033
    %12231 = vst.msk [vmem:[%s8 + $0x298] sm:$0xff] %vm12147, %v12035
    %12232 = vst.msk [vmem:[%s8 + $0x2a0] sm:$0xff] %vm12147, %v12038
    %12233 = vst.msk [vmem:[%s8 + $0x2a8] sm:$0xff] %vm12147, %v12040
    %12234 = vst.msk [vmem:[%s8 + $0x2b0] sm:$0xff] %vm12147, %v12043
    %12235 = vst.msk [vmem:[%s8 + $0x2b8] sm:$0xff] %vm12147, %v12045
    %12236 = vst.msk [vmem:[%s8 + $0x2c0] sm:$0xff] %vm12147, %v12048
    %12237 = vst.msk [vmem:[%s8 + $0x2c8] sm:$0xff] %vm12147, %v12050
    %12238 = vst.msk [vmem:[%s8 + $0x2d0] sm:$0xff] %vm12147, %v12053
    %12239 = vst.msk [vmem:[%s8 + $0x2d8] sm:$0xff] %vm12147, %v12055
    %12240 = vst.msk [vmem:[%s8 + $0x2e0] sm:$0xff] %vm12147, %v12058
    %12241 = vst.msk [vmem:[%s8 + $0x2e8] sm:$0xff] %vm12147, %v12060
    %12242 = vst.msk [vmem:[%s8 + $0x2f0] sm:$0xff] %vm12147, %v12063
    %12243 = vst.msk [vmem:[%s8 + $0x2f8] sm:$0xff] %vm12147, %v12065
    %12244 = vst.msk [vmem:[%s8 + $0x300] sm:$0xff] %vm12147, %v12068
    %12245 = vst.msk [vmem:[%s8 + $0x308] sm:$0xff] %vm12147, %v12070
    %12246 = vst.msk [vmem:[%s8 + $0x310] sm:$0xff] %vm12147, %v12073
    %12247 = vst.msk [vmem:[%s8 + $0x318] sm:$0xff] %vm12147, %v12075
    %12248 = vst.msk [vmem:[%s8 + $0x320] sm:$0xff] %vm12147, %v12078
    %12249 = vst.msk [vmem:[%s8 + $0x328] sm:$0xff] %vm12147, %v12080
    %12250 = vst.msk [vmem:[%s8 + $0x330] sm:$0xff] %vm12147, %v12083
    %12251 = vst.msk [vmem:[%s8 + $0x338] sm:$0xff] %vm12147, %v12085
    %12252 = vst.msk [vmem:[%s8 + $0x340] sm:$0xff] %vm12147, %v12088
    %12253 = vst.msk [vmem:[%s8 + $0x348] sm:$0xff] %vm12147, %v12090
    %12254 = vst.msk [vmem:[%s8 + $0x350] sm:$0xff] %vm12147, %v12093
    %12255 = vst.msk [vmem:[%s8 + $0x358] sm:$0xff] %vm12147, %v12095
    %12256 = vst.msk [vmem:[%s8 + $0x360] sm:$0xff] %vm12147, %v12098
    %12257 = vst.msk [vmem:[%s8 + $0x368] sm:$0xff] %vm12147, %v12100
    %12258 = vst.msk [vmem:[%s8 + $0x370] sm:$0xff] %vm12147, %v12103
    %12259 = vst.msk [vmem:[%s8 + $0x378] sm:$0xff] %vm12147, %v12105
    %12260 = vst.msk [vmem:[%s8 + $0x380] sm:$0xff] %vm12147, %v12108
    %12261 = vst.msk [vmem:[%s8 + $0x388] sm:$0xff] %vm12147, %v12110
    %12262 = vst.msk [vmem:[%s8 + $0x390] sm:$0xff] %vm12147, %v12113
    %12263 = vst.msk [vmem:[%s8 + $0x398] sm:$0xff] %vm12147, %v12115
    %12264 = vst.msk [vmem:[%s8 + $0x3a0] sm:$0xff] %vm12147, %v12118
    %12265 = vst.msk [vmem:[%s8 + $0x3a8] sm:$0xff] %vm12147, %v12120
    %12266 = vst.msk [vmem:[%s8 + $0x3b0] sm:$0xff] %vm12147, %v12123
    %12267 = vst.msk [vmem:[%s8 + $0x3b8] sm:$0xff] %vm12147, %v12125
    %12268 = vst.msk [vmem:[%s8 + $0x3c0] sm:$0xff] %vm12147, %v12128
    %12269 = vst.msk [vmem:[%s8 + $0x3c8] sm:$0xff] %vm12147, %v12130
    %12270 = vst.msk [vmem:[%s8 + $0x3d0] sm:$0xff] %vm12147, %v12133
    %12271 = vst.msk [vmem:[%s8 + $0x3d8] sm:$0xff] %vm12147, %v12135
    %12272 = vst.msk [vmem:[%s8 + $0x3e0] sm:$0xff] %vm12147, %v12138
    %12273 = vst.msk [vmem:[%s8 + $0x3e8] sm:$0xff] %vm12147, %v12140
    %12274 = vst.msk [vmem:[%s8 + $0x3f0] sm:$0xff] %vm12147, %v12143
    %12275 = vst.msk [vmem:[%s8 + $0x3f8] sm:$0xff] %vm12147, %v12145
    // Predicated region
    $region38: #{tpu_custom_call.1} parent=1 // pred_check
      _
    $region39: #{tpu_custom_call.1} parent=1 // pred_check_branch
      %12277 = sbr.rel (0) target = $region41
    $region40: #{tpu_custom_call.1} parent=1 // pred_region
      _
    $region41: #{tpu_custom_call.1} parent=1 // pred_fallthru
      _
    // Predicated region
    $region42: #{tpu_custom_call.1} parent=1 // pred_check
      _
    $region43: #{tpu_custom_call.1} parent=1 // pred_check_branch
      %12279 = sbr.rel (0) target = $region45
    $region44: #{tpu_custom_call.1} parent=1 // pred_region
      _
    $region45: #{tpu_custom_call.1} parent=1 // pred_fallthru
      _
    %12280 = vsyncpa [#allocation3], 1

</llo_original>
